<compile_context>
chip_gen: v7x
topology: tpu7x:2x2x1
jax: 0.10.0
libtpu: 0.0.40
codegen_flags: <defaults>
</compile_context>

<pallas_src>
import functools

import jax
import jax.numpy as jnp
from jax import lax
from jax.experimental import pallas as pl
from jax.experimental.pallas import tpu as pltpu

_LANE = 128


def _round_up(x, m):
    return (x + m - 1) // m * m


def _pick_row_tile(H, W, max_rows=512):
    """Largest divisor t of H with t*W <= max_rows, preferring (t*W) % 8 == 0."""
    best, best_aligned = 1, None
    for t in range(1, H + 1):
        if H % t == 0 and t * W <= max_rows:
            best = t
            if (t * W) % 8 == 0:
                best_aligned = t
    return best_aligned if best_aligned is not None else best


def _basic_block_kernel(x_ref, w1_ref, b1_ref, w2_ref, b2_ref, o_ref,
                        xp_ref, y1p_ref, col_ref, *, H, W, Ci, Co, TM_H, proj):
    """Fused BasicBlock forward for one batch element (NHWC, padded channels).

    x   : (H, W, Ci)            bf16 input block (channel-padded)
    w1  : (9*Ci, Co)     bf16   conv1 weight, tap-major im2col, BN1 scale folded
    b1  : (1, Co)        f32    BN1 folded bias
    w2  : (9*Co[+Ci],Co) bf16   conv2 (+ fused 1x1 projection) weight, scale folded
    b2  : (1, Co)        f32    BN2 (+ BNs) folded bias
    o   : (H, W, Co)     bf16   output block
    xp  : (H+2, W+2, Ci) VMEM   spatially padded input
    y1p : (H+2, W+2, Co) VMEM   spatially padded conv1 activation
    col : (RB, Kmax)     VMEM   per-row-tile im2col slab (reused by both convs)
    """
    n_blocks = H // TM_H
    RB = TM_H * W
    cdtype = x_ref.dtype

    # ---- stage 0: zero ONLY the 1-pixel halo of the padded scratches --------
    xp_ref[0:1, :, :] = jnp.zeros((1, W + 2, Ci), cdtype)
    xp_ref[H + 1:H + 2, :, :] = jnp.zeros((1, W + 2, Ci), cdtype)
    xp_ref[:, 0:1, :] = jnp.zeros((H + 2, 1, Ci), cdtype)
    xp_ref[:, W + 1:W + 2, :] = jnp.zeros((H + 2, 1, Ci), cdtype)
    # TODO(synk): DMA x directly from HBM into the xp interior (memory_space=
    #             pl.ANY) to drop this VMEM->VMEM pass once sliced-destination
    #             DMA is validated on all target generations.
    xp_ref[1:H + 1, 1:W + 1, :] = x_ref[...]

    y1p_ref[0:1, :, :] = jnp.zeros((1, W + 2, Co), cdtype)
    y1p_ref[H + 1:H + 2, :, :] = jnp.zeros((1, W + 2, Co), cdtype)
    y1p_ref[:, 0:1, :] = jnp.zeros((H + 2, 1, Co), cdtype)
    y1p_ref[:, W + 1:W + 2, :] = jnp.zeros((H + 2, 1, Co), cdtype)

    b1 = b1_ref[...]          # hoisted, loop-invariant
    b2 = b2_ref[...]

    # ---- conv1 (+ bn1 + relu), one row tile at a time ------------------------
    def conv1_tile(rb):
        h0 = rb * TM_H
        for t in range(9):
            dh, dw = divmod(t, 3)
            col_ref[:, t * Ci:(t + 1) * Ci] = (
                xp_ref[pl.ds(h0 + dh, TM_H), dw:dw + W, :].reshape(RB, Ci))
        acc = jnp.dot(col_ref[:, 0:9 * Ci], w1_ref[...],
                      preferred_element_type=jnp.float32)
        y1 = jnp.maximum(acc + b1, 0.0)
        y1p_ref[pl.ds(h0 + 1, TM_H), 1:W + 1, :] = (
            y1.astype(cdtype).reshape(TM_H, W, Co))

    # ---- conv2 (+ bn2) + shortcut + final relu, one row tile at a time ------
    def conv2_tile(rb):
        h0 = rb * TM_H
        for t in range(9):
            dh, dw = divmod(t, 3)
            col_ref[:, t * Co:(t + 1) * Co] = (
                y1p_ref[pl.ds(h0 + dh, TM_H), dw:dw + W, :].reshape(RB, Co))
        if proj:
            # Fused projection shortcut: x tile appended as extra K columns,
            # ws (scale-folded) appended as extra rows of w2 -> one matmul.
            col_ref[:, 9 * Co:9 * Co + Ci] = (
                x_ref[pl.ds(h0, TM_H), :, :].reshape(RB, Ci))
            acc = jnp.dot(col_ref[:, 0:9 * Co + Ci], w2_ref[...],
                          preferred_element_type=jnp.float32)
            out = jnp.maximum(acc + b2, 0.0)
        else:
            acc = jnp.dot(col_ref[:, 0:9 * Co], w2_ref[...],
                          preferred_element_type=jnp.float32)
            sc = x_ref[pl.ds(h0, TM_H), :, :].reshape(RB, Ci).astype(jnp.float32)
            out = jnp.maximum(acc + b2 + sc, 0.0)
        o_ref[pl.ds(h0, TM_H), :, :] = (
            out.astype(o_ref.dtype).reshape(TM_H, W, Co))

    # conv2 of tile rb reads conv1 rows of neighbouring tiles -> two passes.
    if n_blocks == 1:
        conv1_tile(0)
        conv2_tile(0)
    else:
        lax.fori_loop(0, n_blocks, lambda rb, c: (conv1_tile(rb), c)[1], 0,
                      unroll=min(2, n_blocks))
        lax.fori_loop(0, n_blocks, lambda rb, c: (conv2_tile(rb), c)[1], 0,
                      unroll=min(2, n_blocks))


# ------------------------------- wrapper --------------------------------------

def _fold_bn(bn, eps=1e-5):
    """Eval-mode BN -> per-channel (scale, bias) in f32."""
    scale = bn["gamma"] / jnp.sqrt(bn["var"] + eps)
    bias = bn["beta"] - bn["mean"] * scale
    return scale, bias


def _prep_conv3x3(w, scale, Ci_p, Co_p):
    """OIHW (Co,Ci,3,3), BN scale folded in f32 -> tap-major (9*Ci_p, Co_p) bf16."""
    Co, Ci = w.shape[0], w.shape[1]
    w = w * scale[:, None, None, None]                    # fold BN scale (f32)
    w = jnp.transpose(w, (2, 3, 1, 0))                    # (3,3,Ci,Co)
    w = jnp.pad(w, ((0, 0), (0, 0), (0, Ci_p - Ci), (0, Co_p - Co)))
    return w.reshape(9 * Ci_p, Co_p).astype(jnp.bfloat16)


def basic_block_pallas(x_nchw, params, stride=1):
    # TODO(synk): stride != 1 (downsampling conv1/shortcut) and training-mode
    #             BatchNorm statistics are not implemented (module default is
    #             stride=1, eval-mode BN).
    assert stride == 1, "only stride=1 implemented"
    N, Cin, H, W = x_nchw.shape
    Cout = params["conv1_w"].shape[0]
    proj = "convs_w" in params
    if not proj:
        assert Cin == Cout, "identity shortcut requires Cin == Cout"

    Ci_p = _round_up(Cin, _LANE)
    Co_p = _round_up(Cout, _LANE)
    TM_H = _pick_row_tile(H, W, max_rows=512)
    RB = TM_H * W

    # NCHW -> NHWC bf16, channel-pad to the 128-lane width (padding is zero).
    # TODO(synk): keep the surrounding model NHWC/bf16 end-to-end to drop the
    #             transposes / f32 casts / channel-slice around this kernel.
    x = jnp.transpose(x_nchw, (0, 2, 3, 1)).astype(jnp.bfloat16)
    x = jnp.pad(x, ((0, 0), (0, 0), (0, 0), (0, Ci_p - Cin)))

    s1, b1 = _fold_bn(params["bn1"])
    s2, b2 = _fold_bn(params["bn2"])
    w1 = _prep_conv3x3(params["conv1_w"], s1, Ci_p, Co_p)
    w2 = _prep_conv3x3(params["conv2_w"], s2, Co_p, Co_p)

    if proj:
        ss, bs = _fold_bn(params["bns"])
        ws = jnp.transpose(params["convs_w"][:, :, 0, 0], (1, 0)) * ss[None, :]
        ws = jnp.pad(ws, ((0, Ci_p - Cin), (0, Co_p - Cout))).astype(jnp.bfloat16)
        w2a = jnp.concatenate([w2, ws], axis=0)           # (9*Co_p + Ci_p, Co_p)
        bias2 = b2 + bs
        K2 = 9 * Co_p + Ci_p
    else:
        w2a = w2
        bias2 = b2
        K2 = 9 * Co_p

    b1v = jnp.pad(b1, (0, Co_p - Cout)).reshape(1, Co_p).astype(jnp.float32)
    b2v = jnp.pad(bias2, (0, Co_p - Cout)).reshape(1, Co_p).astype(jnp.float32)

    Kw = max(9 * Ci_p, K2)                                # shared col width

    vec = lambda n: (0, 0)
    in_specs = [
        pl.BlockSpec((pl.Squeezed(), H, W, Ci_p), lambda n: (n, 0, 0, 0)),
        pl.BlockSpec((9 * Ci_p, Co_p), vec),
        pl.BlockSpec((1, Co_p), vec),
        pl.BlockSpec((K2, Co_p), vec),
        pl.BlockSpec((1, Co_p), vec),
    ]

    kernel = functools.partial(_basic_block_kernel, H=H, W=W, Ci=Ci_p, Co=Co_p,
                               TM_H=TM_H, proj=proj)

    scratch_shapes = [
        pltpu.VMEM((H + 2, W + 2, Ci_p), jnp.bfloat16),   # padded input
        pltpu.VMEM((H + 2, W + 2, Co_p), jnp.bfloat16),   # padded conv1 act
        pltpu.VMEM((RB, Kw), jnp.bfloat16),               # per-tile im2col slab
    ]

    # Advisory cost estimate for the XLA scheduler.
    flops = 2 * N * H * W * (9 * Ci_p * Co_p + K2 * Co_p)
    bytes_accessed = (x.size * 2 + N * H * W * Co_p * 2
                      + (w1.size + w2a.size) * 2 + 2 * 2 * Co_p * 4)
    cost = pl.CostEstimate(flops=flops, transcendentals=0,
                           bytes_accessed=bytes_accessed)

    # Generation-aware VMEM budget: estimated need (with headroom), capped
    # below the physical per-core capacity (52 MiB on v7x, ~116 MiB v5e/v6e).
    blk_bytes = 2 * (H * W * Ci_p + H * W * Co_p) * 2     # dbl-buffered x / out
    wgt_bytes = 2 * (w1.size + w2a.size) * 2 + 2 * 2 * Co_p * 4
    scr_bytes = ((H + 2) * (W + 2) * (Ci_p + Co_p) + RB * Kw) * 2
    need = int(1.3 * (blk_bytes + wgt_bytes + scr_bytes)) + (4 << 20)
    try:
        cap = int(pltpu.get_tpu_info().vmem_capacity_bytes)
    except Exception:
        cap = 64 << 20
    vmem_limit = max(min(need, cap - (12 << 20)), 16 << 20)

    # TODO(synk): add a halo-aware spatial (row-band) parallel grid axis so both
    #             v7x TensorCores get work when N == 1; batch-parallel for now.
    # TODO(synk): on v5e, accumulate 9 shifted K=C matmuls instead of im2col
    #             (128-deep MXU already filled per tap; saves col stores).
    out_nhwc = pl.pallas_call(
        kernel,
        out_shape=jax.ShapeDtypeStruct((N, H, W, Co_p), jnp.bfloat16),
        grid_spec=pltpu.PrefetchScalarGridSpec(
            num_scalar_prefetch=0,
            grid=(N,),
            in_specs=in_specs,
            out_specs=pl.BlockSpec((pl.Squeezed(), H, W, Co_p),
                                   lambda n: (n, 0, 0, 0)),
            scratch_shapes=scratch_shapes,
        ),
        compiler_params=pltpu.CompilerParams(
            dimension_semantics=("parallel",),
            vmem_limit_bytes=vmem_limit),
        cost_estimate=cost,
    )(x, w1, b1v, w2a, b2v)

    out = out_nhwc[..., :Cout]                            # drop channel padding
    return jnp.transpose(out, (0, 3, 1, 2)).astype(jnp.float32)   # NHWC -> NCHW


# ----------------------------- reference & setup ------------------------------

def init_params(key, cin, cout, stride=1):
    """Deterministic synthetic parameters matching BasicBlock.__init__ shapes."""
    ks = jax.random.split(key, 6)

    def bn_params(k):
        k1, k2, k3, k4 = jax.random.split(k, 4)
        return dict(
            gamma=1.0 + 0.1 * jax.random.normal(k1, (cout,), jnp.float32),
            beta=0.1 * jax.random.normal(k2, (cout,), jnp.float32),
            mean=0.05 * jax.random.normal(k3, (cout,), jnp.float32),
            var=0.5 + jax.random.uniform(k4, (cout,), jnp.float32),
        )

    p = {
        "conv1_w": 0.2 * jax.random.normal(ks[0], (cout, cin, 3, 3), jnp.float32),
        "bn1": bn_params(ks[1]),
        "conv2_w": 0.2 * jax.random.normal(ks[2], (cout, cout, 3, 3), jnp.float32),
        "bn2": bn_params(ks[3]),
    }
    if stride != 1 or cin != cout:
        p["convs_w"] = 0.2 * jax.random.normal(ks[4], (cout, cin, 1, 1), jnp.float32)
        p["bns"] = bn_params(ks[5])
    return p


def basic_block_reference(x_nchw, params, eps=1e-5):
    """Pure-JAX (XLA, f32) reference; eval-mode BatchNorm; NCHW like torch."""
    def conv(x, w):
        return jax.lax.conv_general_dilated(
            x, w, (1, 1), "SAME",
            dimension_numbers=("NCHW", "OIHW", "NCHW"))

    def bn(x, b):
        s = b["gamma"] / jnp.sqrt(b["var"] + eps)
        t = b["beta"] - b["mean"] * s
        return x * s[None, :, None, None] + t[None, :, None, None]

    out = jax.nn.relu(bn(conv(x_nchw, params["conv1_w"]), params["bn1"]))
    out = bn(conv(out, params["conv2_w"]), params["bn2"])
    if "convs_w" in params:
        sc = bn(conv(x_nchw, params["convs_w"]), params["bns"])
    else:
        sc = x_nchw
    return jax.nn.relu(out + sc)


def _check(out, ref, name, tol=0.1):
    # bf16 activations / weights -> compare with |ref|-normalized error.
    err = float(jnp.max(jnp.abs(out - ref) / jnp.maximum(jnp.abs(ref), 1.0)))
    assert err < tol, f"{name}: normalized max error {err}"


if __name__ == "__main__":
    key = jax.random.PRNGKey(0)
    kx1, kp1, kx2, kp2 = jax.random.split(key, 4)

    # Case 1: projection shortcut (Cin != Cout -> fused 1x1 conv + bn shortcut).
    N, Cin, H, W, Cout = 2, 4, 16, 16, 8
    x1 = jax.random.normal(kx1, (N, Cin, H, W), jnp.float32)
    p1 = init_params(kp1, Cin, Cout, stride=1)
    out1 = jax.block_until_ready(basic_block_pallas(x1, p1, stride=1))
    assert out1.shape == (N, Cout, H, W), out1.shape
    _check(out1, basic_block_reference(x1, p1), "projection-shortcut")

    # Case 2: identity shortcut (Cin == Cout -> direct residual add).
    C = 8
    x2 = jax.random.normal(kx2, (N, C, H, W), jnp.float32)
    p2 = init_params(kp2, C, C, stride=1)
    out2 = jax.block_until_ready(basic_block_pallas(x2, p2, stride=1))
    assert out2.shape == (N, C, H, W), out2.shape
    _check(out2, basic_block_reference(x2, p2), "identity-shortcut")

    print("KERNEL_OK")
</pallas_src>

<mosaic_0001>
module attributes {stable_mosaic.version = 11 : i64} {
  func.func @_basic_block_kernel(%arg0: i32, %arg1: memref<1x16x16x128xbf16, #tpu.memory_space<vmem>>, %arg2: memref<1152x128xbf16, #tpu.memory_space<vmem>>, %arg3: memref<1x128xf32, #tpu.memory_space<vmem>>, %arg4: memref<1280x128xbf16, #tpu.memory_space<vmem>>, %arg5: memref<1x128xf32, #tpu.memory_space<vmem>>, %arg6: memref<1x16x16x128xbf16, #tpu.memory_space<vmem>>, %arg7: memref<18x18x128xbf16, #tpu.memory_space<vmem>>, %arg8: memref<18x18x128xbf16, #tpu.memory_space<vmem>>, %arg9: memref<256x1280xbf16, #tpu.memory_space<vmem>>) attributes {dimension_semantics = [#tpu.dimension_semantics<parallel>], iteration_bounds = array<i64: 2>, scalar_prefetch = 0 : i64, scratch_operands = 3 : i64, tpu.core_type = #tpu.core_type<tc>, window_params = [{transform_indices = @transform_0, window_bounds = array<i64: 1, 16, 16, 128>}, {pipeline_mode = #tpu.pipeline_mode<synchronous>, transform_indices = @transform_1, window_bounds = array<i64: 1152, 128>}, {pipeline_mode = #tpu.pipeline_mode<synchronous>, transform_indices = @transform_2, window_bounds = array<i64: 1, 128>}, {pipeline_mode = #tpu.pipeline_mode<synchronous>, transform_indices = @transform_3, window_bounds = array<i64: 1280, 128>}, {pipeline_mode = #tpu.pipeline_mode<synchronous>, transform_indices = @transform_4, window_bounds = array<i64: 1, 128>}, {transform_indices = @transform_5, window_bounds = array<i64: 1, 16, 16, 128>}]} {
    %cst = arith.constant 0.000000e+00 : bf16
    %0 = vector.broadcast %cst : bf16 to vector<1x18x128xbf16>
    %c0 = arith.constant 0 : index
    %c0_0 = arith.constant 0 : index
    %c0_1 = arith.constant 0 : index
    %1 = vector.load %arg7[%c0, %c0_0, %c0_1] : memref<18x18x128xbf16, #tpu.memory_space<vmem>>, vector<1x18x128xbf16>
    tpu.vector_store %arg7[%c0, %c0_0, %c0_1], %0 {strides = array<i32>} : memref<18x18x128xbf16, #tpu.memory_space<vmem>>, vector<1x18x128xbf16>,
    %cst_2 = arith.constant 0.000000e+00 : bf16
    %2 = vector.broadcast %cst_2 : bf16 to vector<1x18x128xbf16>
    %c17 = arith.constant 17 : index
    %c0_3 = arith.constant 0 : index
    %c0_4 = arith.constant 0 : index
    %3 = vector.load %arg7[%c17, %c0_3, %c0_4] : memref<18x18x128xbf16, #tpu.memory_space<vmem>>, vector<1x18x128xbf16>
    tpu.vector_store %arg7[%c17, %c0_3, %c0_4], %2 {strides = array<i32>} : memref<18x18x128xbf16, #tpu.memory_space<vmem>>, vector<1x18x128xbf16>,
    %cst_5 = arith.constant 0.000000e+00 : bf16
    %4 = vector.broadcast %cst_5 : bf16 to vector<18x1x128xbf16>
    %c0_6 = arith.constant 0 : index
    %c0_7 = arith.constant 0 : index
    %c0_8 = arith.constant 0 : index
    %5 = vector.load %arg7[%c0_6, %c0_7, %c0_8] : memref<18x18x128xbf16, #tpu.memory_space<vmem>>, vector<18x1x128xbf16>
    tpu.vector_store %arg7[%c0_6, %c0_7, %c0_8], %4 {strides = array<i32>} : memref<18x18x128xbf16, #tpu.memory_space<vmem>>, vector<18x1x128xbf16>,
    %cst_9 = arith.constant 0.000000e+00 : bf16
    %6 = vector.broadcast %cst_9 : bf16 to vector<18x1x128xbf16>
    %c0_10 = arith.constant 0 : index
    %c17_11 = arith.constant 17 : index
    %c0_12 = arith.constant 0 : index
    %7 = vector.load %arg7[%c0_10, %c17_11, %c0_12] : memref<18x18x128xbf16, #tpu.memory_space<vmem>>, vector<18x1x128xbf16>
    tpu.vector_store %arg7[%c0_10, %c17_11, %c0_12], %6 {strides = array<i32>} : memref<18x18x128xbf16, #tpu.memory_space<vmem>>, vector<18x1x128xbf16>,
    %c0_13 = arith.constant 0 : index
    %c0_14 = arith.constant 0 : index
    %c0_15 = arith.constant 0 : index
    %c0_16 = arith.constant 0 : index
    %8 = vector.load %arg1[%c0_13, %c0_14, %c0_15, %c0_16] : memref<1x16x16x128xbf16, #tpu.memory_space<vmem>>, vector<1x16x16x128xbf16>
    %9 = vector.shape_cast %8 : vector<1x16x16x128xbf16> to vector<16x16x128xbf16>
    %c1 = arith.constant 1 : index
    %c1_17 = arith.constant 1 : index
    %c0_18 = arith.constant 0 : index
    %10 = vector.load %arg7[%c1, %c1_17, %c0_18] : memref<18x18x128xbf16, #tpu.memory_space<vmem>>, vector<16x16x128xbf16>
    tpu.vector_store %arg7[%c1, %c1_17, %c0_18], %9 {strides = array<i32>} : memref<18x18x128xbf16, #tpu.memory_space<vmem>>, vector<16x16x128xbf16>,
    %cst_19 = arith.constant 0.000000e+00 : bf16
    %11 = vector.broadcast %cst_19 : bf16 to vector<1x18x128xbf16>
    %c0_20 = arith.constant 0 : index
    %c0_21 = arith.constant 0 : index
    %c0_22 = arith.constant 0 : index
    %12 = vector.load %arg8[%c0_20, %c0_21, %c0_22] : memref<18x18x128xbf16, #tpu.memory_space<vmem>>, vector<1x18x128xbf16>
    tpu.vector_store %arg8[%c0_20, %c0_21, %c0_22], %11 {strides = array<i32>} : memref<18x18x128xbf16, #tpu.memory_space<vmem>>, vector<1x18x128xbf16>,
    %cst_23 = arith.constant 0.000000e+00 : bf16
    %13 = vector.broadcast %cst_23 : bf16 to vector<1x18x128xbf16>
    %c17_24 = arith.constant 17 : index
    %c0_25 = arith.constant 0 : index
    %c0_26 = arith.constant 0 : index
    %14 = vector.load %arg8[%c17_24, %c0_25, %c0_26] : memref<18x18x128xbf16, #tpu.memory_space<vmem>>, vector<1x18x128xbf16>
    tpu.vector_store %arg8[%c17_24, %c0_25, %c0_26], %13 {strides = array<i32>} : memref<18x18x128xbf16, #tpu.memory_space<vmem>>, vector<1x18x128xbf16>,
    %cst_27 = arith.constant 0.000000e+00 : bf16
    %15 = vector.broadcast %cst_27 : bf16 to vector<18x1x128xbf16>
    %c0_28 = arith.constant 0 : index
    %c0_29 = arith.constant 0 : index
    %c0_30 = arith.constant 0 : index
    %16 = vector.load %arg8[%c0_28, %c0_29, %c0_30] : memref<18x18x128xbf16, #tpu.memory_space<vmem>>, vector<18x1x128xbf16>
    tpu.vector_store %arg8[%c0_28, %c0_29, %c0_30], %15 {strides = array<i32>} : memref<18x18x128xbf16, #tpu.memory_space<vmem>>, vector<18x1x128xbf16>,
    %cst_31 = arith.constant 0.000000e+00 : bf16
    %17 = vector.broadcast %cst_31 : bf16 to vector<18x1x128xbf16>
    %c0_32 = arith.constant 0 : index
    %c17_33 = arith.constant 17 : index
    %c0_34 = arith.constant 0 : index
    %18 = vector.load %arg8[%c0_32, %c17_33, %c0_34] : memref<18x18x128xbf16, #tpu.memory_space<vmem>>, vector<18x1x128xbf16>
    tpu.vector_store %arg8[%c0_32, %c17_33, %c0_34], %17 {strides = array<i32>} : memref<18x18x128xbf16, #tpu.memory_space<vmem>>, vector<18x1x128xbf16>,
    %c0_35 = arith.constant 0 : index
    %c0_36 = arith.constant 0 : index
    %19 = vector.load %arg3[%c0_35, %c0_36] : memref<1x128xf32, #tpu.memory_space<vmem>>, vector<1x128xf32>
    %c0_37 = arith.constant 0 : index
    %c0_38 = arith.constant 0 : index
    %20 = vector.load %arg5[%c0_37, %c0_38] : memref<1x128xf32, #tpu.memory_space<vmem>>, vector<1x128xf32>
    %c0_39 = arith.constant 0 : index
    %c0_40 = arith.constant 0 : index
    %c0_41 = arith.constant 0 : index
    %21 = vector.load %arg7[%c0_39, %c0_40, %c0_41] : memref<18x18x128xbf16, #tpu.memory_space<vmem>>, vector<16x16x128xbf16>
    %22 = vector.shape_cast %21 : vector<16x16x128xbf16> to vector<256x128xbf16>
    %c0_42 = arith.constant 0 : index
    %c0_43 = arith.constant 0 : index
    %23 = vector.load %arg9[%c0_42, %c0_43] : memref<256x1280xbf16, #tpu.memory_space<vmem>>, vector<256x128xbf16>
    tpu.vector_store %arg9[%c0_42, %c0_43], %22 {strides = array<i32>} : memref<256x1280xbf16, #tpu.memory_space<vmem>>, vector<256x128xbf16>,
    %c0_44 = arith.constant 0 : index
    %c1_45 = arith.constant 1 : index
    %c0_46 = arith.constant 0 : index
    %24 = vector.load %arg7[%c0_44, %c1_45, %c0_46] : memref<18x18x128xbf16, #tpu.memory_space<vmem>>, vector<16x16x128xbf16>
    %25 = vector.shape_cast %24 : vector<16x16x128xbf16> to vector<256x128xbf16>
    %c0_47 = arith.constant 0 : index
    %c128 = arith.constant 128 : index
    %26 = vector.load %arg9[%c0_47, %c128] : memref<256x1280xbf16, #tpu.memory_space<vmem>>, vector<256x128xbf16>
    tpu.vector_store %arg9[%c0_47, %c128], %25 {strides = array<i32>} : memref<256x1280xbf16, #tpu.memory_space<vmem>>, vector<256x128xbf16>,
    %c0_48 = arith.constant 0 : index
    %c2 = arith.constant 2 : index
    %c0_49 = arith.constant 0 : index
    %27 = vector.load %arg7[%c0_48, %c2, %c0_49] : memref<18x18x128xbf16, #tpu.memory_space<vmem>>, vector<16x16x128xbf16>
    %28 = vector.shape_cast %27 : vector<16x16x128xbf16> to vector<256x128xbf16>
    %c0_50 = arith.constant 0 : index
    %c256 = arith.constant 256 : index
    %29 = vector.load %arg9[%c0_50, %c256] : memref<256x1280xbf16, #tpu.memory_space<vmem>>, vector<256x128xbf16>
    tpu.vector_store %arg9[%c0_50, %c256], %28 {strides = array<i32>} : memref<256x1280xbf16, #tpu.memory_space<vmem>>, vector<256x128xbf16>,
    %c1_51 = arith.constant 1 : index
    %c0_52 = arith.constant 0 : index
    %c0_53 = arith.constant 0 : index
    %30 = vector.load %arg7[%c1_51, %c0_52, %c0_53] : memref<18x18x128xbf16, #tpu.memory_space<vmem>>, vector<16x16x128xbf16>
    %31 = vector.shape_cast %30 : vector<16x16x128xbf16> to vector<256x128xbf16>
    %c0_54 = arith.constant 0 : index
    %c384 = arith.constant 384 : index
    %32 = vector.load %arg9[%c0_54, %c384] : memref<256x1280xbf16, #tpu.memory_space<vmem>>, vector<256x128xbf16>
    tpu.vector_store %arg9[%c0_54, %c384], %31 {strides = array<i32>} : memref<256x1280xbf16, #tpu.memory_space<vmem>>, vector<256x128xbf16>,
    %c1_55 = arith.constant 1 : index
    %c1_56 = arith.constant 1 : index
    %c0_57 = arith.constant 0 : index
    %33 = vector.load %arg7[%c1_55, %c1_56, %c0_57] : memref<18x18x128xbf16, #tpu.memory_space<vmem>>, vector<16x16x128xbf16>
    %34 = vector.shape_cast %33 : vector<16x16x128xbf16> to vector<256x128xbf16>
    %c0_58 = arith.constant 0 : index
    %c512 = arith.constant 512 : index
    %35 = vector.load %arg9[%c0_58, %c512] : memref<256x1280xbf16, #tpu.memory_space<vmem>>, vector<256x128xbf16>
    tpu.vector_store %arg9[%c0_58, %c512], %34 {strides = array<i32>} : memref<256x1280xbf16, #tpu.memory_space<vmem>>, vector<256x128xbf16>,
    %c1_59 = arith.constant 1 : index
    %c2_60 = arith.constant 2 : index
    %c0_61 = arith.constant 0 : index
    %36 = vector.load %arg7[%c1_59, %c2_60, %c0_61] : memref<18x18x128xbf16, #tpu.memory_space<vmem>>, vector<16x16x128xbf16>
    %37 = vector.shape_cast %36 : vector<16x16x128xbf16> to vector<256x128xbf16>
    %c0_62 = arith.constant 0 : index
    %c640 = arith.constant 640 : index
    %38 = vector.load %arg9[%c0_62, %c640] : memref<256x1280xbf16, #tpu.memory_space<vmem>>, vector<256x128xbf16>
    tpu.vector_store %arg9[%c0_62, %c640], %37 {strides = array<i32>} : memref<256x1280xbf16, #tpu.memory_space<vmem>>, vector<256x128xbf16>,
    %c2_63 = arith.constant 2 : index
    %c0_64 = arith.constant 0 : index
    %c0_65 = arith.constant 0 : index
    %39 = vector.load %arg7[%c2_63, %c0_64, %c0_65] : memref<18x18x128xbf16, #tpu.memory_space<vmem>>, vector<16x16x128xbf16>
    %40 = vector.shape_cast %39 : vector<16x16x128xbf16> to vector<256x128xbf16>
    %c0_66 = arith.constant 0 : index
    %c768 = arith.constant 768 : index
    %41 = vector.load %arg9[%c0_66, %c768] : memref<256x1280xbf16, #tpu.memory_space<vmem>>, vector<256x128xbf16>
    tpu.vector_store %arg9[%c0_66, %c768], %40 {strides = array<i32>} : memref<256x1280xbf16, #tpu.memory_space<vmem>>, vector<256x128xbf16>,
    %c2_67 = arith.constant 2 : index
    %c1_68 = arith.constant 1 : index
    %c0_69 = arith.constant 0 : index
    %42 = vector.load %arg7[%c2_67, %c1_68, %c0_69] : memref<18x18x128xbf16, #tpu.memory_space<vmem>>, vector<16x16x128xbf16>
    %43 = vector.shape_cast %42 : vector<16x16x128xbf16> to vector<256x128xbf16>
    %c0_70 = arith.constant 0 : index
    %c896 = arith.constant 896 : index
    %44 = vector.load %arg9[%c0_70, %c896] : memref<256x1280xbf16, #tpu.memory_space<vmem>>, vector<256x128xbf16>
    tpu.vector_store %arg9[%c0_70, %c896], %43 {strides = array<i32>} : memref<256x1280xbf16, #tpu.memory_space<vmem>>, vector<256x128xbf16>,
    %c2_71 = arith.constant 2 : index
    %c2_72 = arith.constant 2 : index
    %c0_73 = arith.constant 0 : index
    %45 = vector.load %arg7[%c2_71, %c2_72, %c0_73] : memref<18x18x128xbf16, #tpu.memory_space<vmem>>, vector<16x16x128xbf16>
    %46 = vector.shape_cast %45 : vector<16x16x128xbf16> to vector<256x128xbf16>
    %c0_74 = arith.constant 0 : index
    %c1024 = arith.constant 1024 : index
    %47 = vector.load %arg9[%c0_74, %c1024] : memref<256x1280xbf16, #tpu.memory_space<vmem>>, vector<256x128xbf16>
    tpu.vector_store %arg9[%c0_74, %c1024], %46 {strides = array<i32>} : memref<256x1280xbf16, #tpu.memory_space<vmem>>, vector<256x128xbf16>,
    %c0_75 = arith.constant 0 : index
    %c0_76 = arith.constant 0 : index
    %48 = vector.load %arg9[%c0_75, %c0_76] : memref<256x1280xbf16, #tpu.memory_space<vmem>>, vector<256x1152xbf16>
    %c0_77 = arith.constant 0 : index
    %c0_78 = arith.constant 0 : index
    %49 = vector.load %arg2[%c0_77, %c0_78] : memref<1152x128xbf16, #tpu.memory_space<vmem>>, vector<1152x128xbf16>
    %cst_79 = arith.constant dense<0.000000e+00> : vector<256x128xf32>
    %50 = tpu.matmul %48, %49, %cst_79 {dimension_numbers = #tpu.dot_dimension_numbers<[1], [0], [0], [1], [0, 0, 1, 1], [], []>} : vector<256x1152xbf16>, vector<1152x128xbf16>, vector<256x128xf32> -> vector<256x128xf32>
    %51 = vector.broadcast %19 : vector<1x128xf32> to vector<256x128xf32>
    %52 = arith.addf %50, %51 : vector<256x128xf32>
    %cst_80 = arith.constant 0.000000e+00 : f32
    %53 = vector.broadcast %cst_80 : f32 to vector<256x128xf32>
    %54 = arith.maximumf %52, %53 : vector<256x128xf32>
    %55 = arith.truncf %54 : vector<256x128xf32> to vector<256x128xbf16>
    %56 = vector.shape_cast %55 : vector<256x128xbf16> to vector<16x16x128xbf16>
    %c1_81 = arith.constant 1 : index
    %c1_82 = arith.constant 1 : index
    %c0_83 = arith.constant 0 : index
    %57 = vector.load %arg8[%c1_81, %c1_82, %c0_83] : memref<18x18x128xbf16, #tpu.memory_space<vmem>>, vector<16x16x128xbf16>
    tpu.vector_store %arg8[%c1_81, %c1_82, %c0_83], %56 {strides = array<i32>} : memref<18x18x128xbf16, #tpu.memory_space<vmem>>, vector<16x16x128xbf16>,
    %c0_84 = arith.constant 0 : index
    %c0_85 = arith.constant 0 : index
    %c0_86 = arith.constant 0 : index
    %58 = vector.load %arg8[%c0_84, %c0_85, %c0_86] : memref<18x18x128xbf16, #tpu.memory_space<vmem>>, vector<16x16x128xbf16>
    %59 = vector.shape_cast %58 : vector<16x16x128xbf16> to vector<256x128xbf16>
    %c0_87 = arith.constant 0 : index
    %c0_88 = arith.constant 0 : index
    %60 = vector.load %arg9[%c0_87, %c0_88] : memref<256x1280xbf16, #tpu.memory_space<vmem>>, vector<256x128xbf16>
    tpu.vector_store %arg9[%c0_87, %c0_88], %59 {strides = array<i32>} : memref<256x1280xbf16, #tpu.memory_space<vmem>>, vector<256x128xbf16>,
    %c0_89 = arith.constant 0 : index
    %c1_90 = arith.constant 1 : index
    %c0_91 = arith.constant 0 : index
    %61 = vector.load %arg8[%c0_89, %c1_90, %c0_91] : memref<18x18x128xbf16, #tpu.memory_space<vmem>>, vector<16x16x128xbf16>
    %62 = vector.shape_cast %61 : vector<16x16x128xbf16> to vector<256x128xbf16>
    %c0_92 = arith.constant 0 : index
    %c128_93 = arith.constant 128 : index
    %63 = vector.load %arg9[%c0_92, %c128_93] : memref<256x1280xbf16, #tpu.memory_space<vmem>>, vector<256x128xbf16>
    tpu.vector_store %arg9[%c0_92, %c128_93], %62 {strides = array<i32>} : memref<256x1280xbf16, #tpu.memory_space<vmem>>, vector<256x128xbf16>,
    %c0_94 = arith.constant 0 : index
    %c2_95 = arith.constant 2 : index
    %c0_96 = arith.constant 0 : index
    %64 = vector.load %arg8[%c0_94, %c2_95, %c0_96] : memref<18x18x128xbf16, #tpu.memory_space<vmem>>, vector<16x16x128xbf16>
    %65 = vector.shape_cast %64 : vector<16x16x128xbf16> to vector<256x128xbf16>
    %c0_97 = arith.constant 0 : index
    %c256_98 = arith.constant 256 : index
    %66 = vector.load %arg9[%c0_97, %c256_98] : memref<256x1280xbf16, #tpu.memory_space<vmem>>, vector<256x128xbf16>
    tpu.vector_store %arg9[%c0_97, %c256_98], %65 {strides = array<i32>} : memref<256x1280xbf16, #tpu.memory_space<vmem>>, vector<256x128xbf16>,
    %c1_99 = arith.constant 1 : index
    %c0_100 = arith.constant 0 : index
    %c0_101 = arith.constant 0 : index
    %67 = vector.load %arg8[%c1_99, %c0_100, %c0_101] : memref<18x18x128xbf16, #tpu.memory_space<vmem>>, vector<16x16x128xbf16>
    %68 = vector.shape_cast %67 : vector<16x16x128xbf16> to vector<256x128xbf16>
    %c0_102 = arith.constant 0 : index
    %c384_103 = arith.constant 384 : index
    %69 = vector.load %arg9[%c0_102, %c384_103] : memref<256x1280xbf16, #tpu.memory_space<vmem>>, vector<256x128xbf16>
    tpu.vector_store %arg9[%c0_102, %c384_103], %68 {strides = array<i32>} : memref<256x1280xbf16, #tpu.memory_space<vmem>>, vector<256x128xbf16>,
    %c1_104 = arith.constant 1 : index
    %c1_105 = arith.constant 1 : index
    %c0_106 = arith.constant 0 : index
    %70 = vector.load %arg8[%c1_104, %c1_105, %c0_106] : memref<18x18x128xbf16, #tpu.memory_space<vmem>>, vector<16x16x128xbf16>
    %71 = vector.shape_cast %70 : vector<16x16x128xbf16> to vector<256x128xbf16>
    %c0_107 = arith.constant 0 : index
    %c512_108 = arith.constant 512 : index
    %72 = vector.load %arg9[%c0_107, %c512_108] : memref<256x1280xbf16, #tpu.memory_space<vmem>>, vector<256x128xbf16>
    tpu.vector_store %arg9[%c0_107, %c512_108], %71 {strides = array<i32>} : memref<256x1280xbf16, #tpu.memory_space<vmem>>, vector<256x128xbf16>,
    %c1_109 = arith.constant 1 : index
    %c2_110 = arith.constant 2 : index
    %c0_111 = arith.constant 0 : index
    %73 = vector.load %arg8[%c1_109, %c2_110, %c0_111] : memref<18x18x128xbf16, #tpu.memory_space<vmem>>, vector<16x16x128xbf16>
    %74 = vector.shape_cast %73 : vector<16x16x128xbf16> to vector<256x128xbf16>
    %c0_112 = arith.constant 0 : index
    %c640_113 = arith.constant 640 : index
    %75 = vector.load %arg9[%c0_112, %c640_113] : memref<256x1280xbf16, #tpu.memory_space<vmem>>, vector<256x128xbf16>
    tpu.vector_store %arg9[%c0_112, %c640_113], %74 {strides = array<i32>} : memref<256x1280xbf16, #tpu.memory_space<vmem>>, vector<256x128xbf16>,
    %c2_114 = arith.constant 2 : index
    %c0_115 = arith.constant 0 : index
    %c0_116 = arith.constant 0 : index
    %76 = vector.load %arg8[%c2_114, %c0_115, %c0_116] : memref<18x18x128xbf16, #tpu.memory_space<vmem>>, vector<16x16x128xbf16>
    %77 = vector.shape_cast %76 : vector<16x16x128xbf16> to vector<256x128xbf16>
    %c0_117 = arith.constant 0 : index
    %c768_118 = arith.constant 768 : index
    %78 = vector.load %arg9[%c0_117, %c768_118] : memref<256x1280xbf16, #tpu.memory_space<vmem>>, vector<256x128xbf16>
    tpu.vector_store %arg9[%c0_117, %c768_118], %77 {strides = array<i32>} : memref<256x1280xbf16, #tpu.memory_space<vmem>>, vector<256x128xbf16>,
    %c2_119 = arith.constant 2 : index
    %c1_120 = arith.constant 1 : index
    %c0_121 = arith.constant 0 : index
    %79 = vector.load %arg8[%c2_119, %c1_120, %c0_121] : memref<18x18x128xbf16, #tpu.memory_space<vmem>>, vector<16x16x128xbf16>
    %80 = vector.shape_cast %79 : vector<16x16x128xbf16> to vector<256x128xbf16>
    %c0_122 = arith.constant 0 : index
    %c896_123 = arith.constant 896 : index
    %81 = vector.load %arg9[%c0_122, %c896_123] : memref<256x1280xbf16, #tpu.memory_space<vmem>>, vector<256x128xbf16>
    tpu.vector_store %arg9[%c0_122, %c896_123], %80 {strides = array<i32>} : memref<256x1280xbf16, #tpu.memory_space<vmem>>, vector<256x128xbf16>,
    %c2_124 = arith.constant 2 : index
    %c2_125 = arith.constant 2 : index
    %c0_126 = arith.constant 0 : index
    %82 = vector.load %arg8[%c2_124, %c2_125, %c0_126] : memref<18x18x128xbf16, #tpu.memory_space<vmem>>, vector<16x16x128xbf16>
    %83 = vector.shape_cast %82 : vector<16x16x128xbf16> to vector<256x128xbf16>
    %c0_127 = arith.constant 0 : index
    %c1024_128 = arith.constant 1024 : index
    %84 = vector.load %arg9[%c0_127, %c1024_128] : memref<256x1280xbf16, #tpu.memory_space<vmem>>, vector<256x128xbf16>
    tpu.vector_store %arg9[%c0_127, %c1024_128], %83 {strides = array<i32>} : memref<256x1280xbf16, #tpu.memory_space<vmem>>, vector<256x128xbf16>,
    %c0_129 = arith.constant 0 : index
    %c0_130 = arith.constant 0 : index
    %c0_131 = arith.constant 0 : index
    %c0_132 = arith.constant 0 : index
    %85 = vector.load %arg1[%c0_129, %c0_130, %c0_131, %c0_132] : memref<1x16x16x128xbf16, #tpu.memory_space<vmem>>, vector<1x16x16x128xbf16>
    %86 = vector.shape_cast %85 : vector<1x16x16x128xbf16> to vector<16x16x128xbf16>
    %87 = vector.shape_cast %86 : vector<16x16x128xbf16> to vector<256x128xbf16>
    %c0_133 = arith.constant 0 : index
    %c1152 = arith.constant 1152 : index
    %88 = vector.load %arg9[%c0_133, %c1152] : memref<256x1280xbf16, #tpu.memory_space<vmem>>, vector<256x128xbf16>
    tpu.vector_store %arg9[%c0_133, %c1152], %87 {strides = array<i32>} : memref<256x1280xbf16, #tpu.memory_space<vmem>>, vector<256x128xbf16>,
    %c0_134 = arith.constant 0 : index
    %c0_135 = arith.constant 0 : index
    %89 = vector.load %arg9[%c0_134, %c0_135] : memref<256x1280xbf16, #tpu.memory_space<vmem>>, vector<256x1280xbf16>
    %c0_136 = arith.constant 0 : index
    %c0_137 = arith.constant 0 : index
    %90 = vector.load %arg4[%c0_136, %c0_137] : memref<1280x128xbf16, #tpu.memory_space<vmem>>, vector<1280x128xbf16>
    %cst_138 = arith.constant dense<0.000000e+00> : vector<256x128xf32>
    %91 = tpu.matmul %89, %90, %cst_138 {dimension_numbers = #tpu.dot_dimension_numbers<[1], [0], [0], [1], [0, 0, 1, 1], [], []>} : vector<256x1280xbf16>, vector<1280x128xbf16>, vector<256x128xf32> -> vector<256x128xf32>
    %92 = vector.broadcast %20 : vector<1x128xf32> to vector<256x128xf32>
    %93 = arith.addf %91, %92 : vector<256x128xf32>
    %cst_139 = arith.constant 0.000000e+00 : f32
    %94 = vector.broadcast %cst_139 : f32 to vector<256x128xf32>
    %95 = arith.maximumf %93, %94 : vector<256x128xf32>
    %96 = arith.truncf %95 : vector<256x128xf32> to vector<256x128xbf16>
    %97 = vector.shape_cast %96 : vector<256x128xbf16> to vector<16x16x128xbf16>
    %c0_140 = arith.constant 0 : index
    %c0_141 = arith.constant 0 : index
    %c0_142 = arith.constant 0 : index
    %c0_143 = arith.constant 0 : index
    %98 = vector.load %arg6[%c0_140, %c0_141, %c0_142, %c0_143] : memref<1x16x16x128xbf16, #tpu.memory_space<vmem>>, vector<1x16x16x128xbf16>
    %99 = vector.shape_cast %98 : vector<1x16x16x128xbf16> to vector<16x16x128xbf16>
    %100 = vector.shape_cast %97 : vector<16x16x128xbf16> to vector<1x16x16x128xbf16>
    tpu.vector_store %arg6[%c0_140, %c0_141, %c0_142, %c0_143], %100 {strides = array<i32>} : memref<1x16x16x128xbf16, #tpu.memory_space<vmem>>, vector<1x16x16x128xbf16>,
    return
  }
  func.func @transform_0(%arg0: i32) -> (i32, i32, i32, i32) {
    %c0_i32 = arith.constant 0 : i32
    %c0_i32_0 = arith.constant 0 : i32
    %c0_i32_1 = arith.constant 0 : i32
    %c0_i32_2 = arith.constant 0 : i32
    return %arg0, %c0_i32, %c0_i32_0, %c0_i32_1 : i32, i32, i32, i32
  }
  func.func @transform_1(%arg0: i32) -> (i32, i32) {
    %c0_i32 = arith.constant 0 : i32
    %c0_i32_0 = arith.constant 0 : i32
    %c0_i32_1 = arith.constant 0 : i32
    return %c0_i32, %c0_i32_0 : i32, i32
  }
  func.func @transform_2(%arg0: i32) -> (i32, i32) {
    %c0_i32 = arith.constant 0 : i32
    %c0_i32_0 = arith.constant 0 : i32
    %c0_i32_1 = arith.constant 0 : i32
    return %c0_i32, %c0_i32_0 : i32, i32
  }
  func.func @transform_3(%arg0: i32) -> (i32, i32) {
    %c0_i32 = arith.constant 0 : i32
    %c0_i32_0 = arith.constant 0 : i32
    %c0_i32_1 = arith.constant 0 : i32
    return %c0_i32, %c0_i32_0 : i32, i32
  }
  func.func @transform_4(%arg0: i32) -> (i32, i32) {
    %c0_i32 = arith.constant 0 : i32
    %c0_i32_0 = arith.constant 0 : i32
    %c0_i32_1 = arith.constant 0 : i32
    return %c0_i32, %c0_i32_0 : i32, i32
  }
  func.func @transform_5(%arg0: i32) -> (i32, i32, i32, i32) {
    %c0_i32 = arith.constant 0 : i32
    %c0_i32_0 = arith.constant 0 : i32
    %c0_i32_1 = arith.constant 0 : i32
    %c0_i32_2 = arith.constant 0 : i32
    return %arg0, %c0_i32, %c0_i32_0, %c0_i32_1 : i32, i32, i32, i32
  }
}

</mosaic_0001>

<llo_original>
// kernel: tpu_custom_call.1
$region0: #{tpu_custom_call.1}
  #allocation0 [shape = 'u32[]', space=smem, size = 0x4, offset = 0x4, fixed_abs, tag = 'smem constant byte address 0x4 - core index']
  #allocation1 [shape = 'u32[144,128]{1,0:T(1,128)}', space=vmem, size = 0x12000, scoped, tag = 'internal scratch']
  #allocation2 [shape = 'bf16[18,18,128]{2,1,0:T(8,128)(2,1)}', space=vmem, size = 0x1b000, scoped, tag = 'scratch operand']
  #allocation3 [shape = 'bf16[18,18,128]{2,1,0:T(8,128)(2,1)}', space=vmem, size = 0x1b000, scoped, tag = 'scratch operand']
  #allocation4 [shape = 'bf16[256,1280]{1,0:T(16,128)(2,1)}', space=vmem, size = 0xa0000, scoped, tag = 'scratch operand']
  %s0 = inlined_call_operand.hbm [shape: bf16[2,16,16,128], index: 0, kind: input, shape index: {}]
  %s1 = inlined_call_operand.hbm [shape: bf16[1152,128], index: 1, kind: input, shape index: {}]
  %s2 = inlined_call_operand.vmem [shape: f32[1,128], index: 2, kind: input, shape index: {}]
  %s3 = inlined_call_operand.hbm [shape: bf16[1280,128], index: 3, kind: input, shape index: {}]
  %s4 = inlined_call_operand.vmem [shape: f32[1,128], index: 4, kind: input, shape index: {}]
  %s5 = inlined_call_operand.hbm [shape: bf16[2,16,16,128], index: 5, kind: output, shape index: {}]
  %s6 = sld [smem:[#allocation0]]
  $region65: #{tpu_custom_call.1} parent=0
    _
  %s8 = ssub.s32 1, %s6
  %s9 = scalar_select 0, %s8, %s6
  $region1: #{tpu_custom_call.1} parent=0
    #allocation5 [shape = 'u8[131072]{0}', space=vmem, size = 0x20000, scoped, tag = 'input window, operand 0']
    #allocation6 [shape = 's32[2]{0}', space=sflag, size = 0x8, scoped, tag = 'scoped memory for tpu_custom_call.1']
    #allocation7 [shape = 's32[2]{0}', space=sflag, size = 0x8, scoped, tag = 'scoped memory for tpu_custom_call.1']
    #allocation8 [shape = 'u8[294912]{0}', space=vmem, size = 0x48000, scoped, tag = 'input window, operand 1, single buffered']
    #allocation9 [shape = 's32[1]{0}', space=sflag, size = 0x4, scoped, tag = 'scoped memory for tpu_custom_call.1']
    #allocation10 [shape = 'u8[327680]{0}', space=vmem, size = 0x50000, scoped, tag = 'input window, operand 3, single buffered']
    #allocation11 [shape = 'u8[131072]{0}', space=vmem, size = 0x20000, scoped, tag = 'output window, operand 0']
    %10 = vsyncpa [#allocation6], 0
    %s11 = scalar_lea.sflag [#allocation6], 1
    %12 = vsyncpa %s11, 0
    %13 = vsyncpa [#allocation9], 0
    %14 = vsyncpa [#allocation7], 0
    %s15 = scalar_lea.sflag [#allocation7], 1
    %16 = vsyncpa %s15, 0
    loop: start=0, step=1, limit=4
    $region2: #{tpu_custom_call.1} parent=1 // loop_pre_header
      _
    $region3: #{tpu_custom_call.1} parent=1 // loop_header
      %s18 = sphi 0, %s22
      %p19 = scmp.ge.s32.totalorder %s18, 4
      %s28 = sphi 0, %s30
      %s31 = sphi 0, %s28
      %s32 = sphi 0, %s31
      %s48 = sphi 0, %s32
      %s52 = sphi 0, %s52
      %s54 = sphi 0, %s52
      %s55 = sphi 0, %s54
      %s69 = sphi 0, %s55
      %s73 = sphi 0, %s73
      %s75 = sphi 0, %s73
      %s76 = sphi 0, %s75
      %s90 = sphi 0, %s76
      %s94 = sphi 0, %s94
      %s96 = sphi 0, %s94
      %s97 = sphi 0, %s96
      %s111 = sphi 0, %s97
      %s115 = sphi 0, %s115
      %s117 = sphi 0, %s115
      %s118 = sphi 0, %s117
      %s132 = sphi 0, %s118
      %s138 = sphi 0, %s140
      %s141 = sphi 0, %s138
      %s142 = sphi 0, %s141
      %s158 = sphi 0, %s142
    $region4: #{tpu_custom_call.1} parent=1 // loop_header_branch
      %21 = sbr.rel (%p19) target = $region8
    $region5: #{tpu_custom_call.1} parent=1 // loop_body
      %s23 = ssub.s32 %s18, 1
      %s24 = ssub.s32 %s18, 2
      %s25 = sadd.s32 %s18, 1
      %s26 = ssub.s32 %s18, %s25
      %p27 = scmp.eq.s32.totalorder %s26, 0
      %s29 = sadd.s32 %s28, 1
      %s30 = scalar_select %p27, %s28, %s29
      %p33 = pneg %p27
      %p34 = scmp.eq.s32.totalorder %s18, 1
      %p35 = por %p33, %p34
      %p36 = scmp.ne.s32.totalorder %s28, %s31
      %p37 = scmp.eq.s32.totalorder %s18, 0
      %p38 = por %p36, %p37
      %p39 = scmp.ne.s32.totalorder %s28, %s31
      %p40 = scmp.eq.s32.totalorder %s23, 1
      %p41 = por %p39, %p40
      %p42 = scmp.ne.s32.totalorder %s31, %s32
      %p43 = scmp.eq.s32.totalorder %s23, 0
      %p44 = por %p42, %p43
      %p45 = scmp.ne.s32.totalorder %s31, %s32
      %p46 = scmp.eq.s32.totalorder %s24, 1
      %p47 = por %p45, %p46
      %p49 = scmp.ne.s32.totalorder %s32, %s48
      %p50 = scmp.eq.s32.totalorder %s24, 0
      %p51 = por %p49, %p50
      %s53 = sadd.s32 %s52, 1
      %p56 = scmp.eq.s32.totalorder %s18, 1
      %p57 = scmp.ne.s32.totalorder %s52, %s54
      %p58 = scmp.eq.s32.totalorder %s18, 0
      %p59 = por %p57, %p58
      %p60 = scmp.ne.s32.totalorder %s52, %s54
      %p61 = scmp.eq.s32.totalorder %s23, 1
      %p62 = por %p60, %p61
      %p63 = scmp.ne.s32.totalorder %s54, %s55
      %p64 = scmp.eq.s32.totalorder %s23, 0
      %p65 = por %p63, %p64
      %p66 = scmp.ne.s32.totalorder %s54, %s55
      %p67 = scmp.eq.s32.totalorder %s24, 1
      %p68 = por %p66, %p67
      %p70 = scmp.ne.s32.totalorder %s55, %s69
      %p71 = scmp.eq.s32.totalorder %s24, 0
      %p72 = por %p70, %p71
      %s74 = sadd.s32 %s73, 1
      %p77 = scmp.eq.s32.totalorder %s18, 1
      %p78 = scmp.ne.s32.totalorder %s73, %s75
      %p79 = scmp.eq.s32.totalorder %s18, 0
      %p80 = por %p78, %p79
      %p81 = scmp.ne.s32.totalorder %s73, %s75
      %p82 = scmp.eq.s32.totalorder %s23, 1
      %p83 = por %p81, %p82
      %p84 = scmp.ne.s32.totalorder %s75, %s76
      %p85 = scmp.eq.s32.totalorder %s23, 0
      %p86 = por %p84, %p85
      %p87 = scmp.ne.s32.totalorder %s75, %s76
      %p88 = scmp.eq.s32.totalorder %s24, 1
      %p89 = por %p87, %p88
      %p91 = scmp.ne.s32.totalorder %s76, %s90
      %p92 = scmp.eq.s32.totalorder %s24, 0
      %p93 = por %p91, %p92
      %s95 = sadd.s32 %s94, 1
      %p98 = scmp.eq.s32.totalorder %s18, 1
      %p99 = scmp.ne.s32.totalorder %s94, %s96
      %p100 = scmp.eq.s32.totalorder %s18, 0
      %p101 = por %p99, %p100
      %p102 = scmp.ne.s32.totalorder %s94, %s96
      %p103 = scmp.eq.s32.totalorder %s23, 1
      %p104 = por %p102, %p103
      %p105 = scmp.ne.s32.totalorder %s96, %s97
      %p106 = scmp.eq.s32.totalorder %s23, 0
      %p107 = por %p105, %p106
      %p108 = scmp.ne.s32.totalorder %s96, %s97
      %p109 = scmp.eq.s32.totalorder %s24, 1
      %p110 = por %p108, %p109
      %p112 = scmp.ne.s32.totalorder %s97, %s111
      %p113 = scmp.eq.s32.totalorder %s24, 0
      %p114 = por %p112, %p113
      %s116 = sadd.s32 %s115, 1
      %p119 = scmp.eq.s32.totalorder %s18, 1
      %p120 = scmp.ne.s32.totalorder %s115, %s117
      %p121 = scmp.eq.s32.totalorder %s18, 0
      %p122 = por %p120, %p121
      %p123 = scmp.ne.s32.totalorder %s115, %s117
      %p124 = scmp.eq.s32.totalorder %s23, 1
      %p125 = por %p123, %p124
      %p126 = scmp.ne.s32.totalorder %s117, %s118
      %p127 = scmp.eq.s32.totalorder %s23, 0
      %p128 = por %p126, %p127
      %p129 = scmp.ne.s32.totalorder %s117, %s118
      %p130 = scmp.eq.s32.totalorder %s24, 1
      %p131 = por %p129, %p130
      %p133 = scmp.ne.s32.totalorder %s118, %s132
      %p134 = scmp.eq.s32.totalorder %s24, 0
      %p135 = por %p133, %p134
      %s136 = ssub.s32 %s18, %s25
      %p137 = scmp.eq.s32.totalorder %s136, 0
      %s139 = sadd.s32 %s138, 1
      %s140 = scalar_select %p137, %s138, %s139
      %p143 = pneg %p137
      %p144 = scmp.eq.s32.totalorder %s18, 1
      %p145 = por %p143, %p144
      %p146 = scmp.ne.s32.totalorder %s138, %s141
      %p147 = scmp.eq.s32.totalorder %s18, 0
      %p148 = por %p146, %p147
      %p149 = scmp.ne.s32.totalorder %s138, %s141
      %p150 = scmp.eq.s32.totalorder %s23, 1
      %p151 = por %p149, %p150
      %p152 = scmp.ne.s32.totalorder %s141, %s142
      %p153 = scmp.eq.s32.totalorder %s23, 0
      %p154 = por %p152, %p153
      %p155 = scmp.ne.s32.totalorder %s141, %s142
      %p156 = scmp.eq.s32.totalorder %s24, 1
      %p157 = por %p155, %p156
      %p159 = scmp.ne.s32.totalorder %s142, %s158
      %p160 = scmp.eq.s32.totalorder %s24, 0
      %p161 = por %p159, %p160
      %p162 = scmp.le.s32.totalorder 1, %s18
      %p163 = scmp.lt.s32.totalorder %s18, 3
      %p164 = pnand %p162, %p163
      %p165 = pneg %p164
      // Predicated region
      $region9: #{tpu_custom_call.1} parent=5 // pred_check
        _
      $region10: #{tpu_custom_call.1} parent=5 // pred_check_branch
        %167 = sbr.rel (%p164) target = $region12
      $region11: #{tpu_custom_call.1} parent=5 // pred_region
        %s168 = ssub.s32 %s18, 1
        // Predicated region
        $region13: #{tpu_custom_call.1} parent=11 // pred_check
          %p169 = pneg %p65
        $region14: #{tpu_custom_call.1} parent=11 // pred_check_branch
          %171 = sbr.rel (%p169) target = $region16
        $region15: #{tpu_custom_call.1} parent=11 // pred_region
          %s173 = ssub.s32 9216, 9216
          %174 = vsyncadd [#allocation9], %s173
          %s175 = sshll.u32 [#allocation8], 4
          %s176 = int_to_ptr.vmem [resolvable:$true] %s175
          %181 = dma.hbm_to_vmem [thread:$0]  %s1, 9216, %s176, [#allocation9], 64, 64, 4
        $region16: #{tpu_custom_call.1} parent=11 // pred_fallthru
          _
        // Predicated region
        $region17: #{tpu_custom_call.1} parent=11 // pred_check
          %p182 = pneg %p86
        $region18: #{tpu_custom_call.1} parent=11 // pred_check_branch
          %184 = sbr.rel (%p182) target = $region20
        $region19: #{tpu_custom_call.1} parent=11 // pred_region
          _
        $region20: #{tpu_custom_call.1} parent=11 // pred_fallthru
          _
        // Predicated region
        $region21: #{tpu_custom_call.1} parent=11 // pred_check
          %p185 = pneg %p107
        $region22: #{tpu_custom_call.1} parent=11 // pred_check_branch
          %187 = sbr.rel (%p185) target = $region24
        $region23: #{tpu_custom_call.1} parent=11 // pred_region
          %s189 = ssub.s32 10240, 10240
          %190 = vsyncadd [#allocation9], %s189
          %s191 = sshll.u32 [#allocation10], 4
          %s192 = int_to_ptr.vmem [resolvable:$true] %s191
          %197 = dma.hbm_to_vmem [thread:$0]  %s3, 10240, %s192, [#allocation9], 64, 64, 4
        $region24: #{tpu_custom_call.1} parent=11 // pred_fallthru
          _
        // Predicated region
        $region25: #{tpu_custom_call.1} parent=11 // pred_check
          %p198 = pneg %p128
        $region26: #{tpu_custom_call.1} parent=11 // pred_check_branch
          %200 = sbr.rel (%p198) target = $region28
        $region27: #{tpu_custom_call.1} parent=11 // pred_region
          _
        $region28: #{tpu_custom_call.1} parent=11 // pred_fallthru
          _
      $region12: #{tpu_custom_call.1} parent=5 // pred_fallthru
        _
      %p201 = scmp.lt.s32.totalorder %s18, 2
      // Predicated region
      $region29: #{tpu_custom_call.1} parent=5 // pred_check
        %p202 = pneg %p201
      $region30: #{tpu_custom_call.1} parent=5 // pred_check_branch
        %204 = sbr.rel (%p202) target = $region32
      $region31: #{tpu_custom_call.1} parent=5 // pred_region
        // Predicated region
        $region33: #{tpu_custom_call.1} parent=31 // pred_check
          %p205 = pneg %p38
        $region34: #{tpu_custom_call.1} parent=31 // pred_check_branch
          %207 = sbr.rel (%p205) target = $region36
        $region35: #{tpu_custom_call.1} parent=31 // pred_region
          %s208 = sand.u32 %s28, 1
          %s209 = scalar_lea.sflag [#allocation6], %s208
          %s210 = sand.u32 %s28, 1
          %s211 = smul.addr %s210, 128
          %s212 = scalar_lea.vmem [#allocation5], %s211
          %s214 = ssub.s32 2048, 2048
          %215 = vsyncadd %s209, %s214
          %s216 = smul.addr %s18, 32
          %s217 = smul.addr %s216, 64
          %s218 = scalar_lea.hbm %s0, %s217
          %s219 = sshll.u32 %s212, 4
          %s220 = int_to_ptr.vmem [resolvable:$true] %s219
          %225 = dma.hbm_to_vmem [thread:$0]  %s218, 2048, %s220, %s209, 64, 64, 4
        $region36: #{tpu_custom_call.1} parent=31 // pred_fallthru
          _
      $region32: #{tpu_custom_call.1} parent=5 // pred_fallthru
        _
      %p226 = scmp.le.s32.totalorder 1, %s18
      %p227 = scmp.lt.s32.totalorder %s18, 3
      %p228 = pnand %p226, %p227
      %p229 = pneg %p228
      // Predicated region
      $region37: #{tpu_custom_call.1} parent=5 // pred_check
        _
      $region38: #{tpu_custom_call.1} parent=5 // pred_check_branch
        %231 = sbr.rel (%p228) target = $region40
      $region39: #{tpu_custom_call.1} parent=5 // pred_region
        %s232 = ssub.s32 %s18, 1
        %s233 = sand.u32 %s31, 1
        %s234 = scalar_lea.sflag [#allocation6], %s233
        %s235 = sand.u32 %s31, 1
        %s236 = smul.addr %s235, 128
        %s237 = scalar_lea.vmem [#allocation5], %s236
        // Predicated region
        $region41: #{tpu_custom_call.1} parent=39 // pred_check
          %p238 = pneg %p44
        $region42: #{tpu_custom_call.1} parent=39 // pred_check_branch
          %240 = sbr.rel (%p238) target = $region44
        $region43: #{tpu_custom_call.1} parent=39 // pred_region
          %241 = dma.done %s234, 2048
        $region44: #{tpu_custom_call.1} parent=39 // pred_fallthru
          _
        // Predicated region
        $region45: #{tpu_custom_call.1} parent=39 // pred_check
          %p242 = pneg %p65
        $region46: #{tpu_custom_call.1} parent=39 // pred_check_branch
          %244 = sbr.rel (%p242) target = $region48
        $region47: #{tpu_custom_call.1} parent=39 // pred_region
          %245 = dma.done [#allocation9], 9216
        $region48: #{tpu_custom_call.1} parent=39 // pred_fallthru
          _
        // Predicated region
        $region49: #{tpu_custom_call.1} parent=39 // pred_check
          %p246 = pneg %p107
        $region50: #{tpu_custom_call.1} parent=39 // pred_check_branch
          %248 = sbr.rel (%p246) target = $region52
        $region51: #{tpu_custom_call.1} parent=39 // pred_region
          %249 = dma.done [#allocation9], 10240
        $region52: #{tpu_custom_call.1} parent=39 // pred_fallthru
          _
        %s250 = sand.u32 %s31, 1
        %s251 = scalar_lea.sflag [#allocation6], %s250
        %s252 = sand.u32 %s31, 1
        %s253 = smul.addr %s252, 128
        %s254 = scalar_lea.vmem [#allocation5], %s253
        %p255 = pneg %p44
        %p256 = pneg %p41
        %p257 = pneg %p65
        %p258 = pneg %p62
        %p259 = pneg %p86
        %p260 = pneg %p83
        %p261 = pneg %p107
        %p262 = pneg %p104
        %p263 = pneg %p128
        %p264 = pneg %p125
        %p265 = pneg %p154
        %p266 = pneg %p151
        %s267 = sand.u32 %s141, 1
        %s268 = scalar_lea.sflag [#allocation7], %s267
        %s269 = sand.u32 %s141, 1
        %s270 = smul.addr %s269, 128
        %s271 = scalar_lea.vmem [#allocation11], %s270
        %273 = vst [vmem:[#allocation2] sm:$0xf] 0
        %274 = vst [vmem:[#allocation2 + $0x4] sm:$0xf] 0
        %275 = vst [vmem:[#allocation2 + $0x8] sm:$0x1] 0
        %s276 = scalar_lea.vmem [#allocation2], 204
        %277 = vst [vmem:[%s276] sm:$0xf] 0
        %278 = vst [vmem:[%s276 + $0x4] sm:$0xf] 0
        %279 = vst [vmem:[%s276 + $0x8] sm:$0x1] 0
        %vm280 = vcmask 1040384
        %vm281 = vsmask.f32 256
        %vm282 = vmand %vm280, %vm281
        %v283 = vld [vmem:[#allocation2] sm:$0x1]
        %v284 = vsel %vm282, 0, %v283
        %285 = vst [vmem:[#allocation2] sm:$0x1] %v284
        %v286 = vld [vmem:[#allocation2 + $0xc] sm:$0x1]
        %v287 = vsel %vm282, 0, %v286
        %288 = vst [vmem:[#allocation2 + $0xc] sm:$0x1] %v287
        %v289 = vld [vmem:[#allocation2 + $0x18] sm:$0x1]
        %v290 = vsel %vm282, 0, %v289
        %291 = vst [vmem:[#allocation2 + $0x18] sm:$0x1] %v290
        %v292 = vld [vmem:[#allocation2 + $0x24] sm:$0x1]
        %v293 = vsel %vm282, 0, %v292
        %294 = vst [vmem:[#allocation2 + $0x24] sm:$0x1] %v293
        %v295 = vld [vmem:[#allocation2 + $0x30] sm:$0x1]
        %v296 = vsel %vm282, 0, %v295
        %297 = vst [vmem:[#allocation2 + $0x30] sm:$0x1] %v296
        %v298 = vld [vmem:[#allocation2 + $0x3c] sm:$0x1]
        %v299 = vsel %vm282, 0, %v298
        %300 = vst [vmem:[#allocation2 + $0x3c] sm:$0x1] %v299
        %v301 = vld [vmem:[#allocation2 + $0x48] sm:$0x1]
        %v302 = vsel %vm282, 0, %v301
        %303 = vst [vmem:[#allocation2 + $0x48] sm:$0x1] %v302
        %v304 = vld [vmem:[#allocation2 + $0x54] sm:$0x1]
        %v305 = vsel %vm282, 0, %v304
        %306 = vst [vmem:[#allocation2 + $0x54] sm:$0x1] %v305
        %v307 = vld [vmem:[#allocation2 + $0x60] sm:$0x1]
        %v308 = vsel %vm282, 0, %v307
        %309 = vst [vmem:[#allocation2 + $0x60] sm:$0x1] %v308
        %v310 = vld [vmem:[#allocation2 + $0x6c] sm:$0x1]
        %v311 = vsel %vm282, 0, %v310
        %312 = vst [vmem:[#allocation2 + $0x6c] sm:$0x1] %v311
        %v313 = vld [vmem:[#allocation2 + $0x78] sm:$0x1]
        %v314 = vsel %vm282, 0, %v313
        %315 = vst [vmem:[#allocation2 + $0x78] sm:$0x1] %v314
        %v316 = vld [vmem:[#allocation2 + $0x84] sm:$0x1]
        %v317 = vsel %vm282, 0, %v316
        %318 = vst [vmem:[#allocation2 + $0x84] sm:$0x1] %v317
        %v319 = vld [vmem:[#allocation2 + $0x90] sm:$0x1]
        %v320 = vsel %vm282, 0, %v319
        %321 = vst [vmem:[#allocation2 + $0x90] sm:$0x1] %v320
        %v322 = vld [vmem:[#allocation2 + $0x9c] sm:$0x1]
        %v323 = vsel %vm282, 0, %v322
        %324 = vst [vmem:[#allocation2 + $0x9c] sm:$0x1] %v323
        %v325 = vld [vmem:[#allocation2 + $0xa8] sm:$0x1]
        %v326 = vsel %vm282, 0, %v325
        %327 = vst [vmem:[#allocation2 + $0xa8] sm:$0x1] %v326
        %v328 = vld [vmem:[#allocation2 + $0xb4] sm:$0x1]
        %v329 = vsel %vm282, 0, %v328
        %330 = vst [vmem:[#allocation2 + $0xb4] sm:$0x1] %v329
        %v331 = vld [vmem:[#allocation2 + $0xc0] sm:$0x1]
        %v332 = vsel %vm282, 0, %v331
        %333 = vst [vmem:[#allocation2 + $0xc0] sm:$0x1] %v332
        %v334 = vld [vmem:[#allocation2 + $0xcc] sm:$0x1]
        %v335 = vsel %vm282, 0, %v334
        %336 = vst [vmem:[#allocation2 + $0xcc] sm:$0x1] %v335
        %vm337 = vsmask.f32 7938
        %vm338 = vmand %vm280, %vm337
        %v339 = vld [vmem:[#allocation2 + $0x8] sm:$0x1]
        %v340 = vsel %vm338, 0, %v339
        %341 = vst [vmem:[#allocation2 + $0x8] sm:$0x1] %v340
        %v342 = vld [vmem:[#allocation2 + $0x14] sm:$0x1]
        %v343 = vsel %vm338, 0, %v342
        %344 = vst [vmem:[#allocation2 + $0x14] sm:$0x1] %v343
        %v345 = vld [vmem:[#allocation2 + $0x20] sm:$0x1]
        %v346 = vsel %vm338, 0, %v345
        %347 = vst [vmem:[#allocation2 + $0x20] sm:$0x1] %v346
        %v348 = vld [vmem:[#allocation2 + $0x2c] sm:$0x1]
        %v349 = vsel %vm338, 0, %v348
        %350 = vst [vmem:[#allocation2 + $0x2c] sm:$0x1] %v349
        %v351 = vld [vmem:[#allocation2 + $0x38] sm:$0x1]
        %v352 = vsel %vm338, 0, %v351
        %353 = vst [vmem:[#allocation2 + $0x38] sm:$0x1] %v352
        %v354 = vld [vmem:[#allocation2 + $0x44] sm:$0x1]
        %v355 = vsel %vm338, 0, %v354
        %356 = vst [vmem:[#allocation2 + $0x44] sm:$0x1] %v355
        %v357 = vld [vmem:[#allocation2 + $0x50] sm:$0x1]
        %v358 = vsel %vm338, 0, %v357
        %359 = vst [vmem:[#allocation2 + $0x50] sm:$0x1] %v358
        %v360 = vld [vmem:[#allocation2 + $0x5c] sm:$0x1]
        %v361 = vsel %vm338, 0, %v360
        %362 = vst [vmem:[#allocation2 + $0x5c] sm:$0x1] %v361
        %v363 = vld [vmem:[#allocation2 + $0x68] sm:$0x1]
        %v364 = vsel %vm338, 0, %v363
        %365 = vst [vmem:[#allocation2 + $0x68] sm:$0x1] %v364
        %v366 = vld [vmem:[#allocation2 + $0x74] sm:$0x1]
        %v367 = vsel %vm338, 0, %v366
        %368 = vst [vmem:[#allocation2 + $0x74] sm:$0x1] %v367
        %v369 = vld [vmem:[#allocation2 + $0x80] sm:$0x1]
        %v370 = vsel %vm338, 0, %v369
        %371 = vst [vmem:[#allocation2 + $0x80] sm:$0x1] %v370
        %v372 = vld [vmem:[#allocation2 + $0x8c] sm:$0x1]
        %v373 = vsel %vm338, 0, %v372
        %374 = vst [vmem:[#allocation2 + $0x8c] sm:$0x1] %v373
        %v375 = vld [vmem:[#allocation2 + $0x98] sm:$0x1]
        %v376 = vsel %vm338, 0, %v375
        %377 = vst [vmem:[#allocation2 + $0x98] sm:$0x1] %v376
        %v378 = vld [vmem:[#allocation2 + $0xa4] sm:$0x1]
        %v379 = vsel %vm338, 0, %v378
        %380 = vst [vmem:[#allocation2 + $0xa4] sm:$0x1] %v379
        %v381 = vld [vmem:[#allocation2 + $0xb0] sm:$0x1]
        %v382 = vsel %vm338, 0, %v381
        %383 = vst [vmem:[#allocation2 + $0xb0] sm:$0x1] %v382
        %v384 = vld [vmem:[#allocation2 + $0xbc] sm:$0x1]
        %v385 = vsel %vm338, 0, %v384
        %386 = vst [vmem:[#allocation2 + $0xbc] sm:$0x1] %v385
        %v387 = vld [vmem:[#allocation2 + $0xc8] sm:$0x1]
        %v388 = vsel %vm338, 0, %v387
        %389 = vst [vmem:[#allocation2 + $0xc8] sm:$0x1] %v388
        %v390 = vld [vmem:[#allocation2 + $0xd4] sm:$0x1]
        %v391 = vsel %vm338, 0, %v390
        %392 = vst [vmem:[#allocation2 + $0xd4] sm:$0x1] %v391
        %v393 = vld [vmem:[%s237] sm:$0xf]
        %v394 = vld [vmem:[%s237 + $0x4] sm:$0xf]
        %v395 = vld [vmem:[%s237 + $0x8] sm:$0xf]
        %v396 = vld [vmem:[%s237 + $0xc] sm:$0xf]
        %v397 = vld [vmem:[%s237 + $0x10] sm:$0xf]
        %v398 = vld [vmem:[%s237 + $0x14] sm:$0xf]
        %v399 = vld [vmem:[%s237 + $0x18] sm:$0xf]
        %v400 = vld [vmem:[%s237 + $0x1c] sm:$0xf]
        %v401 = vld [vmem:[%s237 + $0x20] sm:$0xf]
        %v402 = vld [vmem:[%s237 + $0x24] sm:$0xf]
        %v403 = vld [vmem:[%s237 + $0x28] sm:$0xf]
        %v404 = vld [vmem:[%s237 + $0x2c] sm:$0xf]
        %v405 = vld [vmem:[%s237 + $0x30] sm:$0xf]
        %v406 = vld [vmem:[%s237 + $0x34] sm:$0xf]
        %v407 = vld [vmem:[%s237 + $0x38] sm:$0xf]
        %v408 = vld [vmem:[%s237 + $0x3c] sm:$0xf]
        %v409 = vld [vmem:[%s237 + $0x40] sm:$0xf]
        %v410 = vld [vmem:[%s237 + $0x44] sm:$0xf]
        %v411 = vld [vmem:[%s237 + $0x48] sm:$0xf]
        %v412 = vld [vmem:[%s237 + $0x4c] sm:$0xf]
        %v413 = vld [vmem:[%s237 + $0x50] sm:$0xf]
        %v414 = vld [vmem:[%s237 + $0x54] sm:$0xf]
        %v415 = vld [vmem:[%s237 + $0x58] sm:$0xf]
        %v416 = vld [vmem:[%s237 + $0x5c] sm:$0xf]
        %v417 = vld [vmem:[%s237 + $0x60] sm:$0xf]
        %v418 = vld [vmem:[%s237 + $0x64] sm:$0xf]
        %v419 = vld [vmem:[%s237 + $0x68] sm:$0xf]
        %v420 = vld [vmem:[%s237 + $0x6c] sm:$0xf]
        %v421 = vld [vmem:[%s237 + $0x70] sm:$0xf]
        %v422 = vld [vmem:[%s237 + $0x74] sm:$0xf]
        %v423 = vld [vmem:[%s237 + $0x78] sm:$0xf]
        %v424 = vld [vmem:[%s237 + $0x7c] sm:$0xf]
        %vm425 = vsmask.f32 4368
        %vm426 = vmor %vm281, %vm425
        %v428 = vshrl.u32 %v393, 16
        %v430 = vrot.slane %v428, 7
        %v431 = vshll.u32 %v393, 16
        %v433 = vor.u32 %v430, %v431
        %v434 = vrot.slane %v430, 4
        %v436 = vshrl.u32 %v394, 16
        %v438 = vrot.slane %v436, 7
        %v439 = vshll.u32 %v394, 16
        %v441 = vor.u32 %v438, %v439
        %v442 = vsel %vm426, %v434, %v441
        %v443 = vrot.slane %v438, 4
        %v445 = vshrl.u32 %v395, 16
        %v447 = vrot.slane %v445, 7
        %v448 = vshll.u32 %v395, 16
        %v450 = vor.u32 %v447, %v448
        %v451 = vrot.slane %v447, 4
        %v453 = vshrl.u32 %v396, 16
        %v455 = vrot.slane %v453, 7
        %v456 = vshll.u32 %v396, 16
        %v458 = vor.u32 %v455, %v456
        %v459 = vsel %vm426, %v451, %v458
        %v460 = vrot.slane %v455, 4
        %v462 = vshrl.u32 %v397, 16
        %v464 = vrot.slane %v462, 7
        %v465 = vshll.u32 %v397, 16
        %v467 = vor.u32 %v464, %v465
        %v468 = vrot.slane %v464, 4
        %v470 = vshrl.u32 %v398, 16
        %v472 = vrot.slane %v470, 7
        %v473 = vshll.u32 %v398, 16
        %v475 = vor.u32 %v472, %v473
        %v476 = vsel %vm426, %v468, %v475
        %v477 = vrot.slane %v472, 4
        %v479 = vshrl.u32 %v399, 16
        %v481 = vrot.slane %v479, 7
        %v482 = vshll.u32 %v399, 16
        %v484 = vor.u32 %v481, %v482
        %v485 = vrot.slane %v481, 4
        %v487 = vshrl.u32 %v400, 16
        %v489 = vrot.slane %v487, 7
        %v490 = vshll.u32 %v400, 16
        %v492 = vor.u32 %v489, %v490
        %v493 = vsel %vm426, %v485, %v492
        %v494 = vrot.slane %v489, 4
        %v496 = vshrl.u32 %v401, 16
        %v498 = vrot.slane %v496, 7
        %v499 = vshll.u32 %v401, 16
        %v501 = vor.u32 %v498, %v499
        %v502 = vrot.slane %v498, 4
        %v504 = vshrl.u32 %v402, 16
        %v506 = vrot.slane %v504, 7
        %v507 = vshll.u32 %v402, 16
        %v509 = vor.u32 %v506, %v507
        %v510 = vsel %vm426, %v502, %v509
        %v511 = vrot.slane %v506, 4
        %v513 = vshrl.u32 %v403, 16
        %v515 = vrot.slane %v513, 7
        %v516 = vshll.u32 %v403, 16
        %v518 = vor.u32 %v515, %v516
        %v519 = vrot.slane %v515, 4
        %v521 = vshrl.u32 %v404, 16
        %v523 = vrot.slane %v521, 7
        %v524 = vshll.u32 %v404, 16
        %v526 = vor.u32 %v523, %v524
        %v527 = vsel %vm426, %v519, %v526
        %v528 = vrot.slane %v523, 4
        %v530 = vshrl.u32 %v405, 16
        %v532 = vrot.slane %v530, 7
        %v533 = vshll.u32 %v405, 16
        %v535 = vor.u32 %v532, %v533
        %v536 = vrot.slane %v532, 4
        %v538 = vshrl.u32 %v406, 16
        %v540 = vrot.slane %v538, 7
        %v541 = vshll.u32 %v406, 16
        %v543 = vor.u32 %v540, %v541
        %v544 = vsel %vm426, %v536, %v543
        %v545 = vrot.slane %v540, 4
        %v547 = vshrl.u32 %v407, 16
        %v549 = vrot.slane %v547, 7
        %v550 = vshll.u32 %v407, 16
        %v552 = vor.u32 %v549, %v550
        %v553 = vrot.slane %v549, 4
        %v555 = vshrl.u32 %v408, 16
        %v557 = vrot.slane %v555, 7
        %v558 = vshll.u32 %v408, 16
        %v560 = vor.u32 %v557, %v558
        %v561 = vsel %vm426, %v553, %v560
        %v562 = vrot.slane %v557, 4
        %v564 = vshrl.u32 %v409, 16
        %v566 = vrot.slane %v564, 7
        %v567 = vshll.u32 %v409, 16
        %v569 = vor.u32 %v566, %v567
        %v570 = vrot.slane %v566, 4
        %v572 = vshrl.u32 %v410, 16
        %v574 = vrot.slane %v572, 7
        %v575 = vshll.u32 %v410, 16
        %v577 = vor.u32 %v574, %v575
        %v578 = vsel %vm426, %v570, %v577
        %v579 = vrot.slane %v574, 4
        %v581 = vshrl.u32 %v411, 16
        %v583 = vrot.slane %v581, 7
        %v584 = vshll.u32 %v411, 16
        %v586 = vor.u32 %v583, %v584
        %v587 = vrot.slane %v583, 4
        %v589 = vshrl.u32 %v412, 16
        %v591 = vrot.slane %v589, 7
        %v592 = vshll.u32 %v412, 16
        %v594 = vor.u32 %v591, %v592
        %v595 = vsel %vm426, %v587, %v594
        %v596 = vrot.slane %v591, 4
        %v598 = vshrl.u32 %v413, 16
        %v600 = vrot.slane %v598, 7
        %v601 = vshll.u32 %v413, 16
        %v603 = vor.u32 %v600, %v601
        %v604 = vrot.slane %v600, 4
        %v606 = vshrl.u32 %v414, 16
        %v608 = vrot.slane %v606, 7
        %v609 = vshll.u32 %v414, 16
        %v611 = vor.u32 %v608, %v609
        %v612 = vsel %vm426, %v604, %v611
        %v613 = vrot.slane %v608, 4
        %v615 = vshrl.u32 %v415, 16
        %v617 = vrot.slane %v615, 7
        %v618 = vshll.u32 %v415, 16
        %v620 = vor.u32 %v617, %v618
        %v621 = vrot.slane %v617, 4
        %v623 = vshrl.u32 %v416, 16
        %v625 = vrot.slane %v623, 7
        %v626 = vshll.u32 %v416, 16
        %v628 = vor.u32 %v625, %v626
        %v629 = vsel %vm426, %v621, %v628
        %v630 = vrot.slane %v625, 4
        %v632 = vshrl.u32 %v417, 16
        %v634 = vrot.slane %v632, 7
        %v635 = vshll.u32 %v417, 16
        %v637 = vor.u32 %v634, %v635
        %v638 = vrot.slane %v634, 4
        %v640 = vshrl.u32 %v418, 16
        %v642 = vrot.slane %v640, 7
        %v643 = vshll.u32 %v418, 16
        %v645 = vor.u32 %v642, %v643
        %v646 = vsel %vm426, %v638, %v645
        %v647 = vrot.slane %v642, 4
        %v649 = vshrl.u32 %v419, 16
        %v651 = vrot.slane %v649, 7
        %v652 = vshll.u32 %v419, 16
        %v654 = vor.u32 %v651, %v652
        %v655 = vrot.slane %v651, 4
        %v657 = vshrl.u32 %v420, 16
        %v659 = vrot.slane %v657, 7
        %v660 = vshll.u32 %v420, 16
        %v662 = vor.u32 %v659, %v660
        %v663 = vsel %vm426, %v655, %v662
        %v664 = vrot.slane %v659, 4
        %v666 = vshrl.u32 %v421, 16
        %v668 = vrot.slane %v666, 7
        %v669 = vshll.u32 %v421, 16
        %v671 = vor.u32 %v668, %v669
        %v672 = vrot.slane %v668, 4
        %v674 = vshrl.u32 %v422, 16
        %v676 = vrot.slane %v674, 7
        %v677 = vshll.u32 %v422, 16
        %v679 = vor.u32 %v676, %v677
        %v680 = vsel %vm426, %v672, %v679
        %v681 = vrot.slane %v676, 4
        %v683 = vshrl.u32 %v423, 16
        %v685 = vrot.slane %v683, 7
        %v686 = vshll.u32 %v423, 16
        %v688 = vor.u32 %v685, %v686
        %v689 = vrot.slane %v685, 4
        %v691 = vshrl.u32 %v424, 16
        %v693 = vrot.slane %v691, 7
        %v694 = vshll.u32 %v424, 16
        %v696 = vor.u32 %v693, %v694
        %v697 = vsel %vm426, %v689, %v696
        %v698 = vrot.slane %v693, 4
        %s747 = scalar_lea.vmem [#allocation2], 12
        %vm748 = vcmask 1043456
        %vm749 = vmand %vm748, %vm337
        %v750 = vld [vmem:[%s747] sm:$0xf]
        %v751 = vsel %vm749, %v433, %v750
        %752 = vst [vmem:[%s747] sm:$0xf] %v751
        %753 = vst [vmem:[%s747 + $0x4] sm:$0xf] %v442
        %v754 = vld [vmem:[%s747 + $0x8] sm:$0x1]
        %v755 = vsel %vm282, %v443, %v754
        %756 = vst [vmem:[%s747 + $0x8] sm:$0x1] %v755
        %v757 = vld [vmem:[%s747 + $0xc] sm:$0xf]
        %v758 = vsel %vm749, %v450, %v757
        %759 = vst [vmem:[%s747 + $0xc] sm:$0xf] %v758
        %760 = vst [vmem:[%s747 + $0x10] sm:$0xf] %v459
        %v761 = vld [vmem:[%s747 + $0x14] sm:$0x1]
        %v762 = vsel %vm282, %v460, %v761
        %763 = vst [vmem:[%s747 + $0x14] sm:$0x1] %v762
        %v764 = vld [vmem:[%s747 + $0x18] sm:$0xf]
        %v765 = vsel %vm749, %v467, %v764
        %766 = vst [vmem:[%s747 + $0x18] sm:$0xf] %v765
        %767 = vst [vmem:[%s747 + $0x1c] sm:$0xf] %v476
        %v768 = vld [vmem:[%s747 + $0x20] sm:$0x1]
        %v769 = vsel %vm282, %v477, %v768
        %770 = vst [vmem:[%s747 + $0x20] sm:$0x1] %v769
        %v771 = vld [vmem:[%s747 + $0x24] sm:$0xf]
        %v772 = vsel %vm749, %v484, %v771
        %773 = vst [vmem:[%s747 + $0x24] sm:$0xf] %v772
        %774 = vst [vmem:[%s747 + $0x28] sm:$0xf] %v493
        %v775 = vld [vmem:[%s747 + $0x2c] sm:$0x1]
        %v776 = vsel %vm282, %v494, %v775
        %777 = vst [vmem:[%s747 + $0x2c] sm:$0x1] %v776
        %v778 = vld [vmem:[%s747 + $0x30] sm:$0xf]
        %v779 = vsel %vm749, %v501, %v778
        %780 = vst [vmem:[%s747 + $0x30] sm:$0xf] %v779
        %781 = vst [vmem:[%s747 + $0x34] sm:$0xf] %v510
        %v782 = vld [vmem:[%s747 + $0x38] sm:$0x1]
        %v783 = vsel %vm282, %v511, %v782
        %784 = vst [vmem:[%s747 + $0x38] sm:$0x1] %v783
        %v785 = vld [vmem:[%s747 + $0x3c] sm:$0xf]
        %v786 = vsel %vm749, %v518, %v785
        %787 = vst [vmem:[%s747 + $0x3c] sm:$0xf] %v786
        %788 = vst [vmem:[%s747 + $0x40] sm:$0xf] %v527
        %v789 = vld [vmem:[%s747 + $0x44] sm:$0x1]
        %v790 = vsel %vm282, %v528, %v789
        %791 = vst [vmem:[%s747 + $0x44] sm:$0x1] %v790
        %v792 = vld [vmem:[%s747 + $0x48] sm:$0xf]
        %v793 = vsel %vm749, %v535, %v792
        %794 = vst [vmem:[%s747 + $0x48] sm:$0xf] %v793
        %795 = vst [vmem:[%s747 + $0x4c] sm:$0xf] %v544
        %v796 = vld [vmem:[%s747 + $0x50] sm:$0x1]
        %v797 = vsel %vm282, %v545, %v796
        %798 = vst [vmem:[%s747 + $0x50] sm:$0x1] %v797
        %v799 = vld [vmem:[%s747 + $0x54] sm:$0xf]
        %v800 = vsel %vm749, %v552, %v799
        %801 = vst [vmem:[%s747 + $0x54] sm:$0xf] %v800
        %802 = vst [vmem:[%s747 + $0x58] sm:$0xf] %v561
        %v803 = vld [vmem:[%s747 + $0x5c] sm:$0x1]
        %v804 = vsel %vm282, %v562, %v803
        %805 = vst [vmem:[%s747 + $0x5c] sm:$0x1] %v804
        %v806 = vld [vmem:[%s747 + $0x60] sm:$0xf]
        %v807 = vsel %vm749, %v569, %v806
        %808 = vst [vmem:[%s747 + $0x60] sm:$0xf] %v807
        %809 = vst [vmem:[%s747 + $0x64] sm:$0xf] %v578
        %v810 = vld [vmem:[%s747 + $0x68] sm:$0x1]
        %v811 = vsel %vm282, %v579, %v810
        %812 = vst [vmem:[%s747 + $0x68] sm:$0x1] %v811
        %v813 = vld [vmem:[%s747 + $0x6c] sm:$0xf]
        %v814 = vsel %vm749, %v586, %v813
        %815 = vst [vmem:[%s747 + $0x6c] sm:$0xf] %v814
        %816 = vst [vmem:[%s747 + $0x70] sm:$0xf] %v595
        %v817 = vld [vmem:[%s747 + $0x74] sm:$0x1]
        %v818 = vsel %vm282, %v596, %v817
        %819 = vst [vmem:[%s747 + $0x74] sm:$0x1] %v818
        %v820 = vld [vmem:[%s747 + $0x78] sm:$0xf]
        %v821 = vsel %vm749, %v603, %v820
        %822 = vst [vmem:[%s747 + $0x78] sm:$0xf] %v821
        %823 = vst [vmem:[%s747 + $0x7c] sm:$0xf] %v612
        %v824 = vld [vmem:[%s747 + $0x80] sm:$0x1]
        %v825 = vsel %vm282, %v613, %v824
        %826 = vst [vmem:[%s747 + $0x80] sm:$0x1] %v825
        %v827 = vld [vmem:[%s747 + $0x84] sm:$0xf]
        %v828 = vsel %vm749, %v620, %v827
        %829 = vst [vmem:[%s747 + $0x84] sm:$0xf] %v828
        %830 = vst [vmem:[%s747 + $0x88] sm:$0xf] %v629
        %v831 = vld [vmem:[%s747 + $0x8c] sm:$0x1]
        %v832 = vsel %vm282, %v630, %v831
        %833 = vst [vmem:[%s747 + $0x8c] sm:$0x1] %v832
        %v834 = vld [vmem:[%s747 + $0x90] sm:$0xf]
        %v835 = vsel %vm749, %v637, %v834
        %836 = vst [vmem:[%s747 + $0x90] sm:$0xf] %v835
        %837 = vst [vmem:[%s747 + $0x94] sm:$0xf] %v646
        %v838 = vld [vmem:[%s747 + $0x98] sm:$0x1]
        %v839 = vsel %vm282, %v647, %v838
        %840 = vst [vmem:[%s747 + $0x98] sm:$0x1] %v839
        %v841 = vld [vmem:[%s747 + $0x9c] sm:$0xf]
        %v842 = vsel %vm749, %v654, %v841
        %843 = vst [vmem:[%s747 + $0x9c] sm:$0xf] %v842
        %844 = vst [vmem:[%s747 + $0xa0] sm:$0xf] %v663
        %v845 = vld [vmem:[%s747 + $0xa4] sm:$0x1]
        %v846 = vsel %vm282, %v664, %v845
        %847 = vst [vmem:[%s747 + $0xa4] sm:$0x1] %v846
        %v848 = vld [vmem:[%s747 + $0xa8] sm:$0xf]
        %v849 = vsel %vm749, %v671, %v848
        %850 = vst [vmem:[%s747 + $0xa8] sm:$0xf] %v849
        %851 = vst [vmem:[%s747 + $0xac] sm:$0xf] %v680
        %v852 = vld [vmem:[%s747 + $0xb0] sm:$0x1]
        %v853 = vsel %vm282, %v681, %v852
        %854 = vst [vmem:[%s747 + $0xb0] sm:$0x1] %v853
        %v855 = vld [vmem:[%s747 + $0xb4] sm:$0xf]
        %v856 = vsel %vm749, %v688, %v855
        %857 = vst [vmem:[%s747 + $0xb4] sm:$0xf] %v856
        %858 = vst [vmem:[%s747 + $0xb8] sm:$0xf] %v697
        %v859 = vld [vmem:[%s747 + $0xbc] sm:$0x1]
        %v860 = vsel %vm282, %v698, %v859
        %861 = vst [vmem:[%s747 + $0xbc] sm:$0x1] %v860
        %862 = vst [vmem:[#allocation3] sm:$0xf] 0
        %863 = vst [vmem:[#allocation3 + $0x4] sm:$0xf] 0
        %864 = vst [vmem:[#allocation3 + $0x8] sm:$0x1] 0
        %s865 = scalar_lea.vmem [#allocation3], 204
        %866 = vst [vmem:[%s865] sm:$0xf] 0
        %867 = vst [vmem:[%s865 + $0x4] sm:$0xf] 0
        %868 = vst [vmem:[%s865 + $0x8] sm:$0x1] 0
        %v869 = vld [vmem:[#allocation3] sm:$0x1]
        %v870 = vsel %vm282, 0, %v869
        %871 = vst [vmem:[#allocation3] sm:$0x1] %v870
        %v872 = vld [vmem:[#allocation3 + $0xc] sm:$0x1]
        %v873 = vsel %vm282, 0, %v872
        %874 = vst [vmem:[#allocation3 + $0xc] sm:$0x1] %v873
        %v875 = vld [vmem:[#allocation3 + $0x18] sm:$0x1]
        %v876 = vsel %vm282, 0, %v875
        %877 = vst [vmem:[#allocation3 + $0x18] sm:$0x1] %v876
        %v878 = vld [vmem:[#allocation3 + $0x24] sm:$0x1]
        %v879 = vsel %vm282, 0, %v878
        %880 = vst [vmem:[#allocation3 + $0x24] sm:$0x1] %v879
        %v881 = vld [vmem:[#allocation3 + $0x30] sm:$0x1]
        %v882 = vsel %vm282, 0, %v881
        %883 = vst [vmem:[#allocation3 + $0x30] sm:$0x1] %v882
        %v884 = vld [vmem:[#allocation3 + $0x3c] sm:$0x1]
        %v885 = vsel %vm282, 0, %v884
        %886 = vst [vmem:[#allocation3 + $0x3c] sm:$0x1] %v885
        %v887 = vld [vmem:[#allocation3 + $0x48] sm:$0x1]
        %v888 = vsel %vm282, 0, %v887
        %889 = vst [vmem:[#allocation3 + $0x48] sm:$0x1] %v888
        %v890 = vld [vmem:[#allocation3 + $0x54] sm:$0x1]
        %v891 = vsel %vm282, 0, %v890
        %892 = vst [vmem:[#allocation3 + $0x54] sm:$0x1] %v891
        %v893 = vld [vmem:[#allocation3 + $0x60] sm:$0x1]
        %v894 = vsel %vm282, 0, %v893
        %895 = vst [vmem:[#allocation3 + $0x60] sm:$0x1] %v894
        %v896 = vld [vmem:[#allocation3 + $0x6c] sm:$0x1]
        %v897 = vsel %vm282, 0, %v896
        %898 = vst [vmem:[#allocation3 + $0x6c] sm:$0x1] %v897
        %v899 = vld [vmem:[#allocation3 + $0x78] sm:$0x1]
        %v900 = vsel %vm282, 0, %v899
        %901 = vst [vmem:[#allocation3 + $0x78] sm:$0x1] %v900
        %v902 = vld [vmem:[#allocation3 + $0x84] sm:$0x1]
        %v903 = vsel %vm282, 0, %v902
        %904 = vst [vmem:[#allocation3 + $0x84] sm:$0x1] %v903
        %v905 = vld [vmem:[#allocation3 + $0x90] sm:$0x1]
        %v906 = vsel %vm282, 0, %v905
        %907 = vst [vmem:[#allocation3 + $0x90] sm:$0x1] %v906
        %v908 = vld [vmem:[#allocation3 + $0x9c] sm:$0x1]
        %v909 = vsel %vm282, 0, %v908
        %910 = vst [vmem:[#allocation3 + $0x9c] sm:$0x1] %v909
        %v911 = vld [vmem:[#allocation3 + $0xa8] sm:$0x1]
        %v912 = vsel %vm282, 0, %v911
        %913 = vst [vmem:[#allocation3 + $0xa8] sm:$0x1] %v912
        %v914 = vld [vmem:[#allocation3 + $0xb4] sm:$0x1]
        %v915 = vsel %vm282, 0, %v914
        %916 = vst [vmem:[#allocation3 + $0xb4] sm:$0x1] %v915
        %v917 = vld [vmem:[#allocation3 + $0xc0] sm:$0x1]
        %v918 = vsel %vm282, 0, %v917
        %919 = vst [vmem:[#allocation3 + $0xc0] sm:$0x1] %v918
        %v920 = vld [vmem:[#allocation3 + $0xcc] sm:$0x1]
        %v921 = vsel %vm282, 0, %v920
        %922 = vst [vmem:[#allocation3 + $0xcc] sm:$0x1] %v921
        %v923 = vld [vmem:[#allocation3 + $0x8] sm:$0x1]
        %v924 = vsel %vm338, 0, %v923
        %925 = vst [vmem:[#allocation3 + $0x8] sm:$0x1] %v924
        %v926 = vld [vmem:[#allocation3 + $0x14] sm:$0x1]
        %v927 = vsel %vm338, 0, %v926
        %928 = vst [vmem:[#allocation3 + $0x14] sm:$0x1] %v927
        %v929 = vld [vmem:[#allocation3 + $0x20] sm:$0x1]
        %v930 = vsel %vm338, 0, %v929
        %931 = vst [vmem:[#allocation3 + $0x20] sm:$0x1] %v930
        %v932 = vld [vmem:[#allocation3 + $0x2c] sm:$0x1]
        %v933 = vsel %vm338, 0, %v932
        %934 = vst [vmem:[#allocation3 + $0x2c] sm:$0x1] %v933
        %v935 = vld [vmem:[#allocation3 + $0x38] sm:$0x1]
        %v936 = vsel %vm338, 0, %v935
        %937 = vst [vmem:[#allocation3 + $0x38] sm:$0x1] %v936
        %v938 = vld [vmem:[#allocation3 + $0x44] sm:$0x1]
        %v939 = vsel %vm338, 0, %v938
        %940 = vst [vmem:[#allocation3 + $0x44] sm:$0x1] %v939
        %v941 = vld [vmem:[#allocation3 + $0x50] sm:$0x1]
        %v942 = vsel %vm338, 0, %v941
        %943 = vst [vmem:[#allocation3 + $0x50] sm:$0x1] %v942
        %v944 = vld [vmem:[#allocation3 + $0x5c] sm:$0x1]
        %v945 = vsel %vm338, 0, %v944
        %946 = vst [vmem:[#allocation3 + $0x5c] sm:$0x1] %v945
        %v947 = vld [vmem:[#allocation3 + $0x68] sm:$0x1]
        %v948 = vsel %vm338, 0, %v947
        %949 = vst [vmem:[#allocation3 + $0x68] sm:$0x1] %v948
        %v950 = vld [vmem:[#allocation3 + $0x74] sm:$0x1]
        %v951 = vsel %vm338, 0, %v950
        %952 = vst [vmem:[#allocation3 + $0x74] sm:$0x1] %v951
        %v953 = vld [vmem:[#allocation3 + $0x80] sm:$0x1]
        %v954 = vsel %vm338, 0, %v953
        %955 = vst [vmem:[#allocation3 + $0x80] sm:$0x1] %v954
        %v956 = vld [vmem:[#allocation3 + $0x8c] sm:$0x1]
        %v957 = vsel %vm338, 0, %v956
        %958 = vst [vmem:[#allocation3 + $0x8c] sm:$0x1] %v957
        %v959 = vld [vmem:[#allocation3 + $0x98] sm:$0x1]
        %v960 = vsel %vm338, 0, %v959
        %961 = vst [vmem:[#allocation3 + $0x98] sm:$0x1] %v960
        %v962 = vld [vmem:[#allocation3 + $0xa4] sm:$0x1]
        %v963 = vsel %vm338, 0, %v962
        %964 = vst [vmem:[#allocation3 + $0xa4] sm:$0x1] %v963
        %v965 = vld [vmem:[#allocation3 + $0xb0] sm:$0x1]
        %v966 = vsel %vm338, 0, %v965
        %967 = vst [vmem:[#allocation3 + $0xb0] sm:$0x1] %v966
        %v968 = vld [vmem:[#allocation3 + $0xbc] sm:$0x1]
        %v969 = vsel %vm338, 0, %v968
        %970 = vst [vmem:[#allocation3 + $0xbc] sm:$0x1] %v969
        %v971 = vld [vmem:[#allocation3 + $0xc8] sm:$0x1]
        %v972 = vsel %vm338, 0, %v971
        %973 = vst [vmem:[#allocation3 + $0xc8] sm:$0x1] %v972
        %v974 = vld [vmem:[#allocation3 + $0xd4] sm:$0x1]
        %v975 = vsel %vm338, 0, %v974
        %976 = vst [vmem:[#allocation3 + $0xd4] sm:$0x1] %v975
        %v977 = vld [vmem:[%s2] sm:$0x1]
        %v978 = vld [vmem:[%s4] sm:$0x1]
        %v979 = vld [vmem:[#allocation2] sm:$0xf]
        %v980 = vld [vmem:[#allocation2 + $0x4] sm:$0xf]
        %v981 = vld [vmem:[#allocation2 + $0xc] sm:$0xf]
        %v982 = vld [vmem:[#allocation2 + $0x10] sm:$0xf]
        %v983 = vld [vmem:[#allocation2 + $0x18] sm:$0xf]
        %v984 = vld [vmem:[#allocation2 + $0x1c] sm:$0xf]
        %v985 = vld [vmem:[#allocation2 + $0x24] sm:$0xf]
        %v986 = vld [vmem:[#allocation2 + $0x28] sm:$0xf]
        %v987 = vld [vmem:[#allocation2 + $0x30] sm:$0xf]
        %v988 = vld [vmem:[#allocation2 + $0x34] sm:$0xf]
        %v989 = vld [vmem:[#allocation2 + $0x3c] sm:$0xf]
        %v990 = vld [vmem:[#allocation2 + $0x40] sm:$0xf]
        %v991 = vld [vmem:[#allocation2 + $0x48] sm:$0xf]
        %v992 = vld [vmem:[#allocation2 + $0x4c] sm:$0xf]
        %v993 = vld [vmem:[#allocation2 + $0x54] sm:$0xf]
        %v994 = vld [vmem:[#allocation2 + $0x58] sm:$0xf]
        %v995 = vld [vmem:[#allocation2 + $0x60] sm:$0xf]
        %v996 = vld [vmem:[#allocation2 + $0x64] sm:$0xf]
        %v997 = vld [vmem:[#allocation2 + $0x6c] sm:$0xf]
        %v998 = vld [vmem:[#allocation2 + $0x70] sm:$0xf]
        %v999 = vld [vmem:[#allocation2 + $0x78] sm:$0xf]
        %v1000 = vld [vmem:[#allocation2 + $0x7c] sm:$0xf]
        %v1001 = vld [vmem:[#allocation2 + $0x84] sm:$0xf]
        %v1002 = vld [vmem:[#allocation2 + $0x88] sm:$0xf]
        %v1003 = vld [vmem:[#allocation2 + $0x90] sm:$0xf]
        %v1004 = vld [vmem:[#allocation2 + $0x94] sm:$0xf]
        %v1005 = vld [vmem:[#allocation2 + $0x9c] sm:$0xf]
        %v1006 = vld [vmem:[#allocation2 + $0xa0] sm:$0xf]
        %v1007 = vld [vmem:[#allocation2 + $0xa8] sm:$0xf]
        %v1008 = vld [vmem:[#allocation2 + $0xac] sm:$0xf]
        %v1009 = vld [vmem:[#allocation2 + $0xb4] sm:$0xf]
        %v1010 = vld [vmem:[#allocation2 + $0xb8] sm:$0xf]
        %v1043 = vunpack.c.l.b16 %v979
        %v1044 = vunpack.c.l.b16 %v980
        %v1045 = vunpack.c.l.b16 %v981
        %v1046 = vunpack.c.l.b16 %v982
        %v1047 = vunpack.c.l.b16 %v983
        %v1048 = vunpack.c.l.b16 %v984
        %v1049 = vunpack.c.l.b16 %v985
        %v1050 = vunpack.c.l.b16 %v986
        %v1051 = vunpack.c.l.b16 %v987
        %v1052 = vunpack.c.l.b16 %v988
        %v1053 = vunpack.c.l.b16 %v989
        %v1054 = vunpack.c.l.b16 %v990
        %v1055 = vunpack.c.l.b16 %v991
        %v1056 = vunpack.c.l.b16 %v992
        %v1057 = vunpack.c.l.b16 %v993
        %v1058 = vunpack.c.l.b16 %v994
        %v1059 = vunpack.c.l.b16 %v995
        %v1060 = vunpack.c.l.b16 %v996
        %v1061 = vunpack.c.l.b16 %v997
        %v1062 = vunpack.c.l.b16 %v998
        %v1063 = vunpack.c.l.b16 %v999
        %v1064 = vunpack.c.l.b16 %v1000
        %v1065 = vunpack.c.l.b16 %v1001
        %v1066 = vunpack.c.l.b16 %v1002
        %v1067 = vunpack.c.l.b16 %v1003
        %v1068 = vunpack.c.l.b16 %v1004
        %v1069 = vunpack.c.l.b16 %v1005
        %v1070 = vunpack.c.l.b16 %v1006
        %v1071 = vunpack.c.l.b16 %v1007
        %v1072 = vunpack.c.l.b16 %v1008
        %v1073 = vunpack.c.l.b16 %v1009
        %v1074 = vunpack.c.l.b16 %v1010
        %v1075 = vpack.c.b16 %v1044, %v1043
        %v1076 = vpack.c.b16 %v1046, %v1045
        %v1077 = vpack.c.b16 %v1048, %v1047
        %v1078 = vpack.c.b16 %v1050, %v1049
        %v1079 = vpack.c.b16 %v1052, %v1051
        %v1080 = vpack.c.b16 %v1054, %v1053
        %v1081 = vpack.c.b16 %v1056, %v1055
        %v1082 = vpack.c.b16 %v1058, %v1057
        %v1083 = vpack.c.b16 %v1060, %v1059
        %v1084 = vpack.c.b16 %v1062, %v1061
        %v1085 = vpack.c.b16 %v1064, %v1063
        %v1086 = vpack.c.b16 %v1066, %v1065
        %v1087 = vpack.c.b16 %v1068, %v1067
        %v1088 = vpack.c.b16 %v1070, %v1069
        %v1089 = vpack.c.b16 %v1072, %v1071
        %v1090 = vpack.c.b16 %v1074, %v1073
        %1107 = vst [vmem:[#allocation4] sm:$0xff] %v1075
        %1108 = vst [vmem:[#allocation4 + $0x50] sm:$0xff] %v1076
        %1109 = vst [vmem:[#allocation4 + $0xa0] sm:$0xff] %v1077
        %1110 = vst [vmem:[#allocation4 + $0xf0] sm:$0xff] %v1078
        %1111 = vst [vmem:[#allocation4 + $0x140] sm:$0xff] %v1079
        %1112 = vst [vmem:[#allocation4 + $0x190] sm:$0xff] %v1080
        %1113 = vst [vmem:[#allocation4 + $0x1e0] sm:$0xff] %v1081
        %1114 = vst [vmem:[#allocation4 + $0x230] sm:$0xff] %v1082
        %1115 = vst [vmem:[#allocation4 + $0x280] sm:$0xff] %v1083
        %1116 = vst [vmem:[#allocation4 + $0x2d0] sm:$0xff] %v1084
        %1117 = vst [vmem:[#allocation4 + $0x320] sm:$0xff] %v1085
        %1118 = vst [vmem:[#allocation4 + $0x370] sm:$0xff] %v1086
        %1119 = vst [vmem:[#allocation4 + $0x3c0] sm:$0xff] %v1087
        %1120 = vst [vmem:[#allocation4 + $0x410] sm:$0xff] %v1088
        %1121 = vst [vmem:[#allocation4 + $0x460] sm:$0xff] %v1089
        %1122 = vst [vmem:[#allocation4 + $0x4b0] sm:$0xff] %v1090
        %v1123 = vld [vmem:[#allocation2] sm:$0xf]
        %v1124 = vld [vmem:[#allocation2 + $0x4] sm:$0xf]
        %v1125 = vld [vmem:[#allocation2 + $0x8] sm:$0x1]
        %v1126 = vld [vmem:[#allocation2 + $0xc] sm:$0xf]
        %v1127 = vld [vmem:[#allocation2 + $0x10] sm:$0xf]
        %v1128 = vld [vmem:[#allocation2 + $0x14] sm:$0x1]
        %v1129 = vld [vmem:[#allocation2 + $0x18] sm:$0xf]
        %v1130 = vld [vmem:[#allocation2 + $0x1c] sm:$0xf]
        %v1131 = vld [vmem:[#allocation2 + $0x20] sm:$0x1]
        %v1132 = vld [vmem:[#allocation2 + $0x24] sm:$0xf]
        %v1133 = vld [vmem:[#allocation2 + $0x28] sm:$0xf]
        %v1134 = vld [vmem:[#allocation2 + $0x2c] sm:$0x1]
        %v1135 = vld [vmem:[#allocation2 + $0x30] sm:$0xf]
        %v1136 = vld [vmem:[#allocation2 + $0x34] sm:$0xf]
        %v1137 = vld [vmem:[#allocation2 + $0x38] sm:$0x1]
        %v1138 = vld [vmem:[#allocation2 + $0x3c] sm:$0xf]
        %v1139 = vld [vmem:[#allocation2 + $0x40] sm:$0xf]
        %v1140 = vld [vmem:[#allocation2 + $0x44] sm:$0x1]
        %v1141 = vld [vmem:[#allocation2 + $0x48] sm:$0xf]
        %v1142 = vld [vmem:[#allocation2 + $0x4c] sm:$0xf]
        %v1143 = vld [vmem:[#allocation2 + $0x50] sm:$0x1]
        %v1144 = vld [vmem:[#allocation2 + $0x54] sm:$0xf]
        %v1145 = vld [vmem:[#allocation2 + $0x58] sm:$0xf]
        %v1146 = vld [vmem:[#allocation2 + $0x5c] sm:$0x1]
        %v1147 = vld [vmem:[#allocation2 + $0x60] sm:$0xf]
        %v1148 = vld [vmem:[#allocation2 + $0x64] sm:$0xf]
        %v1149 = vld [vmem:[#allocation2 + $0x68] sm:$0x1]
        %v1150 = vld [vmem:[#allocation2 + $0x6c] sm:$0xf]
        %v1151 = vld [vmem:[#allocation2 + $0x70] sm:$0xf]
        %v1152 = vld [vmem:[#allocation2 + $0x74] sm:$0x1]
        %v1153 = vld [vmem:[#allocation2 + $0x78] sm:$0xf]
        %v1154 = vld [vmem:[#allocation2 + $0x7c] sm:$0xf]
        %v1155 = vld [vmem:[#allocation2 + $0x80] sm:$0x1]
        %v1156 = vld [vmem:[#allocation2 + $0x84] sm:$0xf]
        %v1157 = vld [vmem:[#allocation2 + $0x88] sm:$0xf]
        %v1158 = vld [vmem:[#allocation2 + $0x8c] sm:$0x1]
        %v1159 = vld [vmem:[#allocation2 + $0x90] sm:$0xf]
        %v1160 = vld [vmem:[#allocation2 + $0x94] sm:$0xf]
        %v1161 = vld [vmem:[#allocation2 + $0x98] sm:$0x1]
        %v1162 = vld [vmem:[#allocation2 + $0x9c] sm:$0xf]
        %v1163 = vld [vmem:[#allocation2 + $0xa0] sm:$0xf]
        %v1164 = vld [vmem:[#allocation2 + $0xa4] sm:$0x1]
        %v1165 = vld [vmem:[#allocation2 + $0xa8] sm:$0xf]
        %v1166 = vld [vmem:[#allocation2 + $0xac] sm:$0xf]
        %v1167 = vld [vmem:[#allocation2 + $0xb0] sm:$0x1]
        %v1168 = vld [vmem:[#allocation2 + $0xb4] sm:$0xf]
        %v1169 = vld [vmem:[#allocation2 + $0xb8] sm:$0xf]
        %v1170 = vld [vmem:[#allocation2 + $0xbc] sm:$0x1]
        %vm1171 = vsmask.f32 3328
        %vm1172 = vsmask.f32 7440
        %vm1173 = vmor %vm1171, %vm1172
        %v1175 = vshrl.u32 %v1123, 16
        %v1177 = vrot.slane %v1175, 4
        %v1178 = vshll.u32 %v1123, 16
        %v1180 = vrot.slane %v1178, 5
        %v1181 = vor.u32 %v1177, %v1180
        %v1182 = vrot.slane %v1181, 4
        %v1184 = vshll.u32 %v1124, 16
        %v1186 = vrot.slane %v1184, 5
        %v1187 = vsel %vm1173, %v1182, %v1186
        %v1188 = vshrl.u32 %v1124, 16
        %v1190 = vrot.slane %v1188, 4
        %v1191 = vor.u32 %v1190, %v1186
        %v1192 = vrot.slane %v1191, 4
        %v1194 = vshll.u32 %v1125, 16
        %v1196 = vrot.slane %v1194, 5
        %v1197 = vsel %vm1173, %v1192, %v1196
        %v1199 = vshrl.u32 %v1126, 16
        %v1201 = vrot.slane %v1199, 4
        %v1202 = vshll.u32 %v1126, 16
        %v1204 = vrot.slane %v1202, 5
        %v1205 = vor.u32 %v1201, %v1204
        %v1206 = vrot.slane %v1205, 4
        %v1208 = vshll.u32 %v1127, 16
        %v1210 = vrot.slane %v1208, 5
        %v1211 = vsel %vm1173, %v1206, %v1210
        %v1212 = vshrl.u32 %v1127, 16
        %v1214 = vrot.slane %v1212, 4
        %v1215 = vor.u32 %v1214, %v1210
        %v1216 = vrot.slane %v1215, 4
        %v1218 = vshll.u32 %v1128, 16
        %v1220 = vrot.slane %v1218, 5
        %v1221 = vsel %vm1173, %v1216, %v1220
        %v1223 = vshrl.u32 %v1129, 16
        %v1225 = vrot.slane %v1223, 4
        %v1226 = vshll.u32 %v1129, 16
        %v1228 = vrot.slane %v1226, 5
        %v1229 = vor.u32 %v1225, %v1228
        %v1230 = vrot.slane %v1229, 4
        %v1232 = vshll.u32 %v1130, 16
        %v1234 = vrot.slane %v1232, 5
        %v1235 = vsel %vm1173, %v1230, %v1234
        %v1236 = vshrl.u32 %v1130, 16
        %v1238 = vrot.slane %v1236, 4
        %v1239 = vor.u32 %v1238, %v1234
        %v1240 = vrot.slane %v1239, 4
        %v1242 = vshll.u32 %v1131, 16
        %v1244 = vrot.slane %v1242, 5
        %v1245 = vsel %vm1173, %v1240, %v1244
        %v1247 = vshrl.u32 %v1132, 16
        %v1249 = vrot.slane %v1247, 4
        %v1250 = vshll.u32 %v1132, 16
        %v1252 = vrot.slane %v1250, 5
        %v1253 = vor.u32 %v1249, %v1252
        %v1254 = vrot.slane %v1253, 4
        %v1256 = vshll.u32 %v1133, 16
        %v1258 = vrot.slane %v1256, 5
        %v1259 = vsel %vm1173, %v1254, %v1258
        %v1260 = vshrl.u32 %v1133, 16
        %v1262 = vrot.slane %v1260, 4
        %v1263 = vor.u32 %v1262, %v1258
        %v1264 = vrot.slane %v1263, 4
        %v1266 = vshll.u32 %v1134, 16
        %v1268 = vrot.slane %v1266, 5
        %v1269 = vsel %vm1173, %v1264, %v1268
        %v1271 = vshrl.u32 %v1135, 16
        %v1273 = vrot.slane %v1271, 4
        %v1274 = vshll.u32 %v1135, 16
        %v1276 = vrot.slane %v1274, 5
        %v1277 = vor.u32 %v1273, %v1276
        %v1278 = vrot.slane %v1277, 4
        %v1280 = vshll.u32 %v1136, 16
        %v1282 = vrot.slane %v1280, 5
        %v1283 = vsel %vm1173, %v1278, %v1282
        %v1284 = vshrl.u32 %v1136, 16
        %v1286 = vrot.slane %v1284, 4
        %v1287 = vor.u32 %v1286, %v1282
        %v1288 = vrot.slane %v1287, 4
        %v1290 = vshll.u32 %v1137, 16
        %v1292 = vrot.slane %v1290, 5
        %v1293 = vsel %vm1173, %v1288, %v1292
        %v1295 = vshrl.u32 %v1138, 16
        %v1297 = vrot.slane %v1295, 4
        %v1298 = vshll.u32 %v1138, 16
        %v1300 = vrot.slane %v1298, 5
        %v1301 = vor.u32 %v1297, %v1300
        %v1302 = vrot.slane %v1301, 4
        %v1304 = vshll.u32 %v1139, 16
        %v1306 = vrot.slane %v1304, 5
        %v1307 = vsel %vm1173, %v1302, %v1306
        %v1308 = vshrl.u32 %v1139, 16
        %v1310 = vrot.slane %v1308, 4
        %v1311 = vor.u32 %v1310, %v1306
        %v1312 = vrot.slane %v1311, 4
        %v1314 = vshll.u32 %v1140, 16
        %v1316 = vrot.slane %v1314, 5
        %v1317 = vsel %vm1173, %v1312, %v1316
        %v1319 = vshrl.u32 %v1141, 16
        %v1321 = vrot.slane %v1319, 4
        %v1322 = vshll.u32 %v1141, 16
        %v1324 = vrot.slane %v1322, 5
        %v1325 = vor.u32 %v1321, %v1324
        %v1326 = vrot.slane %v1325, 4
        %v1328 = vshll.u32 %v1142, 16
        %v1330 = vrot.slane %v1328, 5
        %v1331 = vsel %vm1173, %v1326, %v1330
        %v1332 = vshrl.u32 %v1142, 16
        %v1334 = vrot.slane %v1332, 4
        %v1335 = vor.u32 %v1334, %v1330
        %v1336 = vrot.slane %v1335, 4
        %v1338 = vshll.u32 %v1143, 16
        %v1340 = vrot.slane %v1338, 5
        %v1341 = vsel %vm1173, %v1336, %v1340
        %v1343 = vshrl.u32 %v1144, 16
        %v1345 = vrot.slane %v1343, 4
        %v1346 = vshll.u32 %v1144, 16
        %v1348 = vrot.slane %v1346, 5
        %v1349 = vor.u32 %v1345, %v1348
        %v1350 = vrot.slane %v1349, 4
        %v1352 = vshll.u32 %v1145, 16
        %v1354 = vrot.slane %v1352, 5
        %v1355 = vsel %vm1173, %v1350, %v1354
        %v1356 = vshrl.u32 %v1145, 16
        %v1358 = vrot.slane %v1356, 4
        %v1359 = vor.u32 %v1358, %v1354
        %v1360 = vrot.slane %v1359, 4
        %v1362 = vshll.u32 %v1146, 16
        %v1364 = vrot.slane %v1362, 5
        %v1365 = vsel %vm1173, %v1360, %v1364
        %v1367 = vshrl.u32 %v1147, 16
        %v1369 = vrot.slane %v1367, 4
        %v1370 = vshll.u32 %v1147, 16
        %v1372 = vrot.slane %v1370, 5
        %v1373 = vor.u32 %v1369, %v1372
        %v1374 = vrot.slane %v1373, 4
        %v1376 = vshll.u32 %v1148, 16
        %v1378 = vrot.slane %v1376, 5
        %v1379 = vsel %vm1173, %v1374, %v1378
        %v1380 = vshrl.u32 %v1148, 16
        %v1382 = vrot.slane %v1380, 4
        %v1383 = vor.u32 %v1382, %v1378
        %v1384 = vrot.slane %v1383, 4
        %v1386 = vshll.u32 %v1149, 16
        %v1388 = vrot.slane %v1386, 5
        %v1389 = vsel %vm1173, %v1384, %v1388
        %v1391 = vshrl.u32 %v1150, 16
        %v1393 = vrot.slane %v1391, 4
        %v1394 = vshll.u32 %v1150, 16
        %v1396 = vrot.slane %v1394, 5
        %v1397 = vor.u32 %v1393, %v1396
        %v1398 = vrot.slane %v1397, 4
        %v1400 = vshll.u32 %v1151, 16
        %v1402 = vrot.slane %v1400, 5
        %v1403 = vsel %vm1173, %v1398, %v1402
        %v1404 = vshrl.u32 %v1151, 16
        %v1406 = vrot.slane %v1404, 4
        %v1407 = vor.u32 %v1406, %v1402
        %v1408 = vrot.slane %v1407, 4
        %v1410 = vshll.u32 %v1152, 16
        %v1412 = vrot.slane %v1410, 5
        %v1413 = vsel %vm1173, %v1408, %v1412
        %v1415 = vshrl.u32 %v1153, 16
        %v1417 = vrot.slane %v1415, 4
        %v1418 = vshll.u32 %v1153, 16
        %v1420 = vrot.slane %v1418, 5
        %v1421 = vor.u32 %v1417, %v1420
        %v1422 = vrot.slane %v1421, 4
        %v1424 = vshll.u32 %v1154, 16
        %v1426 = vrot.slane %v1424, 5
        %v1427 = vsel %vm1173, %v1422, %v1426
        %v1428 = vshrl.u32 %v1154, 16
        %v1430 = vrot.slane %v1428, 4
        %v1431 = vor.u32 %v1430, %v1426
        %v1432 = vrot.slane %v1431, 4
        %v1434 = vshll.u32 %v1155, 16
        %v1436 = vrot.slane %v1434, 5
        %v1437 = vsel %vm1173, %v1432, %v1436
        %v1439 = vshrl.u32 %v1156, 16
        %v1441 = vrot.slane %v1439, 4
        %v1442 = vshll.u32 %v1156, 16
        %v1444 = vrot.slane %v1442, 5
        %v1445 = vor.u32 %v1441, %v1444
        %v1446 = vrot.slane %v1445, 4
        %v1448 = vshll.u32 %v1157, 16
        %v1450 = vrot.slane %v1448, 5
        %v1451 = vsel %vm1173, %v1446, %v1450
        %v1452 = vshrl.u32 %v1157, 16
        %v1454 = vrot.slane %v1452, 4
        %v1455 = vor.u32 %v1454, %v1450
        %v1456 = vrot.slane %v1455, 4
        %v1458 = vshll.u32 %v1158, 16
        %v1460 = vrot.slane %v1458, 5
        %v1461 = vsel %vm1173, %v1456, %v1460
        %v1463 = vshrl.u32 %v1159, 16
        %v1465 = vrot.slane %v1463, 4
        %v1466 = vshll.u32 %v1159, 16
        %v1468 = vrot.slane %v1466, 5
        %v1469 = vor.u32 %v1465, %v1468
        %v1470 = vrot.slane %v1469, 4
        %v1472 = vshll.u32 %v1160, 16
        %v1474 = vrot.slane %v1472, 5
        %v1475 = vsel %vm1173, %v1470, %v1474
        %v1476 = vshrl.u32 %v1160, 16
        %v1478 = vrot.slane %v1476, 4
        %v1479 = vor.u32 %v1478, %v1474
        %v1480 = vrot.slane %v1479, 4
        %v1482 = vshll.u32 %v1161, 16
        %v1484 = vrot.slane %v1482, 5
        %v1485 = vsel %vm1173, %v1480, %v1484
        %v1487 = vshrl.u32 %v1162, 16
        %v1489 = vrot.slane %v1487, 4
        %v1490 = vshll.u32 %v1162, 16
        %v1492 = vrot.slane %v1490, 5
        %v1493 = vor.u32 %v1489, %v1492
        %v1494 = vrot.slane %v1493, 4
        %v1496 = vshll.u32 %v1163, 16
        %v1498 = vrot.slane %v1496, 5
        %v1499 = vsel %vm1173, %v1494, %v1498
        %v1500 = vshrl.u32 %v1163, 16
        %v1502 = vrot.slane %v1500, 4
        %v1503 = vor.u32 %v1502, %v1498
        %v1504 = vrot.slane %v1503, 4
        %v1506 = vshll.u32 %v1164, 16
        %v1508 = vrot.slane %v1506, 5
        %v1509 = vsel %vm1173, %v1504, %v1508
        %v1511 = vshrl.u32 %v1165, 16
        %v1513 = vrot.slane %v1511, 4
        %v1514 = vshll.u32 %v1165, 16
        %v1516 = vrot.slane %v1514, 5
        %v1517 = vor.u32 %v1513, %v1516
        %v1518 = vrot.slane %v1517, 4
        %v1520 = vshll.u32 %v1166, 16
        %v1522 = vrot.slane %v1520, 5
        %v1523 = vsel %vm1173, %v1518, %v1522
        %v1524 = vshrl.u32 %v1166, 16
        %v1526 = vrot.slane %v1524, 4
        %v1527 = vor.u32 %v1526, %v1522
        %v1528 = vrot.slane %v1527, 4
        %v1530 = vshll.u32 %v1167, 16
        %v1532 = vrot.slane %v1530, 5
        %v1533 = vsel %vm1173, %v1528, %v1532
        %v1535 = vshrl.u32 %v1168, 16
        %v1537 = vrot.slane %v1535, 4
        %v1538 = vshll.u32 %v1168, 16
        %v1540 = vrot.slane %v1538, 5
        %v1541 = vor.u32 %v1537, %v1540
        %v1542 = vrot.slane %v1541, 4
        %v1544 = vshll.u32 %v1169, 16
        %v1546 = vrot.slane %v1544, 5
        %v1547 = vsel %vm1173, %v1542, %v1546
        %v1548 = vshrl.u32 %v1169, 16
        %v1550 = vrot.slane %v1548, 4
        %v1551 = vor.u32 %v1550, %v1546
        %v1552 = vrot.slane %v1551, 4
        %v1554 = vshll.u32 %v1170, 16
        %v1556 = vrot.slane %v1554, 5
        %v1557 = vsel %vm1173, %v1552, %v1556
        %v1558 = vunpack.c.l.b16 %v1187
        %v1559 = vunpack.c.l.b16 %v1197
        %v1560 = vunpack.c.l.b16 %v1211
        %v1561 = vunpack.c.l.b16 %v1221
        %v1562 = vunpack.c.l.b16 %v1235
        %v1563 = vunpack.c.l.b16 %v1245
        %v1564 = vunpack.c.l.b16 %v1259
        %v1565 = vunpack.c.l.b16 %v1269
        %v1566 = vunpack.c.l.b16 %v1283
        %v1567 = vunpack.c.l.b16 %v1293
        %v1568 = vunpack.c.l.b16 %v1307
        %v1569 = vunpack.c.l.b16 %v1317
        %v1570 = vunpack.c.l.b16 %v1331
        %v1571 = vunpack.c.l.b16 %v1341
        %v1572 = vunpack.c.l.b16 %v1355
        %v1573 = vunpack.c.l.b16 %v1365
        %v1574 = vunpack.c.l.b16 %v1379
        %v1575 = vunpack.c.l.b16 %v1389
        %v1576 = vunpack.c.l.b16 %v1403
        %v1577 = vunpack.c.l.b16 %v1413
        %v1578 = vunpack.c.l.b16 %v1427
        %v1579 = vunpack.c.l.b16 %v1437
        %v1580 = vunpack.c.l.b16 %v1451
        %v1581 = vunpack.c.l.b16 %v1461
        %v1582 = vunpack.c.l.b16 %v1475
        %v1583 = vunpack.c.l.b16 %v1485
        %v1584 = vunpack.c.l.b16 %v1499
        %v1585 = vunpack.c.l.b16 %v1509
        %v1586 = vunpack.c.l.b16 %v1523
        %v1587 = vunpack.c.l.b16 %v1533
        %v1588 = vunpack.c.l.b16 %v1547
        %v1589 = vunpack.c.l.b16 %v1557
        %v1590 = vpack.c.b16 %v1559, %v1558
        %v1591 = vpack.c.b16 %v1561, %v1560
        %v1592 = vpack.c.b16 %v1563, %v1562
        %v1593 = vpack.c.b16 %v1565, %v1564
        %v1594 = vpack.c.b16 %v1567, %v1566
        %v1595 = vpack.c.b16 %v1569, %v1568
        %v1596 = vpack.c.b16 %v1571, %v1570
        %v1597 = vpack.c.b16 %v1573, %v1572
        %v1598 = vpack.c.b16 %v1575, %v1574
        %v1599 = vpack.c.b16 %v1577, %v1576
        %v1600 = vpack.c.b16 %v1579, %v1578
        %v1601 = vpack.c.b16 %v1581, %v1580
        %v1602 = vpack.c.b16 %v1583, %v1582
        %v1603 = vpack.c.b16 %v1585, %v1584
        %v1604 = vpack.c.b16 %v1587, %v1586
        %v1605 = vpack.c.b16 %v1589, %v1588
        %1622 = vst [vmem:[#allocation4 + $0x8] sm:$0xff] %v1590
        %1623 = vst [vmem:[#allocation4 + $0x58] sm:$0xff] %v1591
        %1624 = vst [vmem:[#allocation4 + $0xa8] sm:$0xff] %v1592
        %1625 = vst [vmem:[#allocation4 + $0xf8] sm:$0xff] %v1593
        %1626 = vst [vmem:[#allocation4 + $0x148] sm:$0xff] %v1594
        %1627 = vst [vmem:[#allocation4 + $0x198] sm:$0xff] %v1595
        %1628 = vst [vmem:[#allocation4 + $0x1e8] sm:$0xff] %v1596
        %1629 = vst [vmem:[#allocation4 + $0x238] sm:$0xff] %v1597
        %1630 = vst [vmem:[#allocation4 + $0x288] sm:$0xff] %v1598
        %1631 = vst [vmem:[#allocation4 + $0x2d8] sm:$0xff] %v1599
        %1632 = vst [vmem:[#allocation4 + $0x328] sm:$0xff] %v1600
        %1633 = vst [vmem:[#allocation4 + $0x378] sm:$0xff] %v1601
        %1634 = vst [vmem:[#allocation4 + $0x3c8] sm:$0xff] %v1602
        %1635 = vst [vmem:[#allocation4 + $0x418] sm:$0xff] %v1603
        %1636 = vst [vmem:[#allocation4 + $0x468] sm:$0xff] %v1604
        %1637 = vst [vmem:[#allocation4 + $0x4b8] sm:$0xff] %v1605
        %v1638 = vld [vmem:[#allocation2] sm:$0xe]
        %v1639 = vld [vmem:[#allocation2 + $0x4] sm:$0xf]
        %v1640 = vld [vmem:[#allocation2 + $0x8] sm:$0x1]
        %v1641 = vld [vmem:[#allocation2 + $0xc] sm:$0xe]
        %v1642 = vld [vmem:[#allocation2 + $0x10] sm:$0xf]
        %v1643 = vld [vmem:[#allocation2 + $0x14] sm:$0x1]
        %v1644 = vld [vmem:[#allocation2 + $0x18] sm:$0xe]
        %v1645 = vld [vmem:[#allocation2 + $0x1c] sm:$0xf]
        %v1646 = vld [vmem:[#allocation2 + $0x20] sm:$0x1]
        %v1647 = vld [vmem:[#allocation2 + $0x24] sm:$0xe]
        %v1648 = vld [vmem:[#allocation2 + $0x28] sm:$0xf]
        %v1649 = vld [vmem:[#allocation2 + $0x2c] sm:$0x1]
        %v1650 = vld [vmem:[#allocation2 + $0x30] sm:$0xe]
        %v1651 = vld [vmem:[#allocation2 + $0x34] sm:$0xf]
        %v1652 = vld [vmem:[#allocation2 + $0x38] sm:$0x1]
        %v1653 = vld [vmem:[#allocation2 + $0x3c] sm:$0xe]
        %v1654 = vld [vmem:[#allocation2 + $0x40] sm:$0xf]
        %v1655 = vld [vmem:[#allocation2 + $0x44] sm:$0x1]
        %v1656 = vld [vmem:[#allocation2 + $0x48] sm:$0xe]
        %v1657 = vld [vmem:[#allocation2 + $0x4c] sm:$0xf]
        %v1658 = vld [vmem:[#allocation2 + $0x50] sm:$0x1]
        %v1659 = vld [vmem:[#allocation2 + $0x54] sm:$0xe]
        %v1660 = vld [vmem:[#allocation2 + $0x58] sm:$0xf]
        %v1661 = vld [vmem:[#allocation2 + $0x5c] sm:$0x1]
        %v1662 = vld [vmem:[#allocation2 + $0x60] sm:$0xe]
        %v1663 = vld [vmem:[#allocation2 + $0x64] sm:$0xf]
        %v1664 = vld [vmem:[#allocation2 + $0x68] sm:$0x1]
        %v1665 = vld [vmem:[#allocation2 + $0x6c] sm:$0xe]
        %v1666 = vld [vmem:[#allocation2 + $0x70] sm:$0xf]
        %v1667 = vld [vmem:[#allocation2 + $0x74] sm:$0x1]
        %v1668 = vld [vmem:[#allocation2 + $0x78] sm:$0xe]
        %v1669 = vld [vmem:[#allocation2 + $0x7c] sm:$0xf]
        %v1670 = vld [vmem:[#allocation2 + $0x80] sm:$0x1]
        %v1671 = vld [vmem:[#allocation2 + $0x84] sm:$0xe]
        %v1672 = vld [vmem:[#allocation2 + $0x88] sm:$0xf]
        %v1673 = vld [vmem:[#allocation2 + $0x8c] sm:$0x1]
        %v1674 = vld [vmem:[#allocation2 + $0x90] sm:$0xe]
        %v1675 = vld [vmem:[#allocation2 + $0x94] sm:$0xf]
        %v1676 = vld [vmem:[#allocation2 + $0x98] sm:$0x1]
        %v1677 = vld [vmem:[#allocation2 + $0x9c] sm:$0xe]
        %v1678 = vld [vmem:[#allocation2 + $0xa0] sm:$0xf]
        %v1679 = vld [vmem:[#allocation2 + $0xa4] sm:$0x1]
        %v1680 = vld [vmem:[#allocation2 + $0xa8] sm:$0xe]
        %v1681 = vld [vmem:[#allocation2 + $0xac] sm:$0xf]
        %v1682 = vld [vmem:[#allocation2 + $0xb0] sm:$0x1]
        %v1683 = vld [vmem:[#allocation2 + $0xb4] sm:$0xe]
        %v1684 = vld [vmem:[#allocation2 + $0xb8] sm:$0xf]
        %v1685 = vld [vmem:[#allocation2 + $0xbc] sm:$0x1]
        %vm1734 = vcmask 1042432
        %vm1735 = vcmask 1046532
        %vm1736 = vmor %vm1734, %vm1735
        %v1737 = vrot.slane %v1638, 5
        %v1738 = vrot.slane %v1737, 4
        %v1739 = vrot.slane %v1639, 5
        %v1740 = vsel %vm1736, %v1738, %v1739
        %v1741 = vrot.slane %v1739, 4
        %v1742 = vrot.slane %v1640, 5
        %v1743 = vsel %vm1736, %v1741, %v1742
        %v1744 = vrot.slane %v1641, 5
        %v1745 = vrot.slane %v1744, 4
        %v1746 = vrot.slane %v1642, 5
        %v1747 = vsel %vm1736, %v1745, %v1746
        %v1748 = vrot.slane %v1746, 4
        %v1749 = vrot.slane %v1643, 5
        %v1750 = vsel %vm1736, %v1748, %v1749
        %v1751 = vrot.slane %v1644, 5
        %v1752 = vrot.slane %v1751, 4
        %v1753 = vrot.slane %v1645, 5
        %v1754 = vsel %vm1736, %v1752, %v1753
        %v1755 = vrot.slane %v1753, 4
        %v1756 = vrot.slane %v1646, 5
        %v1757 = vsel %vm1736, %v1755, %v1756
        %v1758 = vrot.slane %v1647, 5
        %v1759 = vrot.slane %v1758, 4
        %v1760 = vrot.slane %v1648, 5
        %v1761 = vsel %vm1736, %v1759, %v1760
        %v1762 = vrot.slane %v1760, 4
        %v1763 = vrot.slane %v1649, 5
        %v1764 = vsel %vm1736, %v1762, %v1763
        %v1765 = vrot.slane %v1650, 5
        %v1766 = vrot.slane %v1765, 4
        %v1767 = vrot.slane %v1651, 5
        %v1768 = vsel %vm1736, %v1766, %v1767
        %v1769 = vrot.slane %v1767, 4
        %v1770 = vrot.slane %v1652, 5
        %v1771 = vsel %vm1736, %v1769, %v1770
        %v1772 = vrot.slane %v1653, 5
        %v1773 = vrot.slane %v1772, 4
        %v1774 = vrot.slane %v1654, 5
        %v1775 = vsel %vm1736, %v1773, %v1774
        %v1776 = vrot.slane %v1774, 4
        %v1777 = vrot.slane %v1655, 5
        %v1778 = vsel %vm1736, %v1776, %v1777
        %v1779 = vrot.slane %v1656, 5
        %v1780 = vrot.slane %v1779, 4
        %v1781 = vrot.slane %v1657, 5
        %v1782 = vsel %vm1736, %v1780, %v1781
        %v1783 = vrot.slane %v1781, 4
        %v1784 = vrot.slane %v1658, 5
        %v1785 = vsel %vm1736, %v1783, %v1784
        %v1786 = vrot.slane %v1659, 5
        %v1787 = vrot.slane %v1786, 4
        %v1788 = vrot.slane %v1660, 5
        %v1789 = vsel %vm1736, %v1787, %v1788
        %v1790 = vrot.slane %v1788, 4
        %v1791 = vrot.slane %v1661, 5
        %v1792 = vsel %vm1736, %v1790, %v1791
        %v1793 = vrot.slane %v1662, 5
        %v1794 = vrot.slane %v1793, 4
        %v1795 = vrot.slane %v1663, 5
        %v1796 = vsel %vm1736, %v1794, %v1795
        %v1797 = vrot.slane %v1795, 4
        %v1798 = vrot.slane %v1664, 5
        %v1799 = vsel %vm1736, %v1797, %v1798
        %v1800 = vrot.slane %v1665, 5
        %v1801 = vrot.slane %v1800, 4
        %v1802 = vrot.slane %v1666, 5
        %v1803 = vsel %vm1736, %v1801, %v1802
        %v1804 = vrot.slane %v1802, 4
        %v1805 = vrot.slane %v1667, 5
        %v1806 = vsel %vm1736, %v1804, %v1805
        %v1807 = vrot.slane %v1668, 5
        %v1808 = vrot.slane %v1807, 4
        %v1809 = vrot.slane %v1669, 5
        %v1810 = vsel %vm1736, %v1808, %v1809
        %v1811 = vrot.slane %v1809, 4
        %v1812 = vrot.slane %v1670, 5
        %v1813 = vsel %vm1736, %v1811, %v1812
        %v1814 = vrot.slane %v1671, 5
        %v1815 = vrot.slane %v1814, 4
        %v1816 = vrot.slane %v1672, 5
        %v1817 = vsel %vm1736, %v1815, %v1816
        %v1818 = vrot.slane %v1816, 4
        %v1819 = vrot.slane %v1673, 5
        %v1820 = vsel %vm1736, %v1818, %v1819
        %v1821 = vrot.slane %v1674, 5
        %v1822 = vrot.slane %v1821, 4
        %v1823 = vrot.slane %v1675, 5
        %v1824 = vsel %vm1736, %v1822, %v1823
        %v1825 = vrot.slane %v1823, 4
        %v1826 = vrot.slane %v1676, 5
        %v1827 = vsel %vm1736, %v1825, %v1826
        %v1828 = vrot.slane %v1677, 5
        %v1829 = vrot.slane %v1828, 4
        %v1830 = vrot.slane %v1678, 5
        %v1831 = vsel %vm1736, %v1829, %v1830
        %v1832 = vrot.slane %v1830, 4
        %v1833 = vrot.slane %v1679, 5
        %v1834 = vsel %vm1736, %v1832, %v1833
        %v1835 = vrot.slane %v1680, 5
        %v1836 = vrot.slane %v1835, 4
        %v1837 = vrot.slane %v1681, 5
        %v1838 = vsel %vm1736, %v1836, %v1837
        %v1839 = vrot.slane %v1837, 4
        %v1840 = vrot.slane %v1682, 5
        %v1841 = vsel %vm1736, %v1839, %v1840
        %v1842 = vrot.slane %v1683, 5
        %v1843 = vrot.slane %v1842, 4
        %v1844 = vrot.slane %v1684, 5
        %v1845 = vsel %vm1736, %v1843, %v1844
        %v1846 = vrot.slane %v1844, 4
        %v1847 = vrot.slane %v1685, 5
        %v1848 = vsel %vm1736, %v1846, %v1847
        %v1849 = vunpack.c.l.b16 %v1740
        %v1850 = vunpack.c.l.b16 %v1743
        %v1851 = vunpack.c.l.b16 %v1747
        %v1852 = vunpack.c.l.b16 %v1750
        %v1853 = vunpack.c.l.b16 %v1754
        %v1854 = vunpack.c.l.b16 %v1757
        %v1855 = vunpack.c.l.b16 %v1761
        %v1856 = vunpack.c.l.b16 %v1764
        %v1857 = vunpack.c.l.b16 %v1768
        %v1858 = vunpack.c.l.b16 %v1771
        %v1859 = vunpack.c.l.b16 %v1775
        %v1860 = vunpack.c.l.b16 %v1778
        %v1861 = vunpack.c.l.b16 %v1782
        %v1862 = vunpack.c.l.b16 %v1785
        %v1863 = vunpack.c.l.b16 %v1789
        %v1864 = vunpack.c.l.b16 %v1792
        %v1865 = vunpack.c.l.b16 %v1796
        %v1866 = vunpack.c.l.b16 %v1799
        %v1867 = vunpack.c.l.b16 %v1803
        %v1868 = vunpack.c.l.b16 %v1806
        %v1869 = vunpack.c.l.b16 %v1810
        %v1870 = vunpack.c.l.b16 %v1813
        %v1871 = vunpack.c.l.b16 %v1817
        %v1872 = vunpack.c.l.b16 %v1820
        %v1873 = vunpack.c.l.b16 %v1824
        %v1874 = vunpack.c.l.b16 %v1827
        %v1875 = vunpack.c.l.b16 %v1831
        %v1876 = vunpack.c.l.b16 %v1834
        %v1877 = vunpack.c.l.b16 %v1838
        %v1878 = vunpack.c.l.b16 %v1841
        %v1879 = vunpack.c.l.b16 %v1845
        %v1880 = vunpack.c.l.b16 %v1848
        %v1881 = vpack.c.b16 %v1850, %v1849
        %v1882 = vpack.c.b16 %v1852, %v1851
        %v1883 = vpack.c.b16 %v1854, %v1853
        %v1884 = vpack.c.b16 %v1856, %v1855
        %v1885 = vpack.c.b16 %v1858, %v1857
        %v1886 = vpack.c.b16 %v1860, %v1859
        %v1887 = vpack.c.b16 %v1862, %v1861
        %v1888 = vpack.c.b16 %v1864, %v1863
        %v1889 = vpack.c.b16 %v1866, %v1865
        %v1890 = vpack.c.b16 %v1868, %v1867
        %v1891 = vpack.c.b16 %v1870, %v1869
        %v1892 = vpack.c.b16 %v1872, %v1871
        %v1893 = vpack.c.b16 %v1874, %v1873
        %v1894 = vpack.c.b16 %v1876, %v1875
        %v1895 = vpack.c.b16 %v1878, %v1877
        %v1896 = vpack.c.b16 %v1880, %v1879
        %1913 = vst [vmem:[#allocation4 + $0x10] sm:$0xff] %v1881
        %1914 = vst [vmem:[#allocation4 + $0x60] sm:$0xff] %v1882
        %1915 = vst [vmem:[#allocation4 + $0xb0] sm:$0xff] %v1883
        %1916 = vst [vmem:[#allocation4 + $0x100] sm:$0xff] %v1884
        %1917 = vst [vmem:[#allocation4 + $0x150] sm:$0xff] %v1885
        %1918 = vst [vmem:[#allocation4 + $0x1a0] sm:$0xff] %v1886
        %1919 = vst [vmem:[#allocation4 + $0x1f0] sm:$0xff] %v1887
        %1920 = vst [vmem:[#allocation4 + $0x240] sm:$0xff] %v1888
        %1921 = vst [vmem:[#allocation4 + $0x290] sm:$0xff] %v1889
        %1922 = vst [vmem:[#allocation4 + $0x2e0] sm:$0xff] %v1890
        %1923 = vst [vmem:[#allocation4 + $0x330] sm:$0xff] %v1891
        %1924 = vst [vmem:[#allocation4 + $0x380] sm:$0xff] %v1892
        %1925 = vst [vmem:[#allocation4 + $0x3d0] sm:$0xff] %v1893
        %1926 = vst [vmem:[#allocation4 + $0x420] sm:$0xff] %v1894
        %1927 = vst [vmem:[#allocation4 + $0x470] sm:$0xff] %v1895
        %1928 = vst [vmem:[#allocation4 + $0x4c0] sm:$0xff] %v1896
        %v1929 = vld [vmem:[%s747] sm:$0xf]
        %v1930 = vld [vmem:[%s747 + $0x4] sm:$0xf]
        %v1931 = vld [vmem:[%s747 + $0xc] sm:$0xf]
        %v1932 = vld [vmem:[%s747 + $0x10] sm:$0xf]
        %v1933 = vld [vmem:[%s747 + $0x18] sm:$0xf]
        %v1934 = vld [vmem:[%s747 + $0x1c] sm:$0xf]
        %v1935 = vld [vmem:[%s747 + $0x24] sm:$0xf]
        %v1936 = vld [vmem:[%s747 + $0x28] sm:$0xf]
        %v1937 = vld [vmem:[%s747 + $0x30] sm:$0xf]
        %v1938 = vld [vmem:[%s747 + $0x34] sm:$0xf]
        %v1939 = vld [vmem:[%s747 + $0x3c] sm:$0xf]
        %v1940 = vld [vmem:[%s747 + $0x40] sm:$0xf]
        %v1941 = vld [vmem:[%s747 + $0x48] sm:$0xf]
        %v1942 = vld [vmem:[%s747 + $0x4c] sm:$0xf]
        %v1943 = vld [vmem:[%s747 + $0x54] sm:$0xf]
        %v1944 = vld [vmem:[%s747 + $0x58] sm:$0xf]
        %v1945 = vld [vmem:[%s747 + $0x60] sm:$0xf]
        %v1946 = vld [vmem:[%s747 + $0x64] sm:$0xf]
        %v1947 = vld [vmem:[%s747 + $0x6c] sm:$0xf]
        %v1948 = vld [vmem:[%s747 + $0x70] sm:$0xf]
        %v1949 = vld [vmem:[%s747 + $0x78] sm:$0xf]
        %v1950 = vld [vmem:[%s747 + $0x7c] sm:$0xf]
        %v1951 = vld [vmem:[%s747 + $0x84] sm:$0xf]
        %v1952 = vld [vmem:[%s747 + $0x88] sm:$0xf]
        %v1953 = vld [vmem:[%s747 + $0x90] sm:$0xf]
        %v1954 = vld [vmem:[%s747 + $0x94] sm:$0xf]
        %v1955 = vld [vmem:[%s747 + $0x9c] sm:$0xf]
        %v1956 = vld [vmem:[%s747 + $0xa0] sm:$0xf]
        %v1957 = vld [vmem:[%s747 + $0xa8] sm:$0xf]
        %v1958 = vld [vmem:[%s747 + $0xac] sm:$0xf]
        %v1959 = vld [vmem:[%s747 + $0xb4] sm:$0xf]
        %v1960 = vld [vmem:[%s747 + $0xb8] sm:$0xf]
        %v1993 = vunpack.c.l.b16 %v1929
        %v1994 = vunpack.c.l.b16 %v1930
        %v1995 = vunpack.c.l.b16 %v1931
        %v1996 = vunpack.c.l.b16 %v1932
        %v1997 = vunpack.c.l.b16 %v1933
        %v1998 = vunpack.c.l.b16 %v1934
        %v1999 = vunpack.c.l.b16 %v1935
        %v2000 = vunpack.c.l.b16 %v1936
        %v2001 = vunpack.c.l.b16 %v1937
        %v2002 = vunpack.c.l.b16 %v1938
        %v2003 = vunpack.c.l.b16 %v1939
        %v2004 = vunpack.c.l.b16 %v1940
        %v2005 = vunpack.c.l.b16 %v1941
        %v2006 = vunpack.c.l.b16 %v1942
        %v2007 = vunpack.c.l.b16 %v1943
        %v2008 = vunpack.c.l.b16 %v1944
        %v2009 = vunpack.c.l.b16 %v1945
        %v2010 = vunpack.c.l.b16 %v1946
        %v2011 = vunpack.c.l.b16 %v1947
        %v2012 = vunpack.c.l.b16 %v1948
        %v2013 = vunpack.c.l.b16 %v1949
        %v2014 = vunpack.c.l.b16 %v1950
        %v2015 = vunpack.c.l.b16 %v1951
        %v2016 = vunpack.c.l.b16 %v1952
        %v2017 = vunpack.c.l.b16 %v1953
        %v2018 = vunpack.c.l.b16 %v1954
        %v2019 = vunpack.c.l.b16 %v1955
        %v2020 = vunpack.c.l.b16 %v1956
        %v2021 = vunpack.c.l.b16 %v1957
        %v2022 = vunpack.c.l.b16 %v1958
        %v2023 = vunpack.c.l.b16 %v1959
        %v2024 = vunpack.c.l.b16 %v1960
        %v2025 = vpack.c.b16 %v1994, %v1993
        %v2026 = vpack.c.b16 %v1996, %v1995
        %v2027 = vpack.c.b16 %v1998, %v1997
        %v2028 = vpack.c.b16 %v2000, %v1999
        %v2029 = vpack.c.b16 %v2002, %v2001
        %v2030 = vpack.c.b16 %v2004, %v2003
        %v2031 = vpack.c.b16 %v2006, %v2005
        %v2032 = vpack.c.b16 %v2008, %v2007
        %v2033 = vpack.c.b16 %v2010, %v2009
        %v2034 = vpack.c.b16 %v2012, %v2011
        %v2035 = vpack.c.b16 %v2014, %v2013
        %v2036 = vpack.c.b16 %v2016, %v2015
        %v2037 = vpack.c.b16 %v2018, %v2017
        %v2038 = vpack.c.b16 %v2020, %v2019
        %v2039 = vpack.c.b16 %v2022, %v2021
        %v2040 = vpack.c.b16 %v2024, %v2023
        %2057 = vst [vmem:[#allocation4 + $0x18] sm:$0xff] %v2025
        %2058 = vst [vmem:[#allocation4 + $0x68] sm:$0xff] %v2026
        %2059 = vst [vmem:[#allocation4 + $0xb8] sm:$0xff] %v2027
        %2060 = vst [vmem:[#allocation4 + $0x108] sm:$0xff] %v2028
        %2061 = vst [vmem:[#allocation4 + $0x158] sm:$0xff] %v2029
        %2062 = vst [vmem:[#allocation4 + $0x1a8] sm:$0xff] %v2030
        %2063 = vst [vmem:[#allocation4 + $0x1f8] sm:$0xff] %v2031
        %2064 = vst [vmem:[#allocation4 + $0x248] sm:$0xff] %v2032
        %2065 = vst [vmem:[#allocation4 + $0x298] sm:$0xff] %v2033
        %2066 = vst [vmem:[#allocation4 + $0x2e8] sm:$0xff] %v2034
        %2067 = vst [vmem:[#allocation4 + $0x338] sm:$0xff] %v2035
        %2068 = vst [vmem:[#allocation4 + $0x388] sm:$0xff] %v2036
        %2069 = vst [vmem:[#allocation4 + $0x3d8] sm:$0xff] %v2037
        %2070 = vst [vmem:[#allocation4 + $0x428] sm:$0xff] %v2038
        %2071 = vst [vmem:[#allocation4 + $0x478] sm:$0xff] %v2039
        %2072 = vst [vmem:[#allocation4 + $0x4c8] sm:$0xff] %v2040
        %v2073 = vld [vmem:[%s747] sm:$0xf]
        %v2074 = vld [vmem:[%s747 + $0x4] sm:$0xf]
        %v2075 = vld [vmem:[%s747 + $0x8] sm:$0x1]
        %v2076 = vld [vmem:[%s747 + $0xc] sm:$0xf]
        %v2077 = vld [vmem:[%s747 + $0x10] sm:$0xf]
        %v2078 = vld [vmem:[%s747 + $0x14] sm:$0x1]
        %v2079 = vld [vmem:[%s747 + $0x18] sm:$0xf]
        %v2080 = vld [vmem:[%s747 + $0x1c] sm:$0xf]
        %v2081 = vld [vmem:[%s747 + $0x20] sm:$0x1]
        %v2082 = vld [vmem:[%s747 + $0x24] sm:$0xf]
        %v2083 = vld [vmem:[%s747 + $0x28] sm:$0xf]
        %v2084 = vld [vmem:[%s747 + $0x2c] sm:$0x1]
        %v2085 = vld [vmem:[%s747 + $0x30] sm:$0xf]
        %v2086 = vld [vmem:[%s747 + $0x34] sm:$0xf]
        %v2087 = vld [vmem:[%s747 + $0x38] sm:$0x1]
        %v2088 = vld [vmem:[%s747 + $0x3c] sm:$0xf]
        %v2089 = vld [vmem:[%s747 + $0x40] sm:$0xf]
        %v2090 = vld [vmem:[%s747 + $0x44] sm:$0x1]
        %v2091 = vld [vmem:[%s747 + $0x48] sm:$0xf]
        %v2092 = vld [vmem:[%s747 + $0x4c] sm:$0xf]
        %v2093 = vld [vmem:[%s747 + $0x50] sm:$0x1]
        %v2094 = vld [vmem:[%s747 + $0x54] sm:$0xf]
        %v2095 = vld [vmem:[%s747 + $0x58] sm:$0xf]
        %v2096 = vld [vmem:[%s747 + $0x5c] sm:$0x1]
        %v2097 = vld [vmem:[%s747 + $0x60] sm:$0xf]
        %v2098 = vld [vmem:[%s747 + $0x64] sm:$0xf]
        %v2099 = vld [vmem:[%s747 + $0x68] sm:$0x1]
        %v2100 = vld [vmem:[%s747 + $0x6c] sm:$0xf]
        %v2101 = vld [vmem:[%s747 + $0x70] sm:$0xf]
        %v2102 = vld [vmem:[%s747 + $0x74] sm:$0x1]
        %v2103 = vld [vmem:[%s747 + $0x78] sm:$0xf]
        %v2104 = vld [vmem:[%s747 + $0x7c] sm:$0xf]
        %v2105 = vld [vmem:[%s747 + $0x80] sm:$0x1]
        %v2106 = vld [vmem:[%s747 + $0x84] sm:$0xf]
        %v2107 = vld [vmem:[%s747 + $0x88] sm:$0xf]
        %v2108 = vld [vmem:[%s747 + $0x8c] sm:$0x1]
        %v2109 = vld [vmem:[%s747 + $0x90] sm:$0xf]
        %v2110 = vld [vmem:[%s747 + $0x94] sm:$0xf]
        %v2111 = vld [vmem:[%s747 + $0x98] sm:$0x1]
        %v2112 = vld [vmem:[%s747 + $0x9c] sm:$0xf]
        %v2113 = vld [vmem:[%s747 + $0xa0] sm:$0xf]
        %v2114 = vld [vmem:[%s747 + $0xa4] sm:$0x1]
        %v2115 = vld [vmem:[%s747 + $0xa8] sm:$0xf]
        %v2116 = vld [vmem:[%s747 + $0xac] sm:$0xf]
        %v2117 = vld [vmem:[%s747 + $0xb0] sm:$0x1]
        %v2118 = vld [vmem:[%s747 + $0xb4] sm:$0xf]
        %v2119 = vld [vmem:[%s747 + $0xb8] sm:$0xf]
        %v2120 = vld [vmem:[%s747 + $0xbc] sm:$0x1]
        %v2122 = vshrl.u32 %v2073, 16
        %v2124 = vrot.slane %v2122, 4
        %v2125 = vshll.u32 %v2073, 16
        %v2127 = vrot.slane %v2125, 5
        %v2128 = vor.u32 %v2124, %v2127
        %v2129 = vrot.slane %v2128, 4
        %v2131 = vshll.u32 %v2074, 16
        %v2133 = vrot.slane %v2131, 5
        %v2134 = vsel %vm1173, %v2129, %v2133
        %v2135 = vshrl.u32 %v2074, 16
        %v2137 = vrot.slane %v2135, 4
        %v2138 = vor.u32 %v2137, %v2133
        %v2139 = vrot.slane %v2138, 4
        %v2141 = vshll.u32 %v2075, 16
        %v2143 = vrot.slane %v2141, 5
        %v2144 = vsel %vm1173, %v2139, %v2143
        %v2146 = vshrl.u32 %v2076, 16
        %v2148 = vrot.slane %v2146, 4
        %v2149 = vshll.u32 %v2076, 16
        %v2151 = vrot.slane %v2149, 5
        %v2152 = vor.u32 %v2148, %v2151
        %v2153 = vrot.slane %v2152, 4
        %v2155 = vshll.u32 %v2077, 16
        %v2157 = vrot.slane %v2155, 5
        %v2158 = vsel %vm1173, %v2153, %v2157
        %v2159 = vshrl.u32 %v2077, 16
        %v2161 = vrot.slane %v2159, 4
        %v2162 = vor.u32 %v2161, %v2157
        %v2163 = vrot.slane %v2162, 4
        %v2165 = vshll.u32 %v2078, 16
        %v2167 = vrot.slane %v2165, 5
        %v2168 = vsel %vm1173, %v2163, %v2167
        %v2170 = vshrl.u32 %v2079, 16
        %v2172 = vrot.slane %v2170, 4
        %v2173 = vshll.u32 %v2079, 16
        %v2175 = vrot.slane %v2173, 5
        %v2176 = vor.u32 %v2172, %v2175
        %v2177 = vrot.slane %v2176, 4
        %v2179 = vshll.u32 %v2080, 16
        %v2181 = vrot.slane %v2179, 5
        %v2182 = vsel %vm1173, %v2177, %v2181
        %v2183 = vshrl.u32 %v2080, 16
        %v2185 = vrot.slane %v2183, 4
        %v2186 = vor.u32 %v2185, %v2181
        %v2187 = vrot.slane %v2186, 4
        %v2189 = vshll.u32 %v2081, 16
        %v2191 = vrot.slane %v2189, 5
        %v2192 = vsel %vm1173, %v2187, %v2191
        %v2194 = vshrl.u32 %v2082, 16
        %v2196 = vrot.slane %v2194, 4
        %v2197 = vshll.u32 %v2082, 16
        %v2199 = vrot.slane %v2197, 5
        %v2200 = vor.u32 %v2196, %v2199
        %v2201 = vrot.slane %v2200, 4
        %v2203 = vshll.u32 %v2083, 16
        %v2205 = vrot.slane %v2203, 5
        %v2206 = vsel %vm1173, %v2201, %v2205
        %v2207 = vshrl.u32 %v2083, 16
        %v2209 = vrot.slane %v2207, 4
        %v2210 = vor.u32 %v2209, %v2205
        %v2211 = vrot.slane %v2210, 4
        %v2213 = vshll.u32 %v2084, 16
        %v2215 = vrot.slane %v2213, 5
        %v2216 = vsel %vm1173, %v2211, %v2215
        %v2218 = vshrl.u32 %v2085, 16
        %v2220 = vrot.slane %v2218, 4
        %v2221 = vshll.u32 %v2085, 16
        %v2223 = vrot.slane %v2221, 5
        %v2224 = vor.u32 %v2220, %v2223
        %v2225 = vrot.slane %v2224, 4
        %v2227 = vshll.u32 %v2086, 16
        %v2229 = vrot.slane %v2227, 5
        %v2230 = vsel %vm1173, %v2225, %v2229
        %v2231 = vshrl.u32 %v2086, 16
        %v2233 = vrot.slane %v2231, 4
        %v2234 = vor.u32 %v2233, %v2229
        %v2235 = vrot.slane %v2234, 4
        %v2237 = vshll.u32 %v2087, 16
        %v2239 = vrot.slane %v2237, 5
        %v2240 = vsel %vm1173, %v2235, %v2239
        %v2242 = vshrl.u32 %v2088, 16
        %v2244 = vrot.slane %v2242, 4
        %v2245 = vshll.u32 %v2088, 16
        %v2247 = vrot.slane %v2245, 5
        %v2248 = vor.u32 %v2244, %v2247
        %v2249 = vrot.slane %v2248, 4
        %v2251 = vshll.u32 %v2089, 16
        %v2253 = vrot.slane %v2251, 5
        %v2254 = vsel %vm1173, %v2249, %v2253
        %v2255 = vshrl.u32 %v2089, 16
        %v2257 = vrot.slane %v2255, 4
        %v2258 = vor.u32 %v2257, %v2253
        %v2259 = vrot.slane %v2258, 4
        %v2261 = vshll.u32 %v2090, 16
        %v2263 = vrot.slane %v2261, 5
        %v2264 = vsel %vm1173, %v2259, %v2263
        %v2266 = vshrl.u32 %v2091, 16
        %v2268 = vrot.slane %v2266, 4
        %v2269 = vshll.u32 %v2091, 16
        %v2271 = vrot.slane %v2269, 5
        %v2272 = vor.u32 %v2268, %v2271
        %v2273 = vrot.slane %v2272, 4
        %v2275 = vshll.u32 %v2092, 16
        %v2277 = vrot.slane %v2275, 5
        %v2278 = vsel %vm1173, %v2273, %v2277
        %v2279 = vshrl.u32 %v2092, 16
        %v2281 = vrot.slane %v2279, 4
        %v2282 = vor.u32 %v2281, %v2277
        %v2283 = vrot.slane %v2282, 4
        %v2285 = vshll.u32 %v2093, 16
        %v2287 = vrot.slane %v2285, 5
        %v2288 = vsel %vm1173, %v2283, %v2287
        %v2290 = vshrl.u32 %v2094, 16
        %v2292 = vrot.slane %v2290, 4
        %v2293 = vshll.u32 %v2094, 16
        %v2295 = vrot.slane %v2293, 5
        %v2296 = vor.u32 %v2292, %v2295
        %v2297 = vrot.slane %v2296, 4
        %v2299 = vshll.u32 %v2095, 16
        %v2301 = vrot.slane %v2299, 5
        %v2302 = vsel %vm1173, %v2297, %v2301
        %v2303 = vshrl.u32 %v2095, 16
        %v2305 = vrot.slane %v2303, 4
        %v2306 = vor.u32 %v2305, %v2301
        %v2307 = vrot.slane %v2306, 4
        %v2309 = vshll.u32 %v2096, 16
        %v2311 = vrot.slane %v2309, 5
        %v2312 = vsel %vm1173, %v2307, %v2311
        %v2314 = vshrl.u32 %v2097, 16
        %v2316 = vrot.slane %v2314, 4
        %v2317 = vshll.u32 %v2097, 16
        %v2319 = vrot.slane %v2317, 5
        %v2320 = vor.u32 %v2316, %v2319
        %v2321 = vrot.slane %v2320, 4
        %v2323 = vshll.u32 %v2098, 16
        %v2325 = vrot.slane %v2323, 5
        %v2326 = vsel %vm1173, %v2321, %v2325
        %v2327 = vshrl.u32 %v2098, 16
        %v2329 = vrot.slane %v2327, 4
        %v2330 = vor.u32 %v2329, %v2325
        %v2331 = vrot.slane %v2330, 4
        %v2333 = vshll.u32 %v2099, 16
        %v2335 = vrot.slane %v2333, 5
        %v2336 = vsel %vm1173, %v2331, %v2335
        %v2338 = vshrl.u32 %v2100, 16
        %v2340 = vrot.slane %v2338, 4
        %v2341 = vshll.u32 %v2100, 16
        %v2343 = vrot.slane %v2341, 5
        %v2344 = vor.u32 %v2340, %v2343
        %v2345 = vrot.slane %v2344, 4
        %v2347 = vshll.u32 %v2101, 16
        %v2349 = vrot.slane %v2347, 5
        %v2350 = vsel %vm1173, %v2345, %v2349
        %v2351 = vshrl.u32 %v2101, 16
        %v2353 = vrot.slane %v2351, 4
        %v2354 = vor.u32 %v2353, %v2349
        %v2355 = vrot.slane %v2354, 4
        %v2357 = vshll.u32 %v2102, 16
        %v2359 = vrot.slane %v2357, 5
        %v2360 = vsel %vm1173, %v2355, %v2359
        %v2362 = vshrl.u32 %v2103, 16
        %v2364 = vrot.slane %v2362, 4
        %v2365 = vshll.u32 %v2103, 16
        %v2367 = vrot.slane %v2365, 5
        %v2368 = vor.u32 %v2364, %v2367
        %v2369 = vrot.slane %v2368, 4
        %v2371 = vshll.u32 %v2104, 16
        %v2373 = vrot.slane %v2371, 5
        %v2374 = vsel %vm1173, %v2369, %v2373
        %v2375 = vshrl.u32 %v2104, 16
        %v2377 = vrot.slane %v2375, 4
        %v2378 = vor.u32 %v2377, %v2373
        %v2379 = vrot.slane %v2378, 4
        %v2381 = vshll.u32 %v2105, 16
        %v2383 = vrot.slane %v2381, 5
        %v2384 = vsel %vm1173, %v2379, %v2383
        %v2386 = vshrl.u32 %v2106, 16
        %v2388 = vrot.slane %v2386, 4
        %v2389 = vshll.u32 %v2106, 16
        %v2391 = vrot.slane %v2389, 5
        %v2392 = vor.u32 %v2388, %v2391
        %v2393 = vrot.slane %v2392, 4
        %v2395 = vshll.u32 %v2107, 16
        %v2397 = vrot.slane %v2395, 5
        %v2398 = vsel %vm1173, %v2393, %v2397
        %v2399 = vshrl.u32 %v2107, 16
        %v2401 = vrot.slane %v2399, 4
        %v2402 = vor.u32 %v2401, %v2397
        %v2403 = vrot.slane %v2402, 4
        %v2405 = vshll.u32 %v2108, 16
        %v2407 = vrot.slane %v2405, 5
        %v2408 = vsel %vm1173, %v2403, %v2407
        %v2410 = vshrl.u32 %v2109, 16
        %v2412 = vrot.slane %v2410, 4
        %v2413 = vshll.u32 %v2109, 16
        %v2415 = vrot.slane %v2413, 5
        %v2416 = vor.u32 %v2412, %v2415
        %v2417 = vrot.slane %v2416, 4
        %v2419 = vshll.u32 %v2110, 16
        %v2421 = vrot.slane %v2419, 5
        %v2422 = vsel %vm1173, %v2417, %v2421
        %v2423 = vshrl.u32 %v2110, 16
        %v2425 = vrot.slane %v2423, 4
        %v2426 = vor.u32 %v2425, %v2421
        %v2427 = vrot.slane %v2426, 4
        %v2429 = vshll.u32 %v2111, 16
        %v2431 = vrot.slane %v2429, 5
        %v2432 = vsel %vm1173, %v2427, %v2431
        %v2434 = vshrl.u32 %v2112, 16
        %v2436 = vrot.slane %v2434, 4
        %v2437 = vshll.u32 %v2112, 16
        %v2439 = vrot.slane %v2437, 5
        %v2440 = vor.u32 %v2436, %v2439
        %v2441 = vrot.slane %v2440, 4
        %v2443 = vshll.u32 %v2113, 16
        %v2445 = vrot.slane %v2443, 5
        %v2446 = vsel %vm1173, %v2441, %v2445
        %v2447 = vshrl.u32 %v2113, 16
        %v2449 = vrot.slane %v2447, 4
        %v2450 = vor.u32 %v2449, %v2445
        %v2451 = vrot.slane %v2450, 4
        %v2453 = vshll.u32 %v2114, 16
        %v2455 = vrot.slane %v2453, 5
        %v2456 = vsel %vm1173, %v2451, %v2455
        %v2458 = vshrl.u32 %v2115, 16
        %v2460 = vrot.slane %v2458, 4
        %v2461 = vshll.u32 %v2115, 16
        %v2463 = vrot.slane %v2461, 5
        %v2464 = vor.u32 %v2460, %v2463
        %v2465 = vrot.slane %v2464, 4
        %v2467 = vshll.u32 %v2116, 16
        %v2469 = vrot.slane %v2467, 5
        %v2470 = vsel %vm1173, %v2465, %v2469
        %v2471 = vshrl.u32 %v2116, 16
        %v2473 = vrot.slane %v2471, 4
        %v2474 = vor.u32 %v2473, %v2469
        %v2475 = vrot.slane %v2474, 4
        %v2477 = vshll.u32 %v2117, 16
        %v2479 = vrot.slane %v2477, 5
        %v2480 = vsel %vm1173, %v2475, %v2479
        %v2482 = vshrl.u32 %v2118, 16
        %v2484 = vrot.slane %v2482, 4
        %v2485 = vshll.u32 %v2118, 16
        %v2487 = vrot.slane %v2485, 5
        %v2488 = vor.u32 %v2484, %v2487
        %v2489 = vrot.slane %v2488, 4
        %v2491 = vshll.u32 %v2119, 16
        %v2493 = vrot.slane %v2491, 5
        %v2494 = vsel %vm1173, %v2489, %v2493
        %v2495 = vshrl.u32 %v2119, 16
        %v2497 = vrot.slane %v2495, 4
        %v2498 = vor.u32 %v2497, %v2493
        %v2499 = vrot.slane %v2498, 4
        %v2501 = vshll.u32 %v2120, 16
        %v2503 = vrot.slane %v2501, 5
        %v2504 = vsel %vm1173, %v2499, %v2503
        %v2505 = vunpack.c.l.b16 %v2134
        %v2506 = vunpack.c.l.b16 %v2144
        %v2507 = vunpack.c.l.b16 %v2158
        %v2508 = vunpack.c.l.b16 %v2168
        %v2509 = vunpack.c.l.b16 %v2182
        %v2510 = vunpack.c.l.b16 %v2192
        %v2511 = vunpack.c.l.b16 %v2206
        %v2512 = vunpack.c.l.b16 %v2216
        %v2513 = vunpack.c.l.b16 %v2230
        %v2514 = vunpack.c.l.b16 %v2240
        %v2515 = vunpack.c.l.b16 %v2254
        %v2516 = vunpack.c.l.b16 %v2264
        %v2517 = vunpack.c.l.b16 %v2278
        %v2518 = vunpack.c.l.b16 %v2288
        %v2519 = vunpack.c.l.b16 %v2302
        %v2520 = vunpack.c.l.b16 %v2312
        %v2521 = vunpack.c.l.b16 %v2326
        %v2522 = vunpack.c.l.b16 %v2336
        %v2523 = vunpack.c.l.b16 %v2350
        %v2524 = vunpack.c.l.b16 %v2360
        %v2525 = vunpack.c.l.b16 %v2374
        %v2526 = vunpack.c.l.b16 %v2384
        %v2527 = vunpack.c.l.b16 %v2398
        %v2528 = vunpack.c.l.b16 %v2408
        %v2529 = vunpack.c.l.b16 %v2422
        %v2530 = vunpack.c.l.b16 %v2432
        %v2531 = vunpack.c.l.b16 %v2446
        %v2532 = vunpack.c.l.b16 %v2456
        %v2533 = vunpack.c.l.b16 %v2470
        %v2534 = vunpack.c.l.b16 %v2480
        %v2535 = vunpack.c.l.b16 %v2494
        %v2536 = vunpack.c.l.b16 %v2504
        %v2537 = vpack.c.b16 %v2506, %v2505
        %v2538 = vpack.c.b16 %v2508, %v2507
        %v2539 = vpack.c.b16 %v2510, %v2509
        %v2540 = vpack.c.b16 %v2512, %v2511
        %v2541 = vpack.c.b16 %v2514, %v2513
        %v2542 = vpack.c.b16 %v2516, %v2515
        %v2543 = vpack.c.b16 %v2518, %v2517
        %v2544 = vpack.c.b16 %v2520, %v2519
        %v2545 = vpack.c.b16 %v2522, %v2521
        %v2546 = vpack.c.b16 %v2524, %v2523
        %v2547 = vpack.c.b16 %v2526, %v2525
        %v2548 = vpack.c.b16 %v2528, %v2527
        %v2549 = vpack.c.b16 %v2530, %v2529
        %v2550 = vpack.c.b16 %v2532, %v2531
        %v2551 = vpack.c.b16 %v2534, %v2533
        %v2552 = vpack.c.b16 %v2536, %v2535
        %2569 = vst [vmem:[#allocation4 + $0x20] sm:$0xff] %v2537
        %2570 = vst [vmem:[#allocation4 + $0x70] sm:$0xff] %v2538
        %2571 = vst [vmem:[#allocation4 + $0xc0] sm:$0xff] %v2539
        %2572 = vst [vmem:[#allocation4 + $0x110] sm:$0xff] %v2540
        %2573 = vst [vmem:[#allocation4 + $0x160] sm:$0xff] %v2541
        %2574 = vst [vmem:[#allocation4 + $0x1b0] sm:$0xff] %v2542
        %2575 = vst [vmem:[#allocation4 + $0x200] sm:$0xff] %v2543
        %2576 = vst [vmem:[#allocation4 + $0x250] sm:$0xff] %v2544
        %2577 = vst [vmem:[#allocation4 + $0x2a0] sm:$0xff] %v2545
        %2578 = vst [vmem:[#allocation4 + $0x2f0] sm:$0xff] %v2546
        %2579 = vst [vmem:[#allocation4 + $0x340] sm:$0xff] %v2547
        %2580 = vst [vmem:[#allocation4 + $0x390] sm:$0xff] %v2548
        %2581 = vst [vmem:[#allocation4 + $0x3e0] sm:$0xff] %v2549
        %2582 = vst [vmem:[#allocation4 + $0x430] sm:$0xff] %v2550
        %2583 = vst [vmem:[#allocation4 + $0x480] sm:$0xff] %v2551
        %2584 = vst [vmem:[#allocation4 + $0x4d0] sm:$0xff] %v2552
        %v2585 = vld [vmem:[%s747] sm:$0xe]
        %v2586 = vld [vmem:[%s747 + $0x4] sm:$0xf]
        %v2587 = vld [vmem:[%s747 + $0x8] sm:$0x1]
        %v2588 = vld [vmem:[%s747 + $0xc] sm:$0xe]
        %v2589 = vld [vmem:[%s747 + $0x10] sm:$0xf]
        %v2590 = vld [vmem:[%s747 + $0x14] sm:$0x1]
        %v2591 = vld [vmem:[%s747 + $0x18] sm:$0xe]
        %v2592 = vld [vmem:[%s747 + $0x1c] sm:$0xf]
        %v2593 = vld [vmem:[%s747 + $0x20] sm:$0x1]
        %v2594 = vld [vmem:[%s747 + $0x24] sm:$0xe]
        %v2595 = vld [vmem:[%s747 + $0x28] sm:$0xf]
        %v2596 = vld [vmem:[%s747 + $0x2c] sm:$0x1]
        %v2597 = vld [vmem:[%s747 + $0x30] sm:$0xe]
        %v2598 = vld [vmem:[%s747 + $0x34] sm:$0xf]
        %v2599 = vld [vmem:[%s747 + $0x38] sm:$0x1]
        %v2600 = vld [vmem:[%s747 + $0x3c] sm:$0xe]
        %v2601 = vld [vmem:[%s747 + $0x40] sm:$0xf]
        %v2602 = vld [vmem:[%s747 + $0x44] sm:$0x1]
        %v2603 = vld [vmem:[%s747 + $0x48] sm:$0xe]
        %v2604 = vld [vmem:[%s747 + $0x4c] sm:$0xf]
        %v2605 = vld [vmem:[%s747 + $0x50] sm:$0x1]
        %v2606 = vld [vmem:[%s747 + $0x54] sm:$0xe]
        %v2607 = vld [vmem:[%s747 + $0x58] sm:$0xf]
        %v2608 = vld [vmem:[%s747 + $0x5c] sm:$0x1]
        %v2609 = vld [vmem:[%s747 + $0x60] sm:$0xe]
        %v2610 = vld [vmem:[%s747 + $0x64] sm:$0xf]
        %v2611 = vld [vmem:[%s747 + $0x68] sm:$0x1]
        %v2612 = vld [vmem:[%s747 + $0x6c] sm:$0xe]
        %v2613 = vld [vmem:[%s747 + $0x70] sm:$0xf]
        %v2614 = vld [vmem:[%s747 + $0x74] sm:$0x1]
        %v2615 = vld [vmem:[%s747 + $0x78] sm:$0xe]
        %v2616 = vld [vmem:[%s747 + $0x7c] sm:$0xf]
        %v2617 = vld [vmem:[%s747 + $0x80] sm:$0x1]
        %v2618 = vld [vmem:[%s747 + $0x84] sm:$0xe]
        %v2619 = vld [vmem:[%s747 + $0x88] sm:$0xf]
        %v2620 = vld [vmem:[%s747 + $0x8c] sm:$0x1]
        %v2621 = vld [vmem:[%s747 + $0x90] sm:$0xe]
        %v2622 = vld [vmem:[%s747 + $0x94] sm:$0xf]
        %v2623 = vld [vmem:[%s747 + $0x98] sm:$0x1]
        %v2624 = vld [vmem:[%s747 + $0x9c] sm:$0xe]
        %v2625 = vld [vmem:[%s747 + $0xa0] sm:$0xf]
        %v2626 = vld [vmem:[%s747 + $0xa4] sm:$0x1]
        %v2627 = vld [vmem:[%s747 + $0xa8] sm:$0xe]
        %v2628 = vld [vmem:[%s747 + $0xac] sm:$0xf]
        %v2629 = vld [vmem:[%s747 + $0xb0] sm:$0x1]
        %v2630 = vld [vmem:[%s747 + $0xb4] sm:$0xe]
        %v2631 = vld [vmem:[%s747 + $0xb8] sm:$0xf]
        %v2632 = vld [vmem:[%s747 + $0xbc] sm:$0x1]
        %v2681 = vrot.slane %v2585, 5
        %v2682 = vrot.slane %v2681, 4
        %v2683 = vrot.slane %v2586, 5
        %v2684 = vsel %vm1736, %v2682, %v2683
        %v2685 = vrot.slane %v2683, 4
        %v2686 = vrot.slane %v2587, 5
        %v2687 = vsel %vm1736, %v2685, %v2686
        %v2688 = vrot.slane %v2588, 5
        %v2689 = vrot.slane %v2688, 4
        %v2690 = vrot.slane %v2589, 5
        %v2691 = vsel %vm1736, %v2689, %v2690
        %v2692 = vrot.slane %v2690, 4
        %v2693 = vrot.slane %v2590, 5
        %v2694 = vsel %vm1736, %v2692, %v2693
        %v2695 = vrot.slane %v2591, 5
        %v2696 = vrot.slane %v2695, 4
        %v2697 = vrot.slane %v2592, 5
        %v2698 = vsel %vm1736, %v2696, %v2697
        %v2699 = vrot.slane %v2697, 4
        %v2700 = vrot.slane %v2593, 5
        %v2701 = vsel %vm1736, %v2699, %v2700
        %v2702 = vrot.slane %v2594, 5
        %v2703 = vrot.slane %v2702, 4
        %v2704 = vrot.slane %v2595, 5
        %v2705 = vsel %vm1736, %v2703, %v2704
        %v2706 = vrot.slane %v2704, 4
        %v2707 = vrot.slane %v2596, 5
        %v2708 = vsel %vm1736, %v2706, %v2707
        %v2709 = vrot.slane %v2597, 5
        %v2710 = vrot.slane %v2709, 4
        %v2711 = vrot.slane %v2598, 5
        %v2712 = vsel %vm1736, %v2710, %v2711
        %v2713 = vrot.slane %v2711, 4
        %v2714 = vrot.slane %v2599, 5
        %v2715 = vsel %vm1736, %v2713, %v2714
        %v2716 = vrot.slane %v2600, 5
        %v2717 = vrot.slane %v2716, 4
        %v2718 = vrot.slane %v2601, 5
        %v2719 = vsel %vm1736, %v2717, %v2718
        %v2720 = vrot.slane %v2718, 4
        %v2721 = vrot.slane %v2602, 5
        %v2722 = vsel %vm1736, %v2720, %v2721
        %v2723 = vrot.slane %v2603, 5
        %v2724 = vrot.slane %v2723, 4
        %v2725 = vrot.slane %v2604, 5
        %v2726 = vsel %vm1736, %v2724, %v2725
        %v2727 = vrot.slane %v2725, 4
        %v2728 = vrot.slane %v2605, 5
        %v2729 = vsel %vm1736, %v2727, %v2728
        %v2730 = vrot.slane %v2606, 5
        %v2731 = vrot.slane %v2730, 4
        %v2732 = vrot.slane %v2607, 5
        %v2733 = vsel %vm1736, %v2731, %v2732
        %v2734 = vrot.slane %v2732, 4
        %v2735 = vrot.slane %v2608, 5
        %v2736 = vsel %vm1736, %v2734, %v2735
        %v2737 = vrot.slane %v2609, 5
        %v2738 = vrot.slane %v2737, 4
        %v2739 = vrot.slane %v2610, 5
        %v2740 = vsel %vm1736, %v2738, %v2739
        %v2741 = vrot.slane %v2739, 4
        %v2742 = vrot.slane %v2611, 5
        %v2743 = vsel %vm1736, %v2741, %v2742
        %v2744 = vrot.slane %v2612, 5
        %v2745 = vrot.slane %v2744, 4
        %v2746 = vrot.slane %v2613, 5
        %v2747 = vsel %vm1736, %v2745, %v2746
        %v2748 = vrot.slane %v2746, 4
        %v2749 = vrot.slane %v2614, 5
        %v2750 = vsel %vm1736, %v2748, %v2749
        %v2751 = vrot.slane %v2615, 5
        %v2752 = vrot.slane %v2751, 4
        %v2753 = vrot.slane %v2616, 5
        %v2754 = vsel %vm1736, %v2752, %v2753
        %v2755 = vrot.slane %v2753, 4
        %v2756 = vrot.slane %v2617, 5
        %v2757 = vsel %vm1736, %v2755, %v2756
        %v2758 = vrot.slane %v2618, 5
        %v2759 = vrot.slane %v2758, 4
        %v2760 = vrot.slane %v2619, 5
        %v2761 = vsel %vm1736, %v2759, %v2760
        %v2762 = vrot.slane %v2760, 4
        %v2763 = vrot.slane %v2620, 5
        %v2764 = vsel %vm1736, %v2762, %v2763
        %v2765 = vrot.slane %v2621, 5
        %v2766 = vrot.slane %v2765, 4
        %v2767 = vrot.slane %v2622, 5
        %v2768 = vsel %vm1736, %v2766, %v2767
        %v2769 = vrot.slane %v2767, 4
        %v2770 = vrot.slane %v2623, 5
        %v2771 = vsel %vm1736, %v2769, %v2770
        %v2772 = vrot.slane %v2624, 5
        %v2773 = vrot.slane %v2772, 4
        %v2774 = vrot.slane %v2625, 5
        %v2775 = vsel %vm1736, %v2773, %v2774
        %v2776 = vrot.slane %v2774, 4
        %v2777 = vrot.slane %v2626, 5
        %v2778 = vsel %vm1736, %v2776, %v2777
        %v2779 = vrot.slane %v2627, 5
        %v2780 = vrot.slane %v2779, 4
        %v2781 = vrot.slane %v2628, 5
        %v2782 = vsel %vm1736, %v2780, %v2781
        %v2783 = vrot.slane %v2781, 4
        %v2784 = vrot.slane %v2629, 5
        %v2785 = vsel %vm1736, %v2783, %v2784
        %v2786 = vrot.slane %v2630, 5
        %v2787 = vrot.slane %v2786, 4
        %v2788 = vrot.slane %v2631, 5
        %v2789 = vsel %vm1736, %v2787, %v2788
        %v2790 = vrot.slane %v2788, 4
        %v2791 = vrot.slane %v2632, 5
        %v2792 = vsel %vm1736, %v2790, %v2791
        %v2793 = vunpack.c.l.b16 %v2684
        %v2794 = vunpack.c.l.b16 %v2687
        %v2795 = vunpack.c.l.b16 %v2691
        %v2796 = vunpack.c.l.b16 %v2694
        %v2797 = vunpack.c.l.b16 %v2698
        %v2798 = vunpack.c.l.b16 %v2701
        %v2799 = vunpack.c.l.b16 %v2705
        %v2800 = vunpack.c.l.b16 %v2708
        %v2801 = vunpack.c.l.b16 %v2712
        %v2802 = vunpack.c.l.b16 %v2715
        %v2803 = vunpack.c.l.b16 %v2719
        %v2804 = vunpack.c.l.b16 %v2722
        %v2805 = vunpack.c.l.b16 %v2726
        %v2806 = vunpack.c.l.b16 %v2729
        %v2807 = vunpack.c.l.b16 %v2733
        %v2808 = vunpack.c.l.b16 %v2736
        %v2809 = vunpack.c.l.b16 %v2740
        %v2810 = vunpack.c.l.b16 %v2743
        %v2811 = vunpack.c.l.b16 %v2747
        %v2812 = vunpack.c.l.b16 %v2750
        %v2813 = vunpack.c.l.b16 %v2754
        %v2814 = vunpack.c.l.b16 %v2757
        %v2815 = vunpack.c.l.b16 %v2761
        %v2816 = vunpack.c.l.b16 %v2764
        %v2817 = vunpack.c.l.b16 %v2768
        %v2818 = vunpack.c.l.b16 %v2771
        %v2819 = vunpack.c.l.b16 %v2775
        %v2820 = vunpack.c.l.b16 %v2778
        %v2821 = vunpack.c.l.b16 %v2782
        %v2822 = vunpack.c.l.b16 %v2785
        %v2823 = vunpack.c.l.b16 %v2789
        %v2824 = vunpack.c.l.b16 %v2792
        %v2825 = vpack.c.b16 %v2794, %v2793
        %v2826 = vpack.c.b16 %v2796, %v2795
        %v2827 = vpack.c.b16 %v2798, %v2797
        %v2828 = vpack.c.b16 %v2800, %v2799
        %v2829 = vpack.c.b16 %v2802, %v2801
        %v2830 = vpack.c.b16 %v2804, %v2803
        %v2831 = vpack.c.b16 %v2806, %v2805
        %v2832 = vpack.c.b16 %v2808, %v2807
        %v2833 = vpack.c.b16 %v2810, %v2809
        %v2834 = vpack.c.b16 %v2812, %v2811
        %v2835 = vpack.c.b16 %v2814, %v2813
        %v2836 = vpack.c.b16 %v2816, %v2815
        %v2837 = vpack.c.b16 %v2818, %v2817
        %v2838 = vpack.c.b16 %v2820, %v2819
        %v2839 = vpack.c.b16 %v2822, %v2821
        %v2840 = vpack.c.b16 %v2824, %v2823
        %2857 = vst [vmem:[#allocation4 + $0x28] sm:$0xff] %v2825
        %2858 = vst [vmem:[#allocation4 + $0x78] sm:$0xff] %v2826
        %2859 = vst [vmem:[#allocation4 + $0xc8] sm:$0xff] %v2827
        %2860 = vst [vmem:[#allocation4 + $0x118] sm:$0xff] %v2828
        %2861 = vst [vmem:[#allocation4 + $0x168] sm:$0xff] %v2829
        %2862 = vst [vmem:[#allocation4 + $0x1b8] sm:$0xff] %v2830
        %2863 = vst [vmem:[#allocation4 + $0x208] sm:$0xff] %v2831
        %2864 = vst [vmem:[#allocation4 + $0x258] sm:$0xff] %v2832
        %2865 = vst [vmem:[#allocation4 + $0x2a8] sm:$0xff] %v2833
        %2866 = vst [vmem:[#allocation4 + $0x2f8] sm:$0xff] %v2834
        %2867 = vst [vmem:[#allocation4 + $0x348] sm:$0xff] %v2835
        %2868 = vst [vmem:[#allocation4 + $0x398] sm:$0xff] %v2836
        %2869 = vst [vmem:[#allocation4 + $0x3e8] sm:$0xff] %v2837
        %2870 = vst [vmem:[#allocation4 + $0x438] sm:$0xff] %v2838
        %2871 = vst [vmem:[#allocation4 + $0x488] sm:$0xff] %v2839
        %2872 = vst [vmem:[#allocation4 + $0x4d8] sm:$0xff] %v2840
        %s2873 = scalar_lea.vmem [#allocation2], 24
        %v2874 = vld [vmem:[%s2873] sm:$0xf]
        %v2875 = vld [vmem:[%s2873 + $0x4] sm:$0xf]
        %v2876 = vld [vmem:[%s2873 + $0xc] sm:$0xf]
        %v2877 = vld [vmem:[%s2873 + $0x10] sm:$0xf]
        %v2878 = vld [vmem:[%s2873 + $0x18] sm:$0xf]
        %v2879 = vld [vmem:[%s2873 + $0x1c] sm:$0xf]
        %v2880 = vld [vmem:[%s2873 + $0x24] sm:$0xf]
        %v2881 = vld [vmem:[%s2873 + $0x28] sm:$0xf]
        %v2882 = vld [vmem:[%s2873 + $0x30] sm:$0xf]
        %v2883 = vld [vmem:[%s2873 + $0x34] sm:$0xf]
        %v2884 = vld [vmem:[%s2873 + $0x3c] sm:$0xf]
        %v2885 = vld [vmem:[%s2873 + $0x40] sm:$0xf]
        %v2886 = vld [vmem:[%s2873 + $0x48] sm:$0xf]
        %v2887 = vld [vmem:[%s2873 + $0x4c] sm:$0xf]
        %v2888 = vld [vmem:[%s2873 + $0x54] sm:$0xf]
        %v2889 = vld [vmem:[%s2873 + $0x58] sm:$0xf]
        %v2890 = vld [vmem:[%s2873 + $0x60] sm:$0xf]
        %v2891 = vld [vmem:[%s2873 + $0x64] sm:$0xf]
        %v2892 = vld [vmem:[%s2873 + $0x6c] sm:$0xf]
        %v2893 = vld [vmem:[%s2873 + $0x70] sm:$0xf]
        %v2894 = vld [vmem:[%s2873 + $0x78] sm:$0xf]
        %v2895 = vld [vmem:[%s2873 + $0x7c] sm:$0xf]
        %v2896 = vld [vmem:[%s2873 + $0x84] sm:$0xf]
        %v2897 = vld [vmem:[%s2873 + $0x88] sm:$0xf]
        %v2898 = vld [vmem:[%s2873 + $0x90] sm:$0xf]
        %v2899 = vld [vmem:[%s2873 + $0x94] sm:$0xf]
        %v2900 = vld [vmem:[%s2873 + $0x9c] sm:$0xf]
        %v2901 = vld [vmem:[%s2873 + $0xa0] sm:$0xf]
        %v2902 = vld [vmem:[%s2873 + $0xa8] sm:$0xf]
        %v2903 = vld [vmem:[%s2873 + $0xac] sm:$0xf]
        %v2904 = vld [vmem:[%s2873 + $0xb4] sm:$0xf]
        %v2905 = vld [vmem:[%s2873 + $0xb8] sm:$0xf]
        %v2938 = vunpack.c.l.b16 %v2874
        %v2939 = vunpack.c.l.b16 %v2875
        %v2940 = vunpack.c.l.b16 %v2876
        %v2941 = vunpack.c.l.b16 %v2877
        %v2942 = vunpack.c.l.b16 %v2878
        %v2943 = vunpack.c.l.b16 %v2879
        %v2944 = vunpack.c.l.b16 %v2880
        %v2945 = vunpack.c.l.b16 %v2881
        %v2946 = vunpack.c.l.b16 %v2882
        %v2947 = vunpack.c.l.b16 %v2883
        %v2948 = vunpack.c.l.b16 %v2884
        %v2949 = vunpack.c.l.b16 %v2885
        %v2950 = vunpack.c.l.b16 %v2886
        %v2951 = vunpack.c.l.b16 %v2887
        %v2952 = vunpack.c.l.b16 %v2888
        %v2953 = vunpack.c.l.b16 %v2889
        %v2954 = vunpack.c.l.b16 %v2890
        %v2955 = vunpack.c.l.b16 %v2891
        %v2956 = vunpack.c.l.b16 %v2892
        %v2957 = vunpack.c.l.b16 %v2893
        %v2958 = vunpack.c.l.b16 %v2894
        %v2959 = vunpack.c.l.b16 %v2895
        %v2960 = vunpack.c.l.b16 %v2896
        %v2961 = vunpack.c.l.b16 %v2897
        %v2962 = vunpack.c.l.b16 %v2898
        %v2963 = vunpack.c.l.b16 %v2899
        %v2964 = vunpack.c.l.b16 %v2900
        %v2965 = vunpack.c.l.b16 %v2901
        %v2966 = vunpack.c.l.b16 %v2902
        %v2967 = vunpack.c.l.b16 %v2903
        %v2968 = vunpack.c.l.b16 %v2904
        %v2969 = vunpack.c.l.b16 %v2905
        %v2970 = vpack.c.b16 %v2939, %v2938
        %v2971 = vpack.c.b16 %v2941, %v2940
        %v2972 = vpack.c.b16 %v2943, %v2942
        %v2973 = vpack.c.b16 %v2945, %v2944
        %v2974 = vpack.c.b16 %v2947, %v2946
        %v2975 = vpack.c.b16 %v2949, %v2948
        %v2976 = vpack.c.b16 %v2951, %v2950
        %v2977 = vpack.c.b16 %v2953, %v2952
        %v2978 = vpack.c.b16 %v2955, %v2954
        %v2979 = vpack.c.b16 %v2957, %v2956
        %v2980 = vpack.c.b16 %v2959, %v2958
        %v2981 = vpack.c.b16 %v2961, %v2960
        %v2982 = vpack.c.b16 %v2963, %v2962
        %v2983 = vpack.c.b16 %v2965, %v2964
        %v2984 = vpack.c.b16 %v2967, %v2966
        %v2985 = vpack.c.b16 %v2969, %v2968
        %3002 = vst [vmem:[#allocation4 + $0x30] sm:$0xff] %v2970
        %3003 = vst [vmem:[#allocation4 + $0x80] sm:$0xff] %v2971
        %3004 = vst [vmem:[#allocation4 + $0xd0] sm:$0xff] %v2972
        %3005 = vst [vmem:[#allocation4 + $0x120] sm:$0xff] %v2973
        %3006 = vst [vmem:[#allocation4 + $0x170] sm:$0xff] %v2974
        %3007 = vst [vmem:[#allocation4 + $0x1c0] sm:$0xff] %v2975
        %3008 = vst [vmem:[#allocation4 + $0x210] sm:$0xff] %v2976
        %3009 = vst [vmem:[#allocation4 + $0x260] sm:$0xff] %v2977
        %3010 = vst [vmem:[#allocation4 + $0x2b0] sm:$0xff] %v2978
        %3011 = vst [vmem:[#allocation4 + $0x300] sm:$0xff] %v2979
        %3012 = vst [vmem:[#allocation4 + $0x350] sm:$0xff] %v2980
        %3013 = vst [vmem:[#allocation4 + $0x3a0] sm:$0xff] %v2981
        %3014 = vst [vmem:[#allocation4 + $0x3f0] sm:$0xff] %v2982
        %3015 = vst [vmem:[#allocation4 + $0x440] sm:$0xff] %v2983
        %3016 = vst [vmem:[#allocation4 + $0x490] sm:$0xff] %v2984
        %3017 = vst [vmem:[#allocation4 + $0x4e0] sm:$0xff] %v2985
        %v3018 = vld [vmem:[%s2873] sm:$0xf]
        %v3019 = vld [vmem:[%s2873 + $0x4] sm:$0xf]
        %v3020 = vld [vmem:[%s2873 + $0x8] sm:$0x1]
        %v3021 = vld [vmem:[%s2873 + $0xc] sm:$0xf]
        %v3022 = vld [vmem:[%s2873 + $0x10] sm:$0xf]
        %v3023 = vld [vmem:[%s2873 + $0x14] sm:$0x1]
        %v3024 = vld [vmem:[%s2873 + $0x18] sm:$0xf]
        %v3025 = vld [vmem:[%s2873 + $0x1c] sm:$0xf]
        %v3026 = vld [vmem:[%s2873 + $0x20] sm:$0x1]
        %v3027 = vld [vmem:[%s2873 + $0x24] sm:$0xf]
        %v3028 = vld [vmem:[%s2873 + $0x28] sm:$0xf]
        %v3029 = vld [vmem:[%s2873 + $0x2c] sm:$0x1]
        %v3030 = vld [vmem:[%s2873 + $0x30] sm:$0xf]
        %v3031 = vld [vmem:[%s2873 + $0x34] sm:$0xf]
        %v3032 = vld [vmem:[%s2873 + $0x38] sm:$0x1]
        %v3033 = vld [vmem:[%s2873 + $0x3c] sm:$0xf]
        %v3034 = vld [vmem:[%s2873 + $0x40] sm:$0xf]
        %v3035 = vld [vmem:[%s2873 + $0x44] sm:$0x1]
        %v3036 = vld [vmem:[%s2873 + $0x48] sm:$0xf]
        %v3037 = vld [vmem:[%s2873 + $0x4c] sm:$0xf]
        %v3038 = vld [vmem:[%s2873 + $0x50] sm:$0x1]
        %v3039 = vld [vmem:[%s2873 + $0x54] sm:$0xf]
        %v3040 = vld [vmem:[%s2873 + $0x58] sm:$0xf]
        %v3041 = vld [vmem:[%s2873 + $0x5c] sm:$0x1]
        %v3042 = vld [vmem:[%s2873 + $0x60] sm:$0xf]
        %v3043 = vld [vmem:[%s2873 + $0x64] sm:$0xf]
        %v3044 = vld [vmem:[%s2873 + $0x68] sm:$0x1]
        %v3045 = vld [vmem:[%s2873 + $0x6c] sm:$0xf]
        %v3046 = vld [vmem:[%s2873 + $0x70] sm:$0xf]
        %v3047 = vld [vmem:[%s2873 + $0x74] sm:$0x1]
        %v3048 = vld [vmem:[%s2873 + $0x78] sm:$0xf]
        %v3049 = vld [vmem:[%s2873 + $0x7c] sm:$0xf]
        %v3050 = vld [vmem:[%s2873 + $0x80] sm:$0x1]
        %v3051 = vld [vmem:[%s2873 + $0x84] sm:$0xf]
        %v3052 = vld [vmem:[%s2873 + $0x88] sm:$0xf]
        %v3053 = vld [vmem:[%s2873 + $0x8c] sm:$0x1]
        %v3054 = vld [vmem:[%s2873 + $0x90] sm:$0xf]
        %v3055 = vld [vmem:[%s2873 + $0x94] sm:$0xf]
        %v3056 = vld [vmem:[%s2873 + $0x98] sm:$0x1]
        %v3057 = vld [vmem:[%s2873 + $0x9c] sm:$0xf]
        %v3058 = vld [vmem:[%s2873 + $0xa0] sm:$0xf]
        %v3059 = vld [vmem:[%s2873 + $0xa4] sm:$0x1]
        %v3060 = vld [vmem:[%s2873 + $0xa8] sm:$0xf]
        %v3061 = vld [vmem:[%s2873 + $0xac] sm:$0xf]
        %v3062 = vld [vmem:[%s2873 + $0xb0] sm:$0x1]
        %v3063 = vld [vmem:[%s2873 + $0xb4] sm:$0xf]
        %v3064 = vld [vmem:[%s2873 + $0xb8] sm:$0xf]
        %v3065 = vld [vmem:[%s2873 + $0xbc] sm:$0x1]
        %v3067 = vshrl.u32 %v3018, 16
        %v3069 = vrot.slane %v3067, 4
        %v3070 = vshll.u32 %v3018, 16
        %v3072 = vrot.slane %v3070, 5
        %v3073 = vor.u32 %v3069, %v3072
        %v3074 = vrot.slane %v3073, 4
        %v3076 = vshll.u32 %v3019, 16
        %v3078 = vrot.slane %v3076, 5
        %v3079 = vsel %vm1173, %v3074, %v3078
        %v3080 = vshrl.u32 %v3019, 16
        %v3082 = vrot.slane %v3080, 4
        %v3083 = vor.u32 %v3082, %v3078
        %v3084 = vrot.slane %v3083, 4
        %v3086 = vshll.u32 %v3020, 16
        %v3088 = vrot.slane %v3086, 5
        %v3089 = vsel %vm1173, %v3084, %v3088
        %v3091 = vshrl.u32 %v3021, 16
        %v3093 = vrot.slane %v3091, 4
        %v3094 = vshll.u32 %v3021, 16
        %v3096 = vrot.slane %v3094, 5
        %v3097 = vor.u32 %v3093, %v3096
        %v3098 = vrot.slane %v3097, 4
        %v3100 = vshll.u32 %v3022, 16
        %v3102 = vrot.slane %v3100, 5
        %v3103 = vsel %vm1173, %v3098, %v3102
        %v3104 = vshrl.u32 %v3022, 16
        %v3106 = vrot.slane %v3104, 4
        %v3107 = vor.u32 %v3106, %v3102
        %v3108 = vrot.slane %v3107, 4
        %v3110 = vshll.u32 %v3023, 16
        %v3112 = vrot.slane %v3110, 5
        %v3113 = vsel %vm1173, %v3108, %v3112
        %v3115 = vshrl.u32 %v3024, 16
        %v3117 = vrot.slane %v3115, 4
        %v3118 = vshll.u32 %v3024, 16
        %v3120 = vrot.slane %v3118, 5
        %v3121 = vor.u32 %v3117, %v3120
        %v3122 = vrot.slane %v3121, 4
        %v3124 = vshll.u32 %v3025, 16
        %v3126 = vrot.slane %v3124, 5
        %v3127 = vsel %vm1173, %v3122, %v3126
        %v3128 = vshrl.u32 %v3025, 16
        %v3130 = vrot.slane %v3128, 4
        %v3131 = vor.u32 %v3130, %v3126
        %v3132 = vrot.slane %v3131, 4
        %v3134 = vshll.u32 %v3026, 16
        %v3136 = vrot.slane %v3134, 5
        %v3137 = vsel %vm1173, %v3132, %v3136
        %v3139 = vshrl.u32 %v3027, 16
        %v3141 = vrot.slane %v3139, 4
        %v3142 = vshll.u32 %v3027, 16
        %v3144 = vrot.slane %v3142, 5
        %v3145 = vor.u32 %v3141, %v3144
        %v3146 = vrot.slane %v3145, 4
        %v3148 = vshll.u32 %v3028, 16
        %v3150 = vrot.slane %v3148, 5
        %v3151 = vsel %vm1173, %v3146, %v3150
        %v3152 = vshrl.u32 %v3028, 16
        %v3154 = vrot.slane %v3152, 4
        %v3155 = vor.u32 %v3154, %v3150
        %v3156 = vrot.slane %v3155, 4
        %v3158 = vshll.u32 %v3029, 16
        %v3160 = vrot.slane %v3158, 5
        %v3161 = vsel %vm1173, %v3156, %v3160
        %v3163 = vshrl.u32 %v3030, 16
        %v3165 = vrot.slane %v3163, 4
        %v3166 = vshll.u32 %v3030, 16
        %v3168 = vrot.slane %v3166, 5
        %v3169 = vor.u32 %v3165, %v3168
        %v3170 = vrot.slane %v3169, 4
        %v3172 = vshll.u32 %v3031, 16
        %v3174 = vrot.slane %v3172, 5
        %v3175 = vsel %vm1173, %v3170, %v3174
        %v3176 = vshrl.u32 %v3031, 16
        %v3178 = vrot.slane %v3176, 4
        %v3179 = vor.u32 %v3178, %v3174
        %v3180 = vrot.slane %v3179, 4
        %v3182 = vshll.u32 %v3032, 16
        %v3184 = vrot.slane %v3182, 5
        %v3185 = vsel %vm1173, %v3180, %v3184
        %v3187 = vshrl.u32 %v3033, 16
        %v3189 = vrot.slane %v3187, 4
        %v3190 = vshll.u32 %v3033, 16
        %v3192 = vrot.slane %v3190, 5
        %v3193 = vor.u32 %v3189, %v3192
        %v3194 = vrot.slane %v3193, 4
        %v3196 = vshll.u32 %v3034, 16
        %v3198 = vrot.slane %v3196, 5
        %v3199 = vsel %vm1173, %v3194, %v3198
        %v3200 = vshrl.u32 %v3034, 16
        %v3202 = vrot.slane %v3200, 4
        %v3203 = vor.u32 %v3202, %v3198
        %v3204 = vrot.slane %v3203, 4
        %v3206 = vshll.u32 %v3035, 16
        %v3208 = vrot.slane %v3206, 5
        %v3209 = vsel %vm1173, %v3204, %v3208
        %v3211 = vshrl.u32 %v3036, 16
        %v3213 = vrot.slane %v3211, 4
        %v3214 = vshll.u32 %v3036, 16
        %v3216 = vrot.slane %v3214, 5
        %v3217 = vor.u32 %v3213, %v3216
        %v3218 = vrot.slane %v3217, 4
        %v3220 = vshll.u32 %v3037, 16
        %v3222 = vrot.slane %v3220, 5
        %v3223 = vsel %vm1173, %v3218, %v3222
        %v3224 = vshrl.u32 %v3037, 16
        %v3226 = vrot.slane %v3224, 4
        %v3227 = vor.u32 %v3226, %v3222
        %v3228 = vrot.slane %v3227, 4
        %v3230 = vshll.u32 %v3038, 16
        %v3232 = vrot.slane %v3230, 5
        %v3233 = vsel %vm1173, %v3228, %v3232
        %v3235 = vshrl.u32 %v3039, 16
        %v3237 = vrot.slane %v3235, 4
        %v3238 = vshll.u32 %v3039, 16
        %v3240 = vrot.slane %v3238, 5
        %v3241 = vor.u32 %v3237, %v3240
        %v3242 = vrot.slane %v3241, 4
        %v3244 = vshll.u32 %v3040, 16
        %v3246 = vrot.slane %v3244, 5
        %v3247 = vsel %vm1173, %v3242, %v3246
        %v3248 = vshrl.u32 %v3040, 16
        %v3250 = vrot.slane %v3248, 4
        %v3251 = vor.u32 %v3250, %v3246
        %v3252 = vrot.slane %v3251, 4
        %v3254 = vshll.u32 %v3041, 16
        %v3256 = vrot.slane %v3254, 5
        %v3257 = vsel %vm1173, %v3252, %v3256
        %v3259 = vshrl.u32 %v3042, 16
        %v3261 = vrot.slane %v3259, 4
        %v3262 = vshll.u32 %v3042, 16
        %v3264 = vrot.slane %v3262, 5
        %v3265 = vor.u32 %v3261, %v3264
        %v3266 = vrot.slane %v3265, 4
        %v3268 = vshll.u32 %v3043, 16
        %v3270 = vrot.slane %v3268, 5
        %v3271 = vsel %vm1173, %v3266, %v3270
        %v3272 = vshrl.u32 %v3043, 16
        %v3274 = vrot.slane %v3272, 4
        %v3275 = vor.u32 %v3274, %v3270
        %v3276 = vrot.slane %v3275, 4
        %v3278 = vshll.u32 %v3044, 16
        %v3280 = vrot.slane %v3278, 5
        %v3281 = vsel %vm1173, %v3276, %v3280
        %v3283 = vshrl.u32 %v3045, 16
        %v3285 = vrot.slane %v3283, 4
        %v3286 = vshll.u32 %v3045, 16
        %v3288 = vrot.slane %v3286, 5
        %v3289 = vor.u32 %v3285, %v3288
        %v3290 = vrot.slane %v3289, 4
        %v3292 = vshll.u32 %v3046, 16
        %v3294 = vrot.slane %v3292, 5
        %v3295 = vsel %vm1173, %v3290, %v3294
        %v3296 = vshrl.u32 %v3046, 16
        %v3298 = vrot.slane %v3296, 4
        %v3299 = vor.u32 %v3298, %v3294
        %v3300 = vrot.slane %v3299, 4
        %v3302 = vshll.u32 %v3047, 16
        %v3304 = vrot.slane %v3302, 5
        %v3305 = vsel %vm1173, %v3300, %v3304
        %v3307 = vshrl.u32 %v3048, 16
        %v3309 = vrot.slane %v3307, 4
        %v3310 = vshll.u32 %v3048, 16
        %v3312 = vrot.slane %v3310, 5
        %v3313 = vor.u32 %v3309, %v3312
        %v3314 = vrot.slane %v3313, 4
        %v3316 = vshll.u32 %v3049, 16
        %v3318 = vrot.slane %v3316, 5
        %v3319 = vsel %vm1173, %v3314, %v3318
        %v3320 = vshrl.u32 %v3049, 16
        %v3322 = vrot.slane %v3320, 4
        %v3323 = vor.u32 %v3322, %v3318
        %v3324 = vrot.slane %v3323, 4
        %v3326 = vshll.u32 %v3050, 16
        %v3328 = vrot.slane %v3326, 5
        %v3329 = vsel %vm1173, %v3324, %v3328
        %v3331 = vshrl.u32 %v3051, 16
        %v3333 = vrot.slane %v3331, 4
        %v3334 = vshll.u32 %v3051, 16
        %v3336 = vrot.slane %v3334, 5
        %v3337 = vor.u32 %v3333, %v3336
        %v3338 = vrot.slane %v3337, 4
        %v3340 = vshll.u32 %v3052, 16
        %v3342 = vrot.slane %v3340, 5
        %v3343 = vsel %vm1173, %v3338, %v3342
        %v3344 = vshrl.u32 %v3052, 16
        %v3346 = vrot.slane %v3344, 4
        %v3347 = vor.u32 %v3346, %v3342
        %v3348 = vrot.slane %v3347, 4
        %v3350 = vshll.u32 %v3053, 16
        %v3352 = vrot.slane %v3350, 5
        %v3353 = vsel %vm1173, %v3348, %v3352
        %v3355 = vshrl.u32 %v3054, 16
        %v3357 = vrot.slane %v3355, 4
        %v3358 = vshll.u32 %v3054, 16
        %v3360 = vrot.slane %v3358, 5
        %v3361 = vor.u32 %v3357, %v3360
        %v3362 = vrot.slane %v3361, 4
        %v3364 = vshll.u32 %v3055, 16
        %v3366 = vrot.slane %v3364, 5
        %v3367 = vsel %vm1173, %v3362, %v3366
        %v3368 = vshrl.u32 %v3055, 16
        %v3370 = vrot.slane %v3368, 4
        %v3371 = vor.u32 %v3370, %v3366
        %v3372 = vrot.slane %v3371, 4
        %v3374 = vshll.u32 %v3056, 16
        %v3376 = vrot.slane %v3374, 5
        %v3377 = vsel %vm1173, %v3372, %v3376
        %v3379 = vshrl.u32 %v3057, 16
        %v3381 = vrot.slane %v3379, 4
        %v3382 = vshll.u32 %v3057, 16
        %v3384 = vrot.slane %v3382, 5
        %v3385 = vor.u32 %v3381, %v3384
        %v3386 = vrot.slane %v3385, 4
        %v3388 = vshll.u32 %v3058, 16
        %v3390 = vrot.slane %v3388, 5
        %v3391 = vsel %vm1173, %v3386, %v3390
        %v3392 = vshrl.u32 %v3058, 16
        %v3394 = vrot.slane %v3392, 4
        %v3395 = vor.u32 %v3394, %v3390
        %v3396 = vrot.slane %v3395, 4
        %v3398 = vshll.u32 %v3059, 16
        %v3400 = vrot.slane %v3398, 5
        %v3401 = vsel %vm1173, %v3396, %v3400
        %v3403 = vshrl.u32 %v3060, 16
        %v3405 = vrot.slane %v3403, 4
        %v3406 = vshll.u32 %v3060, 16
        %v3408 = vrot.slane %v3406, 5
        %v3409 = vor.u32 %v3405, %v3408
        %v3410 = vrot.slane %v3409, 4
        %v3412 = vshll.u32 %v3061, 16
        %v3414 = vrot.slane %v3412, 5
        %v3415 = vsel %vm1173, %v3410, %v3414
        %v3416 = vshrl.u32 %v3061, 16
        %v3418 = vrot.slane %v3416, 4
        %v3419 = vor.u32 %v3418, %v3414
        %v3420 = vrot.slane %v3419, 4
        %v3422 = vshll.u32 %v3062, 16
        %v3424 = vrot.slane %v3422, 5
        %v3425 = vsel %vm1173, %v3420, %v3424
        %v3427 = vshrl.u32 %v3063, 16
        %v3429 = vrot.slane %v3427, 4
        %v3430 = vshll.u32 %v3063, 16
        %v3432 = vrot.slane %v3430, 5
        %v3433 = vor.u32 %v3429, %v3432
        %v3434 = vrot.slane %v3433, 4
        %v3436 = vshll.u32 %v3064, 16
        %v3438 = vrot.slane %v3436, 5
        %v3439 = vsel %vm1173, %v3434, %v3438
        %v3440 = vshrl.u32 %v3064, 16
        %v3442 = vrot.slane %v3440, 4
        %v3443 = vor.u32 %v3442, %v3438
        %v3444 = vrot.slane %v3443, 4
        %v3446 = vshll.u32 %v3065, 16
        %v3448 = vrot.slane %v3446, 5
        %v3449 = vsel %vm1173, %v3444, %v3448
        %v3450 = vunpack.c.l.b16 %v3079
        %v3451 = vunpack.c.l.b16 %v3089
        %v3452 = vunpack.c.l.b16 %v3103
        %v3453 = vunpack.c.l.b16 %v3113
        %v3454 = vunpack.c.l.b16 %v3127
        %v3455 = vunpack.c.l.b16 %v3137
        %v3456 = vunpack.c.l.b16 %v3151
        %v3457 = vunpack.c.l.b16 %v3161
        %v3458 = vunpack.c.l.b16 %v3175
        %v3459 = vunpack.c.l.b16 %v3185
        %v3460 = vunpack.c.l.b16 %v3199
        %v3461 = vunpack.c.l.b16 %v3209
        %v3462 = vunpack.c.l.b16 %v3223
        %v3463 = vunpack.c.l.b16 %v3233
        %v3464 = vunpack.c.l.b16 %v3247
        %v3465 = vunpack.c.l.b16 %v3257
        %v3466 = vunpack.c.l.b16 %v3271
        %v3467 = vunpack.c.l.b16 %v3281
        %v3468 = vunpack.c.l.b16 %v3295
        %v3469 = vunpack.c.l.b16 %v3305
        %v3470 = vunpack.c.l.b16 %v3319
        %v3471 = vunpack.c.l.b16 %v3329
        %v3472 = vunpack.c.l.b16 %v3343
        %v3473 = vunpack.c.l.b16 %v3353
        %v3474 = vunpack.c.l.b16 %v3367
        %v3475 = vunpack.c.l.b16 %v3377
        %v3476 = vunpack.c.l.b16 %v3391
        %v3477 = vunpack.c.l.b16 %v3401
        %v3478 = vunpack.c.l.b16 %v3415
        %v3479 = vunpack.c.l.b16 %v3425
        %v3480 = vunpack.c.l.b16 %v3439
        %v3481 = vunpack.c.l.b16 %v3449
        %v3482 = vpack.c.b16 %v3451, %v3450
        %v3483 = vpack.c.b16 %v3453, %v3452
        %v3484 = vpack.c.b16 %v3455, %v3454
        %v3485 = vpack.c.b16 %v3457, %v3456
        %v3486 = vpack.c.b16 %v3459, %v3458
        %v3487 = vpack.c.b16 %v3461, %v3460
        %v3488 = vpack.c.b16 %v3463, %v3462
        %v3489 = vpack.c.b16 %v3465, %v3464
        %v3490 = vpack.c.b16 %v3467, %v3466
        %v3491 = vpack.c.b16 %v3469, %v3468
        %v3492 = vpack.c.b16 %v3471, %v3470
        %v3493 = vpack.c.b16 %v3473, %v3472
        %v3494 = vpack.c.b16 %v3475, %v3474
        %v3495 = vpack.c.b16 %v3477, %v3476
        %v3496 = vpack.c.b16 %v3479, %v3478
        %v3497 = vpack.c.b16 %v3481, %v3480
        %3514 = vst [vmem:[#allocation4 + $0x38] sm:$0xff] %v3482
        %3515 = vst [vmem:[#allocation4 + $0x88] sm:$0xff] %v3483
        %3516 = vst [vmem:[#allocation4 + $0xd8] sm:$0xff] %v3484
        %3517 = vst [vmem:[#allocation4 + $0x128] sm:$0xff] %v3485
        %3518 = vst [vmem:[#allocation4 + $0x178] sm:$0xff] %v3486
        %3519 = vst [vmem:[#allocation4 + $0x1c8] sm:$0xff] %v3487
        %3520 = vst [vmem:[#allocation4 + $0x218] sm:$0xff] %v3488
        %3521 = vst [vmem:[#allocation4 + $0x268] sm:$0xff] %v3489
        %3522 = vst [vmem:[#allocation4 + $0x2b8] sm:$0xff] %v3490
        %3523 = vst [vmem:[#allocation4 + $0x308] sm:$0xff] %v3491
        %3524 = vst [vmem:[#allocation4 + $0x358] sm:$0xff] %v3492
        %3525 = vst [vmem:[#allocation4 + $0x3a8] sm:$0xff] %v3493
        %3526 = vst [vmem:[#allocation4 + $0x3f8] sm:$0xff] %v3494
        %3527 = vst [vmem:[#allocation4 + $0x448] sm:$0xff] %v3495
        %3528 = vst [vmem:[#allocation4 + $0x498] sm:$0xff] %v3496
        %3529 = vst [vmem:[#allocation4 + $0x4e8] sm:$0xff] %v3497
        %v3530 = vld [vmem:[%s2873] sm:$0xe]
        %v3531 = vld [vmem:[%s2873 + $0x4] sm:$0xf]
        %v3532 = vld [vmem:[%s2873 + $0x8] sm:$0x1]
        %v3533 = vld [vmem:[%s2873 + $0xc] sm:$0xe]
        %v3534 = vld [vmem:[%s2873 + $0x10] sm:$0xf]
        %v3535 = vld [vmem:[%s2873 + $0x14] sm:$0x1]
        %v3536 = vld [vmem:[%s2873 + $0x18] sm:$0xe]
        %v3537 = vld [vmem:[%s2873 + $0x1c] sm:$0xf]
        %v3538 = vld [vmem:[%s2873 + $0x20] sm:$0x1]
        %v3539 = vld [vmem:[%s2873 + $0x24] sm:$0xe]
        %v3540 = vld [vmem:[%s2873 + $0x28] sm:$0xf]
        %v3541 = vld [vmem:[%s2873 + $0x2c] sm:$0x1]
        %v3542 = vld [vmem:[%s2873 + $0x30] sm:$0xe]
        %v3543 = vld [vmem:[%s2873 + $0x34] sm:$0xf]
        %v3544 = vld [vmem:[%s2873 + $0x38] sm:$0x1]
        %v3545 = vld [vmem:[%s2873 + $0x3c] sm:$0xe]
        %v3546 = vld [vmem:[%s2873 + $0x40] sm:$0xf]
        %v3547 = vld [vmem:[%s2873 + $0x44] sm:$0x1]
        %v3548 = vld [vmem:[%s2873 + $0x48] sm:$0xe]
        %v3549 = vld [vmem:[%s2873 + $0x4c] sm:$0xf]
        %v3550 = vld [vmem:[%s2873 + $0x50] sm:$0x1]
        %v3551 = vld [vmem:[%s2873 + $0x54] sm:$0xe]
        %v3552 = vld [vmem:[%s2873 + $0x58] sm:$0xf]
        %v3553 = vld [vmem:[%s2873 + $0x5c] sm:$0x1]
        %v3554 = vld [vmem:[%s2873 + $0x60] sm:$0xe]
        %v3555 = vld [vmem:[%s2873 + $0x64] sm:$0xf]
        %v3556 = vld [vmem:[%s2873 + $0x68] sm:$0x1]
        %v3557 = vld [vmem:[%s2873 + $0x6c] sm:$0xe]
        %v3558 = vld [vmem:[%s2873 + $0x70] sm:$0xf]
        %v3559 = vld [vmem:[%s2873 + $0x74] sm:$0x1]
        %v3560 = vld [vmem:[%s2873 + $0x78] sm:$0xe]
        %v3561 = vld [vmem:[%s2873 + $0x7c] sm:$0xf]
        %v3562 = vld [vmem:[%s2873 + $0x80] sm:$0x1]
        %v3563 = vld [vmem:[%s2873 + $0x84] sm:$0xe]
        %v3564 = vld [vmem:[%s2873 + $0x88] sm:$0xf]
        %v3565 = vld [vmem:[%s2873 + $0x8c] sm:$0x1]
        %v3566 = vld [vmem:[%s2873 + $0x90] sm:$0xe]
        %v3567 = vld [vmem:[%s2873 + $0x94] sm:$0xf]
        %v3568 = vld [vmem:[%s2873 + $0x98] sm:$0x1]
        %v3569 = vld [vmem:[%s2873 + $0x9c] sm:$0xe]
        %v3570 = vld [vmem:[%s2873 + $0xa0] sm:$0xf]
        %v3571 = vld [vmem:[%s2873 + $0xa4] sm:$0x1]
        %v3572 = vld [vmem:[%s2873 + $0xa8] sm:$0xe]
        %v3573 = vld [vmem:[%s2873 + $0xac] sm:$0xf]
        %v3574 = vld [vmem:[%s2873 + $0xb0] sm:$0x1]
        %v3575 = vld [vmem:[%s2873 + $0xb4] sm:$0xe]
        %v3576 = vld [vmem:[%s2873 + $0xb8] sm:$0xf]
        %v3577 = vld [vmem:[%s2873 + $0xbc] sm:$0x1]
        %v3626 = vrot.slane %v3530, 5
        %v3627 = vrot.slane %v3626, 4
        %v3628 = vrot.slane %v3531, 5
        %v3629 = vsel %vm1736, %v3627, %v3628
        %v3630 = vrot.slane %v3628, 4
        %v3631 = vrot.slane %v3532, 5
        %v3632 = vsel %vm1736, %v3630, %v3631
        %v3633 = vrot.slane %v3533, 5
        %v3634 = vrot.slane %v3633, 4
        %v3635 = vrot.slane %v3534, 5
        %v3636 = vsel %vm1736, %v3634, %v3635
        %v3637 = vrot.slane %v3635, 4
        %v3638 = vrot.slane %v3535, 5
        %v3639 = vsel %vm1736, %v3637, %v3638
        %v3640 = vrot.slane %v3536, 5
        %v3641 = vrot.slane %v3640, 4
        %v3642 = vrot.slane %v3537, 5
        %v3643 = vsel %vm1736, %v3641, %v3642
        %v3644 = vrot.slane %v3642, 4
        %v3645 = vrot.slane %v3538, 5
        %v3646 = vsel %vm1736, %v3644, %v3645
        %v3647 = vrot.slane %v3539, 5
        %v3648 = vrot.slane %v3647, 4
        %v3649 = vrot.slane %v3540, 5
        %v3650 = vsel %vm1736, %v3648, %v3649
        %v3651 = vrot.slane %v3649, 4
        %v3652 = vrot.slane %v3541, 5
        %v3653 = vsel %vm1736, %v3651, %v3652
        %v3654 = vrot.slane %v3542, 5
        %v3655 = vrot.slane %v3654, 4
        %v3656 = vrot.slane %v3543, 5
        %v3657 = vsel %vm1736, %v3655, %v3656
        %v3658 = vrot.slane %v3656, 4
        %v3659 = vrot.slane %v3544, 5
        %v3660 = vsel %vm1736, %v3658, %v3659
        %v3661 = vrot.slane %v3545, 5
        %v3662 = vrot.slane %v3661, 4
        %v3663 = vrot.slane %v3546, 5
        %v3664 = vsel %vm1736, %v3662, %v3663
        %v3665 = vrot.slane %v3663, 4
        %v3666 = vrot.slane %v3547, 5
        %v3667 = vsel %vm1736, %v3665, %v3666
        %v3668 = vrot.slane %v3548, 5
        %v3669 = vrot.slane %v3668, 4
        %v3670 = vrot.slane %v3549, 5
        %v3671 = vsel %vm1736, %v3669, %v3670
        %v3672 = vrot.slane %v3670, 4
        %v3673 = vrot.slane %v3550, 5
        %v3674 = vsel %vm1736, %v3672, %v3673
        %v3675 = vrot.slane %v3551, 5
        %v3676 = vrot.slane %v3675, 4
        %v3677 = vrot.slane %v3552, 5
        %v3678 = vsel %vm1736, %v3676, %v3677
        %v3679 = vrot.slane %v3677, 4
        %v3680 = vrot.slane %v3553, 5
        %v3681 = vsel %vm1736, %v3679, %v3680
        %v3682 = vrot.slane %v3554, 5
        %v3683 = vrot.slane %v3682, 4
        %v3684 = vrot.slane %v3555, 5
        %v3685 = vsel %vm1736, %v3683, %v3684
        %v3686 = vrot.slane %v3684, 4
        %v3687 = vrot.slane %v3556, 5
        %v3688 = vsel %vm1736, %v3686, %v3687
        %v3689 = vrot.slane %v3557, 5
        %v3690 = vrot.slane %v3689, 4
        %v3691 = vrot.slane %v3558, 5
        %v3692 = vsel %vm1736, %v3690, %v3691
        %v3693 = vrot.slane %v3691, 4
        %v3694 = vrot.slane %v3559, 5
        %v3695 = vsel %vm1736, %v3693, %v3694
        %v3696 = vrot.slane %v3560, 5
        %v3697 = vrot.slane %v3696, 4
        %v3698 = vrot.slane %v3561, 5
        %v3699 = vsel %vm1736, %v3697, %v3698
        %v3700 = vrot.slane %v3698, 4
        %v3701 = vrot.slane %v3562, 5
        %v3702 = vsel %vm1736, %v3700, %v3701
        %v3703 = vrot.slane %v3563, 5
        %v3704 = vrot.slane %v3703, 4
        %v3705 = vrot.slane %v3564, 5
        %v3706 = vsel %vm1736, %v3704, %v3705
        %v3707 = vrot.slane %v3705, 4
        %v3708 = vrot.slane %v3565, 5
        %v3709 = vsel %vm1736, %v3707, %v3708
        %v3710 = vrot.slane %v3566, 5
        %v3711 = vrot.slane %v3710, 4
        %v3712 = vrot.slane %v3567, 5
        %v3713 = vsel %vm1736, %v3711, %v3712
        %v3714 = vrot.slane %v3712, 4
        %v3715 = vrot.slane %v3568, 5
        %v3716 = vsel %vm1736, %v3714, %v3715
        %v3717 = vrot.slane %v3569, 5
        %v3718 = vrot.slane %v3717, 4
        %v3719 = vrot.slane %v3570, 5
        %v3720 = vsel %vm1736, %v3718, %v3719
        %v3721 = vrot.slane %v3719, 4
        %v3722 = vrot.slane %v3571, 5
        %v3723 = vsel %vm1736, %v3721, %v3722
        %v3724 = vrot.slane %v3572, 5
        %v3725 = vrot.slane %v3724, 4
        %v3726 = vrot.slane %v3573, 5
        %v3727 = vsel %vm1736, %v3725, %v3726
        %v3728 = vrot.slane %v3726, 4
        %v3729 = vrot.slane %v3574, 5
        %v3730 = vsel %vm1736, %v3728, %v3729
        %v3731 = vrot.slane %v3575, 5
        %v3732 = vrot.slane %v3731, 4
        %v3733 = vrot.slane %v3576, 5
        %v3734 = vsel %vm1736, %v3732, %v3733
        %v3735 = vrot.slane %v3733, 4
        %v3736 = vrot.slane %v3577, 5
        %v3737 = vsel %vm1736, %v3735, %v3736
        %v3738 = vunpack.c.l.b16 %v3629
        %v3739 = vunpack.c.l.b16 %v3632
        %v3740 = vunpack.c.l.b16 %v3636
        %v3741 = vunpack.c.l.b16 %v3639
        %v3742 = vunpack.c.l.b16 %v3643
        %v3743 = vunpack.c.l.b16 %v3646
        %v3744 = vunpack.c.l.b16 %v3650
        %v3745 = vunpack.c.l.b16 %v3653
        %v3746 = vunpack.c.l.b16 %v3657
        %v3747 = vunpack.c.l.b16 %v3660
        %v3748 = vunpack.c.l.b16 %v3664
        %v3749 = vunpack.c.l.b16 %v3667
        %v3750 = vunpack.c.l.b16 %v3671
        %v3751 = vunpack.c.l.b16 %v3674
        %v3752 = vunpack.c.l.b16 %v3678
        %v3753 = vunpack.c.l.b16 %v3681
        %v3754 = vunpack.c.l.b16 %v3685
        %v3755 = vunpack.c.l.b16 %v3688
        %v3756 = vunpack.c.l.b16 %v3692
        %v3757 = vunpack.c.l.b16 %v3695
        %v3758 = vunpack.c.l.b16 %v3699
        %v3759 = vunpack.c.l.b16 %v3702
        %v3760 = vunpack.c.l.b16 %v3706
        %v3761 = vunpack.c.l.b16 %v3709
        %v3762 = vunpack.c.l.b16 %v3713
        %v3763 = vunpack.c.l.b16 %v3716
        %v3764 = vunpack.c.l.b16 %v3720
        %v3765 = vunpack.c.l.b16 %v3723
        %v3766 = vunpack.c.l.b16 %v3727
        %v3767 = vunpack.c.l.b16 %v3730
        %v3768 = vunpack.c.l.b16 %v3734
        %v3769 = vunpack.c.l.b16 %v3737
        %v3770 = vpack.c.b16 %v3739, %v3738
        %v3771 = vpack.c.b16 %v3741, %v3740
        %v3772 = vpack.c.b16 %v3743, %v3742
        %v3773 = vpack.c.b16 %v3745, %v3744
        %v3774 = vpack.c.b16 %v3747, %v3746
        %v3775 = vpack.c.b16 %v3749, %v3748
        %v3776 = vpack.c.b16 %v3751, %v3750
        %v3777 = vpack.c.b16 %v3753, %v3752
        %v3778 = vpack.c.b16 %v3755, %v3754
        %v3779 = vpack.c.b16 %v3757, %v3756
        %v3780 = vpack.c.b16 %v3759, %v3758
        %v3781 = vpack.c.b16 %v3761, %v3760
        %v3782 = vpack.c.b16 %v3763, %v3762
        %v3783 = vpack.c.b16 %v3765, %v3764
        %v3784 = vpack.c.b16 %v3767, %v3766
        %v3785 = vpack.c.b16 %v3769, %v3768
        %3802 = vst [vmem:[#allocation4 + $0x40] sm:$0xff] %v3770
        %3803 = vst [vmem:[#allocation4 + $0x90] sm:$0xff] %v3771
        %3804 = vst [vmem:[#allocation4 + $0xe0] sm:$0xff] %v3772
        %3805 = vst [vmem:[#allocation4 + $0x130] sm:$0xff] %v3773
        %3806 = vst [vmem:[#allocation4 + $0x180] sm:$0xff] %v3774
        %3807 = vst [vmem:[#allocation4 + $0x1d0] sm:$0xff] %v3775
        %3808 = vst [vmem:[#allocation4 + $0x220] sm:$0xff] %v3776
        %3809 = vst [vmem:[#allocation4 + $0x270] sm:$0xff] %v3777
        %3810 = vst [vmem:[#allocation4 + $0x2c0] sm:$0xff] %v3778
        %3811 = vst [vmem:[#allocation4 + $0x310] sm:$0xff] %v3779
        %3812 = vst [vmem:[#allocation4 + $0x360] sm:$0xff] %v3780
        %3813 = vst [vmem:[#allocation4 + $0x3b0] sm:$0xff] %v3781
        %3814 = vst [vmem:[#allocation4 + $0x400] sm:$0xff] %v3782
        %3815 = vst [vmem:[#allocation4 + $0x450] sm:$0xff] %v3783
        %3816 = vst [vmem:[#allocation4 + $0x4a0] sm:$0xff] %v3784
        %3817 = vst [vmem:[#allocation4 + $0x4f0] sm:$0xff] %v3785
        %v3818 = vld [vmem:[#allocation4] sm:$0xff]
        %v3819 = vld [vmem:[#allocation4 + $0x8] sm:$0xff]
        %v3820 = vld [vmem:[#allocation4 + $0x10] sm:$0xff]
        %v3821 = vld [vmem:[#allocation4 + $0x18] sm:$0xff]
        %v3822 = vld [vmem:[#allocation4 + $0x20] sm:$0xff]
        %v3823 = vld [vmem:[#allocation4 + $0x28] sm:$0xff]
        %v3824 = vld [vmem:[#allocation4 + $0x30] sm:$0xff]
        %v3825 = vld [vmem:[#allocation4 + $0x38] sm:$0xff]
        %v3826 = vld [vmem:[#allocation4 + $0x40] sm:$0xff]
        %v3827 = vld [vmem:[#allocation4 + $0x50] sm:$0xff]
        %v3828 = vld [vmem:[#allocation4 + $0x58] sm:$0xff]
        %v3829 = vld [vmem:[#allocation4 + $0x60] sm:$0xff]
        %v3830 = vld [vmem:[#allocation4 + $0x68] sm:$0xff]
        %v3831 = vld [vmem:[#allocation4 + $0x70] sm:$0xff]
        %v3832 = vld [vmem:[#allocation4 + $0x78] sm:$0xff]
        %v3833 = vld [vmem:[#allocation4 + $0x80] sm:$0xff]
        %v3834 = vld [vmem:[#allocation4 + $0x88] sm:$0xff]
        %v3835 = vld [vmem:[#allocation4 + $0x90] sm:$0xff]
        %v3836 = vld [vmem:[#allocation4 + $0xa0] sm:$0xff]
        %v3837 = vld [vmem:[#allocation4 + $0xa8] sm:$0xff]
        %v3838 = vld [vmem:[#allocation4 + $0xb0] sm:$0xff]
        %v3839 = vld [vmem:[#allocation4 + $0xb8] sm:$0xff]
        %v3840 = vld [vmem:[#allocation4 + $0xc0] sm:$0xff]
        %v3841 = vld [vmem:[#allocation4 + $0xc8] sm:$0xff]
        %v3842 = vld [vmem:[#allocation4 + $0xd0] sm:$0xff]
        %v3843 = vld [vmem:[#allocation4 + $0xd8] sm:$0xff]
        %v3844 = vld [vmem:[#allocation4 + $0xe0] sm:$0xff]
        %v3845 = vld [vmem:[#allocation4 + $0xf0] sm:$0xff]
        %v3846 = vld [vmem:[#allocation4 + $0xf8] sm:$0xff]
        %v3847 = vld [vmem:[#allocation4 + $0x100] sm:$0xff]
        %v3848 = vld [vmem:[#allocation4 + $0x108] sm:$0xff]
        %v3849 = vld [vmem:[#allocation4 + $0x110] sm:$0xff]
        %v3850 = vld [vmem:[#allocation4 + $0x118] sm:$0xff]
        %v3851 = vld [vmem:[#allocation4 + $0x120] sm:$0xff]
        %v3852 = vld [vmem:[#allocation4 + $0x128] sm:$0xff]
        %v3853 = vld [vmem:[#allocation4 + $0x130] sm:$0xff]
        %v3854 = vld [vmem:[#allocation4 + $0x140] sm:$0xff]
        %v3855 = vld [vmem:[#allocation4 + $0x148] sm:$0xff]
        %v3856 = vld [vmem:[#allocation4 + $0x150] sm:$0xff]
        %v3857 = vld [vmem:[#allocation4 + $0x158] sm:$0xff]
        %v3858 = vld [vmem:[#allocation4 + $0x160] sm:$0xff]
        %v3859 = vld [vmem:[#allocation4 + $0x168] sm:$0xff]
        %v3860 = vld [vmem:[#allocation4 + $0x170] sm:$0xff]
        %v3861 = vld [vmem:[#allocation4 + $0x178] sm:$0xff]
        %v3862 = vld [vmem:[#allocation4 + $0x180] sm:$0xff]
        %v3863 = vld [vmem:[#allocation4 + $0x190] sm:$0xff]
        %v3864 = vld [vmem:[#allocation4 + $0x198] sm:$0xff]
        %v3865 = vld [vmem:[#allocation4 + $0x1a0] sm:$0xff]
        %v3866 = vld [vmem:[#allocation4 + $0x1a8] sm:$0xff]
        %v3867 = vld [vmem:[#allocation4 + $0x1b0] sm:$0xff]
        %v3868 = vld [vmem:[#allocation4 + $0x1b8] sm:$0xff]
        %v3869 = vld [vmem:[#allocation4 + $0x1c0] sm:$0xff]
        %v3870 = vld [vmem:[#allocation4 + $0x1c8] sm:$0xff]
        %v3871 = vld [vmem:[#allocation4 + $0x1d0] sm:$0xff]
        %v3872 = vld [vmem:[#allocation4 + $0x1e0] sm:$0xff]
        %v3873 = vld [vmem:[#allocation4 + $0x1e8] sm:$0xff]
        %v3874 = vld [vmem:[#allocation4 + $0x1f0] sm:$0xff]
        %v3875 = vld [vmem:[#allocation4 + $0x1f8] sm:$0xff]
        %v3876 = vld [vmem:[#allocation4 + $0x200] sm:$0xff]
        %v3877 = vld [vmem:[#allocation4 + $0x208] sm:$0xff]
        %v3878 = vld [vmem:[#allocation4 + $0x210] sm:$0xff]
        %v3879 = vld [vmem:[#allocation4 + $0x218] sm:$0xff]
        %v3880 = vld [vmem:[#allocation4 + $0x220] sm:$0xff]
        %v3881 = vld [vmem:[#allocation4 + $0x230] sm:$0xff]
        %v3882 = vld [vmem:[#allocation4 + $0x238] sm:$0xff]
        %v3883 = vld [vmem:[#allocation4 + $0x240] sm:$0xff]
        %v3884 = vld [vmem:[#allocation4 + $0x248] sm:$0xff]
        %v3885 = vld [vmem:[#allocation4 + $0x250] sm:$0xff]
        %v3886 = vld [vmem:[#allocation4 + $0x258] sm:$0xff]
        %v3887 = vld [vmem:[#allocation4 + $0x260] sm:$0xff]
        %v3888 = vld [vmem:[#allocation4 + $0x268] sm:$0xff]
        %v3889 = vld [vmem:[#allocation4 + $0x270] sm:$0xff]
        %v3890 = vld [vmem:[#allocation4 + $0x280] sm:$0xff]
        %v3891 = vld [vmem:[#allocation4 + $0x288] sm:$0xff]
        %v3892 = vld [vmem:[#allocation4 + $0x290] sm:$0xff]
        %v3893 = vld [vmem:[#allocation4 + $0x298] sm:$0xff]
        %v3894 = vld [vmem:[#allocation4 + $0x2a0] sm:$0xff]
        %v3895 = vld [vmem:[#allocation4 + $0x2a8] sm:$0xff]
        %v3896 = vld [vmem:[#allocation4 + $0x2b0] sm:$0xff]
        %v3897 = vld [vmem:[#allocation4 + $0x2b8] sm:$0xff]
        %v3898 = vld [vmem:[#allocation4 + $0x2c0] sm:$0xff]
        %v3899 = vld [vmem:[#allocation4 + $0x2d0] sm:$0xff]
        %v3900 = vld [vmem:[#allocation4 + $0x2d8] sm:$0xff]
        %v3901 = vld [vmem:[#allocation4 + $0x2e0] sm:$0xff]
        %v3902 = vld [vmem:[#allocation4 + $0x2e8] sm:$0xff]
        %v3903 = vld [vmem:[#allocation4 + $0x2f0] sm:$0xff]
        %v3904 = vld [vmem:[#allocation4 + $0x2f8] sm:$0xff]
        %v3905 = vld [vmem:[#allocation4 + $0x300] sm:$0xff]
        %v3906 = vld [vmem:[#allocation4 + $0x308] sm:$0xff]
        %v3907 = vld [vmem:[#allocation4 + $0x310] sm:$0xff]
        %v3908 = vld [vmem:[#allocation4 + $0x320] sm:$0xff]
        %v3909 = vld [vmem:[#allocation4 + $0x328] sm:$0xff]
        %v3910 = vld [vmem:[#allocation4 + $0x330] sm:$0xff]
        %v3911 = vld [vmem:[#allocation4 + $0x338] sm:$0xff]
        %v3912 = vld [vmem:[#allocation4 + $0x340] sm:$0xff]
        %v3913 = vld [vmem:[#allocation4 + $0x348] sm:$0xff]
        %v3914 = vld [vmem:[#allocation4 + $0x350] sm:$0xff]
        %v3915 = vld [vmem:[#allocation4 + $0x358] sm:$0xff]
        %v3916 = vld [vmem:[#allocation4 + $0x360] sm:$0xff]
        %v3917 = vld [vmem:[#allocation4 + $0x370] sm:$0xff]
        %v3918 = vld [vmem:[#allocation4 + $0x378] sm:$0xff]
        %v3919 = vld [vmem:[#allocation4 + $0x380] sm:$0xff]
        %v3920 = vld [vmem:[#allocation4 + $0x388] sm:$0xff]
        %v3921 = vld [vmem:[#allocation4 + $0x390] sm:$0xff]
        %v3922 = vld [vmem:[#allocation4 + $0x398] sm:$0xff]
        %v3923 = vld [vmem:[#allocation4 + $0x3a0] sm:$0xff]
        %v3924 = vld [vmem:[#allocation4 + $0x3a8] sm:$0xff]
        %v3925 = vld [vmem:[#allocation4 + $0x3b0] sm:$0xff]
        %v3926 = vld [vmem:[#allocation4 + $0x3c0] sm:$0xff]
        %v3927 = vld [vmem:[#allocation4 + $0x3c8] sm:$0xff]
        %v3928 = vld [vmem:[#allocation4 + $0x3d0] sm:$0xff]
        %v3929 = vld [vmem:[#allocation4 + $0x3d8] sm:$0xff]
        %v3930 = vld [vmem:[#allocation4 + $0x3e0] sm:$0xff]
        %v3931 = vld [vmem:[#allocation4 + $0x3e8] sm:$0xff]
        %v3932 = vld [vmem:[#allocation4 + $0x3f0] sm:$0xff]
        %v3933 = vld [vmem:[#allocation4 + $0x3f8] sm:$0xff]
        %v3934 = vld [vmem:[#allocation4 + $0x400] sm:$0xff]
        %v3935 = vld [vmem:[#allocation4 + $0x410] sm:$0xff]
        %v3936 = vld [vmem:[#allocation4 + $0x418] sm:$0xff]
        %v3937 = vld [vmem:[#allocation4 + $0x420] sm:$0xff]
        %v3938 = vld [vmem:[#allocation4 + $0x428] sm:$0xff]
        %v3939 = vld [vmem:[#allocation4 + $0x430] sm:$0xff]
        %v3940 = vld [vmem:[#allocation4 + $0x438] sm:$0xff]
        %v3941 = vld [vmem:[#allocation4 + $0x440] sm:$0xff]
        %v3942 = vld [vmem:[#allocation4 + $0x448] sm:$0xff]
        %v3943 = vld [vmem:[#allocation4 + $0x450] sm:$0xff]
        %v3944 = vld [vmem:[#allocation4 + $0x460] sm:$0xff]
        %v3945 = vld [vmem:[#allocation4 + $0x468] sm:$0xff]
        %v3946 = vld [vmem:[#allocation4 + $0x470] sm:$0xff]
        %v3947 = vld [vmem:[#allocation4 + $0x478] sm:$0xff]
        %v3948 = vld [vmem:[#allocation4 + $0x480] sm:$0xff]
        %v3949 = vld [vmem:[#allocation4 + $0x488] sm:$0xff]
        %v3950 = vld [vmem:[#allocation4 + $0x490] sm:$0xff]
        %v3951 = vld [vmem:[#allocation4 + $0x498] sm:$0xff]
        %v3952 = vld [vmem:[#allocation4 + $0x4a0] sm:$0xff]
        %v3953 = vld [vmem:[#allocation4 + $0x4b0] sm:$0xff]
        %v3954 = vld [vmem:[#allocation4 + $0x4b8] sm:$0xff]
        %v3955 = vld [vmem:[#allocation4 + $0x4c0] sm:$0xff]
        %v3956 = vld [vmem:[#allocation4 + $0x4c8] sm:$0xff]
        %v3957 = vld [vmem:[#allocation4 + $0x4d0] sm:$0xff]
        %v3958 = vld [vmem:[#allocation4 + $0x4d8] sm:$0xff]
        %v3959 = vld [vmem:[#allocation4 + $0x4e0] sm:$0xff]
        %v3960 = vld [vmem:[#allocation4 + $0x4e8] sm:$0xff]
        %v3961 = vld [vmem:[#allocation4 + $0x4f0] sm:$0xff]
        %v3962 = vld [vmem:[#allocation8] sm:$0xf]
        %v3963 = vld [vmem:[#allocation8 + $0x4] sm:$0xf]
        %v3964 = vld [vmem:[#allocation8 + $0x8] sm:$0xf]
        %v3965 = vld [vmem:[#allocation8 + $0xc] sm:$0xf]
        %v3966 = vld [vmem:[#allocation8 + $0x10] sm:$0xf]
        %v3967 = vld [vmem:[#allocation8 + $0x14] sm:$0xf]
        %v3968 = vld [vmem:[#allocation8 + $0x18] sm:$0xf]
        %v3969 = vld [vmem:[#allocation8 + $0x1c] sm:$0xf]
        %v3970 = vld [vmem:[#allocation8 + $0x20] sm:$0xf]
        %v3971 = vld [vmem:[#allocation8 + $0x24] sm:$0xf]
        %v3972 = vld [vmem:[#allocation8 + $0x28] sm:$0xf]
        %v3973 = vld [vmem:[#allocation8 + $0x2c] sm:$0xf]
        %v3974 = vld [vmem:[#allocation8 + $0x30] sm:$0xf]
        %v3975 = vld [vmem:[#allocation8 + $0x34] sm:$0xf]
        %v3976 = vld [vmem:[#allocation8 + $0x38] sm:$0xf]
        %v3977 = vld [vmem:[#allocation8 + $0x3c] sm:$0xf]
        %v3978 = vld [vmem:[#allocation8 + $0x40] sm:$0xf]
        %v3979 = vld [vmem:[#allocation8 + $0x44] sm:$0xf]
        %v3980 = vld [vmem:[#allocation8 + $0x48] sm:$0xf]
        %v3981 = vld [vmem:[#allocation8 + $0x4c] sm:$0xf]
        %v3982 = vld [vmem:[#allocation8 + $0x50] sm:$0xf]
        %v3983 = vld [vmem:[#allocation8 + $0x54] sm:$0xf]
        %v3984 = vld [vmem:[#allocation8 + $0x58] sm:$0xf]
        %v3985 = vld [vmem:[#allocation8 + $0x5c] sm:$0xf]
        %v3986 = vld [vmem:[#allocation8 + $0x60] sm:$0xf]
        %v3987 = vld [vmem:[#allocation8 + $0x64] sm:$0xf]
        %v3988 = vld [vmem:[#allocation8 + $0x68] sm:$0xf]
        %v3989 = vld [vmem:[#allocation8 + $0x6c] sm:$0xf]
        %v3990 = vld [vmem:[#allocation8 + $0x70] sm:$0xf]
        %v3991 = vld [vmem:[#allocation8 + $0x74] sm:$0xf]
        %v3992 = vld [vmem:[#allocation8 + $0x78] sm:$0xf]
        %v3993 = vld [vmem:[#allocation8 + $0x7c] sm:$0xf]
        %v3994 = vld [vmem:[#allocation8 + $0x80] sm:$0xf]
        %v3995 = vld [vmem:[#allocation8 + $0x84] sm:$0xf]
        %v3996 = vld [vmem:[#allocation8 + $0x88] sm:$0xf]
        %v3997 = vld [vmem:[#allocation8 + $0x8c] sm:$0xf]
        %v3998 = vld [vmem:[#allocation8 + $0x90] sm:$0xf]
        %v3999 = vld [vmem:[#allocation8 + $0x94] sm:$0xf]
        %v4000 = vld [vmem:[#allocation8 + $0x98] sm:$0xf]
        %v4001 = vld [vmem:[#allocation8 + $0x9c] sm:$0xf]
        %v4002 = vld [vmem:[#allocation8 + $0xa0] sm:$0xf]
        %v4003 = vld [vmem:[#allocation8 + $0xa4] sm:$0xf]
        %v4004 = vld [vmem:[#allocation8 + $0xa8] sm:$0xf]
        %v4005 = vld [vmem:[#allocation8 + $0xac] sm:$0xf]
        %v4006 = vld [vmem:[#allocation8 + $0xb0] sm:$0xf]
        %v4007 = vld [vmem:[#allocation8 + $0xb4] sm:$0xf]
        %v4008 = vld [vmem:[#allocation8 + $0xb8] sm:$0xf]
        %v4009 = vld [vmem:[#allocation8 + $0xbc] sm:$0xf]
        %v4010 = vld [vmem:[#allocation8 + $0xc0] sm:$0xf]
        %v4011 = vld [vmem:[#allocation8 + $0xc4] sm:$0xf]
        %v4012 = vld [vmem:[#allocation8 + $0xc8] sm:$0xf]
        %v4013 = vld [vmem:[#allocation8 + $0xcc] sm:$0xf]
        %v4014 = vld [vmem:[#allocation8 + $0xd0] sm:$0xf]
        %v4015 = vld [vmem:[#allocation8 + $0xd4] sm:$0xf]
        %v4016 = vld [vmem:[#allocation8 + $0xd8] sm:$0xf]
        %v4017 = vld [vmem:[#allocation8 + $0xdc] sm:$0xf]
        %v4018 = vld [vmem:[#allocation8 + $0xe0] sm:$0xf]
        %v4019 = vld [vmem:[#allocation8 + $0xe4] sm:$0xf]
        %v4020 = vld [vmem:[#allocation8 + $0xe8] sm:$0xf]
        %v4021 = vld [vmem:[#allocation8 + $0xec] sm:$0xf]
        %v4022 = vld [vmem:[#allocation8 + $0xf0] sm:$0xf]
        %v4023 = vld [vmem:[#allocation8 + $0xf4] sm:$0xf]
        %v4024 = vld [vmem:[#allocation8 + $0xf8] sm:$0xf]
        %v4025 = vld [vmem:[#allocation8 + $0xfc] sm:$0xf]
        %v4026 = vld [vmem:[#allocation8 + $0x100] sm:$0xf]
        %v4027 = vld [vmem:[#allocation8 + $0x104] sm:$0xf]
        %v4028 = vld [vmem:[#allocation8 + $0x108] sm:$0xf]
        %v4029 = vld [vmem:[#allocation8 + $0x10c] sm:$0xf]
        %v4030 = vld [vmem:[#allocation8 + $0x110] sm:$0xf]
        %v4031 = vld [vmem:[#allocation8 + $0x114] sm:$0xf]
        %v4032 = vld [vmem:[#allocation8 + $0x118] sm:$0xf]
        %v4033 = vld [vmem:[#allocation8 + $0x11c] sm:$0xf]
        %v4034 = vld [vmem:[#allocation8 + $0x120] sm:$0xf]
        %v4035 = vld [vmem:[#allocation8 + $0x124] sm:$0xf]
        %v4036 = vld [vmem:[#allocation8 + $0x128] sm:$0xf]
        %v4037 = vld [vmem:[#allocation8 + $0x12c] sm:$0xf]
        %v4038 = vld [vmem:[#allocation8 + $0x130] sm:$0xf]
        %v4039 = vld [vmem:[#allocation8 + $0x134] sm:$0xf]
        %v4040 = vld [vmem:[#allocation8 + $0x138] sm:$0xf]
        %v4041 = vld [vmem:[#allocation8 + $0x13c] sm:$0xf]
        %v4042 = vld [vmem:[#allocation8 + $0x140] sm:$0xf]
        %v4043 = vld [vmem:[#allocation8 + $0x144] sm:$0xf]
        %v4044 = vld [vmem:[#allocation8 + $0x148] sm:$0xf]
        %v4045 = vld [vmem:[#allocation8 + $0x14c] sm:$0xf]
        %v4046 = vld [vmem:[#allocation8 + $0x150] sm:$0xf]
        %v4047 = vld [vmem:[#allocation8 + $0x154] sm:$0xf]
        %v4048 = vld [vmem:[#allocation8 + $0x158] sm:$0xf]
        %v4049 = vld [vmem:[#allocation8 + $0x15c] sm:$0xf]
        %v4050 = vld [vmem:[#allocation8 + $0x160] sm:$0xf]
        %v4051 = vld [vmem:[#allocation8 + $0x164] sm:$0xf]
        %v4052 = vld [vmem:[#allocation8 + $0x168] sm:$0xf]
        %v4053 = vld [vmem:[#allocation8 + $0x16c] sm:$0xf]
        %v4054 = vld [vmem:[#allocation8 + $0x170] sm:$0xf]
        %v4055 = vld [vmem:[#allocation8 + $0x174] sm:$0xf]
        %v4056 = vld [vmem:[#allocation8 + $0x178] sm:$0xf]
        %v4057 = vld [vmem:[#allocation8 + $0x17c] sm:$0xf]
        %v4058 = vld [vmem:[#allocation8 + $0x180] sm:$0xf]
        %v4059 = vld [vmem:[#allocation8 + $0x184] sm:$0xf]
        %v4060 = vld [vmem:[#allocation8 + $0x188] sm:$0xf]
        %v4061 = vld [vmem:[#allocation8 + $0x18c] sm:$0xf]
        %v4062 = vld [vmem:[#allocation8 + $0x190] sm:$0xf]
        %v4063 = vld [vmem:[#allocation8 + $0x194] sm:$0xf]
        %v4064 = vld [vmem:[#allocation8 + $0x198] sm:$0xf]
        %v4065 = vld [vmem:[#allocation8 + $0x19c] sm:$0xf]
        %v4066 = vld [vmem:[#allocation8 + $0x1a0] sm:$0xf]
        %v4067 = vld [vmem:[#allocation8 + $0x1a4] sm:$0xf]
        %v4068 = vld [vmem:[#allocation8 + $0x1a8] sm:$0xf]
        %v4069 = vld [vmem:[#allocation8 + $0x1ac] sm:$0xf]
        %v4070 = vld [vmem:[#allocation8 + $0x1b0] sm:$0xf]
        %v4071 = vld [vmem:[#allocation8 + $0x1b4] sm:$0xf]
        %v4072 = vld [vmem:[#allocation8 + $0x1b8] sm:$0xf]
        %v4073 = vld [vmem:[#allocation8 + $0x1bc] sm:$0xf]
        %v4074 = vld [vmem:[#allocation8 + $0x1c0] sm:$0xf]
        %v4075 = vld [vmem:[#allocation8 + $0x1c4] sm:$0xf]
        %v4076 = vld [vmem:[#allocation8 + $0x1c8] sm:$0xf]
        %v4077 = vld [vmem:[#allocation8 + $0x1cc] sm:$0xf]
        %v4078 = vld [vmem:[#allocation8 + $0x1d0] sm:$0xf]
        %v4079 = vld [vmem:[#allocation8 + $0x1d4] sm:$0xf]
        %v4080 = vld [vmem:[#allocation8 + $0x1d8] sm:$0xf]
        %v4081 = vld [vmem:[#allocation8 + $0x1dc] sm:$0xf]
        %v4082 = vld [vmem:[#allocation8 + $0x1e0] sm:$0xf]
        %v4083 = vld [vmem:[#allocation8 + $0x1e4] sm:$0xf]
        %v4084 = vld [vmem:[#allocation8 + $0x1e8] sm:$0xf]
        %v4085 = vld [vmem:[#allocation8 + $0x1ec] sm:$0xf]
        %v4086 = vld [vmem:[#allocation8 + $0x1f0] sm:$0xf]
        %v4087 = vld [vmem:[#allocation8 + $0x1f4] sm:$0xf]
        %v4088 = vld [vmem:[#allocation8 + $0x1f8] sm:$0xf]
        %v4089 = vld [vmem:[#allocation8 + $0x1fc] sm:$0xf]
        %v4090 = vld [vmem:[#allocation8 + $0x200] sm:$0xf]
        %v4091 = vld [vmem:[#allocation8 + $0x204] sm:$0xf]
        %v4092 = vld [vmem:[#allocation8 + $0x208] sm:$0xf]
        %v4093 = vld [vmem:[#allocation8 + $0x20c] sm:$0xf]
        %v4094 = vld [vmem:[#allocation8 + $0x210] sm:$0xf]
        %v4095 = vld [vmem:[#allocation8 + $0x214] sm:$0xf]
        %v4096 = vld [vmem:[#allocation8 + $0x218] sm:$0xf]
        %v4097 = vld [vmem:[#allocation8 + $0x21c] sm:$0xf]
        %v4098 = vld [vmem:[#allocation8 + $0x220] sm:$0xf]
        %v4099 = vld [vmem:[#allocation8 + $0x224] sm:$0xf]
        %v4100 = vld [vmem:[#allocation8 + $0x228] sm:$0xf]
        %v4101 = vld [vmem:[#allocation8 + $0x22c] sm:$0xf]
        %v4102 = vld [vmem:[#allocation8 + $0x230] sm:$0xf]
        %v4103 = vld [vmem:[#allocation8 + $0x234] sm:$0xf]
        %v4104 = vld [vmem:[#allocation8 + $0x238] sm:$0xf]
        %v4105 = vld [vmem:[#allocation8 + $0x23c] sm:$0xf]
        %v4107 = vlaneseq
        %v4108 = vshrl.u32 %v4107, 7
        %v4109 = vsub.s32 0, %v4108
        %v4110 = vrot.slane %v977, %v4109
        %v4256 = vunpack.c.l.b16 %v3962
        %v4257 = vunpack.c.l.b16 %v3963
        %v4258 = vunpack.c.l.b16 %v3964
        %v4259 = vunpack.c.l.b16 %v3965
        %v4260 = vunpack.c.l.b16 %v3966
        %v4261 = vunpack.c.l.b16 %v3967
        %v4262 = vunpack.c.l.b16 %v3968
        %v4263 = vunpack.c.l.b16 %v3969
        %v4264 = vunpack.c.l.b16 %v3970
        %v4265 = vunpack.c.l.b16 %v3971
        %v4266 = vunpack.c.l.b16 %v3972
        %v4267 = vunpack.c.l.b16 %v3973
        %v4268 = vunpack.c.l.b16 %v3974
        %v4269 = vunpack.c.l.b16 %v3975
        %v4270 = vunpack.c.l.b16 %v3976
        %v4271 = vunpack.c.l.b16 %v3977
        %v4272 = vunpack.c.l.b16 %v3978
        %v4273 = vunpack.c.l.b16 %v3979
        %v4274 = vunpack.c.l.b16 %v3980
        %v4275 = vunpack.c.l.b16 %v3981
        %v4276 = vunpack.c.l.b16 %v3982
        %v4277 = vunpack.c.l.b16 %v3983
        %v4278 = vunpack.c.l.b16 %v3984
        %v4279 = vunpack.c.l.b16 %v3985
        %v4280 = vunpack.c.l.b16 %v3986
        %v4281 = vunpack.c.l.b16 %v3987
        %v4282 = vunpack.c.l.b16 %v3988
        %v4283 = vunpack.c.l.b16 %v3989
        %v4284 = vunpack.c.l.b16 %v3990
        %v4285 = vunpack.c.l.b16 %v3991
        %v4286 = vunpack.c.l.b16 %v3992
        %v4287 = vunpack.c.l.b16 %v3993
        %v4288 = vunpack.c.l.b16 %v3994
        %v4289 = vunpack.c.l.b16 %v3995
        %v4290 = vunpack.c.l.b16 %v3996
        %v4291 = vunpack.c.l.b16 %v3997
        %v4292 = vunpack.c.l.b16 %v3998
        %v4293 = vunpack.c.l.b16 %v3999
        %v4294 = vunpack.c.l.b16 %v4000
        %v4295 = vunpack.c.l.b16 %v4001
        %v4296 = vunpack.c.l.b16 %v4002
        %v4297 = vunpack.c.l.b16 %v4003
        %v4298 = vunpack.c.l.b16 %v4004
        %v4299 = vunpack.c.l.b16 %v4005
        %v4300 = vunpack.c.l.b16 %v4006
        %v4301 = vunpack.c.l.b16 %v4007
        %v4302 = vunpack.c.l.b16 %v4008
        %v4303 = vunpack.c.l.b16 %v4009
        %v4304 = vunpack.c.l.b16 %v4010
        %v4305 = vunpack.c.l.b16 %v4011
        %v4306 = vunpack.c.l.b16 %v4012
        %v4307 = vunpack.c.l.b16 %v4013
        %v4308 = vunpack.c.l.b16 %v4014
        %v4309 = vunpack.c.l.b16 %v4015
        %v4310 = vunpack.c.l.b16 %v4016
        %v4311 = vunpack.c.l.b16 %v4017
        %v4312 = vunpack.c.l.b16 %v4018
        %v4313 = vunpack.c.l.b16 %v4019
        %v4314 = vunpack.c.l.b16 %v4020
        %v4315 = vunpack.c.l.b16 %v4021
        %v4316 = vunpack.c.l.b16 %v4022
        %v4317 = vunpack.c.l.b16 %v4023
        %v4318 = vunpack.c.l.b16 %v4024
        %v4319 = vunpack.c.l.b16 %v4025
        %v4320 = vunpack.c.l.b16 %v4026
        %v4321 = vunpack.c.l.b16 %v4027
        %v4322 = vunpack.c.l.b16 %v4028
        %v4323 = vunpack.c.l.b16 %v4029
        %v4324 = vunpack.c.l.b16 %v4030
        %v4325 = vunpack.c.l.b16 %v4031
        %v4326 = vunpack.c.l.b16 %v4032
        %v4327 = vunpack.c.l.b16 %v4033
        %v4328 = vunpack.c.l.b16 %v4034
        %v4329 = vunpack.c.l.b16 %v4035
        %v4330 = vunpack.c.l.b16 %v4036
        %v4331 = vunpack.c.l.b16 %v4037
        %v4332 = vunpack.c.l.b16 %v4038
        %v4333 = vunpack.c.l.b16 %v4039
        %v4334 = vunpack.c.l.b16 %v4040
        %v4335 = vunpack.c.l.b16 %v4041
        %v4336 = vunpack.c.l.b16 %v4042
        %v4337 = vunpack.c.l.b16 %v4043
        %v4338 = vunpack.c.l.b16 %v4044
        %v4339 = vunpack.c.l.b16 %v4045
        %v4340 = vunpack.c.l.b16 %v4046
        %v4341 = vunpack.c.l.b16 %v4047
        %v4342 = vunpack.c.l.b16 %v4048
        %v4343 = vunpack.c.l.b16 %v4049
        %v4344 = vunpack.c.l.b16 %v4050
        %v4345 = vunpack.c.l.b16 %v4051
        %v4346 = vunpack.c.l.b16 %v4052
        %v4347 = vunpack.c.l.b16 %v4053
        %v4348 = vunpack.c.l.b16 %v4054
        %v4349 = vunpack.c.l.b16 %v4055
        %v4350 = vunpack.c.l.b16 %v4056
        %v4351 = vunpack.c.l.b16 %v4057
        %v4352 = vunpack.c.l.b16 %v4058
        %v4353 = vunpack.c.l.b16 %v4059
        %v4354 = vunpack.c.l.b16 %v4060
        %v4355 = vunpack.c.l.b16 %v4061
        %v4356 = vunpack.c.l.b16 %v4062
        %v4357 = vunpack.c.l.b16 %v4063
        %v4358 = vunpack.c.l.b16 %v4064
        %v4359 = vunpack.c.l.b16 %v4065
        %v4360 = vunpack.c.l.b16 %v4066
        %v4361 = vunpack.c.l.b16 %v4067
        %v4362 = vunpack.c.l.b16 %v4068
        %v4363 = vunpack.c.l.b16 %v4069
        %v4364 = vunpack.c.l.b16 %v4070
        %v4365 = vunpack.c.l.b16 %v4071
        %v4366 = vunpack.c.l.b16 %v4072
        %v4367 = vunpack.c.l.b16 %v4073
        %v4368 = vunpack.c.l.b16 %v4074
        %v4369 = vunpack.c.l.b16 %v4075
        %v4370 = vunpack.c.l.b16 %v4076
        %v4371 = vunpack.c.l.b16 %v4077
        %v4372 = vunpack.c.l.b16 %v4078
        %v4373 = vunpack.c.l.b16 %v4079
        %v4374 = vunpack.c.l.b16 %v4080
        %v4375 = vunpack.c.l.b16 %v4081
        %v4376 = vunpack.c.l.b16 %v4082
        %v4377 = vunpack.c.l.b16 %v4083
        %v4378 = vunpack.c.l.b16 %v4084
        %v4379 = vunpack.c.l.b16 %v4085
        %v4380 = vunpack.c.l.b16 %v4086
        %v4381 = vunpack.c.l.b16 %v4087
        %v4382 = vunpack.c.l.b16 %v4088
        %v4383 = vunpack.c.l.b16 %v4089
        %v4384 = vunpack.c.l.b16 %v4090
        %v4385 = vunpack.c.l.b16 %v4091
        %v4386 = vunpack.c.l.b16 %v4092
        %v4387 = vunpack.c.l.b16 %v4093
        %v4388 = vunpack.c.l.b16 %v4094
        %v4389 = vunpack.c.l.b16 %v4095
        %v4390 = vunpack.c.l.b16 %v4096
        %v4391 = vunpack.c.l.b16 %v4097
        %v4392 = vunpack.c.l.b16 %v4098
        %v4393 = vunpack.c.l.b16 %v4099
        %v4394 = vunpack.c.l.b16 %v4100
        %v4395 = vunpack.c.l.b16 %v4101
        %v4396 = vunpack.c.l.b16 %v4102
        %v4397 = vunpack.c.l.b16 %v4103
        %v4398 = vunpack.c.l.b16 %v4104
        %v4399 = vunpack.c.l.b16 %v4105
        %v4400 = vpack.c.b16 %v4257, %v4256
        %v4401 = vpack.c.b16 %v4259, %v4258
        %v4402 = vpack.c.b16 %v4261, %v4260
        %v4403 = vpack.c.b16 %v4263, %v4262
        %v4404 = vpack.c.b16 %v4265, %v4264
        %v4405 = vpack.c.b16 %v4267, %v4266
        %v4406 = vpack.c.b16 %v4269, %v4268
        %v4407 = vpack.c.b16 %v4271, %v4270
        %v4408 = vpack.c.b16 %v4273, %v4272
        %v4409 = vpack.c.b16 %v4275, %v4274
        %v4410 = vpack.c.b16 %v4277, %v4276
        %v4411 = vpack.c.b16 %v4279, %v4278
        %v4412 = vpack.c.b16 %v4281, %v4280
        %v4413 = vpack.c.b16 %v4283, %v4282
        %v4414 = vpack.c.b16 %v4285, %v4284
        %v4415 = vpack.c.b16 %v4287, %v4286
        %v4416 = vpack.c.b16 %v4289, %v4288
        %v4417 = vpack.c.b16 %v4291, %v4290
        %v4418 = vpack.c.b16 %v4293, %v4292
        %v4419 = vpack.c.b16 %v4295, %v4294
        %v4420 = vpack.c.b16 %v4297, %v4296
        %v4421 = vpack.c.b16 %v4299, %v4298
        %v4422 = vpack.c.b16 %v4301, %v4300
        %v4423 = vpack.c.b16 %v4303, %v4302
        %v4424 = vpack.c.b16 %v4305, %v4304
        %v4425 = vpack.c.b16 %v4307, %v4306
        %v4426 = vpack.c.b16 %v4309, %v4308
        %v4427 = vpack.c.b16 %v4311, %v4310
        %v4428 = vpack.c.b16 %v4313, %v4312
        %v4429 = vpack.c.b16 %v4315, %v4314
        %v4430 = vpack.c.b16 %v4317, %v4316
        %v4431 = vpack.c.b16 %v4319, %v4318
        %v4432 = vpack.c.b16 %v4321, %v4320
        %v4433 = vpack.c.b16 %v4323, %v4322
        %v4434 = vpack.c.b16 %v4325, %v4324
        %v4435 = vpack.c.b16 %v4327, %v4326
        %v4436 = vpack.c.b16 %v4329, %v4328
        %v4437 = vpack.c.b16 %v4331, %v4330
        %v4438 = vpack.c.b16 %v4333, %v4332
        %v4439 = vpack.c.b16 %v4335, %v4334
        %v4440 = vpack.c.b16 %v4337, %v4336
        %v4441 = vpack.c.b16 %v4339, %v4338
        %v4442 = vpack.c.b16 %v4341, %v4340
        %v4443 = vpack.c.b16 %v4343, %v4342
        %v4444 = vpack.c.b16 %v4345, %v4344
        %v4445 = vpack.c.b16 %v4347, %v4346
        %v4446 = vpack.c.b16 %v4349, %v4348
        %v4447 = vpack.c.b16 %v4351, %v4350
        %v4448 = vpack.c.b16 %v4353, %v4352
        %v4449 = vpack.c.b16 %v4355, %v4354
        %v4450 = vpack.c.b16 %v4357, %v4356
        %v4451 = vpack.c.b16 %v4359, %v4358
        %v4452 = vpack.c.b16 %v4361, %v4360
        %v4453 = vpack.c.b16 %v4363, %v4362
        %v4454 = vpack.c.b16 %v4365, %v4364
        %v4455 = vpack.c.b16 %v4367, %v4366
        %v4456 = vpack.c.b16 %v4369, %v4368
        %v4457 = vpack.c.b16 %v4371, %v4370
        %v4458 = vpack.c.b16 %v4373, %v4372
        %v4459 = vpack.c.b16 %v4375, %v4374
        %v4460 = vpack.c.b16 %v4377, %v4376
        %v4461 = vpack.c.b16 %v4379, %v4378
        %v4462 = vpack.c.b16 %v4381, %v4380
        %v4463 = vpack.c.b16 %v4383, %v4382
        %v4464 = vpack.c.b16 %v4385, %v4384
        %v4465 = vpack.c.b16 %v4387, %v4386
        %v4466 = vpack.c.b16 %v4389, %v4388
        %v4467 = vpack.c.b16 %v4391, %v4390
        %v4468 = vpack.c.b16 %v4393, %v4392
        %v4469 = vpack.c.b16 %v4395, %v4394
        %v4470 = vpack.c.b16 %v4397, %v4396
        %v4471 = vpack.c.b16 %v4399, %v4398
        %4544 = vmatprep.subr.bf16.mxu0 0
        %4545 = vmatpush1.bf16.msra.mxu0 %v4400
        %4546 = vmatprep.subr.bf16.mxu0 0
        %4547 = vmatpush1.bf16.msra.mxu0 %v4401
        %4548 = vmatprep.subr.bf16.mxu0 0
        %4549 = vmatpush1.bf16.msra.mxu0 %v4402
        %4550 = vmatprep.subr.bf16.mxu0 0
        %4551 = vmatpush1.bf16.msra.mxu0 %v4403
        %4552 = vmatprep.subr.bf16.mxu0 0
        %4553 = vmatpush1.bf16.msra.mxu0 %v4404
        %4554 = vmatprep.subr.bf16.mxu0 0
        %4555 = vmatpush1.bf16.msra.mxu0 %v4405
        %4556 = vmatprep.subr.bf16.mxu0 0
        %4557 = vmatpush1.bf16.msra.mxu0 %v4406
        %4558 = vmatprep.subr.bf16.mxu0 0
        %4559 = vmatpush1.bf16.msra.mxu0 %v4407
        %4560 = vmatprep.subr.bf16.mxu0 0
        %4561 = vmatpush1.bf16.msra.mxu0 %v4408
        %4562 = vmatprep.subr.bf16.mxu0 0
        %4563 = vmatpush1.bf16.msra.mxu0 %v4409
        %4564 = vmatprep.subr.bf16.mxu0 0
        %4565 = vmatpush1.bf16.msra.mxu0 %v4410
        %4566 = vmatprep.subr.bf16.mxu0 0
        %4567 = vmatpush1.bf16.msra.mxu0 %v4411
        %4568 = vmatprep.subr.bf16.mxu0 0
        %4569 = vmatpush1.bf16.msra.mxu0 %v4412
        %4570 = vmatprep.subr.bf16.mxu0 0
        %4571 = vmatpush1.bf16.msra.mxu0 %v4413
        %4572 = vmatprep.subr.bf16.mxu0 0
        %4573 = vmatpush1.bf16.msra.mxu0 %v4414
        %4574 = vmatprep.subr.bf16.mxu0 0
        %4575 = vmatpush1.bf16.msra.mxu0 %v4415
        %4576 = vmatprep.mubr.bf16.mxu0 %v3819
        %4577 = vmatmul.mubr.bf16.gmra.mrb[0].mxu0 %v3818
        %v4578 = vpop.f32.mrb[0].mxu0
        %v4579 = vadd.f32 %v4110, %v4578
        %v4580 = vpop.f32.mrb[0].mxu0
        %v4581 = vpop.f32.mrb[0].mxu0
        %v4582 = vadd.f32 %v4110, %v4581
        %v4583 = vpop.f32.mrb[0].mxu0
        %4584 = vmatprep.mubr.bf16.mxu0 %v3828
        %4585 = vmatmul.mubr.bf16.gmra.mrb[0].mxu0 %v3827
        %v4586 = vpop.f32.mrb[0].mxu0
        %v4587 = vadd.f32 %v4110, %v4586
        %v4588 = vpop.f32.mrb[0].mxu0
        %v4589 = vpop.f32.mrb[0].mxu0
        %v4590 = vadd.f32 %v4110, %v4589
        %v4591 = vpop.f32.mrb[0].mxu0
        %4592 = vmatprep.mubr.bf16.mxu0 %v3837
        %4593 = vmatmul.mubr.bf16.gmra.mrb[0].mxu0 %v3836
        %v4594 = vpop.f32.mrb[0].mxu0
        %v4595 = vadd.f32 %v4110, %v4594
        %v4596 = vpop.f32.mrb[0].mxu0
        %v4597 = vpop.f32.mrb[0].mxu0
        %v4598 = vadd.f32 %v4110, %v4597
        %v4599 = vpop.f32.mrb[0].mxu0
        %4600 = vmatprep.mubr.bf16.mxu0 %v3846
        %4601 = vmatmul.mubr.bf16.gmra.mrb[0].mxu0 %v3845
        %v4602 = vpop.f32.mrb[0].mxu0
        %v4603 = vadd.f32 %v4110, %v4602
        %v4604 = vpop.f32.mrb[0].mxu0
        %v4605 = vpop.f32.mrb[0].mxu0
        %v4606 = vadd.f32 %v4110, %v4605
        %v4607 = vpop.f32.mrb[0].mxu0
        %4608 = vmatprep.mubr.bf16.mxu0 %v3855
        %4609 = vmatmul.mubr.bf16.gmra.mrb[0].mxu0 %v3854
        %v4610 = vpop.f32.mrb[0].mxu0
        %v4611 = vadd.f32 %v4110, %v4610
        %v4612 = vpop.f32.mrb[0].mxu0
        %v4613 = vpop.f32.mrb[0].mxu0
        %v4614 = vadd.f32 %v4110, %v4613
        %v4615 = vpop.f32.mrb[0].mxu0
        %4616 = vmatprep.mubr.bf16.mxu0 %v3864
        %4617 = vmatmul.mubr.bf16.gmra.mrb[0].mxu0 %v3863
        %v4618 = vpop.f32.mrb[0].mxu0
        %v4619 = vadd.f32 %v4110, %v4618
        %v4620 = vpop.f32.mrb[0].mxu0
        %v4621 = vpop.f32.mrb[0].mxu0
        %v4622 = vadd.f32 %v4110, %v4621
        %v4623 = vpop.f32.mrb[0].mxu0
        %4624 = vmatprep.mubr.bf16.mxu0 %v3873
        %4625 = vmatmul.mubr.bf16.gmra.mrb[0].mxu0 %v3872
        %v4626 = vpop.f32.mrb[0].mxu0
        %v4627 = vadd.f32 %v4110, %v4626
        %v4628 = vpop.f32.mrb[0].mxu0
        %v4629 = vpop.f32.mrb[0].mxu0
        %v4630 = vadd.f32 %v4110, %v4629
        %v4631 = vpop.f32.mrb[0].mxu0
        %4632 = vmatprep.mubr.bf16.mxu0 %v3882
        %4633 = vmatmul.mubr.bf16.gmra.mrb[0].mxu0 %v3881
        %v4634 = vpop.f32.mrb[0].mxu0
        %v4635 = vadd.f32 %v4110, %v4634
        %v4636 = vpop.f32.mrb[0].mxu0
        %v4637 = vpop.f32.mrb[0].mxu0
        %v4638 = vadd.f32 %v4110, %v4637
        %v4639 = vpop.f32.mrb[0].mxu0
        %4640 = vmatprep.mubr.bf16.mxu0 %v3891
        %4641 = vmatmul.mubr.bf16.gmra.mrb[0].mxu0 %v3890
        %v4642 = vpop.f32.mrb[0].mxu0
        %v4643 = vadd.f32 %v4110, %v4642
        %v4644 = vpop.f32.mrb[0].mxu0
        %v4645 = vpop.f32.mrb[0].mxu0
        %v4646 = vadd.f32 %v4110, %v4645
        %v4647 = vpop.f32.mrb[0].mxu0
        %4648 = vmatprep.mubr.bf16.mxu0 %v3900
        %4649 = vmatmul.mubr.bf16.gmra.mrb[0].mxu0 %v3899
        %v4650 = vpop.f32.mrb[0].mxu0
        %v4651 = vadd.f32 %v4110, %v4650
        %v4652 = vpop.f32.mrb[0].mxu0
        %v4653 = vpop.f32.mrb[0].mxu0
        %v4654 = vadd.f32 %v4110, %v4653
        %v4655 = vpop.f32.mrb[0].mxu0
        %4656 = vmatprep.mubr.bf16.mxu0 %v3909
        %4657 = vmatmul.mubr.bf16.gmra.mrb[0].mxu0 %v3908
        %v4658 = vpop.f32.mrb[0].mxu0
        %v4659 = vadd.f32 %v4110, %v4658
        %v4660 = vpop.f32.mrb[0].mxu0
        %v4661 = vpop.f32.mrb[0].mxu0
        %v4662 = vadd.f32 %v4110, %v4661
        %v4663 = vpop.f32.mrb[0].mxu0
        %4664 = vmatprep.mubr.bf16.mxu0 %v3918
        %4665 = vmatmul.mubr.bf16.gmra.mrb[0].mxu0 %v3917
        %v4666 = vpop.f32.mrb[0].mxu0
        %v4667 = vadd.f32 %v4110, %v4666
        %v4668 = vpop.f32.mrb[0].mxu0
        %v4669 = vpop.f32.mrb[0].mxu0
        %v4670 = vadd.f32 %v4110, %v4669
        %v4671 = vpop.f32.mrb[0].mxu0
        %4672 = vmatprep.mubr.bf16.mxu0 %v3927
        %4673 = vmatmul.mubr.bf16.gmra.mrb[0].mxu0 %v3926
        %v4674 = vpop.f32.mrb[0].mxu0
        %v4675 = vadd.f32 %v4110, %v4674
        %v4676 = vpop.f32.mrb[0].mxu0
        %v4677 = vpop.f32.mrb[0].mxu0
        %v4678 = vadd.f32 %v4110, %v4677
        %v4679 = vpop.f32.mrb[0].mxu0
        %4680 = vmatprep.mubr.bf16.mxu0 %v3936
        %4681 = vmatmul.mubr.bf16.gmra.mrb[0].mxu0 %v3935
        %v4682 = vpop.f32.mrb[0].mxu0
        %v4683 = vadd.f32 %v4110, %v4682
        %v4684 = vpop.f32.mrb[0].mxu0
        %v4685 = vpop.f32.mrb[0].mxu0
        %v4686 = vadd.f32 %v4110, %v4685
        %v4687 = vpop.f32.mrb[0].mxu0
        %4688 = vmatprep.mubr.bf16.mxu0 %v3945
        %4689 = vmatmul.mubr.bf16.gmra.mrb[0].mxu0 %v3944
        %v4690 = vpop.f32.mrb[0].mxu0
        %v4691 = vadd.f32 %v4110, %v4690
        %v4692 = vpop.f32.mrb[0].mxu0
        %v4693 = vpop.f32.mrb[0].mxu0
        %v4694 = vadd.f32 %v4110, %v4693
        %v4695 = vpop.f32.mrb[0].mxu0
        %4696 = vmatprep.mubr.bf16.mxu0 %v3954
        %4697 = vmatmul.mubr.bf16.gmra.mrb[0].mxu0 %v3953
        %v4698 = vpop.f32.mrb[0].mxu0
        %v4699 = vadd.f32 %v4110, %v4698
        %v4700 = vpop.f32.mrb[0].mxu0
        %v4701 = vpop.f32.mrb[0].mxu0
        %v4702 = vadd.f32 %v4110, %v4701
        %v4703 = vpop.f32.mrb[0].mxu0
        %4704 = vdwg.mxu0
        %4705 = vmatprep.subr.bf16.mxu0 0
        %4706 = vmatpush1.bf16.msra.mxu0 %v4416
        %4707 = vmatprep.subr.bf16.mxu0 0
        %4708 = vmatpush1.bf16.msra.mxu0 %v4417
        %4709 = vmatprep.subr.bf16.mxu0 0
        %4710 = vmatpush1.bf16.msra.mxu0 %v4418
        %4711 = vmatprep.subr.bf16.mxu0 0
        %4712 = vmatpush1.bf16.msra.mxu0 %v4419
        %4713 = vmatprep.subr.bf16.mxu0 0
        %4714 = vmatpush1.bf16.msra.mxu0 %v4420
        %4715 = vmatprep.subr.bf16.mxu0 0
        %4716 = vmatpush1.bf16.msra.mxu0 %v4421
        %4717 = vmatprep.subr.bf16.mxu0 0
        %4718 = vmatpush1.bf16.msra.mxu0 %v4422
        %4719 = vmatprep.subr.bf16.mxu0 0
        %4720 = vmatpush1.bf16.msra.mxu0 %v4423
        %4721 = vmatprep.subr.bf16.mxu0 0
        %4722 = vmatpush1.bf16.msra.mxu0 %v4424
        %4723 = vmatprep.subr.bf16.mxu0 0
        %4724 = vmatpush1.bf16.msra.mxu0 %v4425
        %4725 = vmatprep.subr.bf16.mxu0 0
        %4726 = vmatpush1.bf16.msra.mxu0 %v4426
        %4727 = vmatprep.subr.bf16.mxu0 0
        %4728 = vmatpush1.bf16.msra.mxu0 %v4427
        %4729 = vmatprep.subr.bf16.mxu0 0
        %4730 = vmatpush1.bf16.msra.mxu0 %v4428
        %4731 = vmatprep.subr.bf16.mxu0 0
        %4732 = vmatpush1.bf16.msra.mxu0 %v4429
        %4733 = vmatprep.subr.bf16.mxu0 0
        %4734 = vmatpush1.bf16.msra.mxu0 %v4430
        %4735 = vmatprep.subr.bf16.mxu0 0
        %4736 = vmatpush1.bf16.msra.mxu0 %v4431
        %4737 = vmatprep.mubr.bf16.mxu0 %v3821
        %4738 = vmatmul.mubr.bf16.gmra.mrb[0].mxu0 %v3820
        %v4739 = vpop.f32.mrb[0].mxu0
        %v4740 = vadd.f32 %v4579, %v4739
        %v4741 = vpop.f32.mrb[0].mxu0
        %v4742 = vpop.f32.mrb[0].mxu0
        %v4743 = vadd.f32 %v4582, %v4742
        %v4744 = vpop.f32.mrb[0].mxu0
        %4745 = vmatprep.mubr.bf16.mxu0 %v3830
        %4746 = vmatmul.mubr.bf16.gmra.mrb[0].mxu0 %v3829
        %v4747 = vpop.f32.mrb[0].mxu0
        %v4748 = vadd.f32 %v4587, %v4747
        %v4749 = vpop.f32.mrb[0].mxu0
        %v4750 = vpop.f32.mrb[0].mxu0
        %v4751 = vadd.f32 %v4590, %v4750
        %v4752 = vpop.f32.mrb[0].mxu0
        %4753 = vmatprep.mubr.bf16.mxu0 %v3839
        %4754 = vmatmul.mubr.bf16.gmra.mrb[0].mxu0 %v3838
        %v4755 = vpop.f32.mrb[0].mxu0
        %v4756 = vadd.f32 %v4595, %v4755
        %v4757 = vpop.f32.mrb[0].mxu0
        %v4758 = vpop.f32.mrb[0].mxu0
        %v4759 = vadd.f32 %v4598, %v4758
        %v4760 = vpop.f32.mrb[0].mxu0
        %4761 = vmatprep.mubr.bf16.mxu0 %v3848
        %4762 = vmatmul.mubr.bf16.gmra.mrb[0].mxu0 %v3847
        %v4763 = vpop.f32.mrb[0].mxu0
        %v4764 = vadd.f32 %v4603, %v4763
        %v4765 = vpop.f32.mrb[0].mxu0
        %v4766 = vpop.f32.mrb[0].mxu0
        %v4767 = vadd.f32 %v4606, %v4766
        %v4768 = vpop.f32.mrb[0].mxu0
        %4769 = vmatprep.mubr.bf16.mxu0 %v3857
        %4770 = vmatmul.mubr.bf16.gmra.mrb[0].mxu0 %v3856
        %v4771 = vpop.f32.mrb[0].mxu0
        %v4772 = vadd.f32 %v4611, %v4771
        %v4773 = vpop.f32.mrb[0].mxu0
        %v4774 = vpop.f32.mrb[0].mxu0
        %v4775 = vadd.f32 %v4614, %v4774
        %v4776 = vpop.f32.mrb[0].mxu0
        %4777 = vmatprep.mubr.bf16.mxu0 %v3866
        %4778 = vmatmul.mubr.bf16.gmra.mrb[0].mxu0 %v3865
        %v4779 = vpop.f32.mrb[0].mxu0
        %v4780 = vadd.f32 %v4619, %v4779
        %v4781 = vpop.f32.mrb[0].mxu0
        %v4782 = vpop.f32.mrb[0].mxu0
        %v4783 = vadd.f32 %v4622, %v4782
        %v4784 = vpop.f32.mrb[0].mxu0
        %4785 = vmatprep.mubr.bf16.mxu0 %v3875
        %4786 = vmatmul.mubr.bf16.gmra.mrb[0].mxu0 %v3874
        %v4787 = vpop.f32.mrb[0].mxu0
        %v4788 = vadd.f32 %v4627, %v4787
        %v4789 = vpop.f32.mrb[0].mxu0
        %v4790 = vpop.f32.mrb[0].mxu0
        %v4791 = vadd.f32 %v4630, %v4790
        %v4792 = vpop.f32.mrb[0].mxu0
        %4793 = vmatprep.mubr.bf16.mxu0 %v3884
        %4794 = vmatmul.mubr.bf16.gmra.mrb[0].mxu0 %v3883
        %v4795 = vpop.f32.mrb[0].mxu0
        %v4796 = vadd.f32 %v4635, %v4795
        %v4797 = vpop.f32.mrb[0].mxu0
        %v4798 = vpop.f32.mrb[0].mxu0
        %v4799 = vadd.f32 %v4638, %v4798
        %v4800 = vpop.f32.mrb[0].mxu0
        %4801 = vmatprep.mubr.bf16.mxu0 %v3893
        %4802 = vmatmul.mubr.bf16.gmra.mrb[0].mxu0 %v3892
        %v4803 = vpop.f32.mrb[0].mxu0
        %v4804 = vadd.f32 %v4643, %v4803
        %v4805 = vpop.f32.mrb[0].mxu0
        %v4806 = vpop.f32.mrb[0].mxu0
        %v4807 = vadd.f32 %v4646, %v4806
        %v4808 = vpop.f32.mrb[0].mxu0
        %4809 = vmatprep.mubr.bf16.mxu0 %v3902
        %4810 = vmatmul.mubr.bf16.gmra.mrb[0].mxu0 %v3901
        %v4811 = vpop.f32.mrb[0].mxu0
        %v4812 = vadd.f32 %v4651, %v4811
        %v4813 = vpop.f32.mrb[0].mxu0
        %v4814 = vpop.f32.mrb[0].mxu0
        %v4815 = vadd.f32 %v4654, %v4814
        %v4816 = vpop.f32.mrb[0].mxu0
        %4817 = vmatprep.mubr.bf16.mxu0 %v3911
        %4818 = vmatmul.mubr.bf16.gmra.mrb[0].mxu0 %v3910
        %v4819 = vpop.f32.mrb[0].mxu0
        %v4820 = vadd.f32 %v4659, %v4819
        %v4821 = vpop.f32.mrb[0].mxu0
        %v4822 = vpop.f32.mrb[0].mxu0
        %v4823 = vadd.f32 %v4662, %v4822
        %v4824 = vpop.f32.mrb[0].mxu0
        %4825 = vmatprep.mubr.bf16.mxu0 %v3920
        %4826 = vmatmul.mubr.bf16.gmra.mrb[0].mxu0 %v3919
        %v4827 = vpop.f32.mrb[0].mxu0
        %v4828 = vadd.f32 %v4667, %v4827
        %v4829 = vpop.f32.mrb[0].mxu0
        %v4830 = vpop.f32.mrb[0].mxu0
        %v4831 = vadd.f32 %v4670, %v4830
        %v4832 = vpop.f32.mrb[0].mxu0
        %4833 = vmatprep.mubr.bf16.mxu0 %v3929
        %4834 = vmatmul.mubr.bf16.gmra.mrb[0].mxu0 %v3928
        %v4835 = vpop.f32.mrb[0].mxu0
        %v4836 = vadd.f32 %v4675, %v4835
        %v4837 = vpop.f32.mrb[0].mxu0
        %v4838 = vpop.f32.mrb[0].mxu0
        %v4839 = vadd.f32 %v4678, %v4838
        %v4840 = vpop.f32.mrb[0].mxu0
        %4841 = vmatprep.mubr.bf16.mxu0 %v3938
        %4842 = vmatmul.mubr.bf16.gmra.mrb[0].mxu0 %v3937
        %v4843 = vpop.f32.mrb[0].mxu0
        %v4844 = vadd.f32 %v4683, %v4843
        %v4845 = vpop.f32.mrb[0].mxu0
        %v4846 = vpop.f32.mrb[0].mxu0
        %v4847 = vadd.f32 %v4686, %v4846
        %v4848 = vpop.f32.mrb[0].mxu0
        %4849 = vmatprep.mubr.bf16.mxu0 %v3947
        %4850 = vmatmul.mubr.bf16.gmra.mrb[0].mxu0 %v3946
        %v4851 = vpop.f32.mrb[0].mxu0
        %v4852 = vadd.f32 %v4691, %v4851
        %v4853 = vpop.f32.mrb[0].mxu0
        %v4854 = vpop.f32.mrb[0].mxu0
        %v4855 = vadd.f32 %v4694, %v4854
        %v4856 = vpop.f32.mrb[0].mxu0
        %4857 = vmatprep.mubr.bf16.mxu0 %v3956
        %4858 = vmatmul.mubr.bf16.gmra.mrb[0].mxu0 %v3955
        %v4859 = vpop.f32.mrb[0].mxu0
        %v4860 = vadd.f32 %v4699, %v4859
        %v4861 = vpop.f32.mrb[0].mxu0
        %v4862 = vpop.f32.mrb[0].mxu0
        %v4863 = vadd.f32 %v4702, %v4862
        %v4864 = vpop.f32.mrb[0].mxu0
        %4865 = vdwg.mxu0
        %4866 = vmatprep.subr.bf16.mxu0 0
        %4867 = vmatpush1.bf16.msra.mxu0 %v4432
        %4868 = vmatprep.subr.bf16.mxu0 0
        %4869 = vmatpush1.bf16.msra.mxu0 %v4433
        %4870 = vmatprep.subr.bf16.mxu0 0
        %4871 = vmatpush1.bf16.msra.mxu0 %v4434
        %4872 = vmatprep.subr.bf16.mxu0 0
        %4873 = vmatpush1.bf16.msra.mxu0 %v4435
        %4874 = vmatprep.subr.bf16.mxu0 0
        %4875 = vmatpush1.bf16.msra.mxu0 %v4436
        %4876 = vmatprep.subr.bf16.mxu0 0
        %4877 = vmatpush1.bf16.msra.mxu0 %v4437
        %4878 = vmatprep.subr.bf16.mxu0 0
        %4879 = vmatpush1.bf16.msra.mxu0 %v4438
        %4880 = vmatprep.subr.bf16.mxu0 0
        %4881 = vmatpush1.bf16.msra.mxu0 %v4439
        %4882 = vmatprep.subr.bf16.mxu0 0
        %4883 = vmatpush1.bf16.msra.mxu0 %v4440
        %4884 = vmatprep.subr.bf16.mxu0 0
        %4885 = vmatpush1.bf16.msra.mxu0 %v4441
        %4886 = vmatprep.subr.bf16.mxu0 0
        %4887 = vmatpush1.bf16.msra.mxu0 %v4442
        %4888 = vmatprep.subr.bf16.mxu0 0
        %4889 = vmatpush1.bf16.msra.mxu0 %v4443
        %4890 = vmatprep.subr.bf16.mxu0 0
        %4891 = vmatpush1.bf16.msra.mxu0 %v4444
        %4892 = vmatprep.subr.bf16.mxu0 0
        %4893 = vmatpush1.bf16.msra.mxu0 %v4445
        %4894 = vmatprep.subr.bf16.mxu0 0
        %4895 = vmatpush1.bf16.msra.mxu0 %v4446
        %4896 = vmatprep.subr.bf16.mxu0 0
        %4897 = vmatpush1.bf16.msra.mxu0 %v4447
        %4898 = vmatprep.mubr.bf16.mxu0 %v3823
        %4899 = vmatmul.mubr.bf16.gmra.mrb[0].mxu0 %v3822
        %v4900 = vpop.f32.mrb[0].mxu0
        %v4901 = vadd.f32 %v4740, %v4900
        %v4902 = vpop.f32.mrb[0].mxu0
        %v4903 = vpop.f32.mrb[0].mxu0
        %v4904 = vadd.f32 %v4743, %v4903
        %v4905 = vpop.f32.mrb[0].mxu0
        %4906 = vmatprep.mubr.bf16.mxu0 %v3832
        %4907 = vmatmul.mubr.bf16.gmra.mrb[0].mxu0 %v3831
        %v4908 = vpop.f32.mrb[0].mxu0
        %v4909 = vadd.f32 %v4748, %v4908
        %v4910 = vpop.f32.mrb[0].mxu0
        %v4911 = vpop.f32.mrb[0].mxu0
        %v4912 = vadd.f32 %v4751, %v4911
        %v4913 = vpop.f32.mrb[0].mxu0
        %4914 = vmatprep.mubr.bf16.mxu0 %v3841
        %4915 = vmatmul.mubr.bf16.gmra.mrb[0].mxu0 %v3840
        %v4916 = vpop.f32.mrb[0].mxu0
        %v4917 = vadd.f32 %v4756, %v4916
        %v4918 = vpop.f32.mrb[0].mxu0
        %v4919 = vpop.f32.mrb[0].mxu0
        %v4920 = vadd.f32 %v4759, %v4919
        %v4921 = vpop.f32.mrb[0].mxu0
        %4922 = vmatprep.mubr.bf16.mxu0 %v3850
        %4923 = vmatmul.mubr.bf16.gmra.mrb[0].mxu0 %v3849
        %v4924 = vpop.f32.mrb[0].mxu0
        %v4925 = vadd.f32 %v4764, %v4924
        %v4926 = vpop.f32.mrb[0].mxu0
        %v4927 = vpop.f32.mrb[0].mxu0
        %v4928 = vadd.f32 %v4767, %v4927
        %v4929 = vpop.f32.mrb[0].mxu0
        %4930 = vmatprep.mubr.bf16.mxu0 %v3859
        %4931 = vmatmul.mubr.bf16.gmra.mrb[0].mxu0 %v3858
        %v4932 = vpop.f32.mrb[0].mxu0
        %v4933 = vadd.f32 %v4772, %v4932
        %v4934 = vpop.f32.mrb[0].mxu0
        %v4935 = vpop.f32.mrb[0].mxu0
        %v4936 = vadd.f32 %v4775, %v4935
        %v4937 = vpop.f32.mrb[0].mxu0
        %4938 = vmatprep.mubr.bf16.mxu0 %v3868
        %4939 = vmatmul.mubr.bf16.gmra.mrb[0].mxu0 %v3867
        %v4940 = vpop.f32.mrb[0].mxu0
        %v4941 = vadd.f32 %v4780, %v4940
        %v4942 = vpop.f32.mrb[0].mxu0
        %v4943 = vpop.f32.mrb[0].mxu0
        %v4944 = vadd.f32 %v4783, %v4943
        %v4945 = vpop.f32.mrb[0].mxu0
        %4946 = vmatprep.mubr.bf16.mxu0 %v3877
        %4947 = vmatmul.mubr.bf16.gmra.mrb[0].mxu0 %v3876
        %v4948 = vpop.f32.mrb[0].mxu0
        %v4949 = vadd.f32 %v4788, %v4948
        %v4950 = vpop.f32.mrb[0].mxu0
        %v4951 = vpop.f32.mrb[0].mxu0
        %v4952 = vadd.f32 %v4791, %v4951
        %v4953 = vpop.f32.mrb[0].mxu0
        %4954 = vmatprep.mubr.bf16.mxu0 %v3886
        %4955 = vmatmul.mubr.bf16.gmra.mrb[0].mxu0 %v3885
        %v4956 = vpop.f32.mrb[0].mxu0
        %v4957 = vadd.f32 %v4796, %v4956
        %v4958 = vpop.f32.mrb[0].mxu0
        %v4959 = vpop.f32.mrb[0].mxu0
        %v4960 = vadd.f32 %v4799, %v4959
        %v4961 = vpop.f32.mrb[0].mxu0
        %4962 = vmatprep.mubr.bf16.mxu0 %v3895
        %4963 = vmatmul.mubr.bf16.gmra.mrb[0].mxu0 %v3894
        %v4964 = vpop.f32.mrb[0].mxu0
        %v4965 = vadd.f32 %v4804, %v4964
        %v4966 = vpop.f32.mrb[0].mxu0
        %v4967 = vpop.f32.mrb[0].mxu0
        %v4968 = vadd.f32 %v4807, %v4967
        %v4969 = vpop.f32.mrb[0].mxu0
        %4970 = vmatprep.mubr.bf16.mxu0 %v3904
        %4971 = vmatmul.mubr.bf16.gmra.mrb[0].mxu0 %v3903
        %v4972 = vpop.f32.mrb[0].mxu0
        %v4973 = vadd.f32 %v4812, %v4972
        %v4974 = vpop.f32.mrb[0].mxu0
        %v4975 = vpop.f32.mrb[0].mxu0
        %v4976 = vadd.f32 %v4815, %v4975
        %v4977 = vpop.f32.mrb[0].mxu0
        %4978 = vmatprep.mubr.bf16.mxu0 %v3913
        %4979 = vmatmul.mubr.bf16.gmra.mrb[0].mxu0 %v3912
        %v4980 = vpop.f32.mrb[0].mxu0
        %v4981 = vadd.f32 %v4820, %v4980
        %v4982 = vpop.f32.mrb[0].mxu0
        %v4983 = vpop.f32.mrb[0].mxu0
        %v4984 = vadd.f32 %v4823, %v4983
        %v4985 = vpop.f32.mrb[0].mxu0
        %4986 = vmatprep.mubr.bf16.mxu0 %v3922
        %4987 = vmatmul.mubr.bf16.gmra.mrb[0].mxu0 %v3921
        %v4988 = vpop.f32.mrb[0].mxu0
        %v4989 = vadd.f32 %v4828, %v4988
        %v4990 = vpop.f32.mrb[0].mxu0
        %v4991 = vpop.f32.mrb[0].mxu0
        %v4992 = vadd.f32 %v4831, %v4991
        %v4993 = vpop.f32.mrb[0].mxu0
        %4994 = vmatprep.mubr.bf16.mxu0 %v3931
        %4995 = vmatmul.mubr.bf16.gmra.mrb[0].mxu0 %v3930
        %v4996 = vpop.f32.mrb[0].mxu0
        %v4997 = vadd.f32 %v4836, %v4996
        %v4998 = vpop.f32.mrb[0].mxu0
        %v4999 = vpop.f32.mrb[0].mxu0
        %v5000 = vadd.f32 %v4839, %v4999
        %v5001 = vpop.f32.mrb[0].mxu0
        %5002 = vmatprep.mubr.bf16.mxu0 %v3940
        %5003 = vmatmul.mubr.bf16.gmra.mrb[0].mxu0 %v3939
        %v5004 = vpop.f32.mrb[0].mxu0
        %v5005 = vadd.f32 %v4844, %v5004
        %v5006 = vpop.f32.mrb[0].mxu0
        %v5007 = vpop.f32.mrb[0].mxu0
        %v5008 = vadd.f32 %v4847, %v5007
        %v5009 = vpop.f32.mrb[0].mxu0
        %5010 = vmatprep.mubr.bf16.mxu0 %v3949
        %5011 = vmatmul.mubr.bf16.gmra.mrb[0].mxu0 %v3948
        %v5012 = vpop.f32.mrb[0].mxu0
        %v5013 = vadd.f32 %v4852, %v5012
        %v5014 = vpop.f32.mrb[0].mxu0
        %v5015 = vpop.f32.mrb[0].mxu0
        %v5016 = vadd.f32 %v4855, %v5015
        %v5017 = vpop.f32.mrb[0].mxu0
        %5018 = vmatprep.mubr.bf16.mxu0 %v3958
        %5019 = vmatmul.mubr.bf16.gmra.mrb[0].mxu0 %v3957
        %v5020 = vpop.f32.mrb[0].mxu0
        %v5021 = vadd.f32 %v4860, %v5020
        %v5022 = vpop.f32.mrb[0].mxu0
        %v5023 = vpop.f32.mrb[0].mxu0
        %v5024 = vadd.f32 %v4863, %v5023
        %v5025 = vpop.f32.mrb[0].mxu0
        %5026 = vdwg.mxu0
        %5027 = vmatprep.subr.bf16.mxu0 0
        %5028 = vmatpush1.bf16.msra.mxu0 %v4448
        %5029 = vmatprep.subr.bf16.mxu0 0
        %5030 = vmatpush1.bf16.msra.mxu0 %v4449
        %5031 = vmatprep.subr.bf16.mxu0 0
        %5032 = vmatpush1.bf16.msra.mxu0 %v4450
        %5033 = vmatprep.subr.bf16.mxu0 0
        %5034 = vmatpush1.bf16.msra.mxu0 %v4451
        %5035 = vmatprep.subr.bf16.mxu0 0
        %5036 = vmatpush1.bf16.msra.mxu0 %v4452
        %5037 = vmatprep.subr.bf16.mxu0 0
        %5038 = vmatpush1.bf16.msra.mxu0 %v4453
        %5039 = vmatprep.subr.bf16.mxu0 0
        %5040 = vmatpush1.bf16.msra.mxu0 %v4454
        %5041 = vmatprep.subr.bf16.mxu0 0
        %5042 = vmatpush1.bf16.msra.mxu0 %v4455
        %5043 = vmatprep.subr.bf16.mxu0 0
        %5044 = vmatpush1.bf16.msra.mxu0 %v4456
        %5045 = vmatprep.subr.bf16.mxu0 0
        %5046 = vmatpush1.bf16.msra.mxu0 %v4457
        %5047 = vmatprep.subr.bf16.mxu0 0
        %5048 = vmatpush1.bf16.msra.mxu0 %v4458
        %5049 = vmatprep.subr.bf16.mxu0 0
        %5050 = vmatpush1.bf16.msra.mxu0 %v4459
        %5051 = vmatprep.subr.bf16.mxu0 0
        %5052 = vmatpush1.bf16.msra.mxu0 %v4460
        %5053 = vmatprep.subr.bf16.mxu0 0
        %5054 = vmatpush1.bf16.msra.mxu0 %v4461
        %5055 = vmatprep.subr.bf16.mxu0 0
        %5056 = vmatpush1.bf16.msra.mxu0 %v4462
        %5057 = vmatprep.subr.bf16.mxu0 0
        %5058 = vmatpush1.bf16.msra.mxu0 %v4463
        %5059 = vmatprep.mubr.bf16.mxu0 %v3825
        %5060 = vmatmul.mubr.bf16.gmra.mrb[0].mxu0 %v3824
        %v5061 = vpop.f32.mrb[0].mxu0
        %v5062 = vadd.f32 %v4901, %v5061
        %v5063 = vpop.f32.mrb[0].mxu0
        %v5064 = vpop.f32.mrb[0].mxu0
        %v5065 = vadd.f32 %v4904, %v5064
        %v5066 = vpop.f32.mrb[0].mxu0
        %5067 = vmatprep.mubr.bf16.mxu0 %v3834
        %5068 = vmatmul.mubr.bf16.gmra.mrb[0].mxu0 %v3833
        %v5069 = vpop.f32.mrb[0].mxu0
        %v5070 = vadd.f32 %v4909, %v5069
        %v5071 = vpop.f32.mrb[0].mxu0
        %v5072 = vpop.f32.mrb[0].mxu0
        %v5073 = vadd.f32 %v4912, %v5072
        %v5074 = vpop.f32.mrb[0].mxu0
        %5075 = vmatprep.mubr.bf16.mxu0 %v3843
        %5076 = vmatmul.mubr.bf16.gmra.mrb[0].mxu0 %v3842
        %v5077 = vpop.f32.mrb[0].mxu0
        %v5078 = vadd.f32 %v4917, %v5077
        %v5079 = vpop.f32.mrb[0].mxu0
        %v5080 = vpop.f32.mrb[0].mxu0
        %v5081 = vadd.f32 %v4920, %v5080
        %v5082 = vpop.f32.mrb[0].mxu0
        %5083 = vmatprep.mubr.bf16.mxu0 %v3852
        %5084 = vmatmul.mubr.bf16.gmra.mrb[0].mxu0 %v3851
        %v5085 = vpop.f32.mrb[0].mxu0
        %v5086 = vadd.f32 %v4925, %v5085
        %v5087 = vpop.f32.mrb[0].mxu0
        %v5088 = vpop.f32.mrb[0].mxu0
        %v5089 = vadd.f32 %v4928, %v5088
        %v5090 = vpop.f32.mrb[0].mxu0
        %5091 = vmatprep.mubr.bf16.mxu0 %v3861
        %5092 = vmatmul.mubr.bf16.gmra.mrb[0].mxu0 %v3860
        %v5093 = vpop.f32.mrb[0].mxu0
        %v5094 = vadd.f32 %v4933, %v5093
        %v5095 = vpop.f32.mrb[0].mxu0
        %v5096 = vpop.f32.mrb[0].mxu0
        %v5097 = vadd.f32 %v4936, %v5096
        %v5098 = vpop.f32.mrb[0].mxu0
        %5099 = vmatprep.mubr.bf16.mxu0 %v3870
        %5100 = vmatmul.mubr.bf16.gmra.mrb[0].mxu0 %v3869
        %v5101 = vpop.f32.mrb[0].mxu0
        %v5102 = vadd.f32 %v4941, %v5101
        %v5103 = vpop.f32.mrb[0].mxu0
        %v5104 = vpop.f32.mrb[0].mxu0
        %v5105 = vadd.f32 %v4944, %v5104
        %v5106 = vpop.f32.mrb[0].mxu0
        %5107 = vmatprep.mubr.bf16.mxu0 %v3879
        %5108 = vmatmul.mubr.bf16.gmra.mrb[0].mxu0 %v3878
        %v5109 = vpop.f32.mrb[0].mxu0
        %v5110 = vadd.f32 %v4949, %v5109
        %v5111 = vpop.f32.mrb[0].mxu0
        %v5112 = vpop.f32.mrb[0].mxu0
        %v5113 = vadd.f32 %v4952, %v5112
        %v5114 = vpop.f32.mrb[0].mxu0
        %5115 = vmatprep.mubr.bf16.mxu0 %v3888
        %5116 = vmatmul.mubr.bf16.gmra.mrb[0].mxu0 %v3887
        %v5117 = vpop.f32.mrb[0].mxu0
        %v5118 = vadd.f32 %v4957, %v5117
        %v5119 = vpop.f32.mrb[0].mxu0
        %v5120 = vpop.f32.mrb[0].mxu0
        %v5121 = vadd.f32 %v4960, %v5120
        %v5122 = vpop.f32.mrb[0].mxu0
        %5123 = vmatprep.mubr.bf16.mxu0 %v3897
        %5124 = vmatmul.mubr.bf16.gmra.mrb[0].mxu0 %v3896
        %v5125 = vpop.f32.mrb[0].mxu0
        %v5126 = vadd.f32 %v4965, %v5125
        %v5127 = vpop.f32.mrb[0].mxu0
        %v5128 = vpop.f32.mrb[0].mxu0
        %v5129 = vadd.f32 %v4968, %v5128
        %v5130 = vpop.f32.mrb[0].mxu0
        %5131 = vmatprep.mubr.bf16.mxu0 %v3906
        %5132 = vmatmul.mubr.bf16.gmra.mrb[0].mxu0 %v3905
        %v5133 = vpop.f32.mrb[0].mxu0
        %v5134 = vadd.f32 %v4973, %v5133
        %v5135 = vpop.f32.mrb[0].mxu0
        %v5136 = vpop.f32.mrb[0].mxu0
        %v5137 = vadd.f32 %v4976, %v5136
        %v5138 = vpop.f32.mrb[0].mxu0
        %5139 = vmatprep.mubr.bf16.mxu0 %v3915
        %5140 = vmatmul.mubr.bf16.gmra.mrb[0].mxu0 %v3914
        %v5141 = vpop.f32.mrb[0].mxu0
        %v5142 = vadd.f32 %v4981, %v5141
        %v5143 = vpop.f32.mrb[0].mxu0
        %v5144 = vpop.f32.mrb[0].mxu0
        %v5145 = vadd.f32 %v4984, %v5144
        %v5146 = vpop.f32.mrb[0].mxu0
        %5147 = vmatprep.mubr.bf16.mxu0 %v3924
        %5148 = vmatmul.mubr.bf16.gmra.mrb[0].mxu0 %v3923
        %v5149 = vpop.f32.mrb[0].mxu0
        %v5150 = vadd.f32 %v4989, %v5149
        %v5151 = vpop.f32.mrb[0].mxu0
        %v5152 = vpop.f32.mrb[0].mxu0
        %v5153 = vadd.f32 %v4992, %v5152
        %v5154 = vpop.f32.mrb[0].mxu0
        %5155 = vmatprep.mubr.bf16.mxu0 %v3933
        %5156 = vmatmul.mubr.bf16.gmra.mrb[0].mxu0 %v3932
        %v5157 = vpop.f32.mrb[0].mxu0
        %v5158 = vadd.f32 %v4997, %v5157
        %v5159 = vpop.f32.mrb[0].mxu0
        %v5160 = vpop.f32.mrb[0].mxu0
        %v5161 = vadd.f32 %v5000, %v5160
        %v5162 = vpop.f32.mrb[0].mxu0
        %5163 = vmatprep.mubr.bf16.mxu0 %v3942
        %5164 = vmatmul.mubr.bf16.gmra.mrb[0].mxu0 %v3941
        %v5165 = vpop.f32.mrb[0].mxu0
        %v5166 = vadd.f32 %v5005, %v5165
        %v5167 = vpop.f32.mrb[0].mxu0
        %v5168 = vpop.f32.mrb[0].mxu0
        %v5169 = vadd.f32 %v5008, %v5168
        %v5170 = vpop.f32.mrb[0].mxu0
        %5171 = vmatprep.mubr.bf16.mxu0 %v3951
        %5172 = vmatmul.mubr.bf16.gmra.mrb[0].mxu0 %v3950
        %v5173 = vpop.f32.mrb[0].mxu0
        %v5174 = vadd.f32 %v5013, %v5173
        %v5175 = vpop.f32.mrb[0].mxu0
        %v5176 = vpop.f32.mrb[0].mxu0
        %v5177 = vadd.f32 %v5016, %v5176
        %v5178 = vpop.f32.mrb[0].mxu0
        %5179 = vmatprep.mubr.bf16.mxu0 %v3960
        %5180 = vmatmul.mubr.bf16.gmra.mrb[0].mxu0 %v3959
        %v5181 = vpop.f32.mrb[0].mxu0
        %v5182 = vadd.f32 %v5021, %v5181
        %v5183 = vpop.f32.mrb[0].mxu0
        %v5184 = vpop.f32.mrb[0].mxu0
        %v5185 = vadd.f32 %v5024, %v5184
        %v5186 = vpop.f32.mrb[0].mxu0
        %5187 = vdwg.mxu0
        %5188 = vmatprep.subr.bf16.mxu0 0
        %5189 = vmatpush1.bf16.msra.mxu0 %v4464
        %5190 = vmatprep.subr.bf16.mxu0 0
        %5191 = vmatpush1.bf16.msra.mxu0 %v4465
        %5192 = vmatprep.subr.bf16.mxu0 0
        %5193 = vmatpush1.bf16.msra.mxu0 %v4466
        %5194 = vmatprep.subr.bf16.mxu0 0
        %5195 = vmatpush1.bf16.msra.mxu0 %v4467
        %5196 = vmatprep.subr.bf16.mxu0 0
        %5197 = vmatpush1.bf16.msra.mxu0 %v4468
        %5198 = vmatprep.subr.bf16.mxu0 0
        %5199 = vmatpush1.bf16.msra.mxu0 %v4469
        %5200 = vmatprep.subr.bf16.mxu0 0
        %5201 = vmatpush1.bf16.msra.mxu0 %v4470
        %5202 = vmatprep.subr.bf16.mxu0 0
        %5203 = vmatpush1.bf16.msra.mxu0 %v4471
        %5204 = vmatprep.subr.bf16.mxu0 0
        %5205 = vmatpush1.bf16.msra.mxu0 0
        %5206 = vmatprep.subr.bf16.mxu0 0
        %5207 = vmatpush1.bf16.msra.mxu0 0
        %5208 = vmatprep.subr.bf16.mxu0 0
        %5209 = vmatpush1.bf16.msra.mxu0 0
        %5210 = vmatprep.subr.bf16.mxu0 0
        %5211 = vmatpush1.bf16.msra.mxu0 0
        %5212 = vmatprep.subr.bf16.mxu0 0
        %5213 = vmatpush1.bf16.msra.mxu0 0
        %5214 = vmatprep.subr.bf16.mxu0 0
        %5215 = vmatpush1.bf16.msra.mxu0 0
        %5216 = vmatprep.subr.bf16.mxu0 0
        %5217 = vmatpush1.bf16.msra.mxu0 0
        %5218 = vmatprep.subr.bf16.mxu0 0
        %5219 = vmatpush1.bf16.msra.mxu0 0
        %5220 = vmatprep.mubr.bf16.mxu0 0
        %5221 = vmatmul.mubr.bf16.gmra.mrb[0].mxu0 %v3826
        %v5222 = vpop.f32.mrb[0].mxu0
        %v5223 = vadd.f32 %v5062, %v5222
        %v5224 = vpop.f32.mrb[0].mxu0
        %v5225 = vpop.f32.mrb[0].mxu0
        %v5226 = vadd.f32 %v5065, %v5225
        %v5227 = vpop.f32.mrb[0].mxu0
        %5228 = vmatprep.mubr.bf16.mxu0 0
        %5229 = vmatmul.mubr.bf16.gmra.mrb[0].mxu0 %v3835
        %v5230 = vpop.f32.mrb[0].mxu0
        %v5231 = vadd.f32 %v5070, %v5230
        %v5232 = vpop.f32.mrb[0].mxu0
        %v5233 = vpop.f32.mrb[0].mxu0
        %v5234 = vadd.f32 %v5073, %v5233
        %v5235 = vpop.f32.mrb[0].mxu0
        %5236 = vmatprep.mubr.bf16.mxu0 0
        %5237 = vmatmul.mubr.bf16.gmra.mrb[0].mxu0 %v3844
        %v5238 = vpop.f32.mrb[0].mxu0
        %v5239 = vadd.f32 %v5078, %v5238
        %v5240 = vpop.f32.mrb[0].mxu0
        %v5241 = vpop.f32.mrb[0].mxu0
        %v5242 = vadd.f32 %v5081, %v5241
        %v5243 = vpop.f32.mrb[0].mxu0
        %5244 = vmatprep.mubr.bf16.mxu0 0
        %5245 = vmatmul.mubr.bf16.gmra.mrb[0].mxu0 %v3853
        %v5246 = vpop.f32.mrb[0].mxu0
        %v5247 = vadd.f32 %v5086, %v5246
        %v5248 = vpop.f32.mrb[0].mxu0
        %v5249 = vpop.f32.mrb[0].mxu0
        %v5250 = vadd.f32 %v5089, %v5249
        %v5251 = vpop.f32.mrb[0].mxu0
        %5252 = vmatprep.mubr.bf16.mxu0 0
        %5253 = vmatmul.mubr.bf16.gmra.mrb[0].mxu0 %v3862
        %v5254 = vpop.f32.mrb[0].mxu0
        %v5255 = vadd.f32 %v5094, %v5254
        %v5256 = vpop.f32.mrb[0].mxu0
        %v5257 = vpop.f32.mrb[0].mxu0
        %v5258 = vadd.f32 %v5097, %v5257
        %v5259 = vpop.f32.mrb[0].mxu0
        %5260 = vmatprep.mubr.bf16.mxu0 0
        %5261 = vmatmul.mubr.bf16.gmra.mrb[0].mxu0 %v3871
        %v5262 = vpop.f32.mrb[0].mxu0
        %v5263 = vadd.f32 %v5102, %v5262
        %v5264 = vpop.f32.mrb[0].mxu0
        %v5265 = vpop.f32.mrb[0].mxu0
        %v5266 = vadd.f32 %v5105, %v5265
        %v5267 = vpop.f32.mrb[0].mxu0
        %5268 = vmatprep.mubr.bf16.mxu0 0
        %5269 = vmatmul.mubr.bf16.gmra.mrb[0].mxu0 %v3880
        %v5270 = vpop.f32.mrb[0].mxu0
        %v5271 = vadd.f32 %v5110, %v5270
        %v5272 = vpop.f32.mrb[0].mxu0
        %v5273 = vpop.f32.mrb[0].mxu0
        %v5274 = vadd.f32 %v5113, %v5273
        %v5275 = vpop.f32.mrb[0].mxu0
        %5276 = vmatprep.mubr.bf16.mxu0 0
        %5277 = vmatmul.mubr.bf16.gmra.mrb[0].mxu0 %v3889
        %v5278 = vpop.f32.mrb[0].mxu0
        %v5279 = vadd.f32 %v5118, %v5278
        %v5280 = vpop.f32.mrb[0].mxu0
        %v5281 = vpop.f32.mrb[0].mxu0
        %v5282 = vadd.f32 %v5121, %v5281
        %v5283 = vpop.f32.mrb[0].mxu0
        %5284 = vmatprep.mubr.bf16.mxu0 0
        %5285 = vmatmul.mubr.bf16.gmra.mrb[0].mxu0 %v3898
        %v5286 = vpop.f32.mrb[0].mxu0
        %v5287 = vadd.f32 %v5126, %v5286
        %v5288 = vpop.f32.mrb[0].mxu0
        %v5289 = vpop.f32.mrb[0].mxu0
        %v5290 = vadd.f32 %v5129, %v5289
        %v5291 = vpop.f32.mrb[0].mxu0
        %5292 = vmatprep.mubr.bf16.mxu0 0
        %5293 = vmatmul.mubr.bf16.gmra.mrb[0].mxu0 %v3907
        %v5294 = vpop.f32.mrb[0].mxu0
        %v5295 = vadd.f32 %v5134, %v5294
        %v5296 = vpop.f32.mrb[0].mxu0
        %v5297 = vpop.f32.mrb[0].mxu0
        %v5298 = vadd.f32 %v5137, %v5297
        %v5299 = vpop.f32.mrb[0].mxu0
        %5300 = vmatprep.mubr.bf16.mxu0 0
        %5301 = vmatmul.mubr.bf16.gmra.mrb[0].mxu0 %v3916
        %v5302 = vpop.f32.mrb[0].mxu0
        %v5303 = vadd.f32 %v5142, %v5302
        %v5304 = vpop.f32.mrb[0].mxu0
        %v5305 = vpop.f32.mrb[0].mxu0
        %v5306 = vadd.f32 %v5145, %v5305
        %v5307 = vpop.f32.mrb[0].mxu0
        %5308 = vmatprep.mubr.bf16.mxu0 0
        %5309 = vmatmul.mubr.bf16.gmra.mrb[0].mxu0 %v3925
        %v5310 = vpop.f32.mrb[0].mxu0
        %v5311 = vadd.f32 %v5150, %v5310
        %v5312 = vpop.f32.mrb[0].mxu0
        %v5313 = vpop.f32.mrb[0].mxu0
        %v5314 = vadd.f32 %v5153, %v5313
        %v5315 = vpop.f32.mrb[0].mxu0
        %5316 = vmatprep.mubr.bf16.mxu0 0
        %5317 = vmatmul.mubr.bf16.gmra.mrb[0].mxu0 %v3934
        %v5318 = vpop.f32.mrb[0].mxu0
        %v5319 = vadd.f32 %v5158, %v5318
        %v5320 = vpop.f32.mrb[0].mxu0
        %v5321 = vpop.f32.mrb[0].mxu0
        %v5322 = vadd.f32 %v5161, %v5321
        %v5323 = vpop.f32.mrb[0].mxu0
        %5324 = vmatprep.mubr.bf16.mxu0 0
        %5325 = vmatmul.mubr.bf16.gmra.mrb[0].mxu0 %v3943
        %v5326 = vpop.f32.mrb[0].mxu0
        %v5327 = vadd.f32 %v5166, %v5326
        %v5328 = vpop.f32.mrb[0].mxu0
        %v5329 = vpop.f32.mrb[0].mxu0
        %v5330 = vadd.f32 %v5169, %v5329
        %v5331 = vpop.f32.mrb[0].mxu0
        %5332 = vmatprep.mubr.bf16.mxu0 0
        %5333 = vmatmul.mubr.bf16.gmra.mrb[0].mxu0 %v3952
        %v5334 = vpop.f32.mrb[0].mxu0
        %v5335 = vadd.f32 %v5174, %v5334
        %v5336 = vpop.f32.mrb[0].mxu0
        %v5337 = vpop.f32.mrb[0].mxu0
        %v5338 = vadd.f32 %v5177, %v5337
        %v5339 = vpop.f32.mrb[0].mxu0
        %5340 = vmatprep.mubr.bf16.mxu0 0
        %5341 = vmatmul.mubr.bf16.gmra.mrb[0].mxu0 %v3961
        %v5342 = vpop.f32.mrb[0].mxu0
        %v5343 = vadd.f32 %v5182, %v5342
        %v5344 = vpop.f32.mrb[0].mxu0
        %v5345 = vpop.f32.mrb[0].mxu0
        %v5346 = vadd.f32 %v5185, %v5345
        %v5347 = vpop.f32.mrb[0].mxu0
        %5348 = vdwg.mxu0
        %v5349 = vmax.f32 %v5223, 0.0
        %v5350 = vmax.f32 %v5226, 0.0
        %v5351 = vmax.f32 %v5231, 0.0
        %v5352 = vmax.f32 %v5234, 0.0
        %v5353 = vmax.f32 %v5239, 0.0
        %v5354 = vmax.f32 %v5242, 0.0
        %v5355 = vmax.f32 %v5247, 0.0
        %v5356 = vmax.f32 %v5250, 0.0
        %v5357 = vmax.f32 %v5255, 0.0
        %v5358 = vmax.f32 %v5258, 0.0
        %v5359 = vmax.f32 %v5263, 0.0
        %v5360 = vmax.f32 %v5266, 0.0
        %v5361 = vmax.f32 %v5271, 0.0
        %v5362 = vmax.f32 %v5274, 0.0
        %v5363 = vmax.f32 %v5279, 0.0
        %v5364 = vmax.f32 %v5282, 0.0
        %v5365 = vmax.f32 %v5287, 0.0
        %v5366 = vmax.f32 %v5290, 0.0
        %v5367 = vmax.f32 %v5295, 0.0
        %v5368 = vmax.f32 %v5298, 0.0
        %v5369 = vmax.f32 %v5303, 0.0
        %v5370 = vmax.f32 %v5306, 0.0
        %v5371 = vmax.f32 %v5311, 0.0
        %v5372 = vmax.f32 %v5314, 0.0
        %v5373 = vmax.f32 %v5319, 0.0
        %v5374 = vmax.f32 %v5322, 0.0
        %v5375 = vmax.f32 %v5327, 0.0
        %v5376 = vmax.f32 %v5330, 0.0
        %v5377 = vmax.f32 %v5335, 0.0
        %v5378 = vmax.f32 %v5338, 0.0
        %v5379 = vmax.f32 %v5343, 0.0
        %v5380 = vmax.f32 %v5346, 0.0
        %v5381 = vpack.c.bf16 %v5350, %v5349
        %v5382 = vpack.c.bf16 %v5352, %v5351
        %v5383 = vpack.c.bf16 %v5354, %v5353
        %v5384 = vpack.c.bf16 %v5356, %v5355
        %v5385 = vpack.c.bf16 %v5358, %v5357
        %v5386 = vpack.c.bf16 %v5360, %v5359
        %v5387 = vpack.c.bf16 %v5362, %v5361
        %v5388 = vpack.c.bf16 %v5364, %v5363
        %v5389 = vpack.c.bf16 %v5366, %v5365
        %v5390 = vpack.c.bf16 %v5368, %v5367
        %v5391 = vpack.c.bf16 %v5370, %v5369
        %v5392 = vpack.c.bf16 %v5372, %v5371
        %v5393 = vpack.c.bf16 %v5374, %v5373
        %v5394 = vpack.c.bf16 %v5376, %v5375
        %v5395 = vpack.c.bf16 %v5378, %v5377
        %v5396 = vpack.c.bf16 %v5380, %v5379
        %v5413 = vunpack.c.l.b16 %v5381
        %v5414 = vunpack.c.h.b16 %v5381
        %v5415 = vunpack.c.l.b16 %v5382
        %v5416 = vunpack.c.h.b16 %v5382
        %v5417 = vunpack.c.l.b16 %v5383
        %v5418 = vunpack.c.h.b16 %v5383
        %v5419 = vunpack.c.l.b16 %v5384
        %v5420 = vunpack.c.h.b16 %v5384
        %v5421 = vunpack.c.l.b16 %v5385
        %v5422 = vunpack.c.h.b16 %v5385
        %v5423 = vunpack.c.l.b16 %v5386
        %v5424 = vunpack.c.h.b16 %v5386
        %v5425 = vunpack.c.l.b16 %v5387
        %v5426 = vunpack.c.h.b16 %v5387
        %v5427 = vunpack.c.l.b16 %v5388
        %v5428 = vunpack.c.h.b16 %v5388
        %v5429 = vunpack.c.l.b16 %v5389
        %v5430 = vunpack.c.h.b16 %v5389
        %v5431 = vunpack.c.l.b16 %v5390
        %v5432 = vunpack.c.h.b16 %v5390
        %v5433 = vunpack.c.l.b16 %v5391
        %v5434 = vunpack.c.h.b16 %v5391
        %v5435 = vunpack.c.l.b16 %v5392
        %v5436 = vunpack.c.h.b16 %v5392
        %v5437 = vunpack.c.l.b16 %v5393
        %v5438 = vunpack.c.h.b16 %v5393
        %v5439 = vunpack.c.l.b16 %v5394
        %v5440 = vunpack.c.h.b16 %v5394
        %v5441 = vunpack.c.l.b16 %v5395
        %v5442 = vunpack.c.h.b16 %v5395
        %v5443 = vunpack.c.l.b16 %v5396
        %v5444 = vunpack.c.h.b16 %v5396
        %v5445 = vpack.c.b16 %v5413, %v5413
        %v5446 = vpack.c.b16 %v5414, %v5414
        %v5447 = vpack.c.b16 %v5415, %v5415
        %v5448 = vpack.c.b16 %v5416, %v5416
        %v5449 = vpack.c.b16 %v5417, %v5417
        %v5450 = vpack.c.b16 %v5418, %v5418
        %v5451 = vpack.c.b16 %v5419, %v5419
        %v5452 = vpack.c.b16 %v5420, %v5420
        %v5453 = vpack.c.b16 %v5421, %v5421
        %v5454 = vpack.c.b16 %v5422, %v5422
        %v5455 = vpack.c.b16 %v5423, %v5423
        %v5456 = vpack.c.b16 %v5424, %v5424
        %v5457 = vpack.c.b16 %v5425, %v5425
        %v5458 = vpack.c.b16 %v5426, %v5426
        %v5459 = vpack.c.b16 %v5427, %v5427
        %v5460 = vpack.c.b16 %v5428, %v5428
        %v5461 = vpack.c.b16 %v5429, %v5429
        %v5462 = vpack.c.b16 %v5430, %v5430
        %v5463 = vpack.c.b16 %v5431, %v5431
        %v5464 = vpack.c.b16 %v5432, %v5432
        %v5465 = vpack.c.b16 %v5433, %v5433
        %v5466 = vpack.c.b16 %v5434, %v5434
        %v5467 = vpack.c.b16 %v5435, %v5435
        %v5468 = vpack.c.b16 %v5436, %v5436
        %v5469 = vpack.c.b16 %v5437, %v5437
        %v5470 = vpack.c.b16 %v5438, %v5438
        %v5471 = vpack.c.b16 %v5439, %v5439
        %v5472 = vpack.c.b16 %v5440, %v5440
        %v5473 = vpack.c.b16 %v5441, %v5441
        %v5474 = vpack.c.b16 %v5442, %v5442
        %v5475 = vpack.c.b16 %v5443, %v5443
        %v5476 = vpack.c.b16 %v5444, %v5444
        %v5478 = vshrl.u32 %v5445, 16
        %v5480 = vrot.slane %v5478, 7
        %v5481 = vshll.u32 %v5445, 16
        %v5483 = vor.u32 %v5480, %v5481
        %v5484 = vrot.slane %v5480, 4
        %v5486 = vshrl.u32 %v5446, 16
        %v5488 = vrot.slane %v5486, 7
        %v5489 = vshll.u32 %v5446, 16
        %v5491 = vor.u32 %v5488, %v5489
        %v5492 = vsel %vm426, %v5484, %v5491
        %v5493 = vrot.slane %v5488, 4
        %v5495 = vshrl.u32 %v5447, 16
        %v5497 = vrot.slane %v5495, 7
        %v5498 = vshll.u32 %v5447, 16
        %v5500 = vor.u32 %v5497, %v5498
        %v5501 = vrot.slane %v5497, 4
        %v5503 = vshrl.u32 %v5448, 16
        %v5505 = vrot.slane %v5503, 7
        %v5506 = vshll.u32 %v5448, 16
        %v5508 = vor.u32 %v5505, %v5506
        %v5509 = vsel %vm426, %v5501, %v5508
        %v5510 = vrot.slane %v5505, 4
        %v5512 = vshrl.u32 %v5449, 16
        %v5514 = vrot.slane %v5512, 7
        %v5515 = vshll.u32 %v5449, 16
        %v5517 = vor.u32 %v5514, %v5515
        %v5518 = vrot.slane %v5514, 4
        %v5520 = vshrl.u32 %v5450, 16
        %v5522 = vrot.slane %v5520, 7
        %v5523 = vshll.u32 %v5450, 16
        %v5525 = vor.u32 %v5522, %v5523
        %v5526 = vsel %vm426, %v5518, %v5525
        %v5527 = vrot.slane %v5522, 4
        %v5529 = vshrl.u32 %v5451, 16
        %v5531 = vrot.slane %v5529, 7
        %v5532 = vshll.u32 %v5451, 16
        %v5534 = vor.u32 %v5531, %v5532
        %v5535 = vrot.slane %v5531, 4
        %v5537 = vshrl.u32 %v5452, 16
        %v5539 = vrot.slane %v5537, 7
        %v5540 = vshll.u32 %v5452, 16
        %v5542 = vor.u32 %v5539, %v5540
        %v5543 = vsel %vm426, %v5535, %v5542
        %v5544 = vrot.slane %v5539, 4
        %v5546 = vshrl.u32 %v5453, 16
        %v5548 = vrot.slane %v5546, 7
        %v5549 = vshll.u32 %v5453, 16
        %v5551 = vor.u32 %v5548, %v5549
        %v5552 = vrot.slane %v5548, 4
        %v5554 = vshrl.u32 %v5454, 16
        %v5556 = vrot.slane %v5554, 7
        %v5557 = vshll.u32 %v5454, 16
        %v5559 = vor.u32 %v5556, %v5557
        %v5560 = vsel %vm426, %v5552, %v5559
        %v5561 = vrot.slane %v5556, 4
        %v5563 = vshrl.u32 %v5455, 16
        %v5565 = vrot.slane %v5563, 7
        %v5566 = vshll.u32 %v5455, 16
        %v5568 = vor.u32 %v5565, %v5566
        %v5569 = vrot.slane %v5565, 4
        %v5571 = vshrl.u32 %v5456, 16
        %v5573 = vrot.slane %v5571, 7
        %v5574 = vshll.u32 %v5456, 16
        %v5576 = vor.u32 %v5573, %v5574
        %v5577 = vsel %vm426, %v5569, %v5576
        %v5578 = vrot.slane %v5573, 4
        %v5580 = vshrl.u32 %v5457, 16
        %v5582 = vrot.slane %v5580, 7
        %v5583 = vshll.u32 %v5457, 16
        %v5585 = vor.u32 %v5582, %v5583
        %v5586 = vrot.slane %v5582, 4
        %v5588 = vshrl.u32 %v5458, 16
        %v5590 = vrot.slane %v5588, 7
        %v5591 = vshll.u32 %v5458, 16
        %v5593 = vor.u32 %v5590, %v5591
        %v5594 = vsel %vm426, %v5586, %v5593
        %v5595 = vrot.slane %v5590, 4
        %v5597 = vshrl.u32 %v5459, 16
        %v5599 = vrot.slane %v5597, 7
        %v5600 = vshll.u32 %v5459, 16
        %v5602 = vor.u32 %v5599, %v5600
        %v5603 = vrot.slane %v5599, 4
        %v5605 = vshrl.u32 %v5460, 16
        %v5607 = vrot.slane %v5605, 7
        %v5608 = vshll.u32 %v5460, 16
        %v5610 = vor.u32 %v5607, %v5608
        %v5611 = vsel %vm426, %v5603, %v5610
        %v5612 = vrot.slane %v5607, 4
        %v5614 = vshrl.u32 %v5461, 16
        %v5616 = vrot.slane %v5614, 7
        %v5617 = vshll.u32 %v5461, 16
        %v5619 = vor.u32 %v5616, %v5617
        %v5620 = vrot.slane %v5616, 4
        %v5622 = vshrl.u32 %v5462, 16
        %v5624 = vrot.slane %v5622, 7
        %v5625 = vshll.u32 %v5462, 16
        %v5627 = vor.u32 %v5624, %v5625
        %v5628 = vsel %vm426, %v5620, %v5627
        %v5629 = vrot.slane %v5624, 4
        %v5631 = vshrl.u32 %v5463, 16
        %v5633 = vrot.slane %v5631, 7
        %v5634 = vshll.u32 %v5463, 16
        %v5636 = vor.u32 %v5633, %v5634
        %v5637 = vrot.slane %v5633, 4
        %v5639 = vshrl.u32 %v5464, 16
        %v5641 = vrot.slane %v5639, 7
        %v5642 = vshll.u32 %v5464, 16
        %v5644 = vor.u32 %v5641, %v5642
        %v5645 = vsel %vm426, %v5637, %v5644
        %v5646 = vrot.slane %v5641, 4
        %v5648 = vshrl.u32 %v5465, 16
        %v5650 = vrot.slane %v5648, 7
        %v5651 = vshll.u32 %v5465, 16
        %v5653 = vor.u32 %v5650, %v5651
        %v5654 = vrot.slane %v5650, 4
        %v5656 = vshrl.u32 %v5466, 16
        %v5658 = vrot.slane %v5656, 7
        %v5659 = vshll.u32 %v5466, 16
        %v5661 = vor.u32 %v5658, %v5659
        %v5662 = vsel %vm426, %v5654, %v5661
        %v5663 = vrot.slane %v5658, 4
        %v5665 = vshrl.u32 %v5467, 16
        %v5667 = vrot.slane %v5665, 7
        %v5668 = vshll.u32 %v5467, 16
        %v5670 = vor.u32 %v5667, %v5668
        %v5671 = vrot.slane %v5667, 4
        %v5673 = vshrl.u32 %v5468, 16
        %v5675 = vrot.slane %v5673, 7
        %v5676 = vshll.u32 %v5468, 16
        %v5678 = vor.u32 %v5675, %v5676
        %v5679 = vsel %vm426, %v5671, %v5678
        %v5680 = vrot.slane %v5675, 4
        %v5682 = vshrl.u32 %v5469, 16
        %v5684 = vrot.slane %v5682, 7
        %v5685 = vshll.u32 %v5469, 16
        %v5687 = vor.u32 %v5684, %v5685
        %v5688 = vrot.slane %v5684, 4
        %v5690 = vshrl.u32 %v5470, 16
        %v5692 = vrot.slane %v5690, 7
        %v5693 = vshll.u32 %v5470, 16
        %v5695 = vor.u32 %v5692, %v5693
        %v5696 = vsel %vm426, %v5688, %v5695
        %v5697 = vrot.slane %v5692, 4
        %v5699 = vshrl.u32 %v5471, 16
        %v5701 = vrot.slane %v5699, 7
        %v5702 = vshll.u32 %v5471, 16
        %v5704 = vor.u32 %v5701, %v5702
        %v5705 = vrot.slane %v5701, 4
        %v5707 = vshrl.u32 %v5472, 16
        %v5709 = vrot.slane %v5707, 7
        %v5710 = vshll.u32 %v5472, 16
        %v5712 = vor.u32 %v5709, %v5710
        %v5713 = vsel %vm426, %v5705, %v5712
        %v5714 = vrot.slane %v5709, 4
        %v5716 = vshrl.u32 %v5473, 16
        %v5718 = vrot.slane %v5716, 7
        %v5719 = vshll.u32 %v5473, 16
        %v5721 = vor.u32 %v5718, %v5719
        %v5722 = vrot.slane %v5718, 4
        %v5724 = vshrl.u32 %v5474, 16
        %v5726 = vrot.slane %v5724, 7
        %v5727 = vshll.u32 %v5474, 16
        %v5729 = vor.u32 %v5726, %v5727
        %v5730 = vsel %vm426, %v5722, %v5729
        %v5731 = vrot.slane %v5726, 4
        %v5733 = vshrl.u32 %v5475, 16
        %v5735 = vrot.slane %v5733, 7
        %v5736 = vshll.u32 %v5475, 16
        %v5738 = vor.u32 %v5735, %v5736
        %v5739 = vrot.slane %v5735, 4
        %v5741 = vshrl.u32 %v5476, 16
        %v5743 = vrot.slane %v5741, 7
        %v5744 = vshll.u32 %v5476, 16
        %v5746 = vor.u32 %v5743, %v5744
        %v5747 = vsel %vm426, %v5739, %v5746
        %v5748 = vrot.slane %v5743, 4
        %s5797 = scalar_lea.vmem [#allocation3], 12
        %v5798 = vld [vmem:[%s5797] sm:$0xf]
        %v5799 = vsel %vm749, %v5483, %v5798
        %5800 = vst [vmem:[%s5797] sm:$0xf] %v5799
        %5801 = vst [vmem:[%s5797 + $0x4] sm:$0xf] %v5492
        %v5802 = vld [vmem:[%s5797 + $0x8] sm:$0x1]
        %v5803 = vsel %vm282, %v5493, %v5802
        %5804 = vst [vmem:[%s5797 + $0x8] sm:$0x1] %v5803
        %v5805 = vld [vmem:[%s5797 + $0xc] sm:$0xf]
        %v5806 = vsel %vm749, %v5500, %v5805
        %5807 = vst [vmem:[%s5797 + $0xc] sm:$0xf] %v5806
        %5808 = vst [vmem:[%s5797 + $0x10] sm:$0xf] %v5509
        %v5809 = vld [vmem:[%s5797 + $0x14] sm:$0x1]
        %v5810 = vsel %vm282, %v5510, %v5809
        %5811 = vst [vmem:[%s5797 + $0x14] sm:$0x1] %v5810
        %v5812 = vld [vmem:[%s5797 + $0x18] sm:$0xf]
        %v5813 = vsel %vm749, %v5517, %v5812
        %5814 = vst [vmem:[%s5797 + $0x18] sm:$0xf] %v5813
        %5815 = vst [vmem:[%s5797 + $0x1c] sm:$0xf] %v5526
        %v5816 = vld [vmem:[%s5797 + $0x20] sm:$0x1]
        %v5817 = vsel %vm282, %v5527, %v5816
        %5818 = vst [vmem:[%s5797 + $0x20] sm:$0x1] %v5817
        %v5819 = vld [vmem:[%s5797 + $0x24] sm:$0xf]
        %v5820 = vsel %vm749, %v5534, %v5819
        %5821 = vst [vmem:[%s5797 + $0x24] sm:$0xf] %v5820
        %5822 = vst [vmem:[%s5797 + $0x28] sm:$0xf] %v5543
        %v5823 = vld [vmem:[%s5797 + $0x2c] sm:$0x1]
        %v5824 = vsel %vm282, %v5544, %v5823
        %5825 = vst [vmem:[%s5797 + $0x2c] sm:$0x1] %v5824
        %v5826 = vld [vmem:[%s5797 + $0x30] sm:$0xf]
        %v5827 = vsel %vm749, %v5551, %v5826
        %5828 = vst [vmem:[%s5797 + $0x30] sm:$0xf] %v5827
        %5829 = vst [vmem:[%s5797 + $0x34] sm:$0xf] %v5560
        %v5830 = vld [vmem:[%s5797 + $0x38] sm:$0x1]
        %v5831 = vsel %vm282, %v5561, %v5830
        %5832 = vst [vmem:[%s5797 + $0x38] sm:$0x1] %v5831
        %v5833 = vld [vmem:[%s5797 + $0x3c] sm:$0xf]
        %v5834 = vsel %vm749, %v5568, %v5833
        %5835 = vst [vmem:[%s5797 + $0x3c] sm:$0xf] %v5834
        %5836 = vst [vmem:[%s5797 + $0x40] sm:$0xf] %v5577
        %v5837 = vld [vmem:[%s5797 + $0x44] sm:$0x1]
        %v5838 = vsel %vm282, %v5578, %v5837
        %5839 = vst [vmem:[%s5797 + $0x44] sm:$0x1] %v5838
        %v5840 = vld [vmem:[%s5797 + $0x48] sm:$0xf]
        %v5841 = vsel %vm749, %v5585, %v5840
        %5842 = vst [vmem:[%s5797 + $0x48] sm:$0xf] %v5841
        %5843 = vst [vmem:[%s5797 + $0x4c] sm:$0xf] %v5594
        %v5844 = vld [vmem:[%s5797 + $0x50] sm:$0x1]
        %v5845 = vsel %vm282, %v5595, %v5844
        %5846 = vst [vmem:[%s5797 + $0x50] sm:$0x1] %v5845
        %v5847 = vld [vmem:[%s5797 + $0x54] sm:$0xf]
        %v5848 = vsel %vm749, %v5602, %v5847
        %5849 = vst [vmem:[%s5797 + $0x54] sm:$0xf] %v5848
        %5850 = vst [vmem:[%s5797 + $0x58] sm:$0xf] %v5611
        %v5851 = vld [vmem:[%s5797 + $0x5c] sm:$0x1]
        %v5852 = vsel %vm282, %v5612, %v5851
        %5853 = vst [vmem:[%s5797 + $0x5c] sm:$0x1] %v5852
        %v5854 = vld [vmem:[%s5797 + $0x60] sm:$0xf]
        %v5855 = vsel %vm749, %v5619, %v5854
        %5856 = vst [vmem:[%s5797 + $0x60] sm:$0xf] %v5855
        %5857 = vst [vmem:[%s5797 + $0x64] sm:$0xf] %v5628
        %v5858 = vld [vmem:[%s5797 + $0x68] sm:$0x1]
        %v5859 = vsel %vm282, %v5629, %v5858
        %5860 = vst [vmem:[%s5797 + $0x68] sm:$0x1] %v5859
        %v5861 = vld [vmem:[%s5797 + $0x6c] sm:$0xf]
        %v5862 = vsel %vm749, %v5636, %v5861
        %5863 = vst [vmem:[%s5797 + $0x6c] sm:$0xf] %v5862
        %5864 = vst [vmem:[%s5797 + $0x70] sm:$0xf] %v5645
        %v5865 = vld [vmem:[%s5797 + $0x74] sm:$0x1]
        %v5866 = vsel %vm282, %v5646, %v5865
        %5867 = vst [vmem:[%s5797 + $0x74] sm:$0x1] %v5866
        %v5868 = vld [vmem:[%s5797 + $0x78] sm:$0xf]
        %v5869 = vsel %vm749, %v5653, %v5868
        %5870 = vst [vmem:[%s5797 + $0x78] sm:$0xf] %v5869
        %5871 = vst [vmem:[%s5797 + $0x7c] sm:$0xf] %v5662
        %v5872 = vld [vmem:[%s5797 + $0x80] sm:$0x1]
        %v5873 = vsel %vm282, %v5663, %v5872
        %5874 = vst [vmem:[%s5797 + $0x80] sm:$0x1] %v5873
        %v5875 = vld [vmem:[%s5797 + $0x84] sm:$0xf]
        %v5876 = vsel %vm749, %v5670, %v5875
        %5877 = vst [vmem:[%s5797 + $0x84] sm:$0xf] %v5876
        %5878 = vst [vmem:[%s5797 + $0x88] sm:$0xf] %v5679
        %v5879 = vld [vmem:[%s5797 + $0x8c] sm:$0x1]
        %v5880 = vsel %vm282, %v5680, %v5879
        %5881 = vst [vmem:[%s5797 + $0x8c] sm:$0x1] %v5880
        %v5882 = vld [vmem:[%s5797 + $0x90] sm:$0xf]
        %v5883 = vsel %vm749, %v5687, %v5882
        %5884 = vst [vmem:[%s5797 + $0x90] sm:$0xf] %v5883
        %5885 = vst [vmem:[%s5797 + $0x94] sm:$0xf] %v5696
        %v5886 = vld [vmem:[%s5797 + $0x98] sm:$0x1]
        %v5887 = vsel %vm282, %v5697, %v5886
        %5888 = vst [vmem:[%s5797 + $0x98] sm:$0x1] %v5887
        %v5889 = vld [vmem:[%s5797 + $0x9c] sm:$0xf]
        %v5890 = vsel %vm749, %v5704, %v5889
        %5891 = vst [vmem:[%s5797 + $0x9c] sm:$0xf] %v5890
        %5892 = vst [vmem:[%s5797 + $0xa0] sm:$0xf] %v5713
        %v5893 = vld [vmem:[%s5797 + $0xa4] sm:$0x1]
        %v5894 = vsel %vm282, %v5714, %v5893
        %5895 = vst [vmem:[%s5797 + $0xa4] sm:$0x1] %v5894
        %v5896 = vld [vmem:[%s5797 + $0xa8] sm:$0xf]
        %v5897 = vsel %vm749, %v5721, %v5896
        %5898 = vst [vmem:[%s5797 + $0xa8] sm:$0xf] %v5897
        %5899 = vst [vmem:[%s5797 + $0xac] sm:$0xf] %v5730
        %v5900 = vld [vmem:[%s5797 + $0xb0] sm:$0x1]
        %v5901 = vsel %vm282, %v5731, %v5900
        %5902 = vst [vmem:[%s5797 + $0xb0] sm:$0x1] %v5901
        %v5903 = vld [vmem:[%s5797 + $0xb4] sm:$0xf]
        %v5904 = vsel %vm749, %v5738, %v5903
        %5905 = vst [vmem:[%s5797 + $0xb4] sm:$0xf] %v5904
        %5906 = vst [vmem:[%s5797 + $0xb8] sm:$0xf] %v5747
        %v5907 = vld [vmem:[%s5797 + $0xbc] sm:$0x1]
        %v5908 = vsel %vm282, %v5748, %v5907
        %5909 = vst [vmem:[%s5797 + $0xbc] sm:$0x1] %v5908
        %v5910 = vld [vmem:[#allocation3] sm:$0xf]
        %v5911 = vld [vmem:[#allocation3 + $0x4] sm:$0xf]
        %v5912 = vld [vmem:[#allocation3 + $0xc] sm:$0xf]
        %v5913 = vld [vmem:[#allocation3 + $0x10] sm:$0xf]
        %v5914 = vld [vmem:[#allocation3 + $0x18] sm:$0xf]
        %v5915 = vld [vmem:[#allocation3 + $0x1c] sm:$0xf]
        %v5916 = vld [vmem:[#allocation3 + $0x24] sm:$0xf]
        %v5917 = vld [vmem:[#allocation3 + $0x28] sm:$0xf]
        %v5918 = vld [vmem:[#allocation3 + $0x30] sm:$0xf]
        %v5919 = vld [vmem:[#allocation3 + $0x34] sm:$0xf]
        %v5920 = vld [vmem:[#allocation3 + $0x3c] sm:$0xf]
        %v5921 = vld [vmem:[#allocation3 + $0x40] sm:$0xf]
        %v5922 = vld [vmem:[#allocation3 + $0x48] sm:$0xf]
        %v5923 = vld [vmem:[#allocation3 + $0x4c] sm:$0xf]
        %v5924 = vld [vmem:[#allocation3 + $0x54] sm:$0xf]
        %v5925 = vld [vmem:[#allocation3 + $0x58] sm:$0xf]
        %v5926 = vld [vmem:[#allocation3 + $0x60] sm:$0xf]
        %v5927 = vld [vmem:[#allocation3 + $0x64] sm:$0xf]
        %v5928 = vld [vmem:[#allocation3 + $0x6c] sm:$0xf]
        %v5929 = vld [vmem:[#allocation3 + $0x70] sm:$0xf]
        %v5930 = vld [vmem:[#allocation3 + $0x78] sm:$0xf]
        %v5931 = vld [vmem:[#allocation3 + $0x7c] sm:$0xf]
        %v5932 = vld [vmem:[#allocation3 + $0x84] sm:$0xf]
        %v5933 = vld [vmem:[#allocation3 + $0x88] sm:$0xf]
        %v5934 = vld [vmem:[#allocation3 + $0x90] sm:$0xf]
        %v5935 = vld [vmem:[#allocation3 + $0x94] sm:$0xf]
        %v5936 = vld [vmem:[#allocation3 + $0x9c] sm:$0xf]
        %v5937 = vld [vmem:[#allocation3 + $0xa0] sm:$0xf]
        %v5938 = vld [vmem:[#allocation3 + $0xa8] sm:$0xf]
        %v5939 = vld [vmem:[#allocation3 + $0xac] sm:$0xf]
        %v5940 = vld [vmem:[#allocation3 + $0xb4] sm:$0xf]
        %v5941 = vld [vmem:[#allocation3 + $0xb8] sm:$0xf]
        %v5974 = vunpack.c.l.b16 %v5910
        %v5975 = vunpack.c.l.b16 %v5911
        %v5976 = vunpack.c.l.b16 %v5912
        %v5977 = vunpack.c.l.b16 %v5913
        %v5978 = vunpack.c.l.b16 %v5914
        %v5979 = vunpack.c.l.b16 %v5915
        %v5980 = vunpack.c.l.b16 %v5916
        %v5981 = vunpack.c.l.b16 %v5917
        %v5982 = vunpack.c.l.b16 %v5918
        %v5983 = vunpack.c.l.b16 %v5919
        %v5984 = vunpack.c.l.b16 %v5920
        %v5985 = vunpack.c.l.b16 %v5921
        %v5986 = vunpack.c.l.b16 %v5922
        %v5987 = vunpack.c.l.b16 %v5923
        %v5988 = vunpack.c.l.b16 %v5924
        %v5989 = vunpack.c.l.b16 %v5925
        %v5990 = vunpack.c.l.b16 %v5926
        %v5991 = vunpack.c.l.b16 %v5927
        %v5992 = vunpack.c.l.b16 %v5928
        %v5993 = vunpack.c.l.b16 %v5929
        %v5994 = vunpack.c.l.b16 %v5930
        %v5995 = vunpack.c.l.b16 %v5931
        %v5996 = vunpack.c.l.b16 %v5932
        %v5997 = vunpack.c.l.b16 %v5933
        %v5998 = vunpack.c.l.b16 %v5934
        %v5999 = vunpack.c.l.b16 %v5935
        %v6000 = vunpack.c.l.b16 %v5936
        %v6001 = vunpack.c.l.b16 %v5937
        %v6002 = vunpack.c.l.b16 %v5938
        %v6003 = vunpack.c.l.b16 %v5939
        %v6004 = vunpack.c.l.b16 %v5940
        %v6005 = vunpack.c.l.b16 %v5941
        %v6006 = vpack.c.b16 %v5975, %v5974
        %v6007 = vpack.c.b16 %v5977, %v5976
        %v6008 = vpack.c.b16 %v5979, %v5978
        %v6009 = vpack.c.b16 %v5981, %v5980
        %v6010 = vpack.c.b16 %v5983, %v5982
        %v6011 = vpack.c.b16 %v5985, %v5984
        %v6012 = vpack.c.b16 %v5987, %v5986
        %v6013 = vpack.c.b16 %v5989, %v5988
        %v6014 = vpack.c.b16 %v5991, %v5990
        %v6015 = vpack.c.b16 %v5993, %v5992
        %v6016 = vpack.c.b16 %v5995, %v5994
        %v6017 = vpack.c.b16 %v5997, %v5996
        %v6018 = vpack.c.b16 %v5999, %v5998
        %v6019 = vpack.c.b16 %v6001, %v6000
        %v6020 = vpack.c.b16 %v6003, %v6002
        %v6021 = vpack.c.b16 %v6005, %v6004
        %6038 = vst [vmem:[#allocation4] sm:$0xff] %v6006
        %6039 = vst [vmem:[#allocation4 + $0x50] sm:$0xff] %v6007
        %6040 = vst [vmem:[#allocation4 + $0xa0] sm:$0xff] %v6008
        %6041 = vst [vmem:[#allocation4 + $0xf0] sm:$0xff] %v6009
        %6042 = vst [vmem:[#allocation4 + $0x140] sm:$0xff] %v6010
        %6043 = vst [vmem:[#allocation4 + $0x190] sm:$0xff] %v6011
        %6044 = vst [vmem:[#allocation4 + $0x1e0] sm:$0xff] %v6012
        %6045 = vst [vmem:[#allocation4 + $0x230] sm:$0xff] %v6013
        %6046 = vst [vmem:[#allocation4 + $0x280] sm:$0xff] %v6014
        %6047 = vst [vmem:[#allocation4 + $0x2d0] sm:$0xff] %v6015
        %6048 = vst [vmem:[#allocation4 + $0x320] sm:$0xff] %v6016
        %6049 = vst [vmem:[#allocation4 + $0x370] sm:$0xff] %v6017
        %6050 = vst [vmem:[#allocation4 + $0x3c0] sm:$0xff] %v6018
        %6051 = vst [vmem:[#allocation4 + $0x410] sm:$0xff] %v6019
        %6052 = vst [vmem:[#allocation4 + $0x460] sm:$0xff] %v6020
        %6053 = vst [vmem:[#allocation4 + $0x4b0] sm:$0xff] %v6021
        %v6054 = vld [vmem:[#allocation3] sm:$0xf]
        %v6055 = vld [vmem:[#allocation3 + $0x4] sm:$0xf]
        %v6056 = vld [vmem:[#allocation3 + $0x8] sm:$0x1]
        %v6057 = vld [vmem:[#allocation3 + $0xc] sm:$0xf]
        %v6058 = vld [vmem:[#allocation3 + $0x10] sm:$0xf]
        %v6059 = vld [vmem:[#allocation3 + $0x14] sm:$0x1]
        %v6060 = vld [vmem:[#allocation3 + $0x18] sm:$0xf]
        %v6061 = vld [vmem:[#allocation3 + $0x1c] sm:$0xf]
        %v6062 = vld [vmem:[#allocation3 + $0x20] sm:$0x1]
        %v6063 = vld [vmem:[#allocation3 + $0x24] sm:$0xf]
        %v6064 = vld [vmem:[#allocation3 + $0x28] sm:$0xf]
        %v6065 = vld [vmem:[#allocation3 + $0x2c] sm:$0x1]
        %v6066 = vld [vmem:[#allocation3 + $0x30] sm:$0xf]
        %v6067 = vld [vmem:[#allocation3 + $0x34] sm:$0xf]
        %v6068 = vld [vmem:[#allocation3 + $0x38] sm:$0x1]
        %v6069 = vld [vmem:[#allocation3 + $0x3c] sm:$0xf]
        %v6070 = vld [vmem:[#allocation3 + $0x40] sm:$0xf]
        %v6071 = vld [vmem:[#allocation3 + $0x44] sm:$0x1]
        %v6072 = vld [vmem:[#allocation3 + $0x48] sm:$0xf]
        %v6073 = vld [vmem:[#allocation3 + $0x4c] sm:$0xf]
        %v6074 = vld [vmem:[#allocation3 + $0x50] sm:$0x1]
        %v6075 = vld [vmem:[#allocation3 + $0x54] sm:$0xf]
        %v6076 = vld [vmem:[#allocation3 + $0x58] sm:$0xf]
        %v6077 = vld [vmem:[#allocation3 + $0x5c] sm:$0x1]
        %v6078 = vld [vmem:[#allocation3 + $0x60] sm:$0xf]
        %v6079 = vld [vmem:[#allocation3 + $0x64] sm:$0xf]
        %v6080 = vld [vmem:[#allocation3 + $0x68] sm:$0x1]
        %v6081 = vld [vmem:[#allocation3 + $0x6c] sm:$0xf]
        %v6082 = vld [vmem:[#allocation3 + $0x70] sm:$0xf]
        %v6083 = vld [vmem:[#allocation3 + $0x74] sm:$0x1]
        %v6084 = vld [vmem:[#allocation3 + $0x78] sm:$0xf]
        %v6085 = vld [vmem:[#allocation3 + $0x7c] sm:$0xf]
        %v6086 = vld [vmem:[#allocation3 + $0x80] sm:$0x1]
        %v6087 = vld [vmem:[#allocation3 + $0x84] sm:$0xf]
        %v6088 = vld [vmem:[#allocation3 + $0x88] sm:$0xf]
        %v6089 = vld [vmem:[#allocation3 + $0x8c] sm:$0x1]
        %v6090 = vld [vmem:[#allocation3 + $0x90] sm:$0xf]
        %v6091 = vld [vmem:[#allocation3 + $0x94] sm:$0xf]
        %v6092 = vld [vmem:[#allocation3 + $0x98] sm:$0x1]
        %v6093 = vld [vmem:[#allocation3 + $0x9c] sm:$0xf]
        %v6094 = vld [vmem:[#allocation3 + $0xa0] sm:$0xf]
        %v6095 = vld [vmem:[#allocation3 + $0xa4] sm:$0x1]
        %v6096 = vld [vmem:[#allocation3 + $0xa8] sm:$0xf]
        %v6097 = vld [vmem:[#allocation3 + $0xac] sm:$0xf]
        %v6098 = vld [vmem:[#allocation3 + $0xb0] sm:$0x1]
        %v6099 = vld [vmem:[#allocation3 + $0xb4] sm:$0xf]
        %v6100 = vld [vmem:[#allocation3 + $0xb8] sm:$0xf]
        %v6101 = vld [vmem:[#allocation3 + $0xbc] sm:$0x1]
        %v6103 = vshrl.u32 %v6054, 16
        %v6105 = vrot.slane %v6103, 4
        %v6106 = vshll.u32 %v6054, 16
        %v6108 = vrot.slane %v6106, 5
        %v6109 = vor.u32 %v6105, %v6108
        %v6110 = vrot.slane %v6109, 4
        %v6112 = vshll.u32 %v6055, 16
        %v6114 = vrot.slane %v6112, 5
        %v6115 = vsel %vm1173, %v6110, %v6114
        %v6116 = vshrl.u32 %v6055, 16
        %v6118 = vrot.slane %v6116, 4
        %v6119 = vor.u32 %v6118, %v6114
        %v6120 = vrot.slane %v6119, 4
        %v6122 = vshll.u32 %v6056, 16
        %v6124 = vrot.slane %v6122, 5
        %v6125 = vsel %vm1173, %v6120, %v6124
        %v6127 = vshrl.u32 %v6057, 16
        %v6129 = vrot.slane %v6127, 4
        %v6130 = vshll.u32 %v6057, 16
        %v6132 = vrot.slane %v6130, 5
        %v6133 = vor.u32 %v6129, %v6132
        %v6134 = vrot.slane %v6133, 4
        %v6136 = vshll.u32 %v6058, 16
        %v6138 = vrot.slane %v6136, 5
        %v6139 = vsel %vm1173, %v6134, %v6138
        %v6140 = vshrl.u32 %v6058, 16
        %v6142 = vrot.slane %v6140, 4
        %v6143 = vor.u32 %v6142, %v6138
        %v6144 = vrot.slane %v6143, 4
        %v6146 = vshll.u32 %v6059, 16
        %v6148 = vrot.slane %v6146, 5
        %v6149 = vsel %vm1173, %v6144, %v6148
        %v6151 = vshrl.u32 %v6060, 16
        %v6153 = vrot.slane %v6151, 4
        %v6154 = vshll.u32 %v6060, 16
        %v6156 = vrot.slane %v6154, 5
        %v6157 = vor.u32 %v6153, %v6156
        %v6158 = vrot.slane %v6157, 4
        %v6160 = vshll.u32 %v6061, 16
        %v6162 = vrot.slane %v6160, 5
        %v6163 = vsel %vm1173, %v6158, %v6162
        %v6164 = vshrl.u32 %v6061, 16
        %v6166 = vrot.slane %v6164, 4
        %v6167 = vor.u32 %v6166, %v6162
        %v6168 = vrot.slane %v6167, 4
        %v6170 = vshll.u32 %v6062, 16
        %v6172 = vrot.slane %v6170, 5
        %v6173 = vsel %vm1173, %v6168, %v6172
        %v6175 = vshrl.u32 %v6063, 16
        %v6177 = vrot.slane %v6175, 4
        %v6178 = vshll.u32 %v6063, 16
        %v6180 = vrot.slane %v6178, 5
        %v6181 = vor.u32 %v6177, %v6180
        %v6182 = vrot.slane %v6181, 4
        %v6184 = vshll.u32 %v6064, 16
        %v6186 = vrot.slane %v6184, 5
        %v6187 = vsel %vm1173, %v6182, %v6186
        %v6188 = vshrl.u32 %v6064, 16
        %v6190 = vrot.slane %v6188, 4
        %v6191 = vor.u32 %v6190, %v6186
        %v6192 = vrot.slane %v6191, 4
        %v6194 = vshll.u32 %v6065, 16
        %v6196 = vrot.slane %v6194, 5
        %v6197 = vsel %vm1173, %v6192, %v6196
        %v6199 = vshrl.u32 %v6066, 16
        %v6201 = vrot.slane %v6199, 4
        %v6202 = vshll.u32 %v6066, 16
        %v6204 = vrot.slane %v6202, 5
        %v6205 = vor.u32 %v6201, %v6204
        %v6206 = vrot.slane %v6205, 4
        %v6208 = vshll.u32 %v6067, 16
        %v6210 = vrot.slane %v6208, 5
        %v6211 = vsel %vm1173, %v6206, %v6210
        %v6212 = vshrl.u32 %v6067, 16
        %v6214 = vrot.slane %v6212, 4
        %v6215 = vor.u32 %v6214, %v6210
        %v6216 = vrot.slane %v6215, 4
        %v6218 = vshll.u32 %v6068, 16
        %v6220 = vrot.slane %v6218, 5
        %v6221 = vsel %vm1173, %v6216, %v6220
        %v6223 = vshrl.u32 %v6069, 16
        %v6225 = vrot.slane %v6223, 4
        %v6226 = vshll.u32 %v6069, 16
        %v6228 = vrot.slane %v6226, 5
        %v6229 = vor.u32 %v6225, %v6228
        %v6230 = vrot.slane %v6229, 4
        %v6232 = vshll.u32 %v6070, 16
        %v6234 = vrot.slane %v6232, 5
        %v6235 = vsel %vm1173, %v6230, %v6234
        %v6236 = vshrl.u32 %v6070, 16
        %v6238 = vrot.slane %v6236, 4
        %v6239 = vor.u32 %v6238, %v6234
        %v6240 = vrot.slane %v6239, 4
        %v6242 = vshll.u32 %v6071, 16
        %v6244 = vrot.slane %v6242, 5
        %v6245 = vsel %vm1173, %v6240, %v6244
        %v6247 = vshrl.u32 %v6072, 16
        %v6249 = vrot.slane %v6247, 4
        %v6250 = vshll.u32 %v6072, 16
        %v6252 = vrot.slane %v6250, 5
        %v6253 = vor.u32 %v6249, %v6252
        %v6254 = vrot.slane %v6253, 4
        %v6256 = vshll.u32 %v6073, 16
        %v6258 = vrot.slane %v6256, 5
        %v6259 = vsel %vm1173, %v6254, %v6258
        %v6260 = vshrl.u32 %v6073, 16
        %v6262 = vrot.slane %v6260, 4
        %v6263 = vor.u32 %v6262, %v6258
        %v6264 = vrot.slane %v6263, 4
        %v6266 = vshll.u32 %v6074, 16
        %v6268 = vrot.slane %v6266, 5
        %v6269 = vsel %vm1173, %v6264, %v6268
        %v6271 = vshrl.u32 %v6075, 16
        %v6273 = vrot.slane %v6271, 4
        %v6274 = vshll.u32 %v6075, 16
        %v6276 = vrot.slane %v6274, 5
        %v6277 = vor.u32 %v6273, %v6276
        %v6278 = vrot.slane %v6277, 4
        %v6280 = vshll.u32 %v6076, 16
        %v6282 = vrot.slane %v6280, 5
        %v6283 = vsel %vm1173, %v6278, %v6282
        %v6284 = vshrl.u32 %v6076, 16
        %v6286 = vrot.slane %v6284, 4
        %v6287 = vor.u32 %v6286, %v6282
        %v6288 = vrot.slane %v6287, 4
        %v6290 = vshll.u32 %v6077, 16
        %v6292 = vrot.slane %v6290, 5
        %v6293 = vsel %vm1173, %v6288, %v6292
        %v6295 = vshrl.u32 %v6078, 16
        %v6297 = vrot.slane %v6295, 4
        %v6298 = vshll.u32 %v6078, 16
        %v6300 = vrot.slane %v6298, 5
        %v6301 = vor.u32 %v6297, %v6300
        %v6302 = vrot.slane %v6301, 4
        %v6304 = vshll.u32 %v6079, 16
        %v6306 = vrot.slane %v6304, 5
        %v6307 = vsel %vm1173, %v6302, %v6306
        %v6308 = vshrl.u32 %v6079, 16
        %v6310 = vrot.slane %v6308, 4
        %v6311 = vor.u32 %v6310, %v6306
        %v6312 = vrot.slane %v6311, 4
        %v6314 = vshll.u32 %v6080, 16
        %v6316 = vrot.slane %v6314, 5
        %v6317 = vsel %vm1173, %v6312, %v6316
        %v6319 = vshrl.u32 %v6081, 16
        %v6321 = vrot.slane %v6319, 4
        %v6322 = vshll.u32 %v6081, 16
        %v6324 = vrot.slane %v6322, 5
        %v6325 = vor.u32 %v6321, %v6324
        %v6326 = vrot.slane %v6325, 4
        %v6328 = vshll.u32 %v6082, 16
        %v6330 = vrot.slane %v6328, 5
        %v6331 = vsel %vm1173, %v6326, %v6330
        %v6332 = vshrl.u32 %v6082, 16
        %v6334 = vrot.slane %v6332, 4
        %v6335 = vor.u32 %v6334, %v6330
        %v6336 = vrot.slane %v6335, 4
        %v6338 = vshll.u32 %v6083, 16
        %v6340 = vrot.slane %v6338, 5
        %v6341 = vsel %vm1173, %v6336, %v6340
        %v6343 = vshrl.u32 %v6084, 16
        %v6345 = vrot.slane %v6343, 4
        %v6346 = vshll.u32 %v6084, 16
        %v6348 = vrot.slane %v6346, 5
        %v6349 = vor.u32 %v6345, %v6348
        %v6350 = vrot.slane %v6349, 4
        %v6352 = vshll.u32 %v6085, 16
        %v6354 = vrot.slane %v6352, 5
        %v6355 = vsel %vm1173, %v6350, %v6354
        %v6356 = vshrl.u32 %v6085, 16
        %v6358 = vrot.slane %v6356, 4
        %v6359 = vor.u32 %v6358, %v6354
        %v6360 = vrot.slane %v6359, 4
        %v6362 = vshll.u32 %v6086, 16
        %v6364 = vrot.slane %v6362, 5
        %v6365 = vsel %vm1173, %v6360, %v6364
        %v6367 = vshrl.u32 %v6087, 16
        %v6369 = vrot.slane %v6367, 4
        %v6370 = vshll.u32 %v6087, 16
        %v6372 = vrot.slane %v6370, 5
        %v6373 = vor.u32 %v6369, %v6372
        %v6374 = vrot.slane %v6373, 4
        %v6376 = vshll.u32 %v6088, 16
        %v6378 = vrot.slane %v6376, 5
        %v6379 = vsel %vm1173, %v6374, %v6378
        %v6380 = vshrl.u32 %v6088, 16
        %v6382 = vrot.slane %v6380, 4
        %v6383 = vor.u32 %v6382, %v6378
        %v6384 = vrot.slane %v6383, 4
        %v6386 = vshll.u32 %v6089, 16
        %v6388 = vrot.slane %v6386, 5
        %v6389 = vsel %vm1173, %v6384, %v6388
        %v6391 = vshrl.u32 %v6090, 16
        %v6393 = vrot.slane %v6391, 4
        %v6394 = vshll.u32 %v6090, 16
        %v6396 = vrot.slane %v6394, 5
        %v6397 = vor.u32 %v6393, %v6396
        %v6398 = vrot.slane %v6397, 4
        %v6400 = vshll.u32 %v6091, 16
        %v6402 = vrot.slane %v6400, 5
        %v6403 = vsel %vm1173, %v6398, %v6402
        %v6404 = vshrl.u32 %v6091, 16
        %v6406 = vrot.slane %v6404, 4
        %v6407 = vor.u32 %v6406, %v6402
        %v6408 = vrot.slane %v6407, 4
        %v6410 = vshll.u32 %v6092, 16
        %v6412 = vrot.slane %v6410, 5
        %v6413 = vsel %vm1173, %v6408, %v6412
        %v6415 = vshrl.u32 %v6093, 16
        %v6417 = vrot.slane %v6415, 4
        %v6418 = vshll.u32 %v6093, 16
        %v6420 = vrot.slane %v6418, 5
        %v6421 = vor.u32 %v6417, %v6420
        %v6422 = vrot.slane %v6421, 4
        %v6424 = vshll.u32 %v6094, 16
        %v6426 = vrot.slane %v6424, 5
        %v6427 = vsel %vm1173, %v6422, %v6426
        %v6428 = vshrl.u32 %v6094, 16
        %v6430 = vrot.slane %v6428, 4
        %v6431 = vor.u32 %v6430, %v6426
        %v6432 = vrot.slane %v6431, 4
        %v6434 = vshll.u32 %v6095, 16
        %v6436 = vrot.slane %v6434, 5
        %v6437 = vsel %vm1173, %v6432, %v6436
        %v6439 = vshrl.u32 %v6096, 16
        %v6441 = vrot.slane %v6439, 4
        %v6442 = vshll.u32 %v6096, 16
        %v6444 = vrot.slane %v6442, 5
        %v6445 = vor.u32 %v6441, %v6444
        %v6446 = vrot.slane %v6445, 4
        %v6448 = vshll.u32 %v6097, 16
        %v6450 = vrot.slane %v6448, 5
        %v6451 = vsel %vm1173, %v6446, %v6450
        %v6452 = vshrl.u32 %v6097, 16
        %v6454 = vrot.slane %v6452, 4
        %v6455 = vor.u32 %v6454, %v6450
        %v6456 = vrot.slane %v6455, 4
        %v6458 = vshll.u32 %v6098, 16
        %v6460 = vrot.slane %v6458, 5
        %v6461 = vsel %vm1173, %v6456, %v6460
        %v6463 = vshrl.u32 %v6099, 16
        %v6465 = vrot.slane %v6463, 4
        %v6466 = vshll.u32 %v6099, 16
        %v6468 = vrot.slane %v6466, 5
        %v6469 = vor.u32 %v6465, %v6468
        %v6470 = vrot.slane %v6469, 4
        %v6472 = vshll.u32 %v6100, 16
        %v6474 = vrot.slane %v6472, 5
        %v6475 = vsel %vm1173, %v6470, %v6474
        %v6476 = vshrl.u32 %v6100, 16
        %v6478 = vrot.slane %v6476, 4
        %v6479 = vor.u32 %v6478, %v6474
        %v6480 = vrot.slane %v6479, 4
        %v6482 = vshll.u32 %v6101, 16
        %v6484 = vrot.slane %v6482, 5
        %v6485 = vsel %vm1173, %v6480, %v6484
        %v6486 = vunpack.c.l.b16 %v6115
        %v6487 = vunpack.c.l.b16 %v6125
        %v6488 = vunpack.c.l.b16 %v6139
        %v6489 = vunpack.c.l.b16 %v6149
        %v6490 = vunpack.c.l.b16 %v6163
        %v6491 = vunpack.c.l.b16 %v6173
        %v6492 = vunpack.c.l.b16 %v6187
        %v6493 = vunpack.c.l.b16 %v6197
        %v6494 = vunpack.c.l.b16 %v6211
        %v6495 = vunpack.c.l.b16 %v6221
        %v6496 = vunpack.c.l.b16 %v6235
        %v6497 = vunpack.c.l.b16 %v6245
        %v6498 = vunpack.c.l.b16 %v6259
        %v6499 = vunpack.c.l.b16 %v6269
        %v6500 = vunpack.c.l.b16 %v6283
        %v6501 = vunpack.c.l.b16 %v6293
        %v6502 = vunpack.c.l.b16 %v6307
        %v6503 = vunpack.c.l.b16 %v6317
        %v6504 = vunpack.c.l.b16 %v6331
        %v6505 = vunpack.c.l.b16 %v6341
        %v6506 = vunpack.c.l.b16 %v6355
        %v6507 = vunpack.c.l.b16 %v6365
        %v6508 = vunpack.c.l.b16 %v6379
        %v6509 = vunpack.c.l.b16 %v6389
        %v6510 = vunpack.c.l.b16 %v6403
        %v6511 = vunpack.c.l.b16 %v6413
        %v6512 = vunpack.c.l.b16 %v6427
        %v6513 = vunpack.c.l.b16 %v6437
        %v6514 = vunpack.c.l.b16 %v6451
        %v6515 = vunpack.c.l.b16 %v6461
        %v6516 = vunpack.c.l.b16 %v6475
        %v6517 = vunpack.c.l.b16 %v6485
        %v6518 = vpack.c.b16 %v6487, %v6486
        %v6519 = vpack.c.b16 %v6489, %v6488
        %v6520 = vpack.c.b16 %v6491, %v6490
        %v6521 = vpack.c.b16 %v6493, %v6492
        %v6522 = vpack.c.b16 %v6495, %v6494
        %v6523 = vpack.c.b16 %v6497, %v6496
        %v6524 = vpack.c.b16 %v6499, %v6498
        %v6525 = vpack.c.b16 %v6501, %v6500
        %v6526 = vpack.c.b16 %v6503, %v6502
        %v6527 = vpack.c.b16 %v6505, %v6504
        %v6528 = vpack.c.b16 %v6507, %v6506
        %v6529 = vpack.c.b16 %v6509, %v6508
        %v6530 = vpack.c.b16 %v6511, %v6510
        %v6531 = vpack.c.b16 %v6513, %v6512
        %v6532 = vpack.c.b16 %v6515, %v6514
        %v6533 = vpack.c.b16 %v6517, %v6516
        %6550 = vst [vmem:[#allocation4 + $0x8] sm:$0xff] %v6518
        %6551 = vst [vmem:[#allocation4 + $0x58] sm:$0xff] %v6519
        %6552 = vst [vmem:[#allocation4 + $0xa8] sm:$0xff] %v6520
        %6553 = vst [vmem:[#allocation4 + $0xf8] sm:$0xff] %v6521
        %6554 = vst [vmem:[#allocation4 + $0x148] sm:$0xff] %v6522
        %6555 = vst [vmem:[#allocation4 + $0x198] sm:$0xff] %v6523
        %6556 = vst [vmem:[#allocation4 + $0x1e8] sm:$0xff] %v6524
        %6557 = vst [vmem:[#allocation4 + $0x238] sm:$0xff] %v6525
        %6558 = vst [vmem:[#allocation4 + $0x288] sm:$0xff] %v6526
        %6559 = vst [vmem:[#allocation4 + $0x2d8] sm:$0xff] %v6527
        %6560 = vst [vmem:[#allocation4 + $0x328] sm:$0xff] %v6528
        %6561 = vst [vmem:[#allocation4 + $0x378] sm:$0xff] %v6529
        %6562 = vst [vmem:[#allocation4 + $0x3c8] sm:$0xff] %v6530
        %6563 = vst [vmem:[#allocation4 + $0x418] sm:$0xff] %v6531
        %6564 = vst [vmem:[#allocation4 + $0x468] sm:$0xff] %v6532
        %6565 = vst [vmem:[#allocation4 + $0x4b8] sm:$0xff] %v6533
        %v6566 = vld [vmem:[#allocation3] sm:$0xe]
        %v6567 = vld [vmem:[#allocation3 + $0x4] sm:$0xf]
        %v6568 = vld [vmem:[#allocation3 + $0x8] sm:$0x1]
        %v6569 = vld [vmem:[#allocation3 + $0xc] sm:$0xe]
        %v6570 = vld [vmem:[#allocation3 + $0x10] sm:$0xf]
        %v6571 = vld [vmem:[#allocation3 + $0x14] sm:$0x1]
        %v6572 = vld [vmem:[#allocation3 + $0x18] sm:$0xe]
        %v6573 = vld [vmem:[#allocation3 + $0x1c] sm:$0xf]
        %v6574 = vld [vmem:[#allocation3 + $0x20] sm:$0x1]
        %v6575 = vld [vmem:[#allocation3 + $0x24] sm:$0xe]
        %v6576 = vld [vmem:[#allocation3 + $0x28] sm:$0xf]
        %v6577 = vld [vmem:[#allocation3 + $0x2c] sm:$0x1]
        %v6578 = vld [vmem:[#allocation3 + $0x30] sm:$0xe]
        %v6579 = vld [vmem:[#allocation3 + $0x34] sm:$0xf]
        %v6580 = vld [vmem:[#allocation3 + $0x38] sm:$0x1]
        %v6581 = vld [vmem:[#allocation3 + $0x3c] sm:$0xe]
        %v6582 = vld [vmem:[#allocation3 + $0x40] sm:$0xf]
        %v6583 = vld [vmem:[#allocation3 + $0x44] sm:$0x1]
        %v6584 = vld [vmem:[#allocation3 + $0x48] sm:$0xe]
        %v6585 = vld [vmem:[#allocation3 + $0x4c] sm:$0xf]
        %v6586 = vld [vmem:[#allocation3 + $0x50] sm:$0x1]
        %v6587 = vld [vmem:[#allocation3 + $0x54] sm:$0xe]
        %v6588 = vld [vmem:[#allocation3 + $0x58] sm:$0xf]
        %v6589 = vld [vmem:[#allocation3 + $0x5c] sm:$0x1]
        %v6590 = vld [vmem:[#allocation3 + $0x60] sm:$0xe]
        %v6591 = vld [vmem:[#allocation3 + $0x64] sm:$0xf]
        %v6592 = vld [vmem:[#allocation3 + $0x68] sm:$0x1]
        %v6593 = vld [vmem:[#allocation3 + $0x6c] sm:$0xe]
        %v6594 = vld [vmem:[#allocation3 + $0x70] sm:$0xf]
        %v6595 = vld [vmem:[#allocation3 + $0x74] sm:$0x1]
        %v6596 = vld [vmem:[#allocation3 + $0x78] sm:$0xe]
        %v6597 = vld [vmem:[#allocation3 + $0x7c] sm:$0xf]
        %v6598 = vld [vmem:[#allocation3 + $0x80] sm:$0x1]
        %v6599 = vld [vmem:[#allocation3 + $0x84] sm:$0xe]
        %v6600 = vld [vmem:[#allocation3 + $0x88] sm:$0xf]
        %v6601 = vld [vmem:[#allocation3 + $0x8c] sm:$0x1]
        %v6602 = vld [vmem:[#allocation3 + $0x90] sm:$0xe]
        %v6603 = vld [vmem:[#allocation3 + $0x94] sm:$0xf]
        %v6604 = vld [vmem:[#allocation3 + $0x98] sm:$0x1]
        %v6605 = vld [vmem:[#allocation3 + $0x9c] sm:$0xe]
        %v6606 = vld [vmem:[#allocation3 + $0xa0] sm:$0xf]
        %v6607 = vld [vmem:[#allocation3 + $0xa4] sm:$0x1]
        %v6608 = vld [vmem:[#allocation3 + $0xa8] sm:$0xe]
        %v6609 = vld [vmem:[#allocation3 + $0xac] sm:$0xf]
        %v6610 = vld [vmem:[#allocation3 + $0xb0] sm:$0x1]
        %v6611 = vld [vmem:[#allocation3 + $0xb4] sm:$0xe]
        %v6612 = vld [vmem:[#allocation3 + $0xb8] sm:$0xf]
        %v6613 = vld [vmem:[#allocation3 + $0xbc] sm:$0x1]
        %v6662 = vrot.slane %v6566, 5
        %v6663 = vrot.slane %v6662, 4
        %v6664 = vrot.slane %v6567, 5
        %v6665 = vsel %vm1736, %v6663, %v6664
        %v6666 = vrot.slane %v6664, 4
        %v6667 = vrot.slane %v6568, 5
        %v6668 = vsel %vm1736, %v6666, %v6667
        %v6669 = vrot.slane %v6569, 5
        %v6670 = vrot.slane %v6669, 4
        %v6671 = vrot.slane %v6570, 5
        %v6672 = vsel %vm1736, %v6670, %v6671
        %v6673 = vrot.slane %v6671, 4
        %v6674 = vrot.slane %v6571, 5
        %v6675 = vsel %vm1736, %v6673, %v6674
        %v6676 = vrot.slane %v6572, 5
        %v6677 = vrot.slane %v6676, 4
        %v6678 = vrot.slane %v6573, 5
        %v6679 = vsel %vm1736, %v6677, %v6678
        %v6680 = vrot.slane %v6678, 4
        %v6681 = vrot.slane %v6574, 5
        %v6682 = vsel %vm1736, %v6680, %v6681
        %v6683 = vrot.slane %v6575, 5
        %v6684 = vrot.slane %v6683, 4
        %v6685 = vrot.slane %v6576, 5
        %v6686 = vsel %vm1736, %v6684, %v6685
        %v6687 = vrot.slane %v6685, 4
        %v6688 = vrot.slane %v6577, 5
        %v6689 = vsel %vm1736, %v6687, %v6688
        %v6690 = vrot.slane %v6578, 5
        %v6691 = vrot.slane %v6690, 4
        %v6692 = vrot.slane %v6579, 5
        %v6693 = vsel %vm1736, %v6691, %v6692
        %v6694 = vrot.slane %v6692, 4
        %v6695 = vrot.slane %v6580, 5
        %v6696 = vsel %vm1736, %v6694, %v6695
        %v6697 = vrot.slane %v6581, 5
        %v6698 = vrot.slane %v6697, 4
        %v6699 = vrot.slane %v6582, 5
        %v6700 = vsel %vm1736, %v6698, %v6699
        %v6701 = vrot.slane %v6699, 4
        %v6702 = vrot.slane %v6583, 5
        %v6703 = vsel %vm1736, %v6701, %v6702
        %v6704 = vrot.slane %v6584, 5
        %v6705 = vrot.slane %v6704, 4
        %v6706 = vrot.slane %v6585, 5
        %v6707 = vsel %vm1736, %v6705, %v6706
        %v6708 = vrot.slane %v6706, 4
        %v6709 = vrot.slane %v6586, 5
        %v6710 = vsel %vm1736, %v6708, %v6709
        %v6711 = vrot.slane %v6587, 5
        %v6712 = vrot.slane %v6711, 4
        %v6713 = vrot.slane %v6588, 5
        %v6714 = vsel %vm1736, %v6712, %v6713
        %v6715 = vrot.slane %v6713, 4
        %v6716 = vrot.slane %v6589, 5
        %v6717 = vsel %vm1736, %v6715, %v6716
        %v6718 = vrot.slane %v6590, 5
        %v6719 = vrot.slane %v6718, 4
        %v6720 = vrot.slane %v6591, 5
        %v6721 = vsel %vm1736, %v6719, %v6720
        %v6722 = vrot.slane %v6720, 4
        %v6723 = vrot.slane %v6592, 5
        %v6724 = vsel %vm1736, %v6722, %v6723
        %v6725 = vrot.slane %v6593, 5
        %v6726 = vrot.slane %v6725, 4
        %v6727 = vrot.slane %v6594, 5
        %v6728 = vsel %vm1736, %v6726, %v6727
        %v6729 = vrot.slane %v6727, 4
        %v6730 = vrot.slane %v6595, 5
        %v6731 = vsel %vm1736, %v6729, %v6730
        %v6732 = vrot.slane %v6596, 5
        %v6733 = vrot.slane %v6732, 4
        %v6734 = vrot.slane %v6597, 5
        %v6735 = vsel %vm1736, %v6733, %v6734
        %v6736 = vrot.slane %v6734, 4
        %v6737 = vrot.slane %v6598, 5
        %v6738 = vsel %vm1736, %v6736, %v6737
        %v6739 = vrot.slane %v6599, 5
        %v6740 = vrot.slane %v6739, 4
        %v6741 = vrot.slane %v6600, 5
        %v6742 = vsel %vm1736, %v6740, %v6741
        %v6743 = vrot.slane %v6741, 4
        %v6744 = vrot.slane %v6601, 5
        %v6745 = vsel %vm1736, %v6743, %v6744
        %v6746 = vrot.slane %v6602, 5
        %v6747 = vrot.slane %v6746, 4
        %v6748 = vrot.slane %v6603, 5
        %v6749 = vsel %vm1736, %v6747, %v6748
        %v6750 = vrot.slane %v6748, 4
        %v6751 = vrot.slane %v6604, 5
        %v6752 = vsel %vm1736, %v6750, %v6751
        %v6753 = vrot.slane %v6605, 5
        %v6754 = vrot.slane %v6753, 4
        %v6755 = vrot.slane %v6606, 5
        %v6756 = vsel %vm1736, %v6754, %v6755
        %v6757 = vrot.slane %v6755, 4
        %v6758 = vrot.slane %v6607, 5
        %v6759 = vsel %vm1736, %v6757, %v6758
        %v6760 = vrot.slane %v6608, 5
        %v6761 = vrot.slane %v6760, 4
        %v6762 = vrot.slane %v6609, 5
        %v6763 = vsel %vm1736, %v6761, %v6762
        %v6764 = vrot.slane %v6762, 4
        %v6765 = vrot.slane %v6610, 5
        %v6766 = vsel %vm1736, %v6764, %v6765
        %v6767 = vrot.slane %v6611, 5
        %v6768 = vrot.slane %v6767, 4
        %v6769 = vrot.slane %v6612, 5
        %v6770 = vsel %vm1736, %v6768, %v6769
        %v6771 = vrot.slane %v6769, 4
        %v6772 = vrot.slane %v6613, 5
        %v6773 = vsel %vm1736, %v6771, %v6772
        %v6774 = vunpack.c.l.b16 %v6665
        %v6775 = vunpack.c.l.b16 %v6668
        %v6776 = vunpack.c.l.b16 %v6672
        %v6777 = vunpack.c.l.b16 %v6675
        %v6778 = vunpack.c.l.b16 %v6679
        %v6779 = vunpack.c.l.b16 %v6682
        %v6780 = vunpack.c.l.b16 %v6686
        %v6781 = vunpack.c.l.b16 %v6689
        %v6782 = vunpack.c.l.b16 %v6693
        %v6783 = vunpack.c.l.b16 %v6696
        %v6784 = vunpack.c.l.b16 %v6700
        %v6785 = vunpack.c.l.b16 %v6703
        %v6786 = vunpack.c.l.b16 %v6707
        %v6787 = vunpack.c.l.b16 %v6710
        %v6788 = vunpack.c.l.b16 %v6714
        %v6789 = vunpack.c.l.b16 %v6717
        %v6790 = vunpack.c.l.b16 %v6721
        %v6791 = vunpack.c.l.b16 %v6724
        %v6792 = vunpack.c.l.b16 %v6728
        %v6793 = vunpack.c.l.b16 %v6731
        %v6794 = vunpack.c.l.b16 %v6735
        %v6795 = vunpack.c.l.b16 %v6738
        %v6796 = vunpack.c.l.b16 %v6742
        %v6797 = vunpack.c.l.b16 %v6745
        %v6798 = vunpack.c.l.b16 %v6749
        %v6799 = vunpack.c.l.b16 %v6752
        %v6800 = vunpack.c.l.b16 %v6756
        %v6801 = vunpack.c.l.b16 %v6759
        %v6802 = vunpack.c.l.b16 %v6763
        %v6803 = vunpack.c.l.b16 %v6766
        %v6804 = vunpack.c.l.b16 %v6770
        %v6805 = vunpack.c.l.b16 %v6773
        %v6806 = vpack.c.b16 %v6775, %v6774
        %v6807 = vpack.c.b16 %v6777, %v6776
        %v6808 = vpack.c.b16 %v6779, %v6778
        %v6809 = vpack.c.b16 %v6781, %v6780
        %v6810 = vpack.c.b16 %v6783, %v6782
        %v6811 = vpack.c.b16 %v6785, %v6784
        %v6812 = vpack.c.b16 %v6787, %v6786
        %v6813 = vpack.c.b16 %v6789, %v6788
        %v6814 = vpack.c.b16 %v6791, %v6790
        %v6815 = vpack.c.b16 %v6793, %v6792
        %v6816 = vpack.c.b16 %v6795, %v6794
        %v6817 = vpack.c.b16 %v6797, %v6796
        %v6818 = vpack.c.b16 %v6799, %v6798
        %v6819 = vpack.c.b16 %v6801, %v6800
        %v6820 = vpack.c.b16 %v6803, %v6802
        %v6821 = vpack.c.b16 %v6805, %v6804
        %6838 = vst [vmem:[#allocation4 + $0x10] sm:$0xff] %v6806
        %6839 = vst [vmem:[#allocation4 + $0x60] sm:$0xff] %v6807
        %6840 = vst [vmem:[#allocation4 + $0xb0] sm:$0xff] %v6808
        %6841 = vst [vmem:[#allocation4 + $0x100] sm:$0xff] %v6809
        %6842 = vst [vmem:[#allocation4 + $0x150] sm:$0xff] %v6810
        %6843 = vst [vmem:[#allocation4 + $0x1a0] sm:$0xff] %v6811
        %6844 = vst [vmem:[#allocation4 + $0x1f0] sm:$0xff] %v6812
        %6845 = vst [vmem:[#allocation4 + $0x240] sm:$0xff] %v6813
        %6846 = vst [vmem:[#allocation4 + $0x290] sm:$0xff] %v6814
        %6847 = vst [vmem:[#allocation4 + $0x2e0] sm:$0xff] %v6815
        %6848 = vst [vmem:[#allocation4 + $0x330] sm:$0xff] %v6816
        %6849 = vst [vmem:[#allocation4 + $0x380] sm:$0xff] %v6817
        %6850 = vst [vmem:[#allocation4 + $0x3d0] sm:$0xff] %v6818
        %6851 = vst [vmem:[#allocation4 + $0x420] sm:$0xff] %v6819
        %6852 = vst [vmem:[#allocation4 + $0x470] sm:$0xff] %v6820
        %6853 = vst [vmem:[#allocation4 + $0x4c0] sm:$0xff] %v6821
        %v6854 = vld [vmem:[%s5797] sm:$0xf]
        %v6855 = vld [vmem:[%s5797 + $0x4] sm:$0xf]
        %v6856 = vld [vmem:[%s5797 + $0xc] sm:$0xf]
        %v6857 = vld [vmem:[%s5797 + $0x10] sm:$0xf]
        %v6858 = vld [vmem:[%s5797 + $0x18] sm:$0xf]
        %v6859 = vld [vmem:[%s5797 + $0x1c] sm:$0xf]
        %v6860 = vld [vmem:[%s5797 + $0x24] sm:$0xf]
        %v6861 = vld [vmem:[%s5797 + $0x28] sm:$0xf]
        %v6862 = vld [vmem:[%s5797 + $0x30] sm:$0xf]
        %v6863 = vld [vmem:[%s5797 + $0x34] sm:$0xf]
        %v6864 = vld [vmem:[%s5797 + $0x3c] sm:$0xf]
        %v6865 = vld [vmem:[%s5797 + $0x40] sm:$0xf]
        %v6866 = vld [vmem:[%s5797 + $0x48] sm:$0xf]
        %v6867 = vld [vmem:[%s5797 + $0x4c] sm:$0xf]
        %v6868 = vld [vmem:[%s5797 + $0x54] sm:$0xf]
        %v6869 = vld [vmem:[%s5797 + $0x58] sm:$0xf]
        %v6870 = vld [vmem:[%s5797 + $0x60] sm:$0xf]
        %v6871 = vld [vmem:[%s5797 + $0x64] sm:$0xf]
        %v6872 = vld [vmem:[%s5797 + $0x6c] sm:$0xf]
        %v6873 = vld [vmem:[%s5797 + $0x70] sm:$0xf]
        %v6874 = vld [vmem:[%s5797 + $0x78] sm:$0xf]
        %v6875 = vld [vmem:[%s5797 + $0x7c] sm:$0xf]
        %v6876 = vld [vmem:[%s5797 + $0x84] sm:$0xf]
        %v6877 = vld [vmem:[%s5797 + $0x88] sm:$0xf]
        %v6878 = vld [vmem:[%s5797 + $0x90] sm:$0xf]
        %v6879 = vld [vmem:[%s5797 + $0x94] sm:$0xf]
        %v6880 = vld [vmem:[%s5797 + $0x9c] sm:$0xf]
        %v6881 = vld [vmem:[%s5797 + $0xa0] sm:$0xf]
        %v6882 = vld [vmem:[%s5797 + $0xa8] sm:$0xf]
        %v6883 = vld [vmem:[%s5797 + $0xac] sm:$0xf]
        %v6884 = vld [vmem:[%s5797 + $0xb4] sm:$0xf]
        %v6885 = vld [vmem:[%s5797 + $0xb8] sm:$0xf]
        %v6918 = vunpack.c.l.b16 %v6854
        %v6919 = vunpack.c.l.b16 %v6855
        %v6920 = vunpack.c.l.b16 %v6856
        %v6921 = vunpack.c.l.b16 %v6857
        %v6922 = vunpack.c.l.b16 %v6858
        %v6923 = vunpack.c.l.b16 %v6859
        %v6924 = vunpack.c.l.b16 %v6860
        %v6925 = vunpack.c.l.b16 %v6861
        %v6926 = vunpack.c.l.b16 %v6862
        %v6927 = vunpack.c.l.b16 %v6863
        %v6928 = vunpack.c.l.b16 %v6864
        %v6929 = vunpack.c.l.b16 %v6865
        %v6930 = vunpack.c.l.b16 %v6866
        %v6931 = vunpack.c.l.b16 %v6867
        %v6932 = vunpack.c.l.b16 %v6868
        %v6933 = vunpack.c.l.b16 %v6869
        %v6934 = vunpack.c.l.b16 %v6870
        %v6935 = vunpack.c.l.b16 %v6871
        %v6936 = vunpack.c.l.b16 %v6872
        %v6937 = vunpack.c.l.b16 %v6873
        %v6938 = vunpack.c.l.b16 %v6874
        %v6939 = vunpack.c.l.b16 %v6875
        %v6940 = vunpack.c.l.b16 %v6876
        %v6941 = vunpack.c.l.b16 %v6877
        %v6942 = vunpack.c.l.b16 %v6878
        %v6943 = vunpack.c.l.b16 %v6879
        %v6944 = vunpack.c.l.b16 %v6880
        %v6945 = vunpack.c.l.b16 %v6881
        %v6946 = vunpack.c.l.b16 %v6882
        %v6947 = vunpack.c.l.b16 %v6883
        %v6948 = vunpack.c.l.b16 %v6884
        %v6949 = vunpack.c.l.b16 %v6885
        %v6950 = vpack.c.b16 %v6919, %v6918
        %v6951 = vpack.c.b16 %v6921, %v6920
        %v6952 = vpack.c.b16 %v6923, %v6922
        %v6953 = vpack.c.b16 %v6925, %v6924
        %v6954 = vpack.c.b16 %v6927, %v6926
        %v6955 = vpack.c.b16 %v6929, %v6928
        %v6956 = vpack.c.b16 %v6931, %v6930
        %v6957 = vpack.c.b16 %v6933, %v6932
        %v6958 = vpack.c.b16 %v6935, %v6934
        %v6959 = vpack.c.b16 %v6937, %v6936
        %v6960 = vpack.c.b16 %v6939, %v6938
        %v6961 = vpack.c.b16 %v6941, %v6940
        %v6962 = vpack.c.b16 %v6943, %v6942
        %v6963 = vpack.c.b16 %v6945, %v6944
        %v6964 = vpack.c.b16 %v6947, %v6946
        %v6965 = vpack.c.b16 %v6949, %v6948
        %6982 = vst [vmem:[#allocation4 + $0x18] sm:$0xff] %v6950
        %6983 = vst [vmem:[#allocation4 + $0x68] sm:$0xff] %v6951
        %6984 = vst [vmem:[#allocation4 + $0xb8] sm:$0xff] %v6952
        %6985 = vst [vmem:[#allocation4 + $0x108] sm:$0xff] %v6953
        %6986 = vst [vmem:[#allocation4 + $0x158] sm:$0xff] %v6954
        %6987 = vst [vmem:[#allocation4 + $0x1a8] sm:$0xff] %v6955
        %6988 = vst [vmem:[#allocation4 + $0x1f8] sm:$0xff] %v6956
        %6989 = vst [vmem:[#allocation4 + $0x248] sm:$0xff] %v6957
        %6990 = vst [vmem:[#allocation4 + $0x298] sm:$0xff] %v6958
        %6991 = vst [vmem:[#allocation4 + $0x2e8] sm:$0xff] %v6959
        %6992 = vst [vmem:[#allocation4 + $0x338] sm:$0xff] %v6960
        %6993 = vst [vmem:[#allocation4 + $0x388] sm:$0xff] %v6961
        %6994 = vst [vmem:[#allocation4 + $0x3d8] sm:$0xff] %v6962
        %6995 = vst [vmem:[#allocation4 + $0x428] sm:$0xff] %v6963
        %6996 = vst [vmem:[#allocation4 + $0x478] sm:$0xff] %v6964
        %6997 = vst [vmem:[#allocation4 + $0x4c8] sm:$0xff] %v6965
        %v6998 = vld [vmem:[%s5797] sm:$0xf]
        %v6999 = vld [vmem:[%s5797 + $0x4] sm:$0xf]
        %v7000 = vld [vmem:[%s5797 + $0x8] sm:$0x1]
        %v7001 = vld [vmem:[%s5797 + $0xc] sm:$0xf]
        %v7002 = vld [vmem:[%s5797 + $0x10] sm:$0xf]
        %v7003 = vld [vmem:[%s5797 + $0x14] sm:$0x1]
        %v7004 = vld [vmem:[%s5797 + $0x18] sm:$0xf]
        %v7005 = vld [vmem:[%s5797 + $0x1c] sm:$0xf]
        %v7006 = vld [vmem:[%s5797 + $0x20] sm:$0x1]
        %v7007 = vld [vmem:[%s5797 + $0x24] sm:$0xf]
        %v7008 = vld [vmem:[%s5797 + $0x28] sm:$0xf]
        %v7009 = vld [vmem:[%s5797 + $0x2c] sm:$0x1]
        %v7010 = vld [vmem:[%s5797 + $0x30] sm:$0xf]
        %v7011 = vld [vmem:[%s5797 + $0x34] sm:$0xf]
        %v7012 = vld [vmem:[%s5797 + $0x38] sm:$0x1]
        %v7013 = vld [vmem:[%s5797 + $0x3c] sm:$0xf]
        %v7014 = vld [vmem:[%s5797 + $0x40] sm:$0xf]
        %v7015 = vld [vmem:[%s5797 + $0x44] sm:$0x1]
        %v7016 = vld [vmem:[%s5797 + $0x48] sm:$0xf]
        %v7017 = vld [vmem:[%s5797 + $0x4c] sm:$0xf]
        %v7018 = vld [vmem:[%s5797 + $0x50] sm:$0x1]
        %v7019 = vld [vmem:[%s5797 + $0x54] sm:$0xf]
        %v7020 = vld [vmem:[%s5797 + $0x58] sm:$0xf]
        %v7021 = vld [vmem:[%s5797 + $0x5c] sm:$0x1]
        %v7022 = vld [vmem:[%s5797 + $0x60] sm:$0xf]
        %v7023 = vld [vmem:[%s5797 + $0x64] sm:$0xf]
        %v7024 = vld [vmem:[%s5797 + $0x68] sm:$0x1]
        %v7025 = vld [vmem:[%s5797 + $0x6c] sm:$0xf]
        %v7026 = vld [vmem:[%s5797 + $0x70] sm:$0xf]
        %v7027 = vld [vmem:[%s5797 + $0x74] sm:$0x1]
        %v7028 = vld [vmem:[%s5797 + $0x78] sm:$0xf]
        %v7029 = vld [vmem:[%s5797 + $0x7c] sm:$0xf]
        %v7030 = vld [vmem:[%s5797 + $0x80] sm:$0x1]
        %v7031 = vld [vmem:[%s5797 + $0x84] sm:$0xf]
        %v7032 = vld [vmem:[%s5797 + $0x88] sm:$0xf]
        %v7033 = vld [vmem:[%s5797 + $0x8c] sm:$0x1]
        %v7034 = vld [vmem:[%s5797 + $0x90] sm:$0xf]
        %v7035 = vld [vmem:[%s5797 + $0x94] sm:$0xf]
        %v7036 = vld [vmem:[%s5797 + $0x98] sm:$0x1]
        %v7037 = vld [vmem:[%s5797 + $0x9c] sm:$0xf]
        %v7038 = vld [vmem:[%s5797 + $0xa0] sm:$0xf]
        %v7039 = vld [vmem:[%s5797 + $0xa4] sm:$0x1]
        %v7040 = vld [vmem:[%s5797 + $0xa8] sm:$0xf]
        %v7041 = vld [vmem:[%s5797 + $0xac] sm:$0xf]
        %v7042 = vld [vmem:[%s5797 + $0xb0] sm:$0x1]
        %v7043 = vld [vmem:[%s5797 + $0xb4] sm:$0xf]
        %v7044 = vld [vmem:[%s5797 + $0xb8] sm:$0xf]
        %v7045 = vld [vmem:[%s5797 + $0xbc] sm:$0x1]
        %v7047 = vshrl.u32 %v6998, 16
        %v7049 = vrot.slane %v7047, 4
        %v7050 = vshll.u32 %v6998, 16
        %v7052 = vrot.slane %v7050, 5
        %v7053 = vor.u32 %v7049, %v7052
        %v7054 = vrot.slane %v7053, 4
        %v7056 = vshll.u32 %v6999, 16
        %v7058 = vrot.slane %v7056, 5
        %v7059 = vsel %vm1173, %v7054, %v7058
        %v7060 = vshrl.u32 %v6999, 16
        %v7062 = vrot.slane %v7060, 4
        %v7063 = vor.u32 %v7062, %v7058
        %v7064 = vrot.slane %v7063, 4
        %v7066 = vshll.u32 %v7000, 16
        %v7068 = vrot.slane %v7066, 5
        %v7069 = vsel %vm1173, %v7064, %v7068
        %v7071 = vshrl.u32 %v7001, 16
        %v7073 = vrot.slane %v7071, 4
        %v7074 = vshll.u32 %v7001, 16
        %v7076 = vrot.slane %v7074, 5
        %v7077 = vor.u32 %v7073, %v7076
        %v7078 = vrot.slane %v7077, 4
        %v7080 = vshll.u32 %v7002, 16
        %v7082 = vrot.slane %v7080, 5
        %v7083 = vsel %vm1173, %v7078, %v7082
        %v7084 = vshrl.u32 %v7002, 16
        %v7086 = vrot.slane %v7084, 4
        %v7087 = vor.u32 %v7086, %v7082
        %v7088 = vrot.slane %v7087, 4
        %v7090 = vshll.u32 %v7003, 16
        %v7092 = vrot.slane %v7090, 5
        %v7093 = vsel %vm1173, %v7088, %v7092
        %v7095 = vshrl.u32 %v7004, 16
        %v7097 = vrot.slane %v7095, 4
        %v7098 = vshll.u32 %v7004, 16
        %v7100 = vrot.slane %v7098, 5
        %v7101 = vor.u32 %v7097, %v7100
        %v7102 = vrot.slane %v7101, 4
        %v7104 = vshll.u32 %v7005, 16
        %v7106 = vrot.slane %v7104, 5
        %v7107 = vsel %vm1173, %v7102, %v7106
        %v7108 = vshrl.u32 %v7005, 16
        %v7110 = vrot.slane %v7108, 4
        %v7111 = vor.u32 %v7110, %v7106
        %v7112 = vrot.slane %v7111, 4
        %v7114 = vshll.u32 %v7006, 16
        %v7116 = vrot.slane %v7114, 5
        %v7117 = vsel %vm1173, %v7112, %v7116
        %v7119 = vshrl.u32 %v7007, 16
        %v7121 = vrot.slane %v7119, 4
        %v7122 = vshll.u32 %v7007, 16
        %v7124 = vrot.slane %v7122, 5
        %v7125 = vor.u32 %v7121, %v7124
        %v7126 = vrot.slane %v7125, 4
        %v7128 = vshll.u32 %v7008, 16
        %v7130 = vrot.slane %v7128, 5
        %v7131 = vsel %vm1173, %v7126, %v7130
        %v7132 = vshrl.u32 %v7008, 16
        %v7134 = vrot.slane %v7132, 4
        %v7135 = vor.u32 %v7134, %v7130
        %v7136 = vrot.slane %v7135, 4
        %v7138 = vshll.u32 %v7009, 16
        %v7140 = vrot.slane %v7138, 5
        %v7141 = vsel %vm1173, %v7136, %v7140
        %v7143 = vshrl.u32 %v7010, 16
        %v7145 = vrot.slane %v7143, 4
        %v7146 = vshll.u32 %v7010, 16
        %v7148 = vrot.slane %v7146, 5
        %v7149 = vor.u32 %v7145, %v7148
        %v7150 = vrot.slane %v7149, 4
        %v7152 = vshll.u32 %v7011, 16
        %v7154 = vrot.slane %v7152, 5
        %v7155 = vsel %vm1173, %v7150, %v7154
        %v7156 = vshrl.u32 %v7011, 16
        %v7158 = vrot.slane %v7156, 4
        %v7159 = vor.u32 %v7158, %v7154
        %v7160 = vrot.slane %v7159, 4
        %v7162 = vshll.u32 %v7012, 16
        %v7164 = vrot.slane %v7162, 5
        %v7165 = vsel %vm1173, %v7160, %v7164
        %v7167 = vshrl.u32 %v7013, 16
        %v7169 = vrot.slane %v7167, 4
        %v7170 = vshll.u32 %v7013, 16
        %v7172 = vrot.slane %v7170, 5
        %v7173 = vor.u32 %v7169, %v7172
        %v7174 = vrot.slane %v7173, 4
        %v7176 = vshll.u32 %v7014, 16
        %v7178 = vrot.slane %v7176, 5
        %v7179 = vsel %vm1173, %v7174, %v7178
        %v7180 = vshrl.u32 %v7014, 16
        %v7182 = vrot.slane %v7180, 4
        %v7183 = vor.u32 %v7182, %v7178
        %v7184 = vrot.slane %v7183, 4
        %v7186 = vshll.u32 %v7015, 16
        %v7188 = vrot.slane %v7186, 5
        %v7189 = vsel %vm1173, %v7184, %v7188
        %v7191 = vshrl.u32 %v7016, 16
        %v7193 = vrot.slane %v7191, 4
        %v7194 = vshll.u32 %v7016, 16
        %v7196 = vrot.slane %v7194, 5
        %v7197 = vor.u32 %v7193, %v7196
        %v7198 = vrot.slane %v7197, 4
        %v7200 = vshll.u32 %v7017, 16
        %v7202 = vrot.slane %v7200, 5
        %v7203 = vsel %vm1173, %v7198, %v7202
        %v7204 = vshrl.u32 %v7017, 16
        %v7206 = vrot.slane %v7204, 4
        %v7207 = vor.u32 %v7206, %v7202
        %v7208 = vrot.slane %v7207, 4
        %v7210 = vshll.u32 %v7018, 16
        %v7212 = vrot.slane %v7210, 5
        %v7213 = vsel %vm1173, %v7208, %v7212
        %v7215 = vshrl.u32 %v7019, 16
        %v7217 = vrot.slane %v7215, 4
        %v7218 = vshll.u32 %v7019, 16
        %v7220 = vrot.slane %v7218, 5
        %v7221 = vor.u32 %v7217, %v7220
        %v7222 = vrot.slane %v7221, 4
        %v7224 = vshll.u32 %v7020, 16
        %v7226 = vrot.slane %v7224, 5
        %v7227 = vsel %vm1173, %v7222, %v7226
        %v7228 = vshrl.u32 %v7020, 16
        %v7230 = vrot.slane %v7228, 4
        %v7231 = vor.u32 %v7230, %v7226
        %v7232 = vrot.slane %v7231, 4
        %v7234 = vshll.u32 %v7021, 16
        %v7236 = vrot.slane %v7234, 5
        %v7237 = vsel %vm1173, %v7232, %v7236
        %v7239 = vshrl.u32 %v7022, 16
        %v7241 = vrot.slane %v7239, 4
        %v7242 = vshll.u32 %v7022, 16
        %v7244 = vrot.slane %v7242, 5
        %v7245 = vor.u32 %v7241, %v7244
        %v7246 = vrot.slane %v7245, 4
        %v7248 = vshll.u32 %v7023, 16
        %v7250 = vrot.slane %v7248, 5
        %v7251 = vsel %vm1173, %v7246, %v7250
        %v7252 = vshrl.u32 %v7023, 16
        %v7254 = vrot.slane %v7252, 4
        %v7255 = vor.u32 %v7254, %v7250
        %v7256 = vrot.slane %v7255, 4
        %v7258 = vshll.u32 %v7024, 16
        %v7260 = vrot.slane %v7258, 5
        %v7261 = vsel %vm1173, %v7256, %v7260
        %v7263 = vshrl.u32 %v7025, 16
        %v7265 = vrot.slane %v7263, 4
        %v7266 = vshll.u32 %v7025, 16
        %v7268 = vrot.slane %v7266, 5
        %v7269 = vor.u32 %v7265, %v7268
        %v7270 = vrot.slane %v7269, 4
        %v7272 = vshll.u32 %v7026, 16
        %v7274 = vrot.slane %v7272, 5
        %v7275 = vsel %vm1173, %v7270, %v7274
        %v7276 = vshrl.u32 %v7026, 16
        %v7278 = vrot.slane %v7276, 4
        %v7279 = vor.u32 %v7278, %v7274
        %v7280 = vrot.slane %v7279, 4
        %v7282 = vshll.u32 %v7027, 16
        %v7284 = vrot.slane %v7282, 5
        %v7285 = vsel %vm1173, %v7280, %v7284
        %v7287 = vshrl.u32 %v7028, 16
        %v7289 = vrot.slane %v7287, 4
        %v7290 = vshll.u32 %v7028, 16
        %v7292 = vrot.slane %v7290, 5
        %v7293 = vor.u32 %v7289, %v7292
        %v7294 = vrot.slane %v7293, 4
        %v7296 = vshll.u32 %v7029, 16
        %v7298 = vrot.slane %v7296, 5
        %v7299 = vsel %vm1173, %v7294, %v7298
        %v7300 = vshrl.u32 %v7029, 16
        %v7302 = vrot.slane %v7300, 4
        %v7303 = vor.u32 %v7302, %v7298
        %v7304 = vrot.slane %v7303, 4
        %v7306 = vshll.u32 %v7030, 16
        %v7308 = vrot.slane %v7306, 5
        %v7309 = vsel %vm1173, %v7304, %v7308
        %v7311 = vshrl.u32 %v7031, 16
        %v7313 = vrot.slane %v7311, 4
        %v7314 = vshll.u32 %v7031, 16
        %v7316 = vrot.slane %v7314, 5
        %v7317 = vor.u32 %v7313, %v7316
        %v7318 = vrot.slane %v7317, 4
        %v7320 = vshll.u32 %v7032, 16
        %v7322 = vrot.slane %v7320, 5
        %v7323 = vsel %vm1173, %v7318, %v7322
        %v7324 = vshrl.u32 %v7032, 16
        %v7326 = vrot.slane %v7324, 4
        %v7327 = vor.u32 %v7326, %v7322
        %v7328 = vrot.slane %v7327, 4
        %v7330 = vshll.u32 %v7033, 16
        %v7332 = vrot.slane %v7330, 5
        %v7333 = vsel %vm1173, %v7328, %v7332
        %v7335 = vshrl.u32 %v7034, 16
        %v7337 = vrot.slane %v7335, 4
        %v7338 = vshll.u32 %v7034, 16
        %v7340 = vrot.slane %v7338, 5
        %v7341 = vor.u32 %v7337, %v7340
        %v7342 = vrot.slane %v7341, 4
        %v7344 = vshll.u32 %v7035, 16
        %v7346 = vrot.slane %v7344, 5
        %v7347 = vsel %vm1173, %v7342, %v7346
        %v7348 = vshrl.u32 %v7035, 16
        %v7350 = vrot.slane %v7348, 4
        %v7351 = vor.u32 %v7350, %v7346
        %v7352 = vrot.slane %v7351, 4
        %v7354 = vshll.u32 %v7036, 16
        %v7356 = vrot.slane %v7354, 5
        %v7357 = vsel %vm1173, %v7352, %v7356
        %v7359 = vshrl.u32 %v7037, 16
        %v7361 = vrot.slane %v7359, 4
        %v7362 = vshll.u32 %v7037, 16
        %v7364 = vrot.slane %v7362, 5
        %v7365 = vor.u32 %v7361, %v7364
        %v7366 = vrot.slane %v7365, 4
        %v7368 = vshll.u32 %v7038, 16
        %v7370 = vrot.slane %v7368, 5
        %v7371 = vsel %vm1173, %v7366, %v7370
        %v7372 = vshrl.u32 %v7038, 16
        %v7374 = vrot.slane %v7372, 4
        %v7375 = vor.u32 %v7374, %v7370
        %v7376 = vrot.slane %v7375, 4
        %v7378 = vshll.u32 %v7039, 16
        %v7380 = vrot.slane %v7378, 5
        %v7381 = vsel %vm1173, %v7376, %v7380
        %v7383 = vshrl.u32 %v7040, 16
        %v7385 = vrot.slane %v7383, 4
        %v7386 = vshll.u32 %v7040, 16
        %v7388 = vrot.slane %v7386, 5
        %v7389 = vor.u32 %v7385, %v7388
        %v7390 = vrot.slane %v7389, 4
        %v7392 = vshll.u32 %v7041, 16
        %v7394 = vrot.slane %v7392, 5
        %v7395 = vsel %vm1173, %v7390, %v7394
        %v7396 = vshrl.u32 %v7041, 16
        %v7398 = vrot.slane %v7396, 4
        %v7399 = vor.u32 %v7398, %v7394
        %v7400 = vrot.slane %v7399, 4
        %v7402 = vshll.u32 %v7042, 16
        %v7404 = vrot.slane %v7402, 5
        %v7405 = vsel %vm1173, %v7400, %v7404
        %v7407 = vshrl.u32 %v7043, 16
        %v7409 = vrot.slane %v7407, 4
        %v7410 = vshll.u32 %v7043, 16
        %v7412 = vrot.slane %v7410, 5
        %v7413 = vor.u32 %v7409, %v7412
        %v7414 = vrot.slane %v7413, 4
        %v7416 = vshll.u32 %v7044, 16
        %v7418 = vrot.slane %v7416, 5
        %v7419 = vsel %vm1173, %v7414, %v7418
        %v7420 = vshrl.u32 %v7044, 16
        %v7422 = vrot.slane %v7420, 4
        %v7423 = vor.u32 %v7422, %v7418
        %v7424 = vrot.slane %v7423, 4
        %v7426 = vshll.u32 %v7045, 16
        %v7428 = vrot.slane %v7426, 5
        %v7429 = vsel %vm1173, %v7424, %v7428
        %v7430 = vunpack.c.l.b16 %v7059
        %v7431 = vunpack.c.l.b16 %v7069
        %v7432 = vunpack.c.l.b16 %v7083
        %v7433 = vunpack.c.l.b16 %v7093
        %v7434 = vunpack.c.l.b16 %v7107
        %v7435 = vunpack.c.l.b16 %v7117
        %v7436 = vunpack.c.l.b16 %v7131
        %v7437 = vunpack.c.l.b16 %v7141
        %v7438 = vunpack.c.l.b16 %v7155
        %v7439 = vunpack.c.l.b16 %v7165
        %v7440 = vunpack.c.l.b16 %v7179
        %v7441 = vunpack.c.l.b16 %v7189
        %v7442 = vunpack.c.l.b16 %v7203
        %v7443 = vunpack.c.l.b16 %v7213
        %v7444 = vunpack.c.l.b16 %v7227
        %v7445 = vunpack.c.l.b16 %v7237
        %v7446 = vunpack.c.l.b16 %v7251
        %v7447 = vunpack.c.l.b16 %v7261
        %v7448 = vunpack.c.l.b16 %v7275
        %v7449 = vunpack.c.l.b16 %v7285
        %v7450 = vunpack.c.l.b16 %v7299
        %v7451 = vunpack.c.l.b16 %v7309
        %v7452 = vunpack.c.l.b16 %v7323
        %v7453 = vunpack.c.l.b16 %v7333
        %v7454 = vunpack.c.l.b16 %v7347
        %v7455 = vunpack.c.l.b16 %v7357
        %v7456 = vunpack.c.l.b16 %v7371
        %v7457 = vunpack.c.l.b16 %v7381
        %v7458 = vunpack.c.l.b16 %v7395
        %v7459 = vunpack.c.l.b16 %v7405
        %v7460 = vunpack.c.l.b16 %v7419
        %v7461 = vunpack.c.l.b16 %v7429
        %v7462 = vpack.c.b16 %v7431, %v7430
        %v7463 = vpack.c.b16 %v7433, %v7432
        %v7464 = vpack.c.b16 %v7435, %v7434
        %v7465 = vpack.c.b16 %v7437, %v7436
        %v7466 = vpack.c.b16 %v7439, %v7438
        %v7467 = vpack.c.b16 %v7441, %v7440
        %v7468 = vpack.c.b16 %v7443, %v7442
        %v7469 = vpack.c.b16 %v7445, %v7444
        %v7470 = vpack.c.b16 %v7447, %v7446
        %v7471 = vpack.c.b16 %v7449, %v7448
        %v7472 = vpack.c.b16 %v7451, %v7450
        %v7473 = vpack.c.b16 %v7453, %v7452
        %v7474 = vpack.c.b16 %v7455, %v7454
        %v7475 = vpack.c.b16 %v7457, %v7456
        %v7476 = vpack.c.b16 %v7459, %v7458
        %v7477 = vpack.c.b16 %v7461, %v7460
        %7494 = vst [vmem:[#allocation4 + $0x20] sm:$0xff] %v7462
        %7495 = vst [vmem:[#allocation4 + $0x70] sm:$0xff] %v7463
        %7496 = vst [vmem:[#allocation4 + $0xc0] sm:$0xff] %v7464
        %7497 = vst [vmem:[#allocation4 + $0x110] sm:$0xff] %v7465
        %7498 = vst [vmem:[#allocation4 + $0x160] sm:$0xff] %v7466
        %7499 = vst [vmem:[#allocation4 + $0x1b0] sm:$0xff] %v7467
        %7500 = vst [vmem:[#allocation4 + $0x200] sm:$0xff] %v7468
        %7501 = vst [vmem:[#allocation4 + $0x250] sm:$0xff] %v7469
        %7502 = vst [vmem:[#allocation4 + $0x2a0] sm:$0xff] %v7470
        %7503 = vst [vmem:[#allocation4 + $0x2f0] sm:$0xff] %v7471
        %7504 = vst [vmem:[#allocation4 + $0x340] sm:$0xff] %v7472
        %7505 = vst [vmem:[#allocation4 + $0x390] sm:$0xff] %v7473
        %7506 = vst [vmem:[#allocation4 + $0x3e0] sm:$0xff] %v7474
        %7507 = vst [vmem:[#allocation4 + $0x430] sm:$0xff] %v7475
        %7508 = vst [vmem:[#allocation4 + $0x480] sm:$0xff] %v7476
        %7509 = vst [vmem:[#allocation4 + $0x4d0] sm:$0xff] %v7477
        %v7510 = vld [vmem:[%s5797] sm:$0xe]
        %v7511 = vld [vmem:[%s5797 + $0x4] sm:$0xf]
        %v7512 = vld [vmem:[%s5797 + $0x8] sm:$0x1]
        %v7513 = vld [vmem:[%s5797 + $0xc] sm:$0xe]
        %v7514 = vld [vmem:[%s5797 + $0x10] sm:$0xf]
        %v7515 = vld [vmem:[%s5797 + $0x14] sm:$0x1]
        %v7516 = vld [vmem:[%s5797 + $0x18] sm:$0xe]
        %v7517 = vld [vmem:[%s5797 + $0x1c] sm:$0xf]
        %v7518 = vld [vmem:[%s5797 + $0x20] sm:$0x1]
        %v7519 = vld [vmem:[%s5797 + $0x24] sm:$0xe]
        %v7520 = vld [vmem:[%s5797 + $0x28] sm:$0xf]
        %v7521 = vld [vmem:[%s5797 + $0x2c] sm:$0x1]
        %v7522 = vld [vmem:[%s5797 + $0x30] sm:$0xe]
        %v7523 = vld [vmem:[%s5797 + $0x34] sm:$0xf]
        %v7524 = vld [vmem:[%s5797 + $0x38] sm:$0x1]
        %v7525 = vld [vmem:[%s5797 + $0x3c] sm:$0xe]
        %v7526 = vld [vmem:[%s5797 + $0x40] sm:$0xf]
        %v7527 = vld [vmem:[%s5797 + $0x44] sm:$0x1]
        %v7528 = vld [vmem:[%s5797 + $0x48] sm:$0xe]
        %v7529 = vld [vmem:[%s5797 + $0x4c] sm:$0xf]
        %v7530 = vld [vmem:[%s5797 + $0x50] sm:$0x1]
        %v7531 = vld [vmem:[%s5797 + $0x54] sm:$0xe]
        %v7532 = vld [vmem:[%s5797 + $0x58] sm:$0xf]
        %v7533 = vld [vmem:[%s5797 + $0x5c] sm:$0x1]
        %v7534 = vld [vmem:[%s5797 + $0x60] sm:$0xe]
        %v7535 = vld [vmem:[%s5797 + $0x64] sm:$0xf]
        %v7536 = vld [vmem:[%s5797 + $0x68] sm:$0x1]
        %v7537 = vld [vmem:[%s5797 + $0x6c] sm:$0xe]
        %v7538 = vld [vmem:[%s5797 + $0x70] sm:$0xf]
        %v7539 = vld [vmem:[%s5797 + $0x74] sm:$0x1]
        %v7540 = vld [vmem:[%s5797 + $0x78] sm:$0xe]
        %v7541 = vld [vmem:[%s5797 + $0x7c] sm:$0xf]
        %v7542 = vld [vmem:[%s5797 + $0x80] sm:$0x1]
        %v7543 = vld [vmem:[%s5797 + $0x84] sm:$0xe]
        %v7544 = vld [vmem:[%s5797 + $0x88] sm:$0xf]
        %v7545 = vld [vmem:[%s5797 + $0x8c] sm:$0x1]
        %v7546 = vld [vmem:[%s5797 + $0x90] sm:$0xe]
        %v7547 = vld [vmem:[%s5797 + $0x94] sm:$0xf]
        %v7548 = vld [vmem:[%s5797 + $0x98] sm:$0x1]
        %v7549 = vld [vmem:[%s5797 + $0x9c] sm:$0xe]
        %v7550 = vld [vmem:[%s5797 + $0xa0] sm:$0xf]
        %v7551 = vld [vmem:[%s5797 + $0xa4] sm:$0x1]
        %v7552 = vld [vmem:[%s5797 + $0xa8] sm:$0xe]
        %v7553 = vld [vmem:[%s5797 + $0xac] sm:$0xf]
        %v7554 = vld [vmem:[%s5797 + $0xb0] sm:$0x1]
        %v7555 = vld [vmem:[%s5797 + $0xb4] sm:$0xe]
        %v7556 = vld [vmem:[%s5797 + $0xb8] sm:$0xf]
        %v7557 = vld [vmem:[%s5797 + $0xbc] sm:$0x1]
        %v7606 = vrot.slane %v7510, 5
        %v7607 = vrot.slane %v7606, 4
        %v7608 = vrot.slane %v7511, 5
        %v7609 = vsel %vm1736, %v7607, %v7608
        %v7610 = vrot.slane %v7608, 4
        %v7611 = vrot.slane %v7512, 5
        %v7612 = vsel %vm1736, %v7610, %v7611
        %v7613 = vrot.slane %v7513, 5
        %v7614 = vrot.slane %v7613, 4
        %v7615 = vrot.slane %v7514, 5
        %v7616 = vsel %vm1736, %v7614, %v7615
        %v7617 = vrot.slane %v7615, 4
        %v7618 = vrot.slane %v7515, 5
        %v7619 = vsel %vm1736, %v7617, %v7618
        %v7620 = vrot.slane %v7516, 5
        %v7621 = vrot.slane %v7620, 4
        %v7622 = vrot.slane %v7517, 5
        %v7623 = vsel %vm1736, %v7621, %v7622
        %v7624 = vrot.slane %v7622, 4
        %v7625 = vrot.slane %v7518, 5
        %v7626 = vsel %vm1736, %v7624, %v7625
        %v7627 = vrot.slane %v7519, 5
        %v7628 = vrot.slane %v7627, 4
        %v7629 = vrot.slane %v7520, 5
        %v7630 = vsel %vm1736, %v7628, %v7629
        %v7631 = vrot.slane %v7629, 4
        %v7632 = vrot.slane %v7521, 5
        %v7633 = vsel %vm1736, %v7631, %v7632
        %v7634 = vrot.slane %v7522, 5
        %v7635 = vrot.slane %v7634, 4
        %v7636 = vrot.slane %v7523, 5
        %v7637 = vsel %vm1736, %v7635, %v7636
        %v7638 = vrot.slane %v7636, 4
        %v7639 = vrot.slane %v7524, 5
        %v7640 = vsel %vm1736, %v7638, %v7639
        %v7641 = vrot.slane %v7525, 5
        %v7642 = vrot.slane %v7641, 4
        %v7643 = vrot.slane %v7526, 5
        %v7644 = vsel %vm1736, %v7642, %v7643
        %v7645 = vrot.slane %v7643, 4
        %v7646 = vrot.slane %v7527, 5
        %v7647 = vsel %vm1736, %v7645, %v7646
        %v7648 = vrot.slane %v7528, 5
        %v7649 = vrot.slane %v7648, 4
        %v7650 = vrot.slane %v7529, 5
        %v7651 = vsel %vm1736, %v7649, %v7650
        %v7652 = vrot.slane %v7650, 4
        %v7653 = vrot.slane %v7530, 5
        %v7654 = vsel %vm1736, %v7652, %v7653
        %v7655 = vrot.slane %v7531, 5
        %v7656 = vrot.slane %v7655, 4
        %v7657 = vrot.slane %v7532, 5
        %v7658 = vsel %vm1736, %v7656, %v7657
        %v7659 = vrot.slane %v7657, 4
        %v7660 = vrot.slane %v7533, 5
        %v7661 = vsel %vm1736, %v7659, %v7660
        %v7662 = vrot.slane %v7534, 5
        %v7663 = vrot.slane %v7662, 4
        %v7664 = vrot.slane %v7535, 5
        %v7665 = vsel %vm1736, %v7663, %v7664
        %v7666 = vrot.slane %v7664, 4
        %v7667 = vrot.slane %v7536, 5
        %v7668 = vsel %vm1736, %v7666, %v7667
        %v7669 = vrot.slane %v7537, 5
        %v7670 = vrot.slane %v7669, 4
        %v7671 = vrot.slane %v7538, 5
        %v7672 = vsel %vm1736, %v7670, %v7671
        %v7673 = vrot.slane %v7671, 4
        %v7674 = vrot.slane %v7539, 5
        %v7675 = vsel %vm1736, %v7673, %v7674
        %v7676 = vrot.slane %v7540, 5
        %v7677 = vrot.slane %v7676, 4
        %v7678 = vrot.slane %v7541, 5
        %v7679 = vsel %vm1736, %v7677, %v7678
        %v7680 = vrot.slane %v7678, 4
        %v7681 = vrot.slane %v7542, 5
        %v7682 = vsel %vm1736, %v7680, %v7681
        %v7683 = vrot.slane %v7543, 5
        %v7684 = vrot.slane %v7683, 4
        %v7685 = vrot.slane %v7544, 5
        %v7686 = vsel %vm1736, %v7684, %v7685
        %v7687 = vrot.slane %v7685, 4
        %v7688 = vrot.slane %v7545, 5
        %v7689 = vsel %vm1736, %v7687, %v7688
        %v7690 = vrot.slane %v7546, 5
        %v7691 = vrot.slane %v7690, 4
        %v7692 = vrot.slane %v7547, 5
        %v7693 = vsel %vm1736, %v7691, %v7692
        %v7694 = vrot.slane %v7692, 4
        %v7695 = vrot.slane %v7548, 5
        %v7696 = vsel %vm1736, %v7694, %v7695
        %v7697 = vrot.slane %v7549, 5
        %v7698 = vrot.slane %v7697, 4
        %v7699 = vrot.slane %v7550, 5
        %v7700 = vsel %vm1736, %v7698, %v7699
        %v7701 = vrot.slane %v7699, 4
        %v7702 = vrot.slane %v7551, 5
        %v7703 = vsel %vm1736, %v7701, %v7702
        %v7704 = vrot.slane %v7552, 5
        %v7705 = vrot.slane %v7704, 4
        %v7706 = vrot.slane %v7553, 5
        %v7707 = vsel %vm1736, %v7705, %v7706
        %v7708 = vrot.slane %v7706, 4
        %v7709 = vrot.slane %v7554, 5
        %v7710 = vsel %vm1736, %v7708, %v7709
        %v7711 = vrot.slane %v7555, 5
        %v7712 = vrot.slane %v7711, 4
        %v7713 = vrot.slane %v7556, 5
        %v7714 = vsel %vm1736, %v7712, %v7713
        %v7715 = vrot.slane %v7713, 4
        %v7716 = vrot.slane %v7557, 5
        %v7717 = vsel %vm1736, %v7715, %v7716
        %v7718 = vunpack.c.l.b16 %v7609
        %v7719 = vunpack.c.l.b16 %v7612
        %v7720 = vunpack.c.l.b16 %v7616
        %v7721 = vunpack.c.l.b16 %v7619
        %v7722 = vunpack.c.l.b16 %v7623
        %v7723 = vunpack.c.l.b16 %v7626
        %v7724 = vunpack.c.l.b16 %v7630
        %v7725 = vunpack.c.l.b16 %v7633
        %v7726 = vunpack.c.l.b16 %v7637
        %v7727 = vunpack.c.l.b16 %v7640
        %v7728 = vunpack.c.l.b16 %v7644
        %v7729 = vunpack.c.l.b16 %v7647
        %v7730 = vunpack.c.l.b16 %v7651
        %v7731 = vunpack.c.l.b16 %v7654
        %v7732 = vunpack.c.l.b16 %v7658
        %v7733 = vunpack.c.l.b16 %v7661
        %v7734 = vunpack.c.l.b16 %v7665
        %v7735 = vunpack.c.l.b16 %v7668
        %v7736 = vunpack.c.l.b16 %v7672
        %v7737 = vunpack.c.l.b16 %v7675
        %v7738 = vunpack.c.l.b16 %v7679
        %v7739 = vunpack.c.l.b16 %v7682
        %v7740 = vunpack.c.l.b16 %v7686
        %v7741 = vunpack.c.l.b16 %v7689
        %v7742 = vunpack.c.l.b16 %v7693
        %v7743 = vunpack.c.l.b16 %v7696
        %v7744 = vunpack.c.l.b16 %v7700
        %v7745 = vunpack.c.l.b16 %v7703
        %v7746 = vunpack.c.l.b16 %v7707
        %v7747 = vunpack.c.l.b16 %v7710
        %v7748 = vunpack.c.l.b16 %v7714
        %v7749 = vunpack.c.l.b16 %v7717
        %v7750 = vpack.c.b16 %v7719, %v7718
        %v7751 = vpack.c.b16 %v7721, %v7720
        %v7752 = vpack.c.b16 %v7723, %v7722
        %v7753 = vpack.c.b16 %v7725, %v7724
        %v7754 = vpack.c.b16 %v7727, %v7726
        %v7755 = vpack.c.b16 %v7729, %v7728
        %v7756 = vpack.c.b16 %v7731, %v7730
        %v7757 = vpack.c.b16 %v7733, %v7732
        %v7758 = vpack.c.b16 %v7735, %v7734
        %v7759 = vpack.c.b16 %v7737, %v7736
        %v7760 = vpack.c.b16 %v7739, %v7738
        %v7761 = vpack.c.b16 %v7741, %v7740
        %v7762 = vpack.c.b16 %v7743, %v7742
        %v7763 = vpack.c.b16 %v7745, %v7744
        %v7764 = vpack.c.b16 %v7747, %v7746
        %v7765 = vpack.c.b16 %v7749, %v7748
        %7782 = vst [vmem:[#allocation4 + $0x28] sm:$0xff] %v7750
        %7783 = vst [vmem:[#allocation4 + $0x78] sm:$0xff] %v7751
        %7784 = vst [vmem:[#allocation4 + $0xc8] sm:$0xff] %v7752
        %7785 = vst [vmem:[#allocation4 + $0x118] sm:$0xff] %v7753
        %7786 = vst [vmem:[#allocation4 + $0x168] sm:$0xff] %v7754
        %7787 = vst [vmem:[#allocation4 + $0x1b8] sm:$0xff] %v7755
        %7788 = vst [vmem:[#allocation4 + $0x208] sm:$0xff] %v7756
        %7789 = vst [vmem:[#allocation4 + $0x258] sm:$0xff] %v7757
        %7790 = vst [vmem:[#allocation4 + $0x2a8] sm:$0xff] %v7758
        %7791 = vst [vmem:[#allocation4 + $0x2f8] sm:$0xff] %v7759
        %7792 = vst [vmem:[#allocation4 + $0x348] sm:$0xff] %v7760
        %7793 = vst [vmem:[#allocation4 + $0x398] sm:$0xff] %v7761
        %7794 = vst [vmem:[#allocation4 + $0x3e8] sm:$0xff] %v7762
        %7795 = vst [vmem:[#allocation4 + $0x438] sm:$0xff] %v7763
        %7796 = vst [vmem:[#allocation4 + $0x488] sm:$0xff] %v7764
        %7797 = vst [vmem:[#allocation4 + $0x4d8] sm:$0xff] %v7765
        %s7798 = scalar_lea.vmem [#allocation3], 24
        %v7799 = vld [vmem:[%s7798] sm:$0xf]
        %v7800 = vld [vmem:[%s7798 + $0x4] sm:$0xf]
        %v7801 = vld [vmem:[%s7798 + $0xc] sm:$0xf]
        %v7802 = vld [vmem:[%s7798 + $0x10] sm:$0xf]
        %v7803 = vld [vmem:[%s7798 + $0x18] sm:$0xf]
        %v7804 = vld [vmem:[%s7798 + $0x1c] sm:$0xf]
        %v7805 = vld [vmem:[%s7798 + $0x24] sm:$0xf]
        %v7806 = vld [vmem:[%s7798 + $0x28] sm:$0xf]
        %v7807 = vld [vmem:[%s7798 + $0x30] sm:$0xf]
        %v7808 = vld [vmem:[%s7798 + $0x34] sm:$0xf]
        %v7809 = vld [vmem:[%s7798 + $0x3c] sm:$0xf]
        %v7810 = vld [vmem:[%s7798 + $0x40] sm:$0xf]
        %v7811 = vld [vmem:[%s7798 + $0x48] sm:$0xf]
        %v7812 = vld [vmem:[%s7798 + $0x4c] sm:$0xf]
        %v7813 = vld [vmem:[%s7798 + $0x54] sm:$0xf]
        %v7814 = vld [vmem:[%s7798 + $0x58] sm:$0xf]
        %v7815 = vld [vmem:[%s7798 + $0x60] sm:$0xf]
        %v7816 = vld [vmem:[%s7798 + $0x64] sm:$0xf]
        %v7817 = vld [vmem:[%s7798 + $0x6c] sm:$0xf]
        %v7818 = vld [vmem:[%s7798 + $0x70] sm:$0xf]
        %v7819 = vld [vmem:[%s7798 + $0x78] sm:$0xf]
        %v7820 = vld [vmem:[%s7798 + $0x7c] sm:$0xf]
        %v7821 = vld [vmem:[%s7798 + $0x84] sm:$0xf]
        %v7822 = vld [vmem:[%s7798 + $0x88] sm:$0xf]
        %v7823 = vld [vmem:[%s7798 + $0x90] sm:$0xf]
        %v7824 = vld [vmem:[%s7798 + $0x94] sm:$0xf]
        %v7825 = vld [vmem:[%s7798 + $0x9c] sm:$0xf]
        %v7826 = vld [vmem:[%s7798 + $0xa0] sm:$0xf]
        %v7827 = vld [vmem:[%s7798 + $0xa8] sm:$0xf]
        %v7828 = vld [vmem:[%s7798 + $0xac] sm:$0xf]
        %v7829 = vld [vmem:[%s7798 + $0xb4] sm:$0xf]
        %v7830 = vld [vmem:[%s7798 + $0xb8] sm:$0xf]
        %v7863 = vunpack.c.l.b16 %v7799
        %v7864 = vunpack.c.l.b16 %v7800
        %v7865 = vunpack.c.l.b16 %v7801
        %v7866 = vunpack.c.l.b16 %v7802
        %v7867 = vunpack.c.l.b16 %v7803
        %v7868 = vunpack.c.l.b16 %v7804
        %v7869 = vunpack.c.l.b16 %v7805
        %v7870 = vunpack.c.l.b16 %v7806
        %v7871 = vunpack.c.l.b16 %v7807
        %v7872 = vunpack.c.l.b16 %v7808
        %v7873 = vunpack.c.l.b16 %v7809
        %v7874 = vunpack.c.l.b16 %v7810
        %v7875 = vunpack.c.l.b16 %v7811
        %v7876 = vunpack.c.l.b16 %v7812
        %v7877 = vunpack.c.l.b16 %v7813
        %v7878 = vunpack.c.l.b16 %v7814
        %v7879 = vunpack.c.l.b16 %v7815
        %v7880 = vunpack.c.l.b16 %v7816
        %v7881 = vunpack.c.l.b16 %v7817
        %v7882 = vunpack.c.l.b16 %v7818
        %v7883 = vunpack.c.l.b16 %v7819
        %v7884 = vunpack.c.l.b16 %v7820
        %v7885 = vunpack.c.l.b16 %v7821
        %v7886 = vunpack.c.l.b16 %v7822
        %v7887 = vunpack.c.l.b16 %v7823
        %v7888 = vunpack.c.l.b16 %v7824
        %v7889 = vunpack.c.l.b16 %v7825
        %v7890 = vunpack.c.l.b16 %v7826
        %v7891 = vunpack.c.l.b16 %v7827
        %v7892 = vunpack.c.l.b16 %v7828
        %v7893 = vunpack.c.l.b16 %v7829
        %v7894 = vunpack.c.l.b16 %v7830
        %v7895 = vpack.c.b16 %v7864, %v7863
        %v7896 = vpack.c.b16 %v7866, %v7865
        %v7897 = vpack.c.b16 %v7868, %v7867
        %v7898 = vpack.c.b16 %v7870, %v7869
        %v7899 = vpack.c.b16 %v7872, %v7871
        %v7900 = vpack.c.b16 %v7874, %v7873
        %v7901 = vpack.c.b16 %v7876, %v7875
        %v7902 = vpack.c.b16 %v7878, %v7877
        %v7903 = vpack.c.b16 %v7880, %v7879
        %v7904 = vpack.c.b16 %v7882, %v7881
        %v7905 = vpack.c.b16 %v7884, %v7883
        %v7906 = vpack.c.b16 %v7886, %v7885
        %v7907 = vpack.c.b16 %v7888, %v7887
        %v7908 = vpack.c.b16 %v7890, %v7889
        %v7909 = vpack.c.b16 %v7892, %v7891
        %v7910 = vpack.c.b16 %v7894, %v7893
        %7927 = vst [vmem:[#allocation4 + $0x30] sm:$0xff] %v7895
        %7928 = vst [vmem:[#allocation4 + $0x80] sm:$0xff] %v7896
        %7929 = vst [vmem:[#allocation4 + $0xd0] sm:$0xff] %v7897
        %7930 = vst [vmem:[#allocation4 + $0x120] sm:$0xff] %v7898
        %7931 = vst [vmem:[#allocation4 + $0x170] sm:$0xff] %v7899
        %7932 = vst [vmem:[#allocation4 + $0x1c0] sm:$0xff] %v7900
        %7933 = vst [vmem:[#allocation4 + $0x210] sm:$0xff] %v7901
        %7934 = vst [vmem:[#allocation4 + $0x260] sm:$0xff] %v7902
        %7935 = vst [vmem:[#allocation4 + $0x2b0] sm:$0xff] %v7903
        %7936 = vst [vmem:[#allocation4 + $0x300] sm:$0xff] %v7904
        %7937 = vst [vmem:[#allocation4 + $0x350] sm:$0xff] %v7905
        %7938 = vst [vmem:[#allocation4 + $0x3a0] sm:$0xff] %v7906
        %7939 = vst [vmem:[#allocation4 + $0x3f0] sm:$0xff] %v7907
        %7940 = vst [vmem:[#allocation4 + $0x440] sm:$0xff] %v7908
        %7941 = vst [vmem:[#allocation4 + $0x490] sm:$0xff] %v7909
        %7942 = vst [vmem:[#allocation4 + $0x4e0] sm:$0xff] %v7910
        %v7943 = vld [vmem:[%s7798] sm:$0xf]
        %v7944 = vld [vmem:[%s7798 + $0x4] sm:$0xf]
        %v7945 = vld [vmem:[%s7798 + $0x8] sm:$0x1]
        %v7946 = vld [vmem:[%s7798 + $0xc] sm:$0xf]
        %v7947 = vld [vmem:[%s7798 + $0x10] sm:$0xf]
        %v7948 = vld [vmem:[%s7798 + $0x14] sm:$0x1]
        %v7949 = vld [vmem:[%s7798 + $0x18] sm:$0xf]
        %v7950 = vld [vmem:[%s7798 + $0x1c] sm:$0xf]
        %v7951 = vld [vmem:[%s7798 + $0x20] sm:$0x1]
        %v7952 = vld [vmem:[%s7798 + $0x24] sm:$0xf]
        %v7953 = vld [vmem:[%s7798 + $0x28] sm:$0xf]
        %v7954 = vld [vmem:[%s7798 + $0x2c] sm:$0x1]
        %v7955 = vld [vmem:[%s7798 + $0x30] sm:$0xf]
        %v7956 = vld [vmem:[%s7798 + $0x34] sm:$0xf]
        %v7957 = vld [vmem:[%s7798 + $0x38] sm:$0x1]
        %v7958 = vld [vmem:[%s7798 + $0x3c] sm:$0xf]
        %v7959 = vld [vmem:[%s7798 + $0x40] sm:$0xf]
        %v7960 = vld [vmem:[%s7798 + $0x44] sm:$0x1]
        %v7961 = vld [vmem:[%s7798 + $0x48] sm:$0xf]
        %v7962 = vld [vmem:[%s7798 + $0x4c] sm:$0xf]
        %v7963 = vld [vmem:[%s7798 + $0x50] sm:$0x1]
        %v7964 = vld [vmem:[%s7798 + $0x54] sm:$0xf]
        %v7965 = vld [vmem:[%s7798 + $0x58] sm:$0xf]
        %v7966 = vld [vmem:[%s7798 + $0x5c] sm:$0x1]
        %v7967 = vld [vmem:[%s7798 + $0x60] sm:$0xf]
        %v7968 = vld [vmem:[%s7798 + $0x64] sm:$0xf]
        %v7969 = vld [vmem:[%s7798 + $0x68] sm:$0x1]
        %v7970 = vld [vmem:[%s7798 + $0x6c] sm:$0xf]
        %v7971 = vld [vmem:[%s7798 + $0x70] sm:$0xf]
        %v7972 = vld [vmem:[%s7798 + $0x74] sm:$0x1]
        %v7973 = vld [vmem:[%s7798 + $0x78] sm:$0xf]
        %v7974 = vld [vmem:[%s7798 + $0x7c] sm:$0xf]
        %v7975 = vld [vmem:[%s7798 + $0x80] sm:$0x1]
        %v7976 = vld [vmem:[%s7798 + $0x84] sm:$0xf]
        %v7977 = vld [vmem:[%s7798 + $0x88] sm:$0xf]
        %v7978 = vld [vmem:[%s7798 + $0x8c] sm:$0x1]
        %v7979 = vld [vmem:[%s7798 + $0x90] sm:$0xf]
        %v7980 = vld [vmem:[%s7798 + $0x94] sm:$0xf]
        %v7981 = vld [vmem:[%s7798 + $0x98] sm:$0x1]
        %v7982 = vld [vmem:[%s7798 + $0x9c] sm:$0xf]
        %v7983 = vld [vmem:[%s7798 + $0xa0] sm:$0xf]
        %v7984 = vld [vmem:[%s7798 + $0xa4] sm:$0x1]
        %v7985 = vld [vmem:[%s7798 + $0xa8] sm:$0xf]
        %v7986 = vld [vmem:[%s7798 + $0xac] sm:$0xf]
        %v7987 = vld [vmem:[%s7798 + $0xb0] sm:$0x1]
        %v7988 = vld [vmem:[%s7798 + $0xb4] sm:$0xf]
        %v7989 = vld [vmem:[%s7798 + $0xb8] sm:$0xf]
        %v7990 = vld [vmem:[%s7798 + $0xbc] sm:$0x1]
        %v7992 = vshrl.u32 %v7943, 16
        %v7994 = vrot.slane %v7992, 4
        %v7995 = vshll.u32 %v7943, 16
        %v7997 = vrot.slane %v7995, 5
        %v7998 = vor.u32 %v7994, %v7997
        %v7999 = vrot.slane %v7998, 4
        %v8001 = vshll.u32 %v7944, 16
        %v8003 = vrot.slane %v8001, 5
        %v8004 = vsel %vm1173, %v7999, %v8003
        %v8005 = vshrl.u32 %v7944, 16
        %v8007 = vrot.slane %v8005, 4
        %v8008 = vor.u32 %v8007, %v8003
        %v8009 = vrot.slane %v8008, 4
        %v8011 = vshll.u32 %v7945, 16
        %v8013 = vrot.slane %v8011, 5
        %v8014 = vsel %vm1173, %v8009, %v8013
        %v8016 = vshrl.u32 %v7946, 16
        %v8018 = vrot.slane %v8016, 4
        %v8019 = vshll.u32 %v7946, 16
        %v8021 = vrot.slane %v8019, 5
        %v8022 = vor.u32 %v8018, %v8021
        %v8023 = vrot.slane %v8022, 4
        %v8025 = vshll.u32 %v7947, 16
        %v8027 = vrot.slane %v8025, 5
        %v8028 = vsel %vm1173, %v8023, %v8027
        %v8029 = vshrl.u32 %v7947, 16
        %v8031 = vrot.slane %v8029, 4
        %v8032 = vor.u32 %v8031, %v8027
        %v8033 = vrot.slane %v8032, 4
        %v8035 = vshll.u32 %v7948, 16
        %v8037 = vrot.slane %v8035, 5
        %v8038 = vsel %vm1173, %v8033, %v8037
        %v8040 = vshrl.u32 %v7949, 16
        %v8042 = vrot.slane %v8040, 4
        %v8043 = vshll.u32 %v7949, 16
        %v8045 = vrot.slane %v8043, 5
        %v8046 = vor.u32 %v8042, %v8045
        %v8047 = vrot.slane %v8046, 4
        %v8049 = vshll.u32 %v7950, 16
        %v8051 = vrot.slane %v8049, 5
        %v8052 = vsel %vm1173, %v8047, %v8051
        %v8053 = vshrl.u32 %v7950, 16
        %v8055 = vrot.slane %v8053, 4
        %v8056 = vor.u32 %v8055, %v8051
        %v8057 = vrot.slane %v8056, 4
        %v8059 = vshll.u32 %v7951, 16
        %v8061 = vrot.slane %v8059, 5
        %v8062 = vsel %vm1173, %v8057, %v8061
        %v8064 = vshrl.u32 %v7952, 16
        %v8066 = vrot.slane %v8064, 4
        %v8067 = vshll.u32 %v7952, 16
        %v8069 = vrot.slane %v8067, 5
        %v8070 = vor.u32 %v8066, %v8069
        %v8071 = vrot.slane %v8070, 4
        %v8073 = vshll.u32 %v7953, 16
        %v8075 = vrot.slane %v8073, 5
        %v8076 = vsel %vm1173, %v8071, %v8075
        %v8077 = vshrl.u32 %v7953, 16
        %v8079 = vrot.slane %v8077, 4
        %v8080 = vor.u32 %v8079, %v8075
        %v8081 = vrot.slane %v8080, 4
        %v8083 = vshll.u32 %v7954, 16
        %v8085 = vrot.slane %v8083, 5
        %v8086 = vsel %vm1173, %v8081, %v8085
        %v8088 = vshrl.u32 %v7955, 16
        %v8090 = vrot.slane %v8088, 4
        %v8091 = vshll.u32 %v7955, 16
        %v8093 = vrot.slane %v8091, 5
        %v8094 = vor.u32 %v8090, %v8093
        %v8095 = vrot.slane %v8094, 4
        %v8097 = vshll.u32 %v7956, 16
        %v8099 = vrot.slane %v8097, 5
        %v8100 = vsel %vm1173, %v8095, %v8099
        %v8101 = vshrl.u32 %v7956, 16
        %v8103 = vrot.slane %v8101, 4
        %v8104 = vor.u32 %v8103, %v8099
        %v8105 = vrot.slane %v8104, 4
        %v8107 = vshll.u32 %v7957, 16
        %v8109 = vrot.slane %v8107, 5
        %v8110 = vsel %vm1173, %v8105, %v8109
        %v8112 = vshrl.u32 %v7958, 16
        %v8114 = vrot.slane %v8112, 4
        %v8115 = vshll.u32 %v7958, 16
        %v8117 = vrot.slane %v8115, 5
        %v8118 = vor.u32 %v8114, %v8117
        %v8119 = vrot.slane %v8118, 4
        %v8121 = vshll.u32 %v7959, 16
        %v8123 = vrot.slane %v8121, 5
        %v8124 = vsel %vm1173, %v8119, %v8123
        %v8125 = vshrl.u32 %v7959, 16
        %v8127 = vrot.slane %v8125, 4
        %v8128 = vor.u32 %v8127, %v8123
        %v8129 = vrot.slane %v8128, 4
        %v8131 = vshll.u32 %v7960, 16
        %v8133 = vrot.slane %v8131, 5
        %v8134 = vsel %vm1173, %v8129, %v8133
        %v8136 = vshrl.u32 %v7961, 16
        %v8138 = vrot.slane %v8136, 4
        %v8139 = vshll.u32 %v7961, 16
        %v8141 = vrot.slane %v8139, 5
        %v8142 = vor.u32 %v8138, %v8141
        %v8143 = vrot.slane %v8142, 4
        %v8145 = vshll.u32 %v7962, 16
        %v8147 = vrot.slane %v8145, 5
        %v8148 = vsel %vm1173, %v8143, %v8147
        %v8149 = vshrl.u32 %v7962, 16
        %v8151 = vrot.slane %v8149, 4
        %v8152 = vor.u32 %v8151, %v8147
        %v8153 = vrot.slane %v8152, 4
        %v8155 = vshll.u32 %v7963, 16
        %v8157 = vrot.slane %v8155, 5
        %v8158 = vsel %vm1173, %v8153, %v8157
        %v8160 = vshrl.u32 %v7964, 16
        %v8162 = vrot.slane %v8160, 4
        %v8163 = vshll.u32 %v7964, 16
        %v8165 = vrot.slane %v8163, 5
        %v8166 = vor.u32 %v8162, %v8165
        %v8167 = vrot.slane %v8166, 4
        %v8169 = vshll.u32 %v7965, 16
        %v8171 = vrot.slane %v8169, 5
        %v8172 = vsel %vm1173, %v8167, %v8171
        %v8173 = vshrl.u32 %v7965, 16
        %v8175 = vrot.slane %v8173, 4
        %v8176 = vor.u32 %v8175, %v8171
        %v8177 = vrot.slane %v8176, 4
        %v8179 = vshll.u32 %v7966, 16
        %v8181 = vrot.slane %v8179, 5
        %v8182 = vsel %vm1173, %v8177, %v8181
        %v8184 = vshrl.u32 %v7967, 16
        %v8186 = vrot.slane %v8184, 4
        %v8187 = vshll.u32 %v7967, 16
        %v8189 = vrot.slane %v8187, 5
        %v8190 = vor.u32 %v8186, %v8189
        %v8191 = vrot.slane %v8190, 4
        %v8193 = vshll.u32 %v7968, 16
        %v8195 = vrot.slane %v8193, 5
        %v8196 = vsel %vm1173, %v8191, %v8195
        %v8197 = vshrl.u32 %v7968, 16
        %v8199 = vrot.slane %v8197, 4
        %v8200 = vor.u32 %v8199, %v8195
        %v8201 = vrot.slane %v8200, 4
        %v8203 = vshll.u32 %v7969, 16
        %v8205 = vrot.slane %v8203, 5
        %v8206 = vsel %vm1173, %v8201, %v8205
        %v8208 = vshrl.u32 %v7970, 16
        %v8210 = vrot.slane %v8208, 4
        %v8211 = vshll.u32 %v7970, 16
        %v8213 = vrot.slane %v8211, 5
        %v8214 = vor.u32 %v8210, %v8213
        %v8215 = vrot.slane %v8214, 4
        %v8217 = vshll.u32 %v7971, 16
        %v8219 = vrot.slane %v8217, 5
        %v8220 = vsel %vm1173, %v8215, %v8219
        %v8221 = vshrl.u32 %v7971, 16
        %v8223 = vrot.slane %v8221, 4
        %v8224 = vor.u32 %v8223, %v8219
        %v8225 = vrot.slane %v8224, 4
        %v8227 = vshll.u32 %v7972, 16
        %v8229 = vrot.slane %v8227, 5
        %v8230 = vsel %vm1173, %v8225, %v8229
        %v8232 = vshrl.u32 %v7973, 16
        %v8234 = vrot.slane %v8232, 4
        %v8235 = vshll.u32 %v7973, 16
        %v8237 = vrot.slane %v8235, 5
        %v8238 = vor.u32 %v8234, %v8237
        %v8239 = vrot.slane %v8238, 4
        %v8241 = vshll.u32 %v7974, 16
        %v8243 = vrot.slane %v8241, 5
        %v8244 = vsel %vm1173, %v8239, %v8243
        %v8245 = vshrl.u32 %v7974, 16
        %v8247 = vrot.slane %v8245, 4
        %v8248 = vor.u32 %v8247, %v8243
        %v8249 = vrot.slane %v8248, 4
        %v8251 = vshll.u32 %v7975, 16
        %v8253 = vrot.slane %v8251, 5
        %v8254 = vsel %vm1173, %v8249, %v8253
        %v8256 = vshrl.u32 %v7976, 16
        %v8258 = vrot.slane %v8256, 4
        %v8259 = vshll.u32 %v7976, 16
        %v8261 = vrot.slane %v8259, 5
        %v8262 = vor.u32 %v8258, %v8261
        %v8263 = vrot.slane %v8262, 4
        %v8265 = vshll.u32 %v7977, 16
        %v8267 = vrot.slane %v8265, 5
        %v8268 = vsel %vm1173, %v8263, %v8267
        %v8269 = vshrl.u32 %v7977, 16
        %v8271 = vrot.slane %v8269, 4
        %v8272 = vor.u32 %v8271, %v8267
        %v8273 = vrot.slane %v8272, 4
        %v8275 = vshll.u32 %v7978, 16
        %v8277 = vrot.slane %v8275, 5
        %v8278 = vsel %vm1173, %v8273, %v8277
        %v8280 = vshrl.u32 %v7979, 16
        %v8282 = vrot.slane %v8280, 4
        %v8283 = vshll.u32 %v7979, 16
        %v8285 = vrot.slane %v8283, 5
        %v8286 = vor.u32 %v8282, %v8285
        %v8287 = vrot.slane %v8286, 4
        %v8289 = vshll.u32 %v7980, 16
        %v8291 = vrot.slane %v8289, 5
        %v8292 = vsel %vm1173, %v8287, %v8291
        %v8293 = vshrl.u32 %v7980, 16
        %v8295 = vrot.slane %v8293, 4
        %v8296 = vor.u32 %v8295, %v8291
        %v8297 = vrot.slane %v8296, 4
        %v8299 = vshll.u32 %v7981, 16
        %v8301 = vrot.slane %v8299, 5
        %v8302 = vsel %vm1173, %v8297, %v8301
        %v8304 = vshrl.u32 %v7982, 16
        %v8306 = vrot.slane %v8304, 4
        %v8307 = vshll.u32 %v7982, 16
        %v8309 = vrot.slane %v8307, 5
        %v8310 = vor.u32 %v8306, %v8309
        %v8311 = vrot.slane %v8310, 4
        %v8313 = vshll.u32 %v7983, 16
        %v8315 = vrot.slane %v8313, 5
        %v8316 = vsel %vm1173, %v8311, %v8315
        %v8317 = vshrl.u32 %v7983, 16
        %v8319 = vrot.slane %v8317, 4
        %v8320 = vor.u32 %v8319, %v8315
        %v8321 = vrot.slane %v8320, 4
        %v8323 = vshll.u32 %v7984, 16
        %v8325 = vrot.slane %v8323, 5
        %v8326 = vsel %vm1173, %v8321, %v8325
        %v8328 = vshrl.u32 %v7985, 16
        %v8330 = vrot.slane %v8328, 4
        %v8331 = vshll.u32 %v7985, 16
        %v8333 = vrot.slane %v8331, 5
        %v8334 = vor.u32 %v8330, %v8333
        %v8335 = vrot.slane %v8334, 4
        %v8337 = vshll.u32 %v7986, 16
        %v8339 = vrot.slane %v8337, 5
        %v8340 = vsel %vm1173, %v8335, %v8339
        %v8341 = vshrl.u32 %v7986, 16
        %v8343 = vrot.slane %v8341, 4
        %v8344 = vor.u32 %v8343, %v8339
        %v8345 = vrot.slane %v8344, 4
        %v8347 = vshll.u32 %v7987, 16
        %v8349 = vrot.slane %v8347, 5
        %v8350 = vsel %vm1173, %v8345, %v8349
        %v8352 = vshrl.u32 %v7988, 16
        %v8354 = vrot.slane %v8352, 4
        %v8355 = vshll.u32 %v7988, 16
        %v8357 = vrot.slane %v8355, 5
        %v8358 = vor.u32 %v8354, %v8357
        %v8359 = vrot.slane %v8358, 4
        %v8361 = vshll.u32 %v7989, 16
        %v8363 = vrot.slane %v8361, 5
        %v8364 = vsel %vm1173, %v8359, %v8363
        %v8365 = vshrl.u32 %v7989, 16
        %v8367 = vrot.slane %v8365, 4
        %v8368 = vor.u32 %v8367, %v8363
        %v8369 = vrot.slane %v8368, 4
        %v8371 = vshll.u32 %v7990, 16
        %v8373 = vrot.slane %v8371, 5
        %v8374 = vsel %vm1173, %v8369, %v8373
        %v8375 = vunpack.c.l.b16 %v8004
        %v8376 = vunpack.c.l.b16 %v8014
        %v8377 = vunpack.c.l.b16 %v8028
        %v8378 = vunpack.c.l.b16 %v8038
        %v8379 = vunpack.c.l.b16 %v8052
        %v8380 = vunpack.c.l.b16 %v8062
        %v8381 = vunpack.c.l.b16 %v8076
        %v8382 = vunpack.c.l.b16 %v8086
        %v8383 = vunpack.c.l.b16 %v8100
        %v8384 = vunpack.c.l.b16 %v8110
        %v8385 = vunpack.c.l.b16 %v8124
        %v8386 = vunpack.c.l.b16 %v8134
        %v8387 = vunpack.c.l.b16 %v8148
        %v8388 = vunpack.c.l.b16 %v8158
        %v8389 = vunpack.c.l.b16 %v8172
        %v8390 = vunpack.c.l.b16 %v8182
        %v8391 = vunpack.c.l.b16 %v8196
        %v8392 = vunpack.c.l.b16 %v8206
        %v8393 = vunpack.c.l.b16 %v8220
        %v8394 = vunpack.c.l.b16 %v8230
        %v8395 = vunpack.c.l.b16 %v8244
        %v8396 = vunpack.c.l.b16 %v8254
        %v8397 = vunpack.c.l.b16 %v8268
        %v8398 = vunpack.c.l.b16 %v8278
        %v8399 = vunpack.c.l.b16 %v8292
        %v8400 = vunpack.c.l.b16 %v8302
        %v8401 = vunpack.c.l.b16 %v8316
        %v8402 = vunpack.c.l.b16 %v8326
        %v8403 = vunpack.c.l.b16 %v8340
        %v8404 = vunpack.c.l.b16 %v8350
        %v8405 = vunpack.c.l.b16 %v8364
        %v8406 = vunpack.c.l.b16 %v8374
        %v8407 = vpack.c.b16 %v8376, %v8375
        %v8408 = vpack.c.b16 %v8378, %v8377
        %v8409 = vpack.c.b16 %v8380, %v8379
        %v8410 = vpack.c.b16 %v8382, %v8381
        %v8411 = vpack.c.b16 %v8384, %v8383
        %v8412 = vpack.c.b16 %v8386, %v8385
        %v8413 = vpack.c.b16 %v8388, %v8387
        %v8414 = vpack.c.b16 %v8390, %v8389
        %v8415 = vpack.c.b16 %v8392, %v8391
        %v8416 = vpack.c.b16 %v8394, %v8393
        %v8417 = vpack.c.b16 %v8396, %v8395
        %v8418 = vpack.c.b16 %v8398, %v8397
        %v8419 = vpack.c.b16 %v8400, %v8399
        %v8420 = vpack.c.b16 %v8402, %v8401
        %v8421 = vpack.c.b16 %v8404, %v8403
        %v8422 = vpack.c.b16 %v8406, %v8405
        %8439 = vst [vmem:[#allocation4 + $0x38] sm:$0xff] %v8407
        %8440 = vst [vmem:[#allocation4 + $0x88] sm:$0xff] %v8408
        %8441 = vst [vmem:[#allocation4 + $0xd8] sm:$0xff] %v8409
        %8442 = vst [vmem:[#allocation4 + $0x128] sm:$0xff] %v8410
        %8443 = vst [vmem:[#allocation4 + $0x178] sm:$0xff] %v8411
        %8444 = vst [vmem:[#allocation4 + $0x1c8] sm:$0xff] %v8412
        %8445 = vst [vmem:[#allocation4 + $0x218] sm:$0xff] %v8413
        %8446 = vst [vmem:[#allocation4 + $0x268] sm:$0xff] %v8414
        %8447 = vst [vmem:[#allocation4 + $0x2b8] sm:$0xff] %v8415
        %8448 = vst [vmem:[#allocation4 + $0x308] sm:$0xff] %v8416
        %8449 = vst [vmem:[#allocation4 + $0x358] sm:$0xff] %v8417
        %8450 = vst [vmem:[#allocation4 + $0x3a8] sm:$0xff] %v8418
        %8451 = vst [vmem:[#allocation4 + $0x3f8] sm:$0xff] %v8419
        %8452 = vst [vmem:[#allocation4 + $0x448] sm:$0xff] %v8420
        %8453 = vst [vmem:[#allocation4 + $0x498] sm:$0xff] %v8421
        %8454 = vst [vmem:[#allocation4 + $0x4e8] sm:$0xff] %v8422
        %v8455 = vld [vmem:[%s7798] sm:$0xe]
        %v8456 = vld [vmem:[%s7798 + $0x4] sm:$0xf]
        %v8457 = vld [vmem:[%s7798 + $0x8] sm:$0x1]
        %v8458 = vld [vmem:[%s7798 + $0xc] sm:$0xe]
        %v8459 = vld [vmem:[%s7798 + $0x10] sm:$0xf]
        %v8460 = vld [vmem:[%s7798 + $0x14] sm:$0x1]
        %v8461 = vld [vmem:[%s7798 + $0x18] sm:$0xe]
        %v8462 = vld [vmem:[%s7798 + $0x1c] sm:$0xf]
        %v8463 = vld [vmem:[%s7798 + $0x20] sm:$0x1]
        %v8464 = vld [vmem:[%s7798 + $0x24] sm:$0xe]
        %v8465 = vld [vmem:[%s7798 + $0x28] sm:$0xf]
        %v8466 = vld [vmem:[%s7798 + $0x2c] sm:$0x1]
        %v8467 = vld [vmem:[%s7798 + $0x30] sm:$0xe]
        %v8468 = vld [vmem:[%s7798 + $0x34] sm:$0xf]
        %v8469 = vld [vmem:[%s7798 + $0x38] sm:$0x1]
        %v8470 = vld [vmem:[%s7798 + $0x3c] sm:$0xe]
        %v8471 = vld [vmem:[%s7798 + $0x40] sm:$0xf]
        %v8472 = vld [vmem:[%s7798 + $0x44] sm:$0x1]
        %v8473 = vld [vmem:[%s7798 + $0x48] sm:$0xe]
        %v8474 = vld [vmem:[%s7798 + $0x4c] sm:$0xf]
        %v8475 = vld [vmem:[%s7798 + $0x50] sm:$0x1]
        %v8476 = vld [vmem:[%s7798 + $0x54] sm:$0xe]
        %v8477 = vld [vmem:[%s7798 + $0x58] sm:$0xf]
        %v8478 = vld [vmem:[%s7798 + $0x5c] sm:$0x1]
        %v8479 = vld [vmem:[%s7798 + $0x60] sm:$0xe]
        %v8480 = vld [vmem:[%s7798 + $0x64] sm:$0xf]
        %v8481 = vld [vmem:[%s7798 + $0x68] sm:$0x1]
        %v8482 = vld [vmem:[%s7798 + $0x6c] sm:$0xe]
        %v8483 = vld [vmem:[%s7798 + $0x70] sm:$0xf]
        %v8484 = vld [vmem:[%s7798 + $0x74] sm:$0x1]
        %v8485 = vld [vmem:[%s7798 + $0x78] sm:$0xe]
        %v8486 = vld [vmem:[%s7798 + $0x7c] sm:$0xf]
        %v8487 = vld [vmem:[%s7798 + $0x80] sm:$0x1]
        %v8488 = vld [vmem:[%s7798 + $0x84] sm:$0xe]
        %v8489 = vld [vmem:[%s7798 + $0x88] sm:$0xf]
        %v8490 = vld [vmem:[%s7798 + $0x8c] sm:$0x1]
        %v8491 = vld [vmem:[%s7798 + $0x90] sm:$0xe]
        %v8492 = vld [vmem:[%s7798 + $0x94] sm:$0xf]
        %v8493 = vld [vmem:[%s7798 + $0x98] sm:$0x1]
        %v8494 = vld [vmem:[%s7798 + $0x9c] sm:$0xe]
        %v8495 = vld [vmem:[%s7798 + $0xa0] sm:$0xf]
        %v8496 = vld [vmem:[%s7798 + $0xa4] sm:$0x1]
        %v8497 = vld [vmem:[%s7798 + $0xa8] sm:$0xe]
        %v8498 = vld [vmem:[%s7798 + $0xac] sm:$0xf]
        %v8499 = vld [vmem:[%s7798 + $0xb0] sm:$0x1]
        %v8500 = vld [vmem:[%s7798 + $0xb4] sm:$0xe]
        %v8501 = vld [vmem:[%s7798 + $0xb8] sm:$0xf]
        %v8502 = vld [vmem:[%s7798 + $0xbc] sm:$0x1]
        %v8551 = vrot.slane %v8455, 5
        %v8552 = vrot.slane %v8551, 4
        %v8553 = vrot.slane %v8456, 5
        %v8554 = vsel %vm1736, %v8552, %v8553
        %v8555 = vrot.slane %v8553, 4
        %v8556 = vrot.slane %v8457, 5
        %v8557 = vsel %vm1736, %v8555, %v8556
        %v8558 = vrot.slane %v8458, 5
        %v8559 = vrot.slane %v8558, 4
        %v8560 = vrot.slane %v8459, 5
        %v8561 = vsel %vm1736, %v8559, %v8560
        %v8562 = vrot.slane %v8560, 4
        %v8563 = vrot.slane %v8460, 5
        %v8564 = vsel %vm1736, %v8562, %v8563
        %v8565 = vrot.slane %v8461, 5
        %v8566 = vrot.slane %v8565, 4
        %v8567 = vrot.slane %v8462, 5
        %v8568 = vsel %vm1736, %v8566, %v8567
        %v8569 = vrot.slane %v8567, 4
        %v8570 = vrot.slane %v8463, 5
        %v8571 = vsel %vm1736, %v8569, %v8570
        %v8572 = vrot.slane %v8464, 5
        %v8573 = vrot.slane %v8572, 4
        %v8574 = vrot.slane %v8465, 5
        %v8575 = vsel %vm1736, %v8573, %v8574
        %v8576 = vrot.slane %v8574, 4
        %v8577 = vrot.slane %v8466, 5
        %v8578 = vsel %vm1736, %v8576, %v8577
        %v8579 = vrot.slane %v8467, 5
        %v8580 = vrot.slane %v8579, 4
        %v8581 = vrot.slane %v8468, 5
        %v8582 = vsel %vm1736, %v8580, %v8581
        %v8583 = vrot.slane %v8581, 4
        %v8584 = vrot.slane %v8469, 5
        %v8585 = vsel %vm1736, %v8583, %v8584
        %v8586 = vrot.slane %v8470, 5
        %v8587 = vrot.slane %v8586, 4
        %v8588 = vrot.slane %v8471, 5
        %v8589 = vsel %vm1736, %v8587, %v8588
        %v8590 = vrot.slane %v8588, 4
        %v8591 = vrot.slane %v8472, 5
        %v8592 = vsel %vm1736, %v8590, %v8591
        %v8593 = vrot.slane %v8473, 5
        %v8594 = vrot.slane %v8593, 4
        %v8595 = vrot.slane %v8474, 5
        %v8596 = vsel %vm1736, %v8594, %v8595
        %v8597 = vrot.slane %v8595, 4
        %v8598 = vrot.slane %v8475, 5
        %v8599 = vsel %vm1736, %v8597, %v8598
        %v8600 = vrot.slane %v8476, 5
        %v8601 = vrot.slane %v8600, 4
        %v8602 = vrot.slane %v8477, 5
        %v8603 = vsel %vm1736, %v8601, %v8602
        %v8604 = vrot.slane %v8602, 4
        %v8605 = vrot.slane %v8478, 5
        %v8606 = vsel %vm1736, %v8604, %v8605
        %v8607 = vrot.slane %v8479, 5
        %v8608 = vrot.slane %v8607, 4
        %v8609 = vrot.slane %v8480, 5
        %v8610 = vsel %vm1736, %v8608, %v8609
        %v8611 = vrot.slane %v8609, 4
        %v8612 = vrot.slane %v8481, 5
        %v8613 = vsel %vm1736, %v8611, %v8612
        %v8614 = vrot.slane %v8482, 5
        %v8615 = vrot.slane %v8614, 4
        %v8616 = vrot.slane %v8483, 5
        %v8617 = vsel %vm1736, %v8615, %v8616
        %v8618 = vrot.slane %v8616, 4
        %v8619 = vrot.slane %v8484, 5
        %v8620 = vsel %vm1736, %v8618, %v8619
        %v8621 = vrot.slane %v8485, 5
        %v8622 = vrot.slane %v8621, 4
        %v8623 = vrot.slane %v8486, 5
        %v8624 = vsel %vm1736, %v8622, %v8623
        %v8625 = vrot.slane %v8623, 4
        %v8626 = vrot.slane %v8487, 5
        %v8627 = vsel %vm1736, %v8625, %v8626
        %v8628 = vrot.slane %v8488, 5
        %v8629 = vrot.slane %v8628, 4
        %v8630 = vrot.slane %v8489, 5
        %v8631 = vsel %vm1736, %v8629, %v8630
        %v8632 = vrot.slane %v8630, 4
        %v8633 = vrot.slane %v8490, 5
        %v8634 = vsel %vm1736, %v8632, %v8633
        %v8635 = vrot.slane %v8491, 5
        %v8636 = vrot.slane %v8635, 4
        %v8637 = vrot.slane %v8492, 5
        %v8638 = vsel %vm1736, %v8636, %v8637
        %v8639 = vrot.slane %v8637, 4
        %v8640 = vrot.slane %v8493, 5
        %v8641 = vsel %vm1736, %v8639, %v8640
        %v8642 = vrot.slane %v8494, 5
        %v8643 = vrot.slane %v8642, 4
        %v8644 = vrot.slane %v8495, 5
        %v8645 = vsel %vm1736, %v8643, %v8644
        %v8646 = vrot.slane %v8644, 4
        %v8647 = vrot.slane %v8496, 5
        %v8648 = vsel %vm1736, %v8646, %v8647
        %v8649 = vrot.slane %v8497, 5
        %v8650 = vrot.slane %v8649, 4
        %v8651 = vrot.slane %v8498, 5
        %v8652 = vsel %vm1736, %v8650, %v8651
        %v8653 = vrot.slane %v8651, 4
        %v8654 = vrot.slane %v8499, 5
        %v8655 = vsel %vm1736, %v8653, %v8654
        %v8656 = vrot.slane %v8500, 5
        %v8657 = vrot.slane %v8656, 4
        %v8658 = vrot.slane %v8501, 5
        %v8659 = vsel %vm1736, %v8657, %v8658
        %v8660 = vrot.slane %v8658, 4
        %v8661 = vrot.slane %v8502, 5
        %v8662 = vsel %vm1736, %v8660, %v8661
        %v8663 = vunpack.c.l.b16 %v8554
        %v8664 = vunpack.c.l.b16 %v8557
        %v8665 = vunpack.c.l.b16 %v8561
        %v8666 = vunpack.c.l.b16 %v8564
        %v8667 = vunpack.c.l.b16 %v8568
        %v8668 = vunpack.c.l.b16 %v8571
        %v8669 = vunpack.c.l.b16 %v8575
        %v8670 = vunpack.c.l.b16 %v8578
        %v8671 = vunpack.c.l.b16 %v8582
        %v8672 = vunpack.c.l.b16 %v8585
        %v8673 = vunpack.c.l.b16 %v8589
        %v8674 = vunpack.c.l.b16 %v8592
        %v8675 = vunpack.c.l.b16 %v8596
        %v8676 = vunpack.c.l.b16 %v8599
        %v8677 = vunpack.c.l.b16 %v8603
        %v8678 = vunpack.c.l.b16 %v8606
        %v8679 = vunpack.c.l.b16 %v8610
        %v8680 = vunpack.c.l.b16 %v8613
        %v8681 = vunpack.c.l.b16 %v8617
        %v8682 = vunpack.c.l.b16 %v8620
        %v8683 = vunpack.c.l.b16 %v8624
        %v8684 = vunpack.c.l.b16 %v8627
        %v8685 = vunpack.c.l.b16 %v8631
        %v8686 = vunpack.c.l.b16 %v8634
        %v8687 = vunpack.c.l.b16 %v8638
        %v8688 = vunpack.c.l.b16 %v8641
        %v8689 = vunpack.c.l.b16 %v8645
        %v8690 = vunpack.c.l.b16 %v8648
        %v8691 = vunpack.c.l.b16 %v8652
        %v8692 = vunpack.c.l.b16 %v8655
        %v8693 = vunpack.c.l.b16 %v8659
        %v8694 = vunpack.c.l.b16 %v8662
        %v8695 = vpack.c.b16 %v8664, %v8663
        %v8696 = vpack.c.b16 %v8666, %v8665
        %v8697 = vpack.c.b16 %v8668, %v8667
        %v8698 = vpack.c.b16 %v8670, %v8669
        %v8699 = vpack.c.b16 %v8672, %v8671
        %v8700 = vpack.c.b16 %v8674, %v8673
        %v8701 = vpack.c.b16 %v8676, %v8675
        %v8702 = vpack.c.b16 %v8678, %v8677
        %v8703 = vpack.c.b16 %v8680, %v8679
        %v8704 = vpack.c.b16 %v8682, %v8681
        %v8705 = vpack.c.b16 %v8684, %v8683
        %v8706 = vpack.c.b16 %v8686, %v8685
        %v8707 = vpack.c.b16 %v8688, %v8687
        %v8708 = vpack.c.b16 %v8690, %v8689
        %v8709 = vpack.c.b16 %v8692, %v8691
        %v8710 = vpack.c.b16 %v8694, %v8693
        %8727 = vst [vmem:[#allocation4 + $0x40] sm:$0xff] %v8695
        %8728 = vst [vmem:[#allocation4 + $0x90] sm:$0xff] %v8696
        %8729 = vst [vmem:[#allocation4 + $0xe0] sm:$0xff] %v8697
        %8730 = vst [vmem:[#allocation4 + $0x130] sm:$0xff] %v8698
        %8731 = vst [vmem:[#allocation4 + $0x180] sm:$0xff] %v8699
        %8732 = vst [vmem:[#allocation4 + $0x1d0] sm:$0xff] %v8700
        %8733 = vst [vmem:[#allocation4 + $0x220] sm:$0xff] %v8701
        %8734 = vst [vmem:[#allocation4 + $0x270] sm:$0xff] %v8702
        %8735 = vst [vmem:[#allocation4 + $0x2c0] sm:$0xff] %v8703
        %8736 = vst [vmem:[#allocation4 + $0x310] sm:$0xff] %v8704
        %8737 = vst [vmem:[#allocation4 + $0x360] sm:$0xff] %v8705
        %8738 = vst [vmem:[#allocation4 + $0x3b0] sm:$0xff] %v8706
        %8739 = vst [vmem:[#allocation4 + $0x400] sm:$0xff] %v8707
        %8740 = vst [vmem:[#allocation4 + $0x450] sm:$0xff] %v8708
        %8741 = vst [vmem:[#allocation4 + $0x4a0] sm:$0xff] %v8709
        %8742 = vst [vmem:[#allocation4 + $0x4f0] sm:$0xff] %v8710
        %v8743 = vld [vmem:[%s237] sm:$0xf]
        %v8744 = vld [vmem:[%s237 + $0x4] sm:$0xf]
        %v8745 = vld [vmem:[%s237 + $0x8] sm:$0xf]
        %v8746 = vld [vmem:[%s237 + $0xc] sm:$0xf]
        %v8747 = vld [vmem:[%s237 + $0x10] sm:$0xf]
        %v8748 = vld [vmem:[%s237 + $0x14] sm:$0xf]
        %v8749 = vld [vmem:[%s237 + $0x18] sm:$0xf]
        %v8750 = vld [vmem:[%s237 + $0x1c] sm:$0xf]
        %v8751 = vld [vmem:[%s237 + $0x20] sm:$0xf]
        %v8752 = vld [vmem:[%s237 + $0x24] sm:$0xf]
        %v8753 = vld [vmem:[%s237 + $0x28] sm:$0xf]
        %v8754 = vld [vmem:[%s237 + $0x2c] sm:$0xf]
        %v8755 = vld [vmem:[%s237 + $0x30] sm:$0xf]
        %v8756 = vld [vmem:[%s237 + $0x34] sm:$0xf]
        %v8757 = vld [vmem:[%s237 + $0x38] sm:$0xf]
        %v8758 = vld [vmem:[%s237 + $0x3c] sm:$0xf]
        %v8759 = vld [vmem:[%s237 + $0x40] sm:$0xf]
        %v8760 = vld [vmem:[%s237 + $0x44] sm:$0xf]
        %v8761 = vld [vmem:[%s237 + $0x48] sm:$0xf]
        %v8762 = vld [vmem:[%s237 + $0x4c] sm:$0xf]
        %v8763 = vld [vmem:[%s237 + $0x50] sm:$0xf]
        %v8764 = vld [vmem:[%s237 + $0x54] sm:$0xf]
        %v8765 = vld [vmem:[%s237 + $0x58] sm:$0xf]
        %v8766 = vld [vmem:[%s237 + $0x5c] sm:$0xf]
        %v8767 = vld [vmem:[%s237 + $0x60] sm:$0xf]
        %v8768 = vld [vmem:[%s237 + $0x64] sm:$0xf]
        %v8769 = vld [vmem:[%s237 + $0x68] sm:$0xf]
        %v8770 = vld [vmem:[%s237 + $0x6c] sm:$0xf]
        %v8771 = vld [vmem:[%s237 + $0x70] sm:$0xf]
        %v8772 = vld [vmem:[%s237 + $0x74] sm:$0xf]
        %v8773 = vld [vmem:[%s237 + $0x78] sm:$0xf]
        %v8774 = vld [vmem:[%s237 + $0x7c] sm:$0xf]
        %v8807 = vunpack.c.l.b16 %v8743
        %v8808 = vunpack.c.l.b16 %v8744
        %v8809 = vunpack.c.l.b16 %v8745
        %v8810 = vunpack.c.l.b16 %v8746
        %v8811 = vunpack.c.l.b16 %v8747
        %v8812 = vunpack.c.l.b16 %v8748
        %v8813 = vunpack.c.l.b16 %v8749
        %v8814 = vunpack.c.l.b16 %v8750
        %v8815 = vunpack.c.l.b16 %v8751
        %v8816 = vunpack.c.l.b16 %v8752
        %v8817 = vunpack.c.l.b16 %v8753
        %v8818 = vunpack.c.l.b16 %v8754
        %v8819 = vunpack.c.l.b16 %v8755
        %v8820 = vunpack.c.l.b16 %v8756
        %v8821 = vunpack.c.l.b16 %v8757
        %v8822 = vunpack.c.l.b16 %v8758
        %v8823 = vunpack.c.l.b16 %v8759
        %v8824 = vunpack.c.l.b16 %v8760
        %v8825 = vunpack.c.l.b16 %v8761
        %v8826 = vunpack.c.l.b16 %v8762
        %v8827 = vunpack.c.l.b16 %v8763
        %v8828 = vunpack.c.l.b16 %v8764
        %v8829 = vunpack.c.l.b16 %v8765
        %v8830 = vunpack.c.l.b16 %v8766
        %v8831 = vunpack.c.l.b16 %v8767
        %v8832 = vunpack.c.l.b16 %v8768
        %v8833 = vunpack.c.l.b16 %v8769
        %v8834 = vunpack.c.l.b16 %v8770
        %v8835 = vunpack.c.l.b16 %v8771
        %v8836 = vunpack.c.l.b16 %v8772
        %v8837 = vunpack.c.l.b16 %v8773
        %v8838 = vunpack.c.l.b16 %v8774
        %v8839 = vpack.c.b16 %v8808, %v8807
        %v8840 = vpack.c.b16 %v8810, %v8809
        %v8841 = vpack.c.b16 %v8812, %v8811
        %v8842 = vpack.c.b16 %v8814, %v8813
        %v8843 = vpack.c.b16 %v8816, %v8815
        %v8844 = vpack.c.b16 %v8818, %v8817
        %v8845 = vpack.c.b16 %v8820, %v8819
        %v8846 = vpack.c.b16 %v8822, %v8821
        %v8847 = vpack.c.b16 %v8824, %v8823
        %v8848 = vpack.c.b16 %v8826, %v8825
        %v8849 = vpack.c.b16 %v8828, %v8827
        %v8850 = vpack.c.b16 %v8830, %v8829
        %v8851 = vpack.c.b16 %v8832, %v8831
        %v8852 = vpack.c.b16 %v8834, %v8833
        %v8853 = vpack.c.b16 %v8836, %v8835
        %v8854 = vpack.c.b16 %v8838, %v8837
        %8871 = vst [vmem:[#allocation4 + $0x48] sm:$0xff] %v8839
        %8872 = vst [vmem:[#allocation4 + $0x98] sm:$0xff] %v8840
        %8873 = vst [vmem:[#allocation4 + $0xe8] sm:$0xff] %v8841
        %8874 = vst [vmem:[#allocation4 + $0x138] sm:$0xff] %v8842
        %8875 = vst [vmem:[#allocation4 + $0x188] sm:$0xff] %v8843
        %8876 = vst [vmem:[#allocation4 + $0x1d8] sm:$0xff] %v8844
        %8877 = vst [vmem:[#allocation4 + $0x228] sm:$0xff] %v8845
        %8878 = vst [vmem:[#allocation4 + $0x278] sm:$0xff] %v8846
        %8879 = vst [vmem:[#allocation4 + $0x2c8] sm:$0xff] %v8847
        %8880 = vst [vmem:[#allocation4 + $0x318] sm:$0xff] %v8848
        %8881 = vst [vmem:[#allocation4 + $0x368] sm:$0xff] %v8849
        %8882 = vst [vmem:[#allocation4 + $0x3b8] sm:$0xff] %v8850
        %8883 = vst [vmem:[#allocation4 + $0x408] sm:$0xff] %v8851
        %8884 = vst [vmem:[#allocation4 + $0x458] sm:$0xff] %v8852
        %8885 = vst [vmem:[#allocation4 + $0x4a8] sm:$0xff] %v8853
        %8886 = vst [vmem:[#allocation4 + $0x4f8] sm:$0xff] %v8854
        %v8887 = vld [vmem:[#allocation4] sm:$0xff]
        %v8888 = vld [vmem:[#allocation4 + $0x8] sm:$0xff]
        %v8889 = vld [vmem:[#allocation4 + $0x10] sm:$0xff]
        %v8890 = vld [vmem:[#allocation4 + $0x18] sm:$0xff]
        %v8891 = vld [vmem:[#allocation4 + $0x20] sm:$0xff]
        %v8892 = vld [vmem:[#allocation4 + $0x28] sm:$0xff]
        %v8893 = vld [vmem:[#allocation4 + $0x30] sm:$0xff]
        %v8894 = vld [vmem:[#allocation4 + $0x38] sm:$0xff]
        %v8895 = vld [vmem:[#allocation4 + $0x40] sm:$0xff]
        %v8896 = vld [vmem:[#allocation4 + $0x48] sm:$0xff]
        %v8897 = vld [vmem:[#allocation4 + $0x50] sm:$0xff]
        %v8898 = vld [vmem:[#allocation4 + $0x58] sm:$0xff]
        %v8899 = vld [vmem:[#allocation4 + $0x60] sm:$0xff]
        %v8900 = vld [vmem:[#allocation4 + $0x68] sm:$0xff]
        %v8901 = vld [vmem:[#allocation4 + $0x70] sm:$0xff]
        %v8902 = vld [vmem:[#allocation4 + $0x78] sm:$0xff]
        %v8903 = vld [vmem:[#allocation4 + $0x80] sm:$0xff]
        %v8904 = vld [vmem:[#allocation4 + $0x88] sm:$0xff]
        %v8905 = vld [vmem:[#allocation4 + $0x90] sm:$0xff]
        %v8906 = vld [vmem:[#allocation4 + $0x98] sm:$0xff]
        %v8907 = vld [vmem:[#allocation4 + $0xa0] sm:$0xff]
        %v8908 = vld [vmem:[#allocation4 + $0xa8] sm:$0xff]
        %v8909 = vld [vmem:[#allocation4 + $0xb0] sm:$0xff]
        %v8910 = vld [vmem:[#allocation4 + $0xb8] sm:$0xff]
        %v8911 = vld [vmem:[#allocation4 + $0xc0] sm:$0xff]
        %v8912 = vld [vmem:[#allocation4 + $0xc8] sm:$0xff]
        %v8913 = vld [vmem:[#allocation4 + $0xd0] sm:$0xff]
        %v8914 = vld [vmem:[#allocation4 + $0xd8] sm:$0xff]
        %v8915 = vld [vmem:[#allocation4 + $0xe0] sm:$0xff]
        %v8916 = vld [vmem:[#allocation4 + $0xe8] sm:$0xff]
        %v8917 = vld [vmem:[#allocation4 + $0xf0] sm:$0xff]
        %v8918 = vld [vmem:[#allocation4 + $0xf8] sm:$0xff]
        %v8919 = vld [vmem:[#allocation4 + $0x100] sm:$0xff]
        %v8920 = vld [vmem:[#allocation4 + $0x108] sm:$0xff]
        %v8921 = vld [vmem:[#allocation4 + $0x110] sm:$0xff]
        %v8922 = vld [vmem:[#allocation4 + $0x118] sm:$0xff]
        %v8923 = vld [vmem:[#allocation4 + $0x120] sm:$0xff]
        %v8924 = vld [vmem:[#allocation4 + $0x128] sm:$0xff]
        %v8925 = vld [vmem:[#allocation4 + $0x130] sm:$0xff]
        %v8926 = vld [vmem:[#allocation4 + $0x138] sm:$0xff]
        %v8927 = vld [vmem:[#allocation4 + $0x140] sm:$0xff]
        %v8928 = vld [vmem:[#allocation4 + $0x148] sm:$0xff]
        %v8929 = vld [vmem:[#allocation4 + $0x150] sm:$0xff]
        %v8930 = vld [vmem:[#allocation4 + $0x158] sm:$0xff]
        %v8931 = vld [vmem:[#allocation4 + $0x160] sm:$0xff]
        %v8932 = vld [vmem:[#allocation4 + $0x168] sm:$0xff]
        %v8933 = vld [vmem:[#allocation4 + $0x170] sm:$0xff]
        %v8934 = vld [vmem:[#allocation4 + $0x178] sm:$0xff]
        %v8935 = vld [vmem:[#allocation4 + $0x180] sm:$0xff]
        %v8936 = vld [vmem:[#allocation4 + $0x188] sm:$0xff]
        %v8937 = vld [vmem:[#allocation4 + $0x190] sm:$0xff]
        %v8938 = vld [vmem:[#allocation4 + $0x198] sm:$0xff]
        %v8939 = vld [vmem:[#allocation4 + $0x1a0] sm:$0xff]
        %v8940 = vld [vmem:[#allocation4 + $0x1a8] sm:$0xff]
        %v8941 = vld [vmem:[#allocation4 + $0x1b0] sm:$0xff]
        %v8942 = vld [vmem:[#allocation4 + $0x1b8] sm:$0xff]
        %v8943 = vld [vmem:[#allocation4 + $0x1c0] sm:$0xff]
        %v8944 = vld [vmem:[#allocation4 + $0x1c8] sm:$0xff]
        %v8945 = vld [vmem:[#allocation4 + $0x1d0] sm:$0xff]
        %v8946 = vld [vmem:[#allocation4 + $0x1d8] sm:$0xff]
        %v8947 = vld [vmem:[#allocation4 + $0x1e0] sm:$0xff]
        %v8948 = vld [vmem:[#allocation4 + $0x1e8] sm:$0xff]
        %v8949 = vld [vmem:[#allocation4 + $0x1f0] sm:$0xff]
        %v8950 = vld [vmem:[#allocation4 + $0x1f8] sm:$0xff]
        %v8951 = vld [vmem:[#allocation4 + $0x200] sm:$0xff]
        %v8952 = vld [vmem:[#allocation4 + $0x208] sm:$0xff]
        %v8953 = vld [vmem:[#allocation4 + $0x210] sm:$0xff]
        %v8954 = vld [vmem:[#allocation4 + $0x218] sm:$0xff]
        %v8955 = vld [vmem:[#allocation4 + $0x220] sm:$0xff]
        %v8956 = vld [vmem:[#allocation4 + $0x228] sm:$0xff]
        %v8957 = vld [vmem:[#allocation4 + $0x230] sm:$0xff]
        %v8958 = vld [vmem:[#allocation4 + $0x238] sm:$0xff]
        %v8959 = vld [vmem:[#allocation4 + $0x240] sm:$0xff]
        %v8960 = vld [vmem:[#allocation4 + $0x248] sm:$0xff]
        %v8961 = vld [vmem:[#allocation4 + $0x250] sm:$0xff]
        %v8962 = vld [vmem:[#allocation4 + $0x258] sm:$0xff]
        %v8963 = vld [vmem:[#allocation4 + $0x260] sm:$0xff]
        %v8964 = vld [vmem:[#allocation4 + $0x268] sm:$0xff]
        %v8965 = vld [vmem:[#allocation4 + $0x270] sm:$0xff]
        %v8966 = vld [vmem:[#allocation4 + $0x278] sm:$0xff]
        %v8967 = vld [vmem:[#allocation4 + $0x280] sm:$0xff]
        %v8968 = vld [vmem:[#allocation4 + $0x288] sm:$0xff]
        %v8969 = vld [vmem:[#allocation4 + $0x290] sm:$0xff]
        %v8970 = vld [vmem:[#allocation4 + $0x298] sm:$0xff]
        %v8971 = vld [vmem:[#allocation4 + $0x2a0] sm:$0xff]
        %v8972 = vld [vmem:[#allocation4 + $0x2a8] sm:$0xff]
        %v8973 = vld [vmem:[#allocation4 + $0x2b0] sm:$0xff]
        %v8974 = vld [vmem:[#allocation4 + $0x2b8] sm:$0xff]
        %v8975 = vld [vmem:[#allocation4 + $0x2c0] sm:$0xff]
        %v8976 = vld [vmem:[#allocation4 + $0x2c8] sm:$0xff]
        %v8977 = vld [vmem:[#allocation4 + $0x2d0] sm:$0xff]
        %v8978 = vld [vmem:[#allocation4 + $0x2d8] sm:$0xff]
        %v8979 = vld [vmem:[#allocation4 + $0x2e0] sm:$0xff]
        %v8980 = vld [vmem:[#allocation4 + $0x2e8] sm:$0xff]
        %v8981 = vld [vmem:[#allocation4 + $0x2f0] sm:$0xff]
        %v8982 = vld [vmem:[#allocation4 + $0x2f8] sm:$0xff]
        %v8983 = vld [vmem:[#allocation4 + $0x300] sm:$0xff]
        %v8984 = vld [vmem:[#allocation4 + $0x308] sm:$0xff]
        %v8985 = vld [vmem:[#allocation4 + $0x310] sm:$0xff]
        %v8986 = vld [vmem:[#allocation4 + $0x318] sm:$0xff]
        %v8987 = vld [vmem:[#allocation4 + $0x320] sm:$0xff]
        %v8988 = vld [vmem:[#allocation4 + $0x328] sm:$0xff]
        %v8989 = vld [vmem:[#allocation4 + $0x330] sm:$0xff]
        %v8990 = vld [vmem:[#allocation4 + $0x338] sm:$0xff]
        %v8991 = vld [vmem:[#allocation4 + $0x340] sm:$0xff]
        %v8992 = vld [vmem:[#allocation4 + $0x348] sm:$0xff]
        %v8993 = vld [vmem:[#allocation4 + $0x350] sm:$0xff]
        %v8994 = vld [vmem:[#allocation4 + $0x358] sm:$0xff]
        %v8995 = vld [vmem:[#allocation4 + $0x360] sm:$0xff]
        %v8996 = vld [vmem:[#allocation4 + $0x368] sm:$0xff]
        %v8997 = vld [vmem:[#allocation4 + $0x370] sm:$0xff]
        %v8998 = vld [vmem:[#allocation4 + $0x378] sm:$0xff]
        %v8999 = vld [vmem:[#allocation4 + $0x380] sm:$0xff]
        %v9000 = vld [vmem:[#allocation4 + $0x388] sm:$0xff]
        %v9001 = vld [vmem:[#allocation4 + $0x390] sm:$0xff]
        %v9002 = vld [vmem:[#allocation4 + $0x398] sm:$0xff]
        %v9003 = vld [vmem:[#allocation4 + $0x3a0] sm:$0xff]
        %v9004 = vld [vmem:[#allocation4 + $0x3a8] sm:$0xff]
        %v9005 = vld [vmem:[#allocation4 + $0x3b0] sm:$0xff]
        %v9006 = vld [vmem:[#allocation4 + $0x3b8] sm:$0xff]
        %v9007 = vld [vmem:[#allocation4 + $0x3c0] sm:$0xff]
        %v9008 = vld [vmem:[#allocation4 + $0x3c8] sm:$0xff]
        %v9009 = vld [vmem:[#allocation4 + $0x3d0] sm:$0xff]
        %v9010 = vld [vmem:[#allocation4 + $0x3d8] sm:$0xff]
        %v9011 = vld [vmem:[#allocation4 + $0x3e0] sm:$0xff]
        %v9012 = vld [vmem:[#allocation4 + $0x3e8] sm:$0xff]
        %v9013 = vld [vmem:[#allocation4 + $0x3f0] sm:$0xff]
        %v9014 = vld [vmem:[#allocation4 + $0x3f8] sm:$0xff]
        %v9015 = vld [vmem:[#allocation4 + $0x400] sm:$0xff]
        %v9016 = vld [vmem:[#allocation4 + $0x408] sm:$0xff]
        %v9017 = vld [vmem:[#allocation4 + $0x410] sm:$0xff]
        %v9018 = vld [vmem:[#allocation4 + $0x418] sm:$0xff]
        %v9019 = vld [vmem:[#allocation4 + $0x420] sm:$0xff]
        %v9020 = vld [vmem:[#allocation4 + $0x428] sm:$0xff]
        %v9021 = vld [vmem:[#allocation4 + $0x430] sm:$0xff]
        %v9022 = vld [vmem:[#allocation4 + $0x438] sm:$0xff]
        %v9023 = vld [vmem:[#allocation4 + $0x440] sm:$0xff]
        %v9024 = vld [vmem:[#allocation4 + $0x448] sm:$0xff]
        %v9025 = vld [vmem:[#allocation4 + $0x450] sm:$0xff]
        %v9026 = vld [vmem:[#allocation4 + $0x458] sm:$0xff]
        %v9027 = vld [vmem:[#allocation4 + $0x460] sm:$0xff]
        %v9028 = vld [vmem:[#allocation4 + $0x468] sm:$0xff]
        %v9029 = vld [vmem:[#allocation4 + $0x470] sm:$0xff]
        %v9030 = vld [vmem:[#allocation4 + $0x478] sm:$0xff]
        %v9031 = vld [vmem:[#allocation4 + $0x480] sm:$0xff]
        %v9032 = vld [vmem:[#allocation4 + $0x488] sm:$0xff]
        %v9033 = vld [vmem:[#allocation4 + $0x490] sm:$0xff]
        %v9034 = vld [vmem:[#allocation4 + $0x498] sm:$0xff]
        %v9035 = vld [vmem:[#allocation4 + $0x4a0] sm:$0xff]
        %v9036 = vld [vmem:[#allocation4 + $0x4a8] sm:$0xff]
        %v9037 = vld [vmem:[#allocation4 + $0x4b0] sm:$0xff]
        %v9038 = vld [vmem:[#allocation4 + $0x4b8] sm:$0xff]
        %v9039 = vld [vmem:[#allocation4 + $0x4c0] sm:$0xff]
        %v9040 = vld [vmem:[#allocation4 + $0x4c8] sm:$0xff]
        %v9041 = vld [vmem:[#allocation4 + $0x4d0] sm:$0xff]
        %v9042 = vld [vmem:[#allocation4 + $0x4d8] sm:$0xff]
        %v9043 = vld [vmem:[#allocation4 + $0x4e0] sm:$0xff]
        %v9044 = vld [vmem:[#allocation4 + $0x4e8] sm:$0xff]
        %v9045 = vld [vmem:[#allocation4 + $0x4f0] sm:$0xff]
        %v9046 = vld [vmem:[#allocation4 + $0x4f8] sm:$0xff]
        %v9047 = vld [vmem:[#allocation10] sm:$0xf]
        %v9048 = vld [vmem:[#allocation10 + $0x4] sm:$0xf]
        %v9049 = vld [vmem:[#allocation10 + $0x8] sm:$0xf]
        %v9050 = vld [vmem:[#allocation10 + $0xc] sm:$0xf]
        %v9051 = vld [vmem:[#allocation10 + $0x10] sm:$0xf]
        %v9052 = vld [vmem:[#allocation10 + $0x14] sm:$0xf]
        %v9053 = vld [vmem:[#allocation10 + $0x18] sm:$0xf]
        %v9054 = vld [vmem:[#allocation10 + $0x1c] sm:$0xf]
        %v9055 = vld [vmem:[#allocation10 + $0x20] sm:$0xf]
        %v9056 = vld [vmem:[#allocation10 + $0x24] sm:$0xf]
        %v9057 = vld [vmem:[#allocation10 + $0x28] sm:$0xf]
        %v9058 = vld [vmem:[#allocation10 + $0x2c] sm:$0xf]
        %v9059 = vld [vmem:[#allocation10 + $0x30] sm:$0xf]
        %v9060 = vld [vmem:[#allocation10 + $0x34] sm:$0xf]
        %v9061 = vld [vmem:[#allocation10 + $0x38] sm:$0xf]
        %v9062 = vld [vmem:[#allocation10 + $0x3c] sm:$0xf]
        %v9063 = vld [vmem:[#allocation10 + $0x40] sm:$0xf]
        %v9064 = vld [vmem:[#allocation10 + $0x44] sm:$0xf]
        %v9065 = vld [vmem:[#allocation10 + $0x48] sm:$0xf]
        %v9066 = vld [vmem:[#allocation10 + $0x4c] sm:$0xf]
        %v9067 = vld [vmem:[#allocation10 + $0x50] sm:$0xf]
        %v9068 = vld [vmem:[#allocation10 + $0x54] sm:$0xf]
        %v9069 = vld [vmem:[#allocation10 + $0x58] sm:$0xf]
        %v9070 = vld [vmem:[#allocation10 + $0x5c] sm:$0xf]
        %v9071 = vld [vmem:[#allocation10 + $0x60] sm:$0xf]
        %v9072 = vld [vmem:[#allocation10 + $0x64] sm:$0xf]
        %v9073 = vld [vmem:[#allocation10 + $0x68] sm:$0xf]
        %v9074 = vld [vmem:[#allocation10 + $0x6c] sm:$0xf]
        %v9075 = vld [vmem:[#allocation10 + $0x70] sm:$0xf]
        %v9076 = vld [vmem:[#allocation10 + $0x74] sm:$0xf]
        %v9077 = vld [vmem:[#allocation10 + $0x78] sm:$0xf]
        %v9078 = vld [vmem:[#allocation10 + $0x7c] sm:$0xf]
        %v9079 = vld [vmem:[#allocation10 + $0x80] sm:$0xf]
        %v9080 = vld [vmem:[#allocation10 + $0x84] sm:$0xf]
        %v9081 = vld [vmem:[#allocation10 + $0x88] sm:$0xf]
        %v9082 = vld [vmem:[#allocation10 + $0x8c] sm:$0xf]
        %v9083 = vld [vmem:[#allocation10 + $0x90] sm:$0xf]
        %v9084 = vld [vmem:[#allocation10 + $0x94] sm:$0xf]
        %v9085 = vld [vmem:[#allocation10 + $0x98] sm:$0xf]
        %v9086 = vld [vmem:[#allocation10 + $0x9c] sm:$0xf]
        %v9087 = vld [vmem:[#allocation10 + $0xa0] sm:$0xf]
        %v9088 = vld [vmem:[#allocation10 + $0xa4] sm:$0xf]
        %v9089 = vld [vmem:[#allocation10 + $0xa8] sm:$0xf]
        %v9090 = vld [vmem:[#allocation10 + $0xac] sm:$0xf]
        %v9091 = vld [vmem:[#allocation10 + $0xb0] sm:$0xf]
        %v9092 = vld [vmem:[#allocation10 + $0xb4] sm:$0xf]
        %v9093 = vld [vmem:[#allocation10 + $0xb8] sm:$0xf]
        %v9094 = vld [vmem:[#allocation10 + $0xbc] sm:$0xf]
        %v9095 = vld [vmem:[#allocation10 + $0xc0] sm:$0xf]
        %v9096 = vld [vmem:[#allocation10 + $0xc4] sm:$0xf]
        %v9097 = vld [vmem:[#allocation10 + $0xc8] sm:$0xf]
        %v9098 = vld [vmem:[#allocation10 + $0xcc] sm:$0xf]
        %v9099 = vld [vmem:[#allocation10 + $0xd0] sm:$0xf]
        %v9100 = vld [vmem:[#allocation10 + $0xd4] sm:$0xf]
        %v9101 = vld [vmem:[#allocation10 + $0xd8] sm:$0xf]
        %v9102 = vld [vmem:[#allocation10 + $0xdc] sm:$0xf]
        %v9103 = vld [vmem:[#allocation10 + $0xe0] sm:$0xf]
        %v9104 = vld [vmem:[#allocation10 + $0xe4] sm:$0xf]
        %v9105 = vld [vmem:[#allocation10 + $0xe8] sm:$0xf]
        %v9106 = vld [vmem:[#allocation10 + $0xec] sm:$0xf]
        %v9107 = vld [vmem:[#allocation10 + $0xf0] sm:$0xf]
        %v9108 = vld [vmem:[#allocation10 + $0xf4] sm:$0xf]
        %v9109 = vld [vmem:[#allocation10 + $0xf8] sm:$0xf]
        %v9110 = vld [vmem:[#allocation10 + $0xfc] sm:$0xf]
        %v9111 = vld [vmem:[#allocation10 + $0x100] sm:$0xf]
        %v9112 = vld [vmem:[#allocation10 + $0x104] sm:$0xf]
        %v9113 = vld [vmem:[#allocation10 + $0x108] sm:$0xf]
        %v9114 = vld [vmem:[#allocation10 + $0x10c] sm:$0xf]
        %v9115 = vld [vmem:[#allocation10 + $0x110] sm:$0xf]
        %v9116 = vld [vmem:[#allocation10 + $0x114] sm:$0xf]
        %v9117 = vld [vmem:[#allocation10 + $0x118] sm:$0xf]
        %v9118 = vld [vmem:[#allocation10 + $0x11c] sm:$0xf]
        %v9119 = vld [vmem:[#allocation10 + $0x120] sm:$0xf]
        %v9120 = vld [vmem:[#allocation10 + $0x124] sm:$0xf]
        %v9121 = vld [vmem:[#allocation10 + $0x128] sm:$0xf]
        %v9122 = vld [vmem:[#allocation10 + $0x12c] sm:$0xf]
        %v9123 = vld [vmem:[#allocation10 + $0x130] sm:$0xf]
        %v9124 = vld [vmem:[#allocation10 + $0x134] sm:$0xf]
        %v9125 = vld [vmem:[#allocation10 + $0x138] sm:$0xf]
        %v9126 = vld [vmem:[#allocation10 + $0x13c] sm:$0xf]
        %v9127 = vld [vmem:[#allocation10 + $0x140] sm:$0xf]
        %v9128 = vld [vmem:[#allocation10 + $0x144] sm:$0xf]
        %v9129 = vld [vmem:[#allocation10 + $0x148] sm:$0xf]
        %v9130 = vld [vmem:[#allocation10 + $0x14c] sm:$0xf]
        %v9131 = vld [vmem:[#allocation10 + $0x150] sm:$0xf]
        %v9132 = vld [vmem:[#allocation10 + $0x154] sm:$0xf]
        %v9133 = vld [vmem:[#allocation10 + $0x158] sm:$0xf]
        %v9134 = vld [vmem:[#allocation10 + $0x15c] sm:$0xf]
        %v9135 = vld [vmem:[#allocation10 + $0x160] sm:$0xf]
        %v9136 = vld [vmem:[#allocation10 + $0x164] sm:$0xf]
        %v9137 = vld [vmem:[#allocation10 + $0x168] sm:$0xf]
        %v9138 = vld [vmem:[#allocation10 + $0x16c] sm:$0xf]
        %v9139 = vld [vmem:[#allocation10 + $0x170] sm:$0xf]
        %v9140 = vld [vmem:[#allocation10 + $0x174] sm:$0xf]
        %v9141 = vld [vmem:[#allocation10 + $0x178] sm:$0xf]
        %v9142 = vld [vmem:[#allocation10 + $0x17c] sm:$0xf]
        %v9143 = vld [vmem:[#allocation10 + $0x180] sm:$0xf]
        %v9144 = vld [vmem:[#allocation10 + $0x184] sm:$0xf]
        %v9145 = vld [vmem:[#allocation10 + $0x188] sm:$0xf]
        %v9146 = vld [vmem:[#allocation10 + $0x18c] sm:$0xf]
        %v9147 = vld [vmem:[#allocation10 + $0x190] sm:$0xf]
        %v9148 = vld [vmem:[#allocation10 + $0x194] sm:$0xf]
        %v9149 = vld [vmem:[#allocation10 + $0x198] sm:$0xf]
        %v9150 = vld [vmem:[#allocation10 + $0x19c] sm:$0xf]
        %v9151 = vld [vmem:[#allocation10 + $0x1a0] sm:$0xf]
        %v9152 = vld [vmem:[#allocation10 + $0x1a4] sm:$0xf]
        %v9153 = vld [vmem:[#allocation10 + $0x1a8] sm:$0xf]
        %v9154 = vld [vmem:[#allocation10 + $0x1ac] sm:$0xf]
        %v9155 = vld [vmem:[#allocation10 + $0x1b0] sm:$0xf]
        %v9156 = vld [vmem:[#allocation10 + $0x1b4] sm:$0xf]
        %v9157 = vld [vmem:[#allocation10 + $0x1b8] sm:$0xf]
        %v9158 = vld [vmem:[#allocation10 + $0x1bc] sm:$0xf]
        %v9159 = vld [vmem:[#allocation10 + $0x1c0] sm:$0xf]
        %v9160 = vld [vmem:[#allocation10 + $0x1c4] sm:$0xf]
        %v9161 = vld [vmem:[#allocation10 + $0x1c8] sm:$0xf]
        %v9162 = vld [vmem:[#allocation10 + $0x1cc] sm:$0xf]
        %v9163 = vld [vmem:[#allocation10 + $0x1d0] sm:$0xf]
        %v9164 = vld [vmem:[#allocation10 + $0x1d4] sm:$0xf]
        %v9165 = vld [vmem:[#allocation10 + $0x1d8] sm:$0xf]
        %v9166 = vld [vmem:[#allocation10 + $0x1dc] sm:$0xf]
        %v9167 = vld [vmem:[#allocation10 + $0x1e0] sm:$0xf]
        %v9168 = vld [vmem:[#allocation10 + $0x1e4] sm:$0xf]
        %v9169 = vld [vmem:[#allocation10 + $0x1e8] sm:$0xf]
        %v9170 = vld [vmem:[#allocation10 + $0x1ec] sm:$0xf]
        %v9171 = vld [vmem:[#allocation10 + $0x1f0] sm:$0xf]
        %v9172 = vld [vmem:[#allocation10 + $0x1f4] sm:$0xf]
        %v9173 = vld [vmem:[#allocation10 + $0x1f8] sm:$0xf]
        %v9174 = vld [vmem:[#allocation10 + $0x1fc] sm:$0xf]
        %v9175 = vld [vmem:[#allocation10 + $0x200] sm:$0xf]
        %v9176 = vld [vmem:[#allocation10 + $0x204] sm:$0xf]
        %v9177 = vld [vmem:[#allocation10 + $0x208] sm:$0xf]
        %v9178 = vld [vmem:[#allocation10 + $0x20c] sm:$0xf]
        %v9179 = vld [vmem:[#allocation10 + $0x210] sm:$0xf]
        %v9180 = vld [vmem:[#allocation10 + $0x214] sm:$0xf]
        %v9181 = vld [vmem:[#allocation10 + $0x218] sm:$0xf]
        %v9182 = vld [vmem:[#allocation10 + $0x21c] sm:$0xf]
        %v9183 = vld [vmem:[#allocation10 + $0x220] sm:$0xf]
        %v9184 = vld [vmem:[#allocation10 + $0x224] sm:$0xf]
        %v9185 = vld [vmem:[#allocation10 + $0x228] sm:$0xf]
        %v9186 = vld [vmem:[#allocation10 + $0x22c] sm:$0xf]
        %v9187 = vld [vmem:[#allocation10 + $0x230] sm:$0xf]
        %v9188 = vld [vmem:[#allocation10 + $0x234] sm:$0xf]
        %v9189 = vld [vmem:[#allocation10 + $0x238] sm:$0xf]
        %v9190 = vld [vmem:[#allocation10 + $0x23c] sm:$0xf]
        %v9191 = vld [vmem:[#allocation10 + $0x240] sm:$0xf]
        %v9192 = vld [vmem:[#allocation10 + $0x244] sm:$0xf]
        %v9193 = vld [vmem:[#allocation10 + $0x248] sm:$0xf]
        %v9194 = vld [vmem:[#allocation10 + $0x24c] sm:$0xf]
        %v9195 = vld [vmem:[#allocation10 + $0x250] sm:$0xf]
        %v9196 = vld [vmem:[#allocation10 + $0x254] sm:$0xf]
        %v9197 = vld [vmem:[#allocation10 + $0x258] sm:$0xf]
        %v9198 = vld [vmem:[#allocation10 + $0x25c] sm:$0xf]
        %v9199 = vld [vmem:[#allocation10 + $0x260] sm:$0xf]
        %v9200 = vld [vmem:[#allocation10 + $0x264] sm:$0xf]
        %v9201 = vld [vmem:[#allocation10 + $0x268] sm:$0xf]
        %v9202 = vld [vmem:[#allocation10 + $0x26c] sm:$0xf]
        %v9203 = vld [vmem:[#allocation10 + $0x270] sm:$0xf]
        %v9204 = vld [vmem:[#allocation10 + $0x274] sm:$0xf]
        %v9205 = vld [vmem:[#allocation10 + $0x278] sm:$0xf]
        %v9206 = vld [vmem:[#allocation10 + $0x27c] sm:$0xf]
        %v9208 = vlaneseq
        %v9209 = vshrl.u32 %v9208, 7
        %v9210 = vsub.s32 0, %v9209
        %v9211 = vrot.slane %v978, %v9210
        %v9373 = vunpack.c.l.b16 %v9047
        %v9374 = vunpack.c.l.b16 %v9048
        %v9375 = vunpack.c.l.b16 %v9049
        %v9376 = vunpack.c.l.b16 %v9050
        %v9377 = vunpack.c.l.b16 %v9051
        %v9378 = vunpack.c.l.b16 %v9052
        %v9379 = vunpack.c.l.b16 %v9053
        %v9380 = vunpack.c.l.b16 %v9054
        %v9381 = vunpack.c.l.b16 %v9055
        %v9382 = vunpack.c.l.b16 %v9056
        %v9383 = vunpack.c.l.b16 %v9057
        %v9384 = vunpack.c.l.b16 %v9058
        %v9385 = vunpack.c.l.b16 %v9059
        %v9386 = vunpack.c.l.b16 %v9060
        %v9387 = vunpack.c.l.b16 %v9061
        %v9388 = vunpack.c.l.b16 %v9062
        %v9389 = vunpack.c.l.b16 %v9063
        %v9390 = vunpack.c.l.b16 %v9064
        %v9391 = vunpack.c.l.b16 %v9065
        %v9392 = vunpack.c.l.b16 %v9066
        %v9393 = vunpack.c.l.b16 %v9067
        %v9394 = vunpack.c.l.b16 %v9068
        %v9395 = vunpack.c.l.b16 %v9069
        %v9396 = vunpack.c.l.b16 %v9070
        %v9397 = vunpack.c.l.b16 %v9071
        %v9398 = vunpack.c.l.b16 %v9072
        %v9399 = vunpack.c.l.b16 %v9073
        %v9400 = vunpack.c.l.b16 %v9074
        %v9401 = vunpack.c.l.b16 %v9075
        %v9402 = vunpack.c.l.b16 %v9076
        %v9403 = vunpack.c.l.b16 %v9077
        %v9404 = vunpack.c.l.b16 %v9078
        %v9405 = vunpack.c.l.b16 %v9079
        %v9406 = vunpack.c.l.b16 %v9080
        %v9407 = vunpack.c.l.b16 %v9081
        %v9408 = vunpack.c.l.b16 %v9082
        %v9409 = vunpack.c.l.b16 %v9083
        %v9410 = vunpack.c.l.b16 %v9084
        %v9411 = vunpack.c.l.b16 %v9085
        %v9412 = vunpack.c.l.b16 %v9086
        %v9413 = vunpack.c.l.b16 %v9087
        %v9414 = vunpack.c.l.b16 %v9088
        %v9415 = vunpack.c.l.b16 %v9089
        %v9416 = vunpack.c.l.b16 %v9090
        %v9417 = vunpack.c.l.b16 %v9091
        %v9418 = vunpack.c.l.b16 %v9092
        %v9419 = vunpack.c.l.b16 %v9093
        %v9420 = vunpack.c.l.b16 %v9094
        %v9421 = vunpack.c.l.b16 %v9095
        %v9422 = vunpack.c.l.b16 %v9096
        %v9423 = vunpack.c.l.b16 %v9097
        %v9424 = vunpack.c.l.b16 %v9098
        %v9425 = vunpack.c.l.b16 %v9099
        %v9426 = vunpack.c.l.b16 %v9100
        %v9427 = vunpack.c.l.b16 %v9101
        %v9428 = vunpack.c.l.b16 %v9102
        %v9429 = vunpack.c.l.b16 %v9103
        %v9430 = vunpack.c.l.b16 %v9104
        %v9431 = vunpack.c.l.b16 %v9105
        %v9432 = vunpack.c.l.b16 %v9106
        %v9433 = vunpack.c.l.b16 %v9107
        %v9434 = vunpack.c.l.b16 %v9108
        %v9435 = vunpack.c.l.b16 %v9109
        %v9436 = vunpack.c.l.b16 %v9110
        %v9437 = vunpack.c.l.b16 %v9111
        %v9438 = vunpack.c.l.b16 %v9112
        %v9439 = vunpack.c.l.b16 %v9113
        %v9440 = vunpack.c.l.b16 %v9114
        %v9441 = vunpack.c.l.b16 %v9115
        %v9442 = vunpack.c.l.b16 %v9116
        %v9443 = vunpack.c.l.b16 %v9117
        %v9444 = vunpack.c.l.b16 %v9118
        %v9445 = vunpack.c.l.b16 %v9119
        %v9446 = vunpack.c.l.b16 %v9120
        %v9447 = vunpack.c.l.b16 %v9121
        %v9448 = vunpack.c.l.b16 %v9122
        %v9449 = vunpack.c.l.b16 %v9123
        %v9450 = vunpack.c.l.b16 %v9124
        %v9451 = vunpack.c.l.b16 %v9125
        %v9452 = vunpack.c.l.b16 %v9126
        %v9453 = vunpack.c.l.b16 %v9127
        %v9454 = vunpack.c.l.b16 %v9128
        %v9455 = vunpack.c.l.b16 %v9129
        %v9456 = vunpack.c.l.b16 %v9130
        %v9457 = vunpack.c.l.b16 %v9131
        %v9458 = vunpack.c.l.b16 %v9132
        %v9459 = vunpack.c.l.b16 %v9133
        %v9460 = vunpack.c.l.b16 %v9134
        %v9461 = vunpack.c.l.b16 %v9135
        %v9462 = vunpack.c.l.b16 %v9136
        %v9463 = vunpack.c.l.b16 %v9137
        %v9464 = vunpack.c.l.b16 %v9138
        %v9465 = vunpack.c.l.b16 %v9139
        %v9466 = vunpack.c.l.b16 %v9140
        %v9467 = vunpack.c.l.b16 %v9141
        %v9468 = vunpack.c.l.b16 %v9142
        %v9469 = vunpack.c.l.b16 %v9143
        %v9470 = vunpack.c.l.b16 %v9144
        %v9471 = vunpack.c.l.b16 %v9145
        %v9472 = vunpack.c.l.b16 %v9146
        %v9473 = vunpack.c.l.b16 %v9147
        %v9474 = vunpack.c.l.b16 %v9148
        %v9475 = vunpack.c.l.b16 %v9149
        %v9476 = vunpack.c.l.b16 %v9150
        %v9477 = vunpack.c.l.b16 %v9151
        %v9478 = vunpack.c.l.b16 %v9152
        %v9479 = vunpack.c.l.b16 %v9153
        %v9480 = vunpack.c.l.b16 %v9154
        %v9481 = vunpack.c.l.b16 %v9155
        %v9482 = vunpack.c.l.b16 %v9156
        %v9483 = vunpack.c.l.b16 %v9157
        %v9484 = vunpack.c.l.b16 %v9158
        %v9485 = vunpack.c.l.b16 %v9159
        %v9486 = vunpack.c.l.b16 %v9160
        %v9487 = vunpack.c.l.b16 %v9161
        %v9488 = vunpack.c.l.b16 %v9162
        %v9489 = vunpack.c.l.b16 %v9163
        %v9490 = vunpack.c.l.b16 %v9164
        %v9491 = vunpack.c.l.b16 %v9165
        %v9492 = vunpack.c.l.b16 %v9166
        %v9493 = vunpack.c.l.b16 %v9167
        %v9494 = vunpack.c.l.b16 %v9168
        %v9495 = vunpack.c.l.b16 %v9169
        %v9496 = vunpack.c.l.b16 %v9170
        %v9497 = vunpack.c.l.b16 %v9171
        %v9498 = vunpack.c.l.b16 %v9172
        %v9499 = vunpack.c.l.b16 %v9173
        %v9500 = vunpack.c.l.b16 %v9174
        %v9501 = vunpack.c.l.b16 %v9175
        %v9502 = vunpack.c.l.b16 %v9176
        %v9503 = vunpack.c.l.b16 %v9177
        %v9504 = vunpack.c.l.b16 %v9178
        %v9505 = vunpack.c.l.b16 %v9179
        %v9506 = vunpack.c.l.b16 %v9180
        %v9507 = vunpack.c.l.b16 %v9181
        %v9508 = vunpack.c.l.b16 %v9182
        %v9509 = vunpack.c.l.b16 %v9183
        %v9510 = vunpack.c.l.b16 %v9184
        %v9511 = vunpack.c.l.b16 %v9185
        %v9512 = vunpack.c.l.b16 %v9186
        %v9513 = vunpack.c.l.b16 %v9187
        %v9514 = vunpack.c.l.b16 %v9188
        %v9515 = vunpack.c.l.b16 %v9189
        %v9516 = vunpack.c.l.b16 %v9190
        %v9517 = vunpack.c.l.b16 %v9191
        %v9518 = vunpack.c.l.b16 %v9192
        %v9519 = vunpack.c.l.b16 %v9193
        %v9520 = vunpack.c.l.b16 %v9194
        %v9521 = vunpack.c.l.b16 %v9195
        %v9522 = vunpack.c.l.b16 %v9196
        %v9523 = vunpack.c.l.b16 %v9197
        %v9524 = vunpack.c.l.b16 %v9198
        %v9525 = vunpack.c.l.b16 %v9199
        %v9526 = vunpack.c.l.b16 %v9200
        %v9527 = vunpack.c.l.b16 %v9201
        %v9528 = vunpack.c.l.b16 %v9202
        %v9529 = vunpack.c.l.b16 %v9203
        %v9530 = vunpack.c.l.b16 %v9204
        %v9531 = vunpack.c.l.b16 %v9205
        %v9532 = vunpack.c.l.b16 %v9206
        %v9533 = vpack.c.b16 %v9374, %v9373
        %v9534 = vpack.c.b16 %v9376, %v9375
        %v9535 = vpack.c.b16 %v9378, %v9377
        %v9536 = vpack.c.b16 %v9380, %v9379
        %v9537 = vpack.c.b16 %v9382, %v9381
        %v9538 = vpack.c.b16 %v9384, %v9383
        %v9539 = vpack.c.b16 %v9386, %v9385
        %v9540 = vpack.c.b16 %v9388, %v9387
        %v9541 = vpack.c.b16 %v9390, %v9389
        %v9542 = vpack.c.b16 %v9392, %v9391
        %v9543 = vpack.c.b16 %v9394, %v9393
        %v9544 = vpack.c.b16 %v9396, %v9395
        %v9545 = vpack.c.b16 %v9398, %v9397
        %v9546 = vpack.c.b16 %v9400, %v9399
        %v9547 = vpack.c.b16 %v9402, %v9401
        %v9548 = vpack.c.b16 %v9404, %v9403
        %v9549 = vpack.c.b16 %v9406, %v9405
        %v9550 = vpack.c.b16 %v9408, %v9407
        %v9551 = vpack.c.b16 %v9410, %v9409
        %v9552 = vpack.c.b16 %v9412, %v9411
        %v9553 = vpack.c.b16 %v9414, %v9413
        %v9554 = vpack.c.b16 %v9416, %v9415
        %v9555 = vpack.c.b16 %v9418, %v9417
        %v9556 = vpack.c.b16 %v9420, %v9419
        %v9557 = vpack.c.b16 %v9422, %v9421
        %v9558 = vpack.c.b16 %v9424, %v9423
        %v9559 = vpack.c.b16 %v9426, %v9425
        %v9560 = vpack.c.b16 %v9428, %v9427
        %v9561 = vpack.c.b16 %v9430, %v9429
        %v9562 = vpack.c.b16 %v9432, %v9431
        %v9563 = vpack.c.b16 %v9434, %v9433
        %v9564 = vpack.c.b16 %v9436, %v9435
        %v9565 = vpack.c.b16 %v9438, %v9437
        %v9566 = vpack.c.b16 %v9440, %v9439
        %v9567 = vpack.c.b16 %v9442, %v9441
        %v9568 = vpack.c.b16 %v9444, %v9443
        %v9569 = vpack.c.b16 %v9446, %v9445
        %v9570 = vpack.c.b16 %v9448, %v9447
        %v9571 = vpack.c.b16 %v9450, %v9449
        %v9572 = vpack.c.b16 %v9452, %v9451
        %v9573 = vpack.c.b16 %v9454, %v9453
        %v9574 = vpack.c.b16 %v9456, %v9455
        %v9575 = vpack.c.b16 %v9458, %v9457
        %v9576 = vpack.c.b16 %v9460, %v9459
        %v9577 = vpack.c.b16 %v9462, %v9461
        %v9578 = vpack.c.b16 %v9464, %v9463
        %v9579 = vpack.c.b16 %v9466, %v9465
        %v9580 = vpack.c.b16 %v9468, %v9467
        %v9581 = vpack.c.b16 %v9470, %v9469
        %v9582 = vpack.c.b16 %v9472, %v9471
        %v9583 = vpack.c.b16 %v9474, %v9473
        %v9584 = vpack.c.b16 %v9476, %v9475
        %v9585 = vpack.c.b16 %v9478, %v9477
        %v9586 = vpack.c.b16 %v9480, %v9479
        %v9587 = vpack.c.b16 %v9482, %v9481
        %v9588 = vpack.c.b16 %v9484, %v9483
        %v9589 = vpack.c.b16 %v9486, %v9485
        %v9590 = vpack.c.b16 %v9488, %v9487
        %v9591 = vpack.c.b16 %v9490, %v9489
        %v9592 = vpack.c.b16 %v9492, %v9491
        %v9593 = vpack.c.b16 %v9494, %v9493
        %v9594 = vpack.c.b16 %v9496, %v9495
        %v9595 = vpack.c.b16 %v9498, %v9497
        %v9596 = vpack.c.b16 %v9500, %v9499
        %v9597 = vpack.c.b16 %v9502, %v9501
        %v9598 = vpack.c.b16 %v9504, %v9503
        %v9599 = vpack.c.b16 %v9506, %v9505
        %v9600 = vpack.c.b16 %v9508, %v9507
        %v9601 = vpack.c.b16 %v9510, %v9509
        %v9602 = vpack.c.b16 %v9512, %v9511
        %v9603 = vpack.c.b16 %v9514, %v9513
        %v9604 = vpack.c.b16 %v9516, %v9515
        %v9605 = vpack.c.b16 %v9518, %v9517
        %v9606 = vpack.c.b16 %v9520, %v9519
        %v9607 = vpack.c.b16 %v9522, %v9521
        %v9608 = vpack.c.b16 %v9524, %v9523
        %v9609 = vpack.c.b16 %v9526, %v9525
        %v9610 = vpack.c.b16 %v9528, %v9527
        %v9611 = vpack.c.b16 %v9530, %v9529
        %v9612 = vpack.c.b16 %v9532, %v9531
        %9693 = vmatprep.subr.bf16.mxu0 0
        %9694 = vmatpush1.bf16.msra.mxu0 %v9533
        %9695 = vmatprep.subr.bf16.mxu0 0
        %9696 = vmatpush1.bf16.msra.mxu0 %v9534
        %9697 = vmatprep.subr.bf16.mxu0 0
        %9698 = vmatpush1.bf16.msra.mxu0 %v9535
        %9699 = vmatprep.subr.bf16.mxu0 0
        %9700 = vmatpush1.bf16.msra.mxu0 %v9536
        %9701 = vmatprep.subr.bf16.mxu0 0
        %9702 = vmatpush1.bf16.msra.mxu0 %v9537
        %9703 = vmatprep.subr.bf16.mxu0 0
        %9704 = vmatpush1.bf16.msra.mxu0 %v9538
        %9705 = vmatprep.subr.bf16.mxu0 0
        %9706 = vmatpush1.bf16.msra.mxu0 %v9539
        %9707 = vmatprep.subr.bf16.mxu0 0
        %9708 = vmatpush1.bf16.msra.mxu0 %v9540
        %9709 = vmatprep.subr.bf16.mxu0 0
        %9710 = vmatpush1.bf16.msra.mxu0 %v9541
        %9711 = vmatprep.subr.bf16.mxu0 0
        %9712 = vmatpush1.bf16.msra.mxu0 %v9542
        %9713 = vmatprep.subr.bf16.mxu0 0
        %9714 = vmatpush1.bf16.msra.mxu0 %v9543
        %9715 = vmatprep.subr.bf16.mxu0 0
        %9716 = vmatpush1.bf16.msra.mxu0 %v9544
        %9717 = vmatprep.subr.bf16.mxu0 0
        %9718 = vmatpush1.bf16.msra.mxu0 %v9545
        %9719 = vmatprep.subr.bf16.mxu0 0
        %9720 = vmatpush1.bf16.msra.mxu0 %v9546
        %9721 = vmatprep.subr.bf16.mxu0 0
        %9722 = vmatpush1.bf16.msra.mxu0 %v9547
        %9723 = vmatprep.subr.bf16.mxu0 0
        %9724 = vmatpush1.bf16.msra.mxu0 %v9548
        %9725 = vmatprep.mubr.bf16.mxu0 %v8888
        %9726 = vmatmul.mubr.bf16.gmra.mrb[0].mxu0 %v8887
        %v9727 = vpop.f32.mrb[0].mxu0
        %v9728 = vadd.f32 %v9211, %v9727
        %v9729 = vpop.f32.mrb[0].mxu0
        %v9730 = vpop.f32.mrb[0].mxu0
        %v9731 = vadd.f32 %v9211, %v9730
        %v9732 = vpop.f32.mrb[0].mxu0
        %9733 = vmatprep.mubr.bf16.mxu0 %v8898
        %9734 = vmatmul.mubr.bf16.gmra.mrb[0].mxu0 %v8897
        %v9735 = vpop.f32.mrb[0].mxu0
        %v9736 = vadd.f32 %v9211, %v9735
        %v9737 = vpop.f32.mrb[0].mxu0
        %v9738 = vpop.f32.mrb[0].mxu0
        %v9739 = vadd.f32 %v9211, %v9738
        %v9740 = vpop.f32.mrb[0].mxu0
        %9741 = vmatprep.mubr.bf16.mxu0 %v8908
        %9742 = vmatmul.mubr.bf16.gmra.mrb[0].mxu0 %v8907
        %v9743 = vpop.f32.mrb[0].mxu0
        %v9744 = vadd.f32 %v9211, %v9743
        %v9745 = vpop.f32.mrb[0].mxu0
        %v9746 = vpop.f32.mrb[0].mxu0
        %v9747 = vadd.f32 %v9211, %v9746
        %v9748 = vpop.f32.mrb[0].mxu0
        %9749 = vmatprep.mubr.bf16.mxu0 %v8918
        %9750 = vmatmul.mubr.bf16.gmra.mrb[0].mxu0 %v8917
        %v9751 = vpop.f32.mrb[0].mxu0
        %v9752 = vadd.f32 %v9211, %v9751
        %v9753 = vpop.f32.mrb[0].mxu0
        %v9754 = vpop.f32.mrb[0].mxu0
        %v9755 = vadd.f32 %v9211, %v9754
        %v9756 = vpop.f32.mrb[0].mxu0
        %9757 = vmatprep.mubr.bf16.mxu0 %v8928
        %9758 = vmatmul.mubr.bf16.gmra.mrb[0].mxu0 %v8927
        %v9759 = vpop.f32.mrb[0].mxu0
        %v9760 = vadd.f32 %v9211, %v9759
        %v9761 = vpop.f32.mrb[0].mxu0
        %v9762 = vpop.f32.mrb[0].mxu0
        %v9763 = vadd.f32 %v9211, %v9762
        %v9764 = vpop.f32.mrb[0].mxu0
        %9765 = vmatprep.mubr.bf16.mxu0 %v8938
        %9766 = vmatmul.mubr.bf16.gmra.mrb[0].mxu0 %v8937
        %v9767 = vpop.f32.mrb[0].mxu0
        %v9768 = vadd.f32 %v9211, %v9767
        %v9769 = vpop.f32.mrb[0].mxu0
        %v9770 = vpop.f32.mrb[0].mxu0
        %v9771 = vadd.f32 %v9211, %v9770
        %v9772 = vpop.f32.mrb[0].mxu0
        %9773 = vmatprep.mubr.bf16.mxu0 %v8948
        %9774 = vmatmul.mubr.bf16.gmra.mrb[0].mxu0 %v8947
        %v9775 = vpop.f32.mrb[0].mxu0
        %v9776 = vadd.f32 %v9211, %v9775
        %v9777 = vpop.f32.mrb[0].mxu0
        %v9778 = vpop.f32.mrb[0].mxu0
        %v9779 = vadd.f32 %v9211, %v9778
        %v9780 = vpop.f32.mrb[0].mxu0
        %9781 = vmatprep.mubr.bf16.mxu0 %v8958
        %9782 = vmatmul.mubr.bf16.gmra.mrb[0].mxu0 %v8957
        %v9783 = vpop.f32.mrb[0].mxu0
        %v9784 = vadd.f32 %v9211, %v9783
        %v9785 = vpop.f32.mrb[0].mxu0
        %v9786 = vpop.f32.mrb[0].mxu0
        %v9787 = vadd.f32 %v9211, %v9786
        %v9788 = vpop.f32.mrb[0].mxu0
        %9789 = vmatprep.mubr.bf16.mxu0 %v8968
        %9790 = vmatmul.mubr.bf16.gmra.mrb[0].mxu0 %v8967
        %v9791 = vpop.f32.mrb[0].mxu0
        %v9792 = vadd.f32 %v9211, %v9791
        %v9793 = vpop.f32.mrb[0].mxu0
        %v9794 = vpop.f32.mrb[0].mxu0
        %v9795 = vadd.f32 %v9211, %v9794
        %v9796 = vpop.f32.mrb[0].mxu0
        %9797 = vmatprep.mubr.bf16.mxu0 %v8978
        %9798 = vmatmul.mubr.bf16.gmra.mrb[0].mxu0 %v8977
        %v9799 = vpop.f32.mrb[0].mxu0
        %v9800 = vadd.f32 %v9211, %v9799
        %v9801 = vpop.f32.mrb[0].mxu0
        %v9802 = vpop.f32.mrb[0].mxu0
        %v9803 = vadd.f32 %v9211, %v9802
        %v9804 = vpop.f32.mrb[0].mxu0
        %9805 = vmatprep.mubr.bf16.mxu0 %v8988
        %9806 = vmatmul.mubr.bf16.gmra.mrb[0].mxu0 %v8987
        %v9807 = vpop.f32.mrb[0].mxu0
        %v9808 = vadd.f32 %v9211, %v9807
        %v9809 = vpop.f32.mrb[0].mxu0
        %v9810 = vpop.f32.mrb[0].mxu0
        %v9811 = vadd.f32 %v9211, %v9810
        %v9812 = vpop.f32.mrb[0].mxu0
        %9813 = vmatprep.mubr.bf16.mxu0 %v8998
        %9814 = vmatmul.mubr.bf16.gmra.mrb[0].mxu0 %v8997
        %v9815 = vpop.f32.mrb[0].mxu0
        %v9816 = vadd.f32 %v9211, %v9815
        %v9817 = vpop.f32.mrb[0].mxu0
        %v9818 = vpop.f32.mrb[0].mxu0
        %v9819 = vadd.f32 %v9211, %v9818
        %v9820 = vpop.f32.mrb[0].mxu0
        %9821 = vmatprep.mubr.bf16.mxu0 %v9008
        %9822 = vmatmul.mubr.bf16.gmra.mrb[0].mxu0 %v9007
        %v9823 = vpop.f32.mrb[0].mxu0
        %v9824 = vadd.f32 %v9211, %v9823
        %v9825 = vpop.f32.mrb[0].mxu0
        %v9826 = vpop.f32.mrb[0].mxu0
        %v9827 = vadd.f32 %v9211, %v9826
        %v9828 = vpop.f32.mrb[0].mxu0
        %9829 = vmatprep.mubr.bf16.mxu0 %v9018
        %9830 = vmatmul.mubr.bf16.gmra.mrb[0].mxu0 %v9017
        %v9831 = vpop.f32.mrb[0].mxu0
        %v9832 = vadd.f32 %v9211, %v9831
        %v9833 = vpop.f32.mrb[0].mxu0
        %v9834 = vpop.f32.mrb[0].mxu0
        %v9835 = vadd.f32 %v9211, %v9834
        %v9836 = vpop.f32.mrb[0].mxu0
        %9837 = vmatprep.mubr.bf16.mxu0 %v9028
        %9838 = vmatmul.mubr.bf16.gmra.mrb[0].mxu0 %v9027
        %v9839 = vpop.f32.mrb[0].mxu0
        %v9840 = vadd.f32 %v9211, %v9839
        %v9841 = vpop.f32.mrb[0].mxu0
        %v9842 = vpop.f32.mrb[0].mxu0
        %v9843 = vadd.f32 %v9211, %v9842
        %v9844 = vpop.f32.mrb[0].mxu0
        %9845 = vmatprep.mubr.bf16.mxu0 %v9038
        %9846 = vmatmul.mubr.bf16.gmra.mrb[0].mxu0 %v9037
        %v9847 = vpop.f32.mrb[0].mxu0
        %v9848 = vadd.f32 %v9211, %v9847
        %v9849 = vpop.f32.mrb[0].mxu0
        %v9850 = vpop.f32.mrb[0].mxu0
        %v9851 = vadd.f32 %v9211, %v9850
        %v9852 = vpop.f32.mrb[0].mxu0
        %9853 = vdwg.mxu0
        %9854 = vmatprep.subr.bf16.mxu0 0
        %9855 = vmatpush1.bf16.msra.mxu0 %v9549
        %9856 = vmatprep.subr.bf16.mxu0 0
        %9857 = vmatpush1.bf16.msra.mxu0 %v9550
        %9858 = vmatprep.subr.bf16.mxu0 0
        %9859 = vmatpush1.bf16.msra.mxu0 %v9551
        %9860 = vmatprep.subr.bf16.mxu0 0
        %9861 = vmatpush1.bf16.msra.mxu0 %v9552
        %9862 = vmatprep.subr.bf16.mxu0 0
        %9863 = vmatpush1.bf16.msra.mxu0 %v9553
        %9864 = vmatprep.subr.bf16.mxu0 0
        %9865 = vmatpush1.bf16.msra.mxu0 %v9554
        %9866 = vmatprep.subr.bf16.mxu0 0
        %9867 = vmatpush1.bf16.msra.mxu0 %v9555
        %9868 = vmatprep.subr.bf16.mxu0 0
        %9869 = vmatpush1.bf16.msra.mxu0 %v9556
        %9870 = vmatprep.subr.bf16.mxu0 0
        %9871 = vmatpush1.bf16.msra.mxu0 %v9557
        %9872 = vmatprep.subr.bf16.mxu0 0
        %9873 = vmatpush1.bf16.msra.mxu0 %v9558
        %9874 = vmatprep.subr.bf16.mxu0 0
        %9875 = vmatpush1.bf16.msra.mxu0 %v9559
        %9876 = vmatprep.subr.bf16.mxu0 0
        %9877 = vmatpush1.bf16.msra.mxu0 %v9560
        %9878 = vmatprep.subr.bf16.mxu0 0
        %9879 = vmatpush1.bf16.msra.mxu0 %v9561
        %9880 = vmatprep.subr.bf16.mxu0 0
        %9881 = vmatpush1.bf16.msra.mxu0 %v9562
        %9882 = vmatprep.subr.bf16.mxu0 0
        %9883 = vmatpush1.bf16.msra.mxu0 %v9563
        %9884 = vmatprep.subr.bf16.mxu0 0
        %9885 = vmatpush1.bf16.msra.mxu0 %v9564
        %9886 = vmatprep.mubr.bf16.mxu0 %v8890
        %9887 = vmatmul.mubr.bf16.gmra.mrb[0].mxu0 %v8889
        %v9888 = vpop.f32.mrb[0].mxu0
        %v9889 = vadd.f32 %v9728, %v9888
        %v9890 = vpop.f32.mrb[0].mxu0
        %v9891 = vpop.f32.mrb[0].mxu0
        %v9892 = vadd.f32 %v9731, %v9891
        %v9893 = vpop.f32.mrb[0].mxu0
        %9894 = vmatprep.mubr.bf16.mxu0 %v8900
        %9895 = vmatmul.mubr.bf16.gmra.mrb[0].mxu0 %v8899
        %v9896 = vpop.f32.mrb[0].mxu0
        %v9897 = vadd.f32 %v9736, %v9896
        %v9898 = vpop.f32.mrb[0].mxu0
        %v9899 = vpop.f32.mrb[0].mxu0
        %v9900 = vadd.f32 %v9739, %v9899
        %v9901 = vpop.f32.mrb[0].mxu0
        %9902 = vmatprep.mubr.bf16.mxu0 %v8910
        %9903 = vmatmul.mubr.bf16.gmra.mrb[0].mxu0 %v8909
        %v9904 = vpop.f32.mrb[0].mxu0
        %v9905 = vadd.f32 %v9744, %v9904
        %v9906 = vpop.f32.mrb[0].mxu0
        %v9907 = vpop.f32.mrb[0].mxu0
        %v9908 = vadd.f32 %v9747, %v9907
        %v9909 = vpop.f32.mrb[0].mxu0
        %9910 = vmatprep.mubr.bf16.mxu0 %v8920
        %9911 = vmatmul.mubr.bf16.gmra.mrb[0].mxu0 %v8919
        %v9912 = vpop.f32.mrb[0].mxu0
        %v9913 = vadd.f32 %v9752, %v9912
        %v9914 = vpop.f32.mrb[0].mxu0
        %v9915 = vpop.f32.mrb[0].mxu0
        %v9916 = vadd.f32 %v9755, %v9915
        %v9917 = vpop.f32.mrb[0].mxu0
        %9918 = vmatprep.mubr.bf16.mxu0 %v8930
        %9919 = vmatmul.mubr.bf16.gmra.mrb[0].mxu0 %v8929
        %v9920 = vpop.f32.mrb[0].mxu0
        %v9921 = vadd.f32 %v9760, %v9920
        %v9922 = vpop.f32.mrb[0].mxu0
        %v9923 = vpop.f32.mrb[0].mxu0
        %v9924 = vadd.f32 %v9763, %v9923
        %v9925 = vpop.f32.mrb[0].mxu0
        %9926 = vmatprep.mubr.bf16.mxu0 %v8940
        %9927 = vmatmul.mubr.bf16.gmra.mrb[0].mxu0 %v8939
        %v9928 = vpop.f32.mrb[0].mxu0
        %v9929 = vadd.f32 %v9768, %v9928
        %v9930 = vpop.f32.mrb[0].mxu0
        %v9931 = vpop.f32.mrb[0].mxu0
        %v9932 = vadd.f32 %v9771, %v9931
        %v9933 = vpop.f32.mrb[0].mxu0
        %9934 = vmatprep.mubr.bf16.mxu0 %v8950
        %9935 = vmatmul.mubr.bf16.gmra.mrb[0].mxu0 %v8949
        %v9936 = vpop.f32.mrb[0].mxu0
        %v9937 = vadd.f32 %v9776, %v9936
        %v9938 = vpop.f32.mrb[0].mxu0
        %v9939 = vpop.f32.mrb[0].mxu0
        %v9940 = vadd.f32 %v9779, %v9939
        %v9941 = vpop.f32.mrb[0].mxu0
        %9942 = vmatprep.mubr.bf16.mxu0 %v8960
        %9943 = vmatmul.mubr.bf16.gmra.mrb[0].mxu0 %v8959
        %v9944 = vpop.f32.mrb[0].mxu0
        %v9945 = vadd.f32 %v9784, %v9944
        %v9946 = vpop.f32.mrb[0].mxu0
        %v9947 = vpop.f32.mrb[0].mxu0
        %v9948 = vadd.f32 %v9787, %v9947
        %v9949 = vpop.f32.mrb[0].mxu0
        %9950 = vmatprep.mubr.bf16.mxu0 %v8970
        %9951 = vmatmul.mubr.bf16.gmra.mrb[0].mxu0 %v8969
        %v9952 = vpop.f32.mrb[0].mxu0
        %v9953 = vadd.f32 %v9792, %v9952
        %v9954 = vpop.f32.mrb[0].mxu0
        %v9955 = vpop.f32.mrb[0].mxu0
        %v9956 = vadd.f32 %v9795, %v9955
        %v9957 = vpop.f32.mrb[0].mxu0
        %9958 = vmatprep.mubr.bf16.mxu0 %v8980
        %9959 = vmatmul.mubr.bf16.gmra.mrb[0].mxu0 %v8979
        %v9960 = vpop.f32.mrb[0].mxu0
        %v9961 = vadd.f32 %v9800, %v9960
        %v9962 = vpop.f32.mrb[0].mxu0
        %v9963 = vpop.f32.mrb[0].mxu0
        %v9964 = vadd.f32 %v9803, %v9963
        %v9965 = vpop.f32.mrb[0].mxu0
        %9966 = vmatprep.mubr.bf16.mxu0 %v8990
        %9967 = vmatmul.mubr.bf16.gmra.mrb[0].mxu0 %v8989
        %v9968 = vpop.f32.mrb[0].mxu0
        %v9969 = vadd.f32 %v9808, %v9968
        %v9970 = vpop.f32.mrb[0].mxu0
        %v9971 = vpop.f32.mrb[0].mxu0
        %v9972 = vadd.f32 %v9811, %v9971
        %v9973 = vpop.f32.mrb[0].mxu0
        %9974 = vmatprep.mubr.bf16.mxu0 %v9000
        %9975 = vmatmul.mubr.bf16.gmra.mrb[0].mxu0 %v8999
        %v9976 = vpop.f32.mrb[0].mxu0
        %v9977 = vadd.f32 %v9816, %v9976
        %v9978 = vpop.f32.mrb[0].mxu0
        %v9979 = vpop.f32.mrb[0].mxu0
        %v9980 = vadd.f32 %v9819, %v9979
        %v9981 = vpop.f32.mrb[0].mxu0
        %9982 = vmatprep.mubr.bf16.mxu0 %v9010
        %9983 = vmatmul.mubr.bf16.gmra.mrb[0].mxu0 %v9009
        %v9984 = vpop.f32.mrb[0].mxu0
        %v9985 = vadd.f32 %v9824, %v9984
        %v9986 = vpop.f32.mrb[0].mxu0
        %v9987 = vpop.f32.mrb[0].mxu0
        %v9988 = vadd.f32 %v9827, %v9987
        %v9989 = vpop.f32.mrb[0].mxu0
        %9990 = vmatprep.mubr.bf16.mxu0 %v9020
        %9991 = vmatmul.mubr.bf16.gmra.mrb[0].mxu0 %v9019
        %v9992 = vpop.f32.mrb[0].mxu0
        %v9993 = vadd.f32 %v9832, %v9992
        %v9994 = vpop.f32.mrb[0].mxu0
        %v9995 = vpop.f32.mrb[0].mxu0
        %v9996 = vadd.f32 %v9835, %v9995
        %v9997 = vpop.f32.mrb[0].mxu0
        %9998 = vmatprep.mubr.bf16.mxu0 %v9030
        %9999 = vmatmul.mubr.bf16.gmra.mrb[0].mxu0 %v9029
        %v10000 = vpop.f32.mrb[0].mxu0
        %v10001 = vadd.f32 %v9840, %v10000
        %v10002 = vpop.f32.mrb[0].mxu0
        %v10003 = vpop.f32.mrb[0].mxu0
        %v10004 = vadd.f32 %v9843, %v10003
        %v10005 = vpop.f32.mrb[0].mxu0
        %10006 = vmatprep.mubr.bf16.mxu0 %v9040
        %10007 = vmatmul.mubr.bf16.gmra.mrb[0].mxu0 %v9039
        %v10008 = vpop.f32.mrb[0].mxu0
        %v10009 = vadd.f32 %v9848, %v10008
        %v10010 = vpop.f32.mrb[0].mxu0
        %v10011 = vpop.f32.mrb[0].mxu0
        %v10012 = vadd.f32 %v9851, %v10011
        %v10013 = vpop.f32.mrb[0].mxu0
        %10014 = vdwg.mxu0
        %10015 = vmatprep.subr.bf16.mxu0 0
        %10016 = vmatpush1.bf16.msra.mxu0 %v9565
        %10017 = vmatprep.subr.bf16.mxu0 0
        %10018 = vmatpush1.bf16.msra.mxu0 %v9566
        %10019 = vmatprep.subr.bf16.mxu0 0
        %10020 = vmatpush1.bf16.msra.mxu0 %v9567
        %10021 = vmatprep.subr.bf16.mxu0 0
        %10022 = vmatpush1.bf16.msra.mxu0 %v9568
        %10023 = vmatprep.subr.bf16.mxu0 0
        %10024 = vmatpush1.bf16.msra.mxu0 %v9569
        %10025 = vmatprep.subr.bf16.mxu0 0
        %10026 = vmatpush1.bf16.msra.mxu0 %v9570
        %10027 = vmatprep.subr.bf16.mxu0 0
        %10028 = vmatpush1.bf16.msra.mxu0 %v9571
        %10029 = vmatprep.subr.bf16.mxu0 0
        %10030 = vmatpush1.bf16.msra.mxu0 %v9572
        %10031 = vmatprep.subr.bf16.mxu0 0
        %10032 = vmatpush1.bf16.msra.mxu0 %v9573
        %10033 = vmatprep.subr.bf16.mxu0 0
        %10034 = vmatpush1.bf16.msra.mxu0 %v9574
        %10035 = vmatprep.subr.bf16.mxu0 0
        %10036 = vmatpush1.bf16.msra.mxu0 %v9575
        %10037 = vmatprep.subr.bf16.mxu0 0
        %10038 = vmatpush1.bf16.msra.mxu0 %v9576
        %10039 = vmatprep.subr.bf16.mxu0 0
        %10040 = vmatpush1.bf16.msra.mxu0 %v9577
        %10041 = vmatprep.subr.bf16.mxu0 0
        %10042 = vmatpush1.bf16.msra.mxu0 %v9578
        %10043 = vmatprep.subr.bf16.mxu0 0
        %10044 = vmatpush1.bf16.msra.mxu0 %v9579
        %10045 = vmatprep.subr.bf16.mxu0 0
        %10046 = vmatpush1.bf16.msra.mxu0 %v9580
        %10047 = vmatprep.mubr.bf16.mxu0 %v8892
        %10048 = vmatmul.mubr.bf16.gmra.mrb[0].mxu0 %v8891
        %v10049 = vpop.f32.mrb[0].mxu0
        %v10050 = vadd.f32 %v9889, %v10049
        %v10051 = vpop.f32.mrb[0].mxu0
        %v10052 = vpop.f32.mrb[0].mxu0
        %v10053 = vadd.f32 %v9892, %v10052
        %v10054 = vpop.f32.mrb[0].mxu0
        %10055 = vmatprep.mubr.bf16.mxu0 %v8902
        %10056 = vmatmul.mubr.bf16.gmra.mrb[0].mxu0 %v8901
        %v10057 = vpop.f32.mrb[0].mxu0
        %v10058 = vadd.f32 %v9897, %v10057
        %v10059 = vpop.f32.mrb[0].mxu0
        %v10060 = vpop.f32.mrb[0].mxu0
        %v10061 = vadd.f32 %v9900, %v10060
        %v10062 = vpop.f32.mrb[0].mxu0
        %10063 = vmatprep.mubr.bf16.mxu0 %v8912
        %10064 = vmatmul.mubr.bf16.gmra.mrb[0].mxu0 %v8911
        %v10065 = vpop.f32.mrb[0].mxu0
        %v10066 = vadd.f32 %v9905, %v10065
        %v10067 = vpop.f32.mrb[0].mxu0
        %v10068 = vpop.f32.mrb[0].mxu0
        %v10069 = vadd.f32 %v9908, %v10068
        %v10070 = vpop.f32.mrb[0].mxu0
        %10071 = vmatprep.mubr.bf16.mxu0 %v8922
        %10072 = vmatmul.mubr.bf16.gmra.mrb[0].mxu0 %v8921
        %v10073 = vpop.f32.mrb[0].mxu0
        %v10074 = vadd.f32 %v9913, %v10073
        %v10075 = vpop.f32.mrb[0].mxu0
        %v10076 = vpop.f32.mrb[0].mxu0
        %v10077 = vadd.f32 %v9916, %v10076
        %v10078 = vpop.f32.mrb[0].mxu0
        %10079 = vmatprep.mubr.bf16.mxu0 %v8932
        %10080 = vmatmul.mubr.bf16.gmra.mrb[0].mxu0 %v8931
        %v10081 = vpop.f32.mrb[0].mxu0
        %v10082 = vadd.f32 %v9921, %v10081
        %v10083 = vpop.f32.mrb[0].mxu0
        %v10084 = vpop.f32.mrb[0].mxu0
        %v10085 = vadd.f32 %v9924, %v10084
        %v10086 = vpop.f32.mrb[0].mxu0
        %10087 = vmatprep.mubr.bf16.mxu0 %v8942
        %10088 = vmatmul.mubr.bf16.gmra.mrb[0].mxu0 %v8941
        %v10089 = vpop.f32.mrb[0].mxu0
        %v10090 = vadd.f32 %v9929, %v10089
        %v10091 = vpop.f32.mrb[0].mxu0
        %v10092 = vpop.f32.mrb[0].mxu0
        %v10093 = vadd.f32 %v9932, %v10092
        %v10094 = vpop.f32.mrb[0].mxu0
        %10095 = vmatprep.mubr.bf16.mxu0 %v8952
        %10096 = vmatmul.mubr.bf16.gmra.mrb[0].mxu0 %v8951
        %v10097 = vpop.f32.mrb[0].mxu0
        %v10098 = vadd.f32 %v9937, %v10097
        %v10099 = vpop.f32.mrb[0].mxu0
        %v10100 = vpop.f32.mrb[0].mxu0
        %v10101 = vadd.f32 %v9940, %v10100
        %v10102 = vpop.f32.mrb[0].mxu0
        %10103 = vmatprep.mubr.bf16.mxu0 %v8962
        %10104 = vmatmul.mubr.bf16.gmra.mrb[0].mxu0 %v8961
        %v10105 = vpop.f32.mrb[0].mxu0
        %v10106 = vadd.f32 %v9945, %v10105
        %v10107 = vpop.f32.mrb[0].mxu0
        %v10108 = vpop.f32.mrb[0].mxu0
        %v10109 = vadd.f32 %v9948, %v10108
        %v10110 = vpop.f32.mrb[0].mxu0
        %10111 = vmatprep.mubr.bf16.mxu0 %v8972
        %10112 = vmatmul.mubr.bf16.gmra.mrb[0].mxu0 %v8971
        %v10113 = vpop.f32.mrb[0].mxu0
        %v10114 = vadd.f32 %v9953, %v10113
        %v10115 = vpop.f32.mrb[0].mxu0
        %v10116 = vpop.f32.mrb[0].mxu0
        %v10117 = vadd.f32 %v9956, %v10116
        %v10118 = vpop.f32.mrb[0].mxu0
        %10119 = vmatprep.mubr.bf16.mxu0 %v8982
        %10120 = vmatmul.mubr.bf16.gmra.mrb[0].mxu0 %v8981
        %v10121 = vpop.f32.mrb[0].mxu0
        %v10122 = vadd.f32 %v9961, %v10121
        %v10123 = vpop.f32.mrb[0].mxu0
        %v10124 = vpop.f32.mrb[0].mxu0
        %v10125 = vadd.f32 %v9964, %v10124
        %v10126 = vpop.f32.mrb[0].mxu0
        %10127 = vmatprep.mubr.bf16.mxu0 %v8992
        %10128 = vmatmul.mubr.bf16.gmra.mrb[0].mxu0 %v8991
        %v10129 = vpop.f32.mrb[0].mxu0
        %v10130 = vadd.f32 %v9969, %v10129
        %v10131 = vpop.f32.mrb[0].mxu0
        %v10132 = vpop.f32.mrb[0].mxu0
        %v10133 = vadd.f32 %v9972, %v10132
        %v10134 = vpop.f32.mrb[0].mxu0
        %10135 = vmatprep.mubr.bf16.mxu0 %v9002
        %10136 = vmatmul.mubr.bf16.gmra.mrb[0].mxu0 %v9001
        %v10137 = vpop.f32.mrb[0].mxu0
        %v10138 = vadd.f32 %v9977, %v10137
        %v10139 = vpop.f32.mrb[0].mxu0
        %v10140 = vpop.f32.mrb[0].mxu0
        %v10141 = vadd.f32 %v9980, %v10140
        %v10142 = vpop.f32.mrb[0].mxu0
        %10143 = vmatprep.mubr.bf16.mxu0 %v9012
        %10144 = vmatmul.mubr.bf16.gmra.mrb[0].mxu0 %v9011
        %v10145 = vpop.f32.mrb[0].mxu0
        %v10146 = vadd.f32 %v9985, %v10145
        %v10147 = vpop.f32.mrb[0].mxu0
        %v10148 = vpop.f32.mrb[0].mxu0
        %v10149 = vadd.f32 %v9988, %v10148
        %v10150 = vpop.f32.mrb[0].mxu0
        %10151 = vmatprep.mubr.bf16.mxu0 %v9022
        %10152 = vmatmul.mubr.bf16.gmra.mrb[0].mxu0 %v9021
        %v10153 = vpop.f32.mrb[0].mxu0
        %v10154 = vadd.f32 %v9993, %v10153
        %v10155 = vpop.f32.mrb[0].mxu0
        %v10156 = vpop.f32.mrb[0].mxu0
        %v10157 = vadd.f32 %v9996, %v10156
        %v10158 = vpop.f32.mrb[0].mxu0
        %10159 = vmatprep.mubr.bf16.mxu0 %v9032
        %10160 = vmatmul.mubr.bf16.gmra.mrb[0].mxu0 %v9031
        %v10161 = vpop.f32.mrb[0].mxu0
        %v10162 = vadd.f32 %v10001, %v10161
        %v10163 = vpop.f32.mrb[0].mxu0
        %v10164 = vpop.f32.mrb[0].mxu0
        %v10165 = vadd.f32 %v10004, %v10164
        %v10166 = vpop.f32.mrb[0].mxu0
        %10167 = vmatprep.mubr.bf16.mxu0 %v9042
        %10168 = vmatmul.mubr.bf16.gmra.mrb[0].mxu0 %v9041
        %v10169 = vpop.f32.mrb[0].mxu0
        %v10170 = vadd.f32 %v10009, %v10169
        %v10171 = vpop.f32.mrb[0].mxu0
        %v10172 = vpop.f32.mrb[0].mxu0
        %v10173 = vadd.f32 %v10012, %v10172
        %v10174 = vpop.f32.mrb[0].mxu0
        %10175 = vdwg.mxu0
        %10176 = vmatprep.subr.bf16.mxu0 0
        %10177 = vmatpush1.bf16.msra.mxu0 %v9581
        %10178 = vmatprep.subr.bf16.mxu0 0
        %10179 = vmatpush1.bf16.msra.mxu0 %v9582
        %10180 = vmatprep.subr.bf16.mxu0 0
        %10181 = vmatpush1.bf16.msra.mxu0 %v9583
        %10182 = vmatprep.subr.bf16.mxu0 0
        %10183 = vmatpush1.bf16.msra.mxu0 %v9584
        %10184 = vmatprep.subr.bf16.mxu0 0
        %10185 = vmatpush1.bf16.msra.mxu0 %v9585
        %10186 = vmatprep.subr.bf16.mxu0 0
        %10187 = vmatpush1.bf16.msra.mxu0 %v9586
        %10188 = vmatprep.subr.bf16.mxu0 0
        %10189 = vmatpush1.bf16.msra.mxu0 %v9587
        %10190 = vmatprep.subr.bf16.mxu0 0
        %10191 = vmatpush1.bf16.msra.mxu0 %v9588
        %10192 = vmatprep.subr.bf16.mxu0 0
        %10193 = vmatpush1.bf16.msra.mxu0 %v9589
        %10194 = vmatprep.subr.bf16.mxu0 0
        %10195 = vmatpush1.bf16.msra.mxu0 %v9590
        %10196 = vmatprep.subr.bf16.mxu0 0
        %10197 = vmatpush1.bf16.msra.mxu0 %v9591
        %10198 = vmatprep.subr.bf16.mxu0 0
        %10199 = vmatpush1.bf16.msra.mxu0 %v9592
        %10200 = vmatprep.subr.bf16.mxu0 0
        %10201 = vmatpush1.bf16.msra.mxu0 %v9593
        %10202 = vmatprep.subr.bf16.mxu0 0
        %10203 = vmatpush1.bf16.msra.mxu0 %v9594
        %10204 = vmatprep.subr.bf16.mxu0 0
        %10205 = vmatpush1.bf16.msra.mxu0 %v9595
        %10206 = vmatprep.subr.bf16.mxu0 0
        %10207 = vmatpush1.bf16.msra.mxu0 %v9596
        %10208 = vmatprep.mubr.bf16.mxu0 %v8894
        %10209 = vmatmul.mubr.bf16.gmra.mrb[0].mxu0 %v8893
        %v10210 = vpop.f32.mrb[0].mxu0
        %v10211 = vadd.f32 %v10050, %v10210
        %v10212 = vpop.f32.mrb[0].mxu0
        %v10213 = vpop.f32.mrb[0].mxu0
        %v10214 = vadd.f32 %v10053, %v10213
        %v10215 = vpop.f32.mrb[0].mxu0
        %10216 = vmatprep.mubr.bf16.mxu0 %v8904
        %10217 = vmatmul.mubr.bf16.gmra.mrb[0].mxu0 %v8903
        %v10218 = vpop.f32.mrb[0].mxu0
        %v10219 = vadd.f32 %v10058, %v10218
        %v10220 = vpop.f32.mrb[0].mxu0
        %v10221 = vpop.f32.mrb[0].mxu0
        %v10222 = vadd.f32 %v10061, %v10221
        %v10223 = vpop.f32.mrb[0].mxu0
        %10224 = vmatprep.mubr.bf16.mxu0 %v8914
        %10225 = vmatmul.mubr.bf16.gmra.mrb[0].mxu0 %v8913
        %v10226 = vpop.f32.mrb[0].mxu0
        %v10227 = vadd.f32 %v10066, %v10226
        %v10228 = vpop.f32.mrb[0].mxu0
        %v10229 = vpop.f32.mrb[0].mxu0
        %v10230 = vadd.f32 %v10069, %v10229
        %v10231 = vpop.f32.mrb[0].mxu0
        %10232 = vmatprep.mubr.bf16.mxu0 %v8924
        %10233 = vmatmul.mubr.bf16.gmra.mrb[0].mxu0 %v8923
        %v10234 = vpop.f32.mrb[0].mxu0
        %v10235 = vadd.f32 %v10074, %v10234
        %v10236 = vpop.f32.mrb[0].mxu0
        %v10237 = vpop.f32.mrb[0].mxu0
        %v10238 = vadd.f32 %v10077, %v10237
        %v10239 = vpop.f32.mrb[0].mxu0
        %10240 = vmatprep.mubr.bf16.mxu0 %v8934
        %10241 = vmatmul.mubr.bf16.gmra.mrb[0].mxu0 %v8933
        %v10242 = vpop.f32.mrb[0].mxu0
        %v10243 = vadd.f32 %v10082, %v10242
        %v10244 = vpop.f32.mrb[0].mxu0
        %v10245 = vpop.f32.mrb[0].mxu0
        %v10246 = vadd.f32 %v10085, %v10245
        %v10247 = vpop.f32.mrb[0].mxu0
        %10248 = vmatprep.mubr.bf16.mxu0 %v8944
        %10249 = vmatmul.mubr.bf16.gmra.mrb[0].mxu0 %v8943
        %v10250 = vpop.f32.mrb[0].mxu0
        %v10251 = vadd.f32 %v10090, %v10250
        %v10252 = vpop.f32.mrb[0].mxu0
        %v10253 = vpop.f32.mrb[0].mxu0
        %v10254 = vadd.f32 %v10093, %v10253
        %v10255 = vpop.f32.mrb[0].mxu0
        %10256 = vmatprep.mubr.bf16.mxu0 %v8954
        %10257 = vmatmul.mubr.bf16.gmra.mrb[0].mxu0 %v8953
        %v10258 = vpop.f32.mrb[0].mxu0
        %v10259 = vadd.f32 %v10098, %v10258
        %v10260 = vpop.f32.mrb[0].mxu0
        %v10261 = vpop.f32.mrb[0].mxu0
        %v10262 = vadd.f32 %v10101, %v10261
        %v10263 = vpop.f32.mrb[0].mxu0
        %10264 = vmatprep.mubr.bf16.mxu0 %v8964
        %10265 = vmatmul.mubr.bf16.gmra.mrb[0].mxu0 %v8963
        %v10266 = vpop.f32.mrb[0].mxu0
        %v10267 = vadd.f32 %v10106, %v10266
        %v10268 = vpop.f32.mrb[0].mxu0
        %v10269 = vpop.f32.mrb[0].mxu0
        %v10270 = vadd.f32 %v10109, %v10269
        %v10271 = vpop.f32.mrb[0].mxu0
        %10272 = vmatprep.mubr.bf16.mxu0 %v8974
        %10273 = vmatmul.mubr.bf16.gmra.mrb[0].mxu0 %v8973
        %v10274 = vpop.f32.mrb[0].mxu0
        %v10275 = vadd.f32 %v10114, %v10274
        %v10276 = vpop.f32.mrb[0].mxu0
        %v10277 = vpop.f32.mrb[0].mxu0
        %v10278 = vadd.f32 %v10117, %v10277
        %v10279 = vpop.f32.mrb[0].mxu0
        %10280 = vmatprep.mubr.bf16.mxu0 %v8984
        %10281 = vmatmul.mubr.bf16.gmra.mrb[0].mxu0 %v8983
        %v10282 = vpop.f32.mrb[0].mxu0
        %v10283 = vadd.f32 %v10122, %v10282
        %v10284 = vpop.f32.mrb[0].mxu0
        %v10285 = vpop.f32.mrb[0].mxu0
        %v10286 = vadd.f32 %v10125, %v10285
        %v10287 = vpop.f32.mrb[0].mxu0
        %10288 = vmatprep.mubr.bf16.mxu0 %v8994
        %10289 = vmatmul.mubr.bf16.gmra.mrb[0].mxu0 %v8993
        %v10290 = vpop.f32.mrb[0].mxu0
        %v10291 = vadd.f32 %v10130, %v10290
        %v10292 = vpop.f32.mrb[0].mxu0
        %v10293 = vpop.f32.mrb[0].mxu0
        %v10294 = vadd.f32 %v10133, %v10293
        %v10295 = vpop.f32.mrb[0].mxu0
        %10296 = vmatprep.mubr.bf16.mxu0 %v9004
        %10297 = vmatmul.mubr.bf16.gmra.mrb[0].mxu0 %v9003
        %v10298 = vpop.f32.mrb[0].mxu0
        %v10299 = vadd.f32 %v10138, %v10298
        %v10300 = vpop.f32.mrb[0].mxu0
        %v10301 = vpop.f32.mrb[0].mxu0
        %v10302 = vadd.f32 %v10141, %v10301
        %v10303 = vpop.f32.mrb[0].mxu0
        %10304 = vmatprep.mubr.bf16.mxu0 %v9014
        %10305 = vmatmul.mubr.bf16.gmra.mrb[0].mxu0 %v9013
        %v10306 = vpop.f32.mrb[0].mxu0
        %v10307 = vadd.f32 %v10146, %v10306
        %v10308 = vpop.f32.mrb[0].mxu0
        %v10309 = vpop.f32.mrb[0].mxu0
        %v10310 = vadd.f32 %v10149, %v10309
        %v10311 = vpop.f32.mrb[0].mxu0
        %10312 = vmatprep.mubr.bf16.mxu0 %v9024
        %10313 = vmatmul.mubr.bf16.gmra.mrb[0].mxu0 %v9023
        %v10314 = vpop.f32.mrb[0].mxu0
        %v10315 = vadd.f32 %v10154, %v10314
        %v10316 = vpop.f32.mrb[0].mxu0
        %v10317 = vpop.f32.mrb[0].mxu0
        %v10318 = vadd.f32 %v10157, %v10317
        %v10319 = vpop.f32.mrb[0].mxu0
        %10320 = vmatprep.mubr.bf16.mxu0 %v9034
        %10321 = vmatmul.mubr.bf16.gmra.mrb[0].mxu0 %v9033
        %v10322 = vpop.f32.mrb[0].mxu0
        %v10323 = vadd.f32 %v10162, %v10322
        %v10324 = vpop.f32.mrb[0].mxu0
        %v10325 = vpop.f32.mrb[0].mxu0
        %v10326 = vadd.f32 %v10165, %v10325
        %v10327 = vpop.f32.mrb[0].mxu0
        %10328 = vmatprep.mubr.bf16.mxu0 %v9044
        %10329 = vmatmul.mubr.bf16.gmra.mrb[0].mxu0 %v9043
        %v10330 = vpop.f32.mrb[0].mxu0
        %v10331 = vadd.f32 %v10170, %v10330
        %v10332 = vpop.f32.mrb[0].mxu0
        %v10333 = vpop.f32.mrb[0].mxu0
        %v10334 = vadd.f32 %v10173, %v10333
        %v10335 = vpop.f32.mrb[0].mxu0
        %10336 = vdwg.mxu0
        %10337 = vmatprep.subr.bf16.mxu0 0
        %10338 = vmatpush1.bf16.msra.mxu0 %v9597
        %10339 = vmatprep.subr.bf16.mxu0 0
        %10340 = vmatpush1.bf16.msra.mxu0 %v9598
        %10341 = vmatprep.subr.bf16.mxu0 0
        %10342 = vmatpush1.bf16.msra.mxu0 %v9599
        %10343 = vmatprep.subr.bf16.mxu0 0
        %10344 = vmatpush1.bf16.msra.mxu0 %v9600
        %10345 = vmatprep.subr.bf16.mxu0 0
        %10346 = vmatpush1.bf16.msra.mxu0 %v9601
        %10347 = vmatprep.subr.bf16.mxu0 0
        %10348 = vmatpush1.bf16.msra.mxu0 %v9602
        %10349 = vmatprep.subr.bf16.mxu0 0
        %10350 = vmatpush1.bf16.msra.mxu0 %v9603
        %10351 = vmatprep.subr.bf16.mxu0 0
        %10352 = vmatpush1.bf16.msra.mxu0 %v9604
        %10353 = vmatprep.subr.bf16.mxu0 0
        %10354 = vmatpush1.bf16.msra.mxu0 %v9605
        %10355 = vmatprep.subr.bf16.mxu0 0
        %10356 = vmatpush1.bf16.msra.mxu0 %v9606
        %10357 = vmatprep.subr.bf16.mxu0 0
        %10358 = vmatpush1.bf16.msra.mxu0 %v9607
        %10359 = vmatprep.subr.bf16.mxu0 0
        %10360 = vmatpush1.bf16.msra.mxu0 %v9608
        %10361 = vmatprep.subr.bf16.mxu0 0
        %10362 = vmatpush1.bf16.msra.mxu0 %v9609
        %10363 = vmatprep.subr.bf16.mxu0 0
        %10364 = vmatpush1.bf16.msra.mxu0 %v9610
        %10365 = vmatprep.subr.bf16.mxu0 0
        %10366 = vmatpush1.bf16.msra.mxu0 %v9611
        %10367 = vmatprep.subr.bf16.mxu0 0
        %10368 = vmatpush1.bf16.msra.mxu0 %v9612
        %10369 = vmatprep.mubr.bf16.mxu0 %v8896
        %10370 = vmatmul.mubr.bf16.gmra.mrb[0].mxu0 %v8895
        %v10371 = vpop.f32.mrb[0].mxu0
        %v10372 = vadd.f32 %v10211, %v10371
        %v10373 = vpop.f32.mrb[0].mxu0
        %v10374 = vpop.f32.mrb[0].mxu0
        %v10375 = vadd.f32 %v10214, %v10374
        %v10376 = vpop.f32.mrb[0].mxu0
        %10377 = vmatprep.mubr.bf16.mxu0 %v8906
        %10378 = vmatmul.mubr.bf16.gmra.mrb[0].mxu0 %v8905
        %v10379 = vpop.f32.mrb[0].mxu0
        %v10380 = vadd.f32 %v10219, %v10379
        %v10381 = vpop.f32.mrb[0].mxu0
        %v10382 = vpop.f32.mrb[0].mxu0
        %v10383 = vadd.f32 %v10222, %v10382
        %v10384 = vpop.f32.mrb[0].mxu0
        %10385 = vmatprep.mubr.bf16.mxu0 %v8916
        %10386 = vmatmul.mubr.bf16.gmra.mrb[0].mxu0 %v8915
        %v10387 = vpop.f32.mrb[0].mxu0
        %v10388 = vadd.f32 %v10227, %v10387
        %v10389 = vpop.f32.mrb[0].mxu0
        %v10390 = vpop.f32.mrb[0].mxu0
        %v10391 = vadd.f32 %v10230, %v10390
        %v10392 = vpop.f32.mrb[0].mxu0
        %10393 = vmatprep.mubr.bf16.mxu0 %v8926
        %10394 = vmatmul.mubr.bf16.gmra.mrb[0].mxu0 %v8925
        %v10395 = vpop.f32.mrb[0].mxu0
        %v10396 = vadd.f32 %v10235, %v10395
        %v10397 = vpop.f32.mrb[0].mxu0
        %v10398 = vpop.f32.mrb[0].mxu0
        %v10399 = vadd.f32 %v10238, %v10398
        %v10400 = vpop.f32.mrb[0].mxu0
        %10401 = vmatprep.mubr.bf16.mxu0 %v8936
        %10402 = vmatmul.mubr.bf16.gmra.mrb[0].mxu0 %v8935
        %v10403 = vpop.f32.mrb[0].mxu0
        %v10404 = vadd.f32 %v10243, %v10403
        %v10405 = vpop.f32.mrb[0].mxu0
        %v10406 = vpop.f32.mrb[0].mxu0
        %v10407 = vadd.f32 %v10246, %v10406
        %v10408 = vpop.f32.mrb[0].mxu0
        %10409 = vmatprep.mubr.bf16.mxu0 %v8946
        %10410 = vmatmul.mubr.bf16.gmra.mrb[0].mxu0 %v8945
        %v10411 = vpop.f32.mrb[0].mxu0
        %v10412 = vadd.f32 %v10251, %v10411
        %v10413 = vpop.f32.mrb[0].mxu0
        %v10414 = vpop.f32.mrb[0].mxu0
        %v10415 = vadd.f32 %v10254, %v10414
        %v10416 = vpop.f32.mrb[0].mxu0
        %10417 = vmatprep.mubr.bf16.mxu0 %v8956
        %10418 = vmatmul.mubr.bf16.gmra.mrb[0].mxu0 %v8955
        %v10419 = vpop.f32.mrb[0].mxu0
        %v10420 = vadd.f32 %v10259, %v10419
        %v10421 = vpop.f32.mrb[0].mxu0
        %v10422 = vpop.f32.mrb[0].mxu0
        %v10423 = vadd.f32 %v10262, %v10422
        %v10424 = vpop.f32.mrb[0].mxu0
        %10425 = vmatprep.mubr.bf16.mxu0 %v8966
        %10426 = vmatmul.mubr.bf16.gmra.mrb[0].mxu0 %v8965
        %v10427 = vpop.f32.mrb[0].mxu0
        %v10428 = vadd.f32 %v10267, %v10427
        %v10429 = vpop.f32.mrb[0].mxu0
        %v10430 = vpop.f32.mrb[0].mxu0
        %v10431 = vadd.f32 %v10270, %v10430
        %v10432 = vpop.f32.mrb[0].mxu0
        %10433 = vmatprep.mubr.bf16.mxu0 %v8976
        %10434 = vmatmul.mubr.bf16.gmra.mrb[0].mxu0 %v8975
        %v10435 = vpop.f32.mrb[0].mxu0
        %v10436 = vadd.f32 %v10275, %v10435
        %v10437 = vpop.f32.mrb[0].mxu0
        %v10438 = vpop.f32.mrb[0].mxu0
        %v10439 = vadd.f32 %v10278, %v10438
        %v10440 = vpop.f32.mrb[0].mxu0
        %10441 = vmatprep.mubr.bf16.mxu0 %v8986
        %10442 = vmatmul.mubr.bf16.gmra.mrb[0].mxu0 %v8985
        %v10443 = vpop.f32.mrb[0].mxu0
        %v10444 = vadd.f32 %v10283, %v10443
        %v10445 = vpop.f32.mrb[0].mxu0
        %v10446 = vpop.f32.mrb[0].mxu0
        %v10447 = vadd.f32 %v10286, %v10446
        %v10448 = vpop.f32.mrb[0].mxu0
        %10449 = vmatprep.mubr.bf16.mxu0 %v8996
        %10450 = vmatmul.mubr.bf16.gmra.mrb[0].mxu0 %v8995
        %v10451 = vpop.f32.mrb[0].mxu0
        %v10452 = vadd.f32 %v10291, %v10451
        %v10453 = vpop.f32.mrb[0].mxu0
        %v10454 = vpop.f32.mrb[0].mxu0
        %v10455 = vadd.f32 %v10294, %v10454
        %v10456 = vpop.f32.mrb[0].mxu0
        %10457 = vmatprep.mubr.bf16.mxu0 %v9006
        %10458 = vmatmul.mubr.bf16.gmra.mrb[0].mxu0 %v9005
        %v10459 = vpop.f32.mrb[0].mxu0
        %v10460 = vadd.f32 %v10299, %v10459
        %v10461 = vpop.f32.mrb[0].mxu0
        %v10462 = vpop.f32.mrb[0].mxu0
        %v10463 = vadd.f32 %v10302, %v10462
        %v10464 = vpop.f32.mrb[0].mxu0
        %10465 = vmatprep.mubr.bf16.mxu0 %v9016
        %10466 = vmatmul.mubr.bf16.gmra.mrb[0].mxu0 %v9015
        %v10467 = vpop.f32.mrb[0].mxu0
        %v10468 = vadd.f32 %v10307, %v10467
        %v10469 = vpop.f32.mrb[0].mxu0
        %v10470 = vpop.f32.mrb[0].mxu0
        %v10471 = vadd.f32 %v10310, %v10470
        %v10472 = vpop.f32.mrb[0].mxu0
        %10473 = vmatprep.mubr.bf16.mxu0 %v9026
        %10474 = vmatmul.mubr.bf16.gmra.mrb[0].mxu0 %v9025
        %v10475 = vpop.f32.mrb[0].mxu0
        %v10476 = vadd.f32 %v10315, %v10475
        %v10477 = vpop.f32.mrb[0].mxu0
        %v10478 = vpop.f32.mrb[0].mxu0
        %v10479 = vadd.f32 %v10318, %v10478
        %v10480 = vpop.f32.mrb[0].mxu0
        %10481 = vmatprep.mubr.bf16.mxu0 %v9036
        %10482 = vmatmul.mubr.bf16.gmra.mrb[0].mxu0 %v9035
        %v10483 = vpop.f32.mrb[0].mxu0
        %v10484 = vadd.f32 %v10323, %v10483
        %v10485 = vpop.f32.mrb[0].mxu0
        %v10486 = vpop.f32.mrb[0].mxu0
        %v10487 = vadd.f32 %v10326, %v10486
        %v10488 = vpop.f32.mrb[0].mxu0
        %10489 = vmatprep.mubr.bf16.mxu0 %v9046
        %10490 = vmatmul.mubr.bf16.gmra.mrb[0].mxu0 %v9045
        %v10491 = vpop.f32.mrb[0].mxu0
        %v10492 = vadd.f32 %v10331, %v10491
        %v10493 = vpop.f32.mrb[0].mxu0
        %v10494 = vpop.f32.mrb[0].mxu0
        %v10495 = vadd.f32 %v10334, %v10494
        %v10496 = vpop.f32.mrb[0].mxu0
        %10497 = vdwg.mxu0
        %v10498 = vmax.f32 %v10372, 0.0
        %v10499 = vmax.f32 %v10375, 0.0
        %v10500 = vmax.f32 %v10380, 0.0
        %v10501 = vmax.f32 %v10383, 0.0
        %v10502 = vmax.f32 %v10388, 0.0
        %v10503 = vmax.f32 %v10391, 0.0
        %v10504 = vmax.f32 %v10396, 0.0
        %v10505 = vmax.f32 %v10399, 0.0
        %v10506 = vmax.f32 %v10404, 0.0
        %v10507 = vmax.f32 %v10407, 0.0
        %v10508 = vmax.f32 %v10412, 0.0
        %v10509 = vmax.f32 %v10415, 0.0
        %v10510 = vmax.f32 %v10420, 0.0
        %v10511 = vmax.f32 %v10423, 0.0
        %v10512 = vmax.f32 %v10428, 0.0
        %v10513 = vmax.f32 %v10431, 0.0
        %v10514 = vmax.f32 %v10436, 0.0
        %v10515 = vmax.f32 %v10439, 0.0
        %v10516 = vmax.f32 %v10444, 0.0
        %v10517 = vmax.f32 %v10447, 0.0
        %v10518 = vmax.f32 %v10452, 0.0
        %v10519 = vmax.f32 %v10455, 0.0
        %v10520 = vmax.f32 %v10460, 0.0
        %v10521 = vmax.f32 %v10463, 0.0
        %v10522 = vmax.f32 %v10468, 0.0
        %v10523 = vmax.f32 %v10471, 0.0
        %v10524 = vmax.f32 %v10476, 0.0
        %v10525 = vmax.f32 %v10479, 0.0
        %v10526 = vmax.f32 %v10484, 0.0
        %v10527 = vmax.f32 %v10487, 0.0
        %v10528 = vmax.f32 %v10492, 0.0
        %v10529 = vmax.f32 %v10495, 0.0
        %v10530 = vpack.c.bf16 %v10499, %v10498
        %v10531 = vpack.c.bf16 %v10501, %v10500
        %v10532 = vpack.c.bf16 %v10503, %v10502
        %v10533 = vpack.c.bf16 %v10505, %v10504
        %v10534 = vpack.c.bf16 %v10507, %v10506
        %v10535 = vpack.c.bf16 %v10509, %v10508
        %v10536 = vpack.c.bf16 %v10511, %v10510
        %v10537 = vpack.c.bf16 %v10513, %v10512
        %v10538 = vpack.c.bf16 %v10515, %v10514
        %v10539 = vpack.c.bf16 %v10517, %v10516
        %v10540 = vpack.c.bf16 %v10519, %v10518
        %v10541 = vpack.c.bf16 %v10521, %v10520
        %v10542 = vpack.c.bf16 %v10523, %v10522
        %v10543 = vpack.c.bf16 %v10525, %v10524
        %v10544 = vpack.c.bf16 %v10527, %v10526
        %v10545 = vpack.c.bf16 %v10529, %v10528
        %v10562 = vunpack.c.l.b16 %v10530
        %v10563 = vunpack.c.h.b16 %v10530
        %v10564 = vunpack.c.l.b16 %v10531
        %v10565 = vunpack.c.h.b16 %v10531
        %v10566 = vunpack.c.l.b16 %v10532
        %v10567 = vunpack.c.h.b16 %v10532
        %v10568 = vunpack.c.l.b16 %v10533
        %v10569 = vunpack.c.h.b16 %v10533
        %v10570 = vunpack.c.l.b16 %v10534
        %v10571 = vunpack.c.h.b16 %v10534
        %v10572 = vunpack.c.l.b16 %v10535
        %v10573 = vunpack.c.h.b16 %v10535
        %v10574 = vunpack.c.l.b16 %v10536
        %v10575 = vunpack.c.h.b16 %v10536
        %v10576 = vunpack.c.l.b16 %v10537
        %v10577 = vunpack.c.h.b16 %v10537
        %v10578 = vunpack.c.l.b16 %v10538
        %v10579 = vunpack.c.h.b16 %v10538
        %v10580 = vunpack.c.l.b16 %v10539
        %v10581 = vunpack.c.h.b16 %v10539
        %v10582 = vunpack.c.l.b16 %v10540
        %v10583 = vunpack.c.h.b16 %v10540
        %v10584 = vunpack.c.l.b16 %v10541
        %v10585 = vunpack.c.h.b16 %v10541
        %v10586 = vunpack.c.l.b16 %v10542
        %v10587 = vunpack.c.h.b16 %v10542
        %v10588 = vunpack.c.l.b16 %v10543
        %v10589 = vunpack.c.h.b16 %v10543
        %v10590 = vunpack.c.l.b16 %v10544
        %v10591 = vunpack.c.h.b16 %v10544
        %v10592 = vunpack.c.l.b16 %v10545
        %v10593 = vunpack.c.h.b16 %v10545
        %v10594 = vpack.c.b16 %v10562, %v10562
        %v10595 = vpack.c.b16 %v10563, %v10563
        %v10596 = vpack.c.b16 %v10564, %v10564
        %v10597 = vpack.c.b16 %v10565, %v10565
        %v10598 = vpack.c.b16 %v10566, %v10566
        %v10599 = vpack.c.b16 %v10567, %v10567
        %v10600 = vpack.c.b16 %v10568, %v10568
        %v10601 = vpack.c.b16 %v10569, %v10569
        %v10602 = vpack.c.b16 %v10570, %v10570
        %v10603 = vpack.c.b16 %v10571, %v10571
        %v10604 = vpack.c.b16 %v10572, %v10572
        %v10605 = vpack.c.b16 %v10573, %v10573
        %v10606 = vpack.c.b16 %v10574, %v10574
        %v10607 = vpack.c.b16 %v10575, %v10575
        %v10608 = vpack.c.b16 %v10576, %v10576
        %v10609 = vpack.c.b16 %v10577, %v10577
        %v10610 = vpack.c.b16 %v10578, %v10578
        %v10611 = vpack.c.b16 %v10579, %v10579
        %v10612 = vpack.c.b16 %v10580, %v10580
        %v10613 = vpack.c.b16 %v10581, %v10581
        %v10614 = vpack.c.b16 %v10582, %v10582
        %v10615 = vpack.c.b16 %v10583, %v10583
        %v10616 = vpack.c.b16 %v10584, %v10584
        %v10617 = vpack.c.b16 %v10585, %v10585
        %v10618 = vpack.c.b16 %v10586, %v10586
        %v10619 = vpack.c.b16 %v10587, %v10587
        %v10620 = vpack.c.b16 %v10588, %v10588
        %v10621 = vpack.c.b16 %v10589, %v10589
        %v10622 = vpack.c.b16 %v10590, %v10590
        %v10623 = vpack.c.b16 %v10591, %v10591
        %v10624 = vpack.c.b16 %v10592, %v10592
        %v10625 = vpack.c.b16 %v10593, %v10593
        %10658 = vst [vmem:[%s271] sm:$0xf] %v10594
        %10659 = vst [vmem:[%s271 + $0x4] sm:$0xf] %v10595
        %10660 = vst [vmem:[%s271 + $0x8] sm:$0xf] %v10596
        %10661 = vst [vmem:[%s271 + $0xc] sm:$0xf] %v10597
        %10662 = vst [vmem:[%s271 + $0x10] sm:$0xf] %v10598
        %10663 = vst [vmem:[%s271 + $0x14] sm:$0xf] %v10599
        %10664 = vst [vmem:[%s271 + $0x18] sm:$0xf] %v10600
        %10665 = vst [vmem:[%s271 + $0x1c] sm:$0xf] %v10601
        %10666 = vst [vmem:[%s271 + $0x20] sm:$0xf] %v10602
        %10667 = vst [vmem:[%s271 + $0x24] sm:$0xf] %v10603
        %10668 = vst [vmem:[%s271 + $0x28] sm:$0xf] %v10604
        %10669 = vst [vmem:[%s271 + $0x2c] sm:$0xf] %v10605
        %10670 = vst [vmem:[%s271 + $0x30] sm:$0xf] %v10606
        %10671 = vst [vmem:[%s271 + $0x34] sm:$0xf] %v10607
        %10672 = vst [vmem:[%s271 + $0x38] sm:$0xf] %v10608
        %10673 = vst [vmem:[%s271 + $0x3c] sm:$0xf] %v10609
        %10674 = vst [vmem:[%s271 + $0x40] sm:$0xf] %v10610
        %10675 = vst [vmem:[%s271 + $0x44] sm:$0xf] %v10611
        %10676 = vst [vmem:[%s271 + $0x48] sm:$0xf] %v10612
        %10677 = vst [vmem:[%s271 + $0x4c] sm:$0xf] %v10613
        %10678 = vst [vmem:[%s271 + $0x50] sm:$0xf] %v10614
        %10679 = vst [vmem:[%s271 + $0x54] sm:$0xf] %v10615
        %10680 = vst [vmem:[%s271 + $0x58] sm:$0xf] %v10616
        %10681 = vst [vmem:[%s271 + $0x5c] sm:$0xf] %v10617
        %10682 = vst [vmem:[%s271 + $0x60] sm:$0xf] %v10618
        %10683 = vst [vmem:[%s271 + $0x64] sm:$0xf] %v10619
        %10684 = vst [vmem:[%s271 + $0x68] sm:$0xf] %v10620
        %10685 = vst [vmem:[%s271 + $0x6c] sm:$0xf] %v10621
        %10686 = vst [vmem:[%s271 + $0x70] sm:$0xf] %v10622
        %10687 = vst [vmem:[%s271 + $0x74] sm:$0xf] %v10623
        %10688 = vst [vmem:[%s271 + $0x78] sm:$0xf] %v10624
        %10689 = vst [vmem:[%s271 + $0x7c] sm:$0xf] %v10625
        %s10690 = sand.u32 %s141, 1
        %s10691 = scalar_lea.sflag [#allocation7], %s10690
        %s10692 = sand.u32 %s141, 1
        %s10693 = smul.addr %s10692, 128
        %s10694 = scalar_lea.vmem [#allocation11], %s10693
        // Predicated region
        $region53: #{tpu_custom_call.1} parent=39 // pred_check
          %p10695 = pneg %p151
        $region54: #{tpu_custom_call.1} parent=39 // pred_check_branch
          %10697 = sbr.rel (%p10695) target = $region56
        $region55: #{tpu_custom_call.1} parent=39 // pred_region
          %s10699 = ssub.s32 2048, 2048
          %10700 = vsyncadd %s10691, %s10699
          %s10701 = smul.addr %s23, 32
          %s10702 = smul.addr %s10701, 64
          %s10703 = scalar_lea.hbm %s5, %s10702
          %s10704 = sshll.u32 %s10694, 4
          %s10705 = int_to_ptr.vmem [resolvable:$true] %s10704
          %10710 = dma.vmem_to_hbm [thread:$0]  %s10705, 2048, %s10703, %s10691, 64, 64, 4
        $region56: #{tpu_custom_call.1} parent=39 // pred_fallthru
          _
      $region40: #{tpu_custom_call.1} parent=5 // pred_fallthru
        _
      %p10711 = scmp.le.s32.totalorder 2, %s18
      // Predicated region
      $region57: #{tpu_custom_call.1} parent=5 // pred_check
        %p10712 = pneg %p10711
      $region58: #{tpu_custom_call.1} parent=5 // pred_check_branch
        %10714 = sbr.rel (%p10712) target = $region60
      $region59: #{tpu_custom_call.1} parent=5 // pred_region
        %s10715 = ssub.s32 %s18, 2
        // Predicated region
        $region61: #{tpu_custom_call.1} parent=59 // pred_check
          %p10716 = pneg %p157
        $region62: #{tpu_custom_call.1} parent=59 // pred_check_branch
          %10718 = sbr.rel (%p10716) target = $region64
        $region63: #{tpu_custom_call.1} parent=59 // pred_region
          %s10719 = sand.u32 %s142, 1
          %s10720 = scalar_lea.sflag [#allocation7], %s10719
          %s10721 = sand.u32 %s142, 1
          %s10722 = smul.addr %s10721, 128
          %s10723 = scalar_lea.vmem [#allocation11], %s10722
          %10724 = dma.done %s10720, 2048
        $region64: #{tpu_custom_call.1} parent=59 // pred_fallthru
          _
      $region60: #{tpu_custom_call.1} parent=5 // pred_fallthru
        _
    $region6: #{tpu_custom_call.1} parent=1 // loop_footer
      %s22 = sadd.s32 1, %s18
    $region7: #{tpu_custom_call.1} parent=1 // loop_footer_branch
      %17 = sbr.rel target = $region3
    $region8: #{tpu_custom_call.1} parent=1 // loop_exit
      _
    %10725 = vsyncpa [#allocation6], 1
    %s10726 = scalar_lea.sflag [#allocation6], 1
    %10727 = vsyncpa %s10726, 1
    %10728 = vsyncpa [#allocation9], 1
    %10729 = vsyncpa [#allocation7], 1
    %s10730 = scalar_lea.sflag [#allocation7], 1
    %10731 = vsyncpa %s10730, 1

</llo_original>
